<compile_context>
chip_gen: v7x
topology: tpu7x:2x2x1
jax: 0.10.0
libtpu: 0.0.40
codegen_flags: <defaults>
</compile_context>

<pallas_src>
import functools

import jax
import jax.numpy as jnp
from jax.experimental import pallas as pl
from jax.experimental.pallas import tpu as pltpu


def _round_up(x, m):
    return ((x + m - 1) // m) * m


# ------------------------- Pallas kernels -------------------------

def _make_conv_stats_kernel(r_out, ws):
    """Fused 4x4/s2/p1 conv (as a 2x2/s1 conv over space-to-depth rows) + BN partial stats."""

    def kernel(xs_ref, w_ref, m_ref, y_ref, s_ref, q_ref):
        x = xs_ref[0]                                            # (R_in, 4*Cin) bf16
        acc = jnp.dot(x[0:r_out, :], w_ref[0], preferred_element_type=jnp.float32)
        acc += jnp.dot(x[1:1 + r_out, :], w_ref[1], preferred_element_type=jnp.float32)
        acc += jnp.dot(x[ws:ws + r_out, :], w_ref[2], preferred_element_type=jnp.float32)
        acc += jnp.dot(x[ws + 1:ws + 1 + r_out, :], w_ref[3], preferred_element_type=jnp.float32)
        y_ref[0] = acc                                           # (R_out, Cp) f32 pre-BN conv
        am = acc * m_ref[...]                                    # mask non-pixel (padding) rows
        s_ref[0] = jnp.sum(am, axis=0, keepdims=True)            # per-image partial sum
        q_ref[0] = jnp.sum(am * acc, axis=0, keepdims=True)      # per-image partial sum of squares

    return kernel


def _bn_lrelu_sum_kernel(y_ref, sc_ref, sh_ref, m_ref, a_ref, h_ref):
    """BatchNorm affine + LeakyReLU(0.2) + fused masked spatial-sum epilogue."""
    z = y_ref[0] * sc_ref[...] + sh_ref[...]
    a = jnp.maximum(z, 0.2 * z)                                  # LeakyReLU(0.2)
    a_ref[0] = a.astype(a_ref.dtype)
    h_ref[0] = jnp.sum(a * m_ref[...], axis=0, keepdims=True)


def _head_kernel(h_ref, onehot_ref, e_ref, o_ref):
    w_y = jnp.dot(onehot_ref[...], e_ref[...], preferred_element_type=jnp.float32)
    o_ref[...] = jnp.sum(w_y * h_ref[...], axis=1, keepdims=True)


# ------------------------- conv + BN + LeakyReLU layer -------------------------

def _prep_weight(w, cp):
    """(Cout, Cin, 4, 4) PyTorch Conv2d weight -> (4 shifts, 4*Cin, Cp) bf16."""
    cout, cin = w.shape[:2]
    w6 = w.reshape(cout, cin, 2, 2, 2, 2)                        # (co, ci, dh, r, dw, s)
    w4 = w6.transpose(2, 4, 3, 5, 1, 0).reshape(4, 4 * cin, cout)
    w4 = jnp.pad(w4, ((0, 0), (0, 0), (0, cp - cout)))
    return w4.astype(jnp.bfloat16)


def conv_bn_lrelu(x_nhwc, w, gamma, beta, eps=1e-5):
    """x_nhwc: (N, H, W, Cin) bf16 -> (act (N,OH,OW,Cout) bf16, spatial_sum (N,Cout) f32)."""
    n, h, wd, cin = x_nhwc.shape
    cout = w.shape[0]
    oh, ow = h // 2, wd // 2
    hs, ws = oh + 1, ow + 1
    cp = _round_up(cout, 128)
    kc = 4 * cin
    r_out = _round_up(oh * ws, 8)
    r_in = _round_up(r_out + ws + 1, 8)

    # glue (activation-sized): pad -> space-to-depth(2) -> flatten rows; no im2col in HBM.
    xp = jnp.pad(x_nhwc, ((0, 0), (1, 1), (1, 1), (0, 0)))
    xs = xp.reshape(n, hs, 2, ws, 2, cin).transpose(0, 1, 3, 2, 4, 5).reshape(n, hs * ws, kc)
    xs = jnp.pad(xs, ((0, 0), (0, r_in - hs * ws), (0, 0))).astype(jnp.bfloat16)
    w4 = _prep_weight(w, cp)

    rows = jnp.arange(r_out)
    mask = (((rows % ws) < ow) & (rows < oh * ws)).astype(jnp.float32).reshape(r_out, 1)

    conv_out, psum, psq = pl.pallas_call(
        _make_conv_stats_kernel(r_out, ws),
        out_shape=(jax.ShapeDtypeStruct((n, r_out, cp), jnp.float32),
                   jax.ShapeDtypeStruct((n, 1, cp), jnp.float32),
                   jax.ShapeDtypeStruct((n, 1, cp), jnp.float32)),
        grid=(n,),
        in_specs=[pl.BlockSpec((1, r_in, kc), lambda i: (i, 0, 0)),
                  pl.BlockSpec((4, kc, cp), lambda i: (0, 0, 0)),
                  pl.BlockSpec((r_out, 1), lambda i: (0, 0))],
        out_specs=[pl.BlockSpec((1, r_out, cp), lambda i: (i, 0, 0)),
                   pl.BlockSpec((1, 1, cp), lambda i: (i, 0, 0)),
                   pl.BlockSpec((1, 1, cp), lambda i: (i, 0, 0))],
        compiler_params=pltpu.CompilerParams(dimension_semantics=("parallel",)),
    )(xs, w4, mask)

    # training-mode BatchNorm batch statistics (biased variance) - tiny XLA reduction.
    cnt = float(n * oh * ow)
    mean = jnp.sum(psum, axis=(0, 1)) / cnt
    var = jnp.maximum(jnp.sum(psq, axis=(0, 1)) / cnt - mean * mean, 0.0)
    gamma_p = jnp.pad(gamma, (0, cp - cout))
    beta_p = jnp.pad(beta, (0, cp - cout))
    scale = (gamma_p * jax.lax.rsqrt(var + eps)).reshape(1, cp)
    shift = beta_p.reshape(1, cp) - mean.reshape(1, cp) * scale

    act, hsum = pl.pallas_call(
        _bn_lrelu_sum_kernel,
        out_shape=(jax.ShapeDtypeStruct((n, r_out, cp), jnp.bfloat16),
                   jax.ShapeDtypeStruct((n, 1, cp), jnp.float32)),
        grid=(n,),
        in_specs=[pl.BlockSpec((1, r_out, cp), lambda i: (i, 0, 0)),
                  pl.BlockSpec((1, cp), lambda i: (0, 0)),
                  pl.BlockSpec((1, cp), lambda i: (0, 0)),
                  pl.BlockSpec((r_out, 1), lambda i: (0, 0))],
        out_specs=[pl.BlockSpec((1, r_out, cp), lambda i: (i, 0, 0)),
                   pl.BlockSpec((1, 1, cp), lambda i: (i, 0, 0))],
        compiler_params=pltpu.CompilerParams(dimension_semantics=("parallel",)),
    )(conv_out, scale, shift, mask)

    act_nhwc = act[:, :oh * ws, :cout].reshape(n, oh, ws, cout)[:, :, :ow, :]
    spatial_sum = hsum[:, 0, :cout]
    return act_nhwc, spatial_sum


# ------------------------- LINnet_D -------------------------

def init_params(key, nc, ndf, n_classes):
    chans = [nc, ndf, ndf * 2, ndf * 4, ndf * 8]
    params = {"conv": [], "gamma": [], "beta": []}
    for i in range(4):
        key, kw, kg = jax.random.split(key, 3)
        # weights_init: Conv ~ N(0, 0.02), bias=False; BN gamma ~ N(1, 0.02), beta = 0
        params["conv"].append(0.02 * jax.random.normal(kw, (chans[i + 1], chans[i], 4, 4), jnp.float32))
        params["gamma"].append(1.0 + 0.02 * jax.random.normal(kg, (chans[i + 1],), jnp.float32))
        params["beta"].append(jnp.zeros((chans[i + 1],), jnp.float32))
    key, ke = jax.random.split(key)
    params["emb"] = jax.random.normal(ke, (ndf * 8, n_classes), jnp.float32)  # N(0,1), no bias
    return params


def linnet_d_forward(params, x, y, n_classes):
    a = x.transpose(0, 2, 3, 1).astype(jnp.bfloat16)             # NCHW -> NHWC bf16 GEMM input
    h = None
    for i in range(4):
        a, h = conv_bn_lrelu(a, params["conv"][i], params["gamma"][i], params["beta"][i])
    # h == torch.sum(layer4_out, dim=2).sum(dim=2), shape (N, ndf*8), already produced by pass 2.
    onehot = jax.nn.one_hot(y, n_classes, dtype=jnp.float32)     # scatter_-style one-hot
    emb_t = params["emb"].T                                      # (n_classes, ndf*8)
    out = pl.pallas_call(
        _head_kernel,
        out_shape=jax.ShapeDtypeStruct((h.shape[0], 1), jnp.float32),
    )(h, onehot, emb_t)
    return out[:, 0]


if __name__ == "__main__":
    NC, NDF, NCLASS, BATCH, H, W = 1, 16, 6, 2, 32, 32           # small config: 32x32 grayscale
    key = jax.random.PRNGKey(0)
    key, kp, kx, ky = jax.random.split(key, 4)
    params = init_params(kp, NC, NDF, NCLASS)
    x = jax.random.normal(kx, (BATCH, NC, H, W), jnp.float32)
    y = jax.random.randint(ky, (BATCH,), 0, NCLASS)

    fwd = jax.jit(functools.partial(linnet_d_forward, n_classes=NCLASS))
    out = jax.block_until_ready(fwd(params, x, y))

    assert out.shape == (BATCH,), out.shape
    assert bool(jnp.all(jnp.isfinite(out)))
    print("KERNEL_OK")
</pallas_src>

<mosaic_0001>
module attributes {stable_mosaic.version = 11 : i64} {
  func.func @kernel(%arg0: i32, %arg1: memref<1x296x4xbf16, #tpu.memory_space<vmem>>, %arg2: memref<4x4x128xbf16, #tpu.memory_space<vmem>>, %arg3: memref<272x1xf32, #tpu.memory_space<vmem>>, %arg4: memref<1x272x128xf32, #tpu.memory_space<vmem>>, %arg5: memref<1x1x128xf32, #tpu.memory_space<vmem>>, %arg6: memref<1x1x128xf32, #tpu.memory_space<vmem>>) attributes {dimension_semantics = [#tpu.dimension_semantics<parallel>], iteration_bounds = array<i64: 2>, scalar_prefetch = 0 : i64, scratch_operands = 0 : i64, tpu.core_type = #tpu.core_type<tc>, window_params = [{transform_indices = @transform_0, window_bounds = array<i64: 1, 296, 4>}, {pipeline_mode = #tpu.pipeline_mode<synchronous>, transform_indices = @transform_1, window_bounds = array<i64: 4, 4, 128>}, {pipeline_mode = #tpu.pipeline_mode<synchronous>, transform_indices = @transform_2, window_bounds = array<i64: 272, 1>}, {transform_indices = @transform_3, window_bounds = array<i64: 1, 272, 128>}, {transform_indices = @transform_4, window_bounds = array<i64: 1, 1, 128>}, {transform_indices = @transform_5, window_bounds = array<i64: 1, 1, 128>}]} {
    %c0 = arith.constant 0 : index
    %c0_0 = arith.constant 0 : index
    %c0_1 = arith.constant 0 : index
    %0 = vector.load %arg1[%c0, %c0_0, %c0_1] : memref<1x296x4xbf16, #tpu.memory_space<vmem>>, vector<1x296x4xbf16>
    %1 = vector.shape_cast %0 : vector<1x296x4xbf16> to vector<296x4xbf16>
    %2 = vector.extract_strided_slice %1 {offsets = [0, 0], sizes = [272, 4], strides = [1, 1]} : vector<296x4xbf16> to vector<272x4xbf16>
    %c0_2 = arith.constant 0 : index
    %c0_3 = arith.constant 0 : index
    %c0_4 = arith.constant 0 : index
    %3 = vector.load %arg2[%c0_2, %c0_3, %c0_4] : memref<4x4x128xbf16, #tpu.memory_space<vmem>>, vector<1x4x128xbf16>
    %4 = vector.shape_cast %3 : vector<1x4x128xbf16> to vector<4x128xbf16>
    %cst = arith.constant dense<0.000000e+00> : vector<272x128xf32>
    %5 = tpu.matmul %2, %4, %cst {dimension_numbers = #tpu.dot_dimension_numbers<[1], [0], [0], [1], [0, 0, 1, 1], [], []>} : vector<272x4xbf16>, vector<4x128xbf16>, vector<272x128xf32> -> vector<272x128xf32>
    %6 = vector.extract_strided_slice %1 {offsets = [1, 0], sizes = [272, 4], strides = [1, 1]} : vector<296x4xbf16> to vector<272x4xbf16>
    %c1 = arith.constant 1 : index
    %c0_5 = arith.constant 0 : index
    %c0_6 = arith.constant 0 : index
    %7 = vector.load %arg2[%c1, %c0_5, %c0_6] : memref<4x4x128xbf16, #tpu.memory_space<vmem>>, vector<1x4x128xbf16>
    %8 = vector.shape_cast %7 : vector<1x4x128xbf16> to vector<4x128xbf16>
    %cst_7 = arith.constant dense<0.000000e+00> : vector<272x128xf32>
    %9 = tpu.matmul %6, %8, %cst_7 {dimension_numbers = #tpu.dot_dimension_numbers<[1], [0], [0], [1], [0, 0, 1, 1], [], []>} : vector<272x4xbf16>, vector<4x128xbf16>, vector<272x128xf32> -> vector<272x128xf32>
    %10 = arith.addf %5, %9 : vector<272x128xf32>
    %11 = vector.extract_strided_slice %1 {offsets = [17, 0], sizes = [272, 4], strides = [1, 1]} : vector<296x4xbf16> to vector<272x4xbf16>
    %c2 = arith.constant 2 : index
    %c0_8 = arith.constant 0 : index
    %c0_9 = arith.constant 0 : index
    %12 = vector.load %arg2[%c2, %c0_8, %c0_9] : memref<4x4x128xbf16, #tpu.memory_space<vmem>>, vector<1x4x128xbf16>
    %13 = vector.shape_cast %12 : vector<1x4x128xbf16> to vector<4x128xbf16>
    %cst_10 = arith.constant dense<0.000000e+00> : vector<272x128xf32>
    %14 = tpu.matmul %11, %13, %cst_10 {dimension_numbers = #tpu.dot_dimension_numbers<[1], [0], [0], [1], [0, 0, 1, 1], [], []>} : vector<272x4xbf16>, vector<4x128xbf16>, vector<272x128xf32> -> vector<272x128xf32>
    %15 = arith.addf %10, %14 : vector<272x128xf32>
    %16 = vector.extract_strided_slice %1 {offsets = [18, 0], sizes = [272, 4], strides = [1, 1]} : vector<296x4xbf16> to vector<272x4xbf16>
    %c3 = arith.constant 3 : index
    %c0_11 = arith.constant 0 : index
    %c0_12 = arith.constant 0 : index
    %17 = vector.load %arg2[%c3, %c0_11, %c0_12] : memref<4x4x128xbf16, #tpu.memory_space<vmem>>, vector<1x4x128xbf16>
    %18 = vector.shape_cast %17 : vector<1x4x128xbf16> to vector<4x128xbf16>
    %cst_13 = arith.constant dense<0.000000e+00> : vector<272x128xf32>
    %19 = tpu.matmul %16, %18, %cst_13 {dimension_numbers = #tpu.dot_dimension_numbers<[1], [0], [0], [1], [0, 0, 1, 1], [], []>} : vector<272x4xbf16>, vector<4x128xbf16>, vector<272x128xf32> -> vector<272x128xf32>
    %20 = arith.addf %15, %19 : vector<272x128xf32>
    %c0_14 = arith.constant 0 : index
    %c0_15 = arith.constant 0 : index
    %c0_16 = arith.constant 0 : index
    %21 = vector.load %arg4[%c0_14, %c0_15, %c0_16] : memref<1x272x128xf32, #tpu.memory_space<vmem>>, vector<1x272x128xf32>
    %22 = vector.shape_cast %21 : vector<1x272x128xf32> to vector<272x128xf32>
    %23 = vector.shape_cast %20 : vector<272x128xf32> to vector<1x272x128xf32>
    tpu.vector_store %arg4[%c0_14, %c0_15, %c0_16], %23 {strides = array<i32>} : memref<1x272x128xf32, #tpu.memory_space<vmem>>, vector<1x272x128xf32>,
    %c0_17 = arith.constant 0 : index
    %c0_18 = arith.constant 0 : index
    %24 = vector.load %arg3[%c0_17, %c0_18] : memref<272x1xf32, #tpu.memory_space<vmem>>, vector<272x1xf32>
    %25 = vector.broadcast %24 : vector<272x1xf32> to vector<272x128xf32>
    %26 = arith.mulf %20, %25 : vector<272x128xf32>
    %cst_19 = arith.constant dense<0.000000e+00> : vector<128xf32>
    %27 = vector.multi_reduction <add>, %26, %cst_19 [0] : vector<272x128xf32> to vector<128xf32>
    %28 = vector.shape_cast %27 : vector<128xf32> to vector<1x128xf32>
    %c0_20 = arith.constant 0 : index
    %c0_21 = arith.constant 0 : index
    %c0_22 = arith.constant 0 : index
    %29 = vector.load %arg5[%c0_20, %c0_21, %c0_22] : memref<1x1x128xf32, #tpu.memory_space<vmem>>, vector<1x1x128xf32>
    %30 = vector.shape_cast %29 : vector<1x1x128xf32> to vector<1x128xf32>
    %31 = vector.shape_cast %28 : vector<1x128xf32> to vector<1x1x128xf32>
    tpu.vector_store %arg5[%c0_20, %c0_21, %c0_22], %31 {strides = array<i32>} : memref<1x1x128xf32, #tpu.memory_space<vmem>>, vector<1x1x128xf32>,
    %32 = arith.mulf %26, %20 : vector<272x128xf32>
    %cst_23 = arith.constant dense<0.000000e+00> : vector<128xf32>
    %33 = vector.multi_reduction <add>, %32, %cst_23 [0] : vector<272x128xf32> to vector<128xf32>
    %34 = vector.shape_cast %33 : vector<128xf32> to vector<1x128xf32>
    %c0_24 = arith.constant 0 : index
    %c0_25 = arith.constant 0 : index
    %c0_26 = arith.constant 0 : index
    %35 = vector.load %arg6[%c0_24, %c0_25, %c0_26] : memref<1x1x128xf32, #tpu.memory_space<vmem>>, vector<1x1x128xf32>
    %36 = vector.shape_cast %35 : vector<1x1x128xf32> to vector<1x128xf32>
    %37 = vector.shape_cast %34 : vector<1x128xf32> to vector<1x1x128xf32>
    tpu.vector_store %arg6[%c0_24, %c0_25, %c0_26], %37 {strides = array<i32>} : memref<1x1x128xf32, #tpu.memory_space<vmem>>, vector<1x1x128xf32>,
    return
  }
  func.func @transform_0(%arg0: i32) -> (i32, i32, i32) {
    %c0_i32 = arith.constant 0 : i32
    %c0_i32_0 = arith.constant 0 : i32
    %c0_i32_1 = arith.constant 0 : i32
    return %arg0, %c0_i32, %c0_i32_0 : i32, i32, i32
  }
  func.func @transform_1(%arg0: i32) -> (i32, i32, i32) {
    %c0_i32 = arith.constant 0 : i32
    %c0_i32_0 = arith.constant 0 : i32
    %c0_i32_1 = arith.constant 0 : i32
    %c0_i32_2 = arith.constant 0 : i32
    return %c0_i32, %c0_i32_0, %c0_i32_1 : i32, i32, i32
  }
  func.func @transform_2(%arg0: i32) -> (i32, i32) {
    %c0_i32 = arith.constant 0 : i32
    %c0_i32_0 = arith.constant 0 : i32
    %c0_i32_1 = arith.constant 0 : i32
    return %c0_i32, %c0_i32_0 : i32, i32
  }
  func.func @transform_3(%arg0: i32) -> (i32, i32, i32) {
    %c0_i32 = arith.constant 0 : i32
    %c0_i32_0 = arith.constant 0 : i32
    %c0_i32_1 = arith.constant 0 : i32
    return %arg0, %c0_i32, %c0_i32_0 : i32, i32, i32
  }
  func.func @transform_4(%arg0: i32) -> (i32, i32, i32) {
    %c0_i32 = arith.constant 0 : i32
    %c0_i32_0 = arith.constant 0 : i32
    %c0_i32_1 = arith.constant 0 : i32
    return %arg0, %c0_i32, %c0_i32_0 : i32, i32, i32
  }
  func.func @transform_5(%arg0: i32) -> (i32, i32, i32) {
    %c0_i32 = arith.constant 0 : i32
    %c0_i32_0 = arith.constant 0 : i32
    %c0_i32_1 = arith.constant 0 : i32
    return %arg0, %c0_i32, %c0_i32_0 : i32, i32, i32
  }
}

module attributes {stable_mosaic.version = 11 : i64} {
  func.func @_bn_lrelu_sum_kernel(%arg0: i32, %arg1: memref<1x272x128xf32, #tpu.memory_space<vmem>>, %arg2: memref<1x128xf32, #tpu.memory_space<vmem>>, %arg3: memref<1x128xf32, #tpu.memory_space<vmem>>, %arg4: memref<272x1xf32, #tpu.memory_space<vmem>>, %arg5: memref<1x272x128xbf16, #tpu.memory_space<vmem>>, %arg6: memref<1x1x128xf32, #tpu.memory_space<vmem>>) attributes {dimension_semantics = [#tpu.dimension_semantics<parallel>], iteration_bounds = array<i64: 2>, scalar_prefetch = 0 : i64, scratch_operands = 0 : i64, tpu.core_type = #tpu.core_type<tc>, window_params = [{transform_indices = @transform_0, window_bounds = array<i64: 1, 272, 128>}, {pipeline_mode = #tpu.pipeline_mode<synchronous>, transform_indices = @transform_1, window_bounds = array<i64: 1, 128>}, {pipeline_mode = #tpu.pipeline_mode<synchronous>, transform_indices = @transform_2, window_bounds = array<i64: 1, 128>}, {pipeline_mode = #tpu.pipeline_mode<synchronous>, transform_indices = @transform_3, window_bounds = array<i64: 272, 1>}, {transform_indices = @transform_4, window_bounds = array<i64: 1, 272, 128>}, {transform_indices = @transform_5, window_bounds = array<i64: 1, 1, 128>}]} {
    %c0 = arith.constant 0 : index
    %c0_0 = arith.constant 0 : index
    %c0_1 = arith.constant 0 : index
    %0 = vector.load %arg1[%c0, %c0_0, %c0_1] : memref<1x272x128xf32, #tpu.memory_space<vmem>>, vector<1x272x128xf32>
    %1 = vector.shape_cast %0 : vector<1x272x128xf32> to vector<272x128xf32>
    %c0_2 = arith.constant 0 : index
    %c0_3 = arith.constant 0 : index
    %2 = vector.load %arg2[%c0_2, %c0_3] : memref<1x128xf32, #tpu.memory_space<vmem>>, vector<1x128xf32>
    %3 = vector.broadcast %2 : vector<1x128xf32> to vector<272x128xf32>
    %4 = arith.mulf %1, %3 : vector<272x128xf32>
    %c0_4 = arith.constant 0 : index
    %c0_5 = arith.constant 0 : index
    %5 = vector.load %arg3[%c0_4, %c0_5] : memref<1x128xf32, #tpu.memory_space<vmem>>, vector<1x128xf32>
    %6 = vector.broadcast %5 : vector<1x128xf32> to vector<272x128xf32>
    %7 = arith.addf %4, %6 : vector<272x128xf32>
    %cst = arith.constant 2.000000e-01 : f32
    %8 = vector.broadcast %cst : f32 to vector<272x128xf32>
    %9 = arith.mulf %8, %7 : vector<272x128xf32>
    %10 = arith.maximumf %7, %9 : vector<272x128xf32>
    %11 = arith.truncf %10 : vector<272x128xf32> to vector<272x128xbf16>
    %c0_6 = arith.constant 0 : index
    %c0_7 = arith.constant 0 : index
    %c0_8 = arith.constant 0 : index
    %12 = vector.load %arg5[%c0_6, %c0_7, %c0_8] : memref<1x272x128xbf16, #tpu.memory_space<vmem>>, vector<1x272x128xbf16>
    %13 = vector.shape_cast %12 : vector<1x272x128xbf16> to vector<272x128xbf16>
    %14 = vector.shape_cast %11 : vector<272x128xbf16> to vector<1x272x128xbf16>
    tpu.vector_store %arg5[%c0_6, %c0_7, %c0_8], %14 {strides = array<i32>} : memref<1x272x128xbf16, #tpu.memory_space<vmem>>, vector<1x272x128xbf16>,
    %c0_9 = arith.constant 0 : index
    %c0_10 = arith.constant 0 : index
    %15 = vector.load %arg4[%c0_9, %c0_10] : memref<272x1xf32, #tpu.memory_space<vmem>>, vector<272x1xf32>
    %16 = vector.broadcast %15 : vector<272x1xf32> to vector<272x128xf32>
    %17 = arith.mulf %10, %16 : vector<272x128xf32>
    %cst_11 = arith.constant dense<0.000000e+00> : vector<128xf32>
    %18 = vector.multi_reduction <add>, %17, %cst_11 [0] : vector<272x128xf32> to vector<128xf32>
    %19 = vector.shape_cast %18 : vector<128xf32> to vector<1x128xf32>
    %c0_12 = arith.constant 0 : index
    %c0_13 = arith.constant 0 : index
    %c0_14 = arith.constant 0 : index
    %20 = vector.load %arg6[%c0_12, %c0_13, %c0_14] : memref<1x1x128xf32, #tpu.memory_space<vmem>>, vector<1x1x128xf32>
    %21 = vector.shape_cast %20 : vector<1x1x128xf32> to vector<1x128xf32>
    %22 = vector.shape_cast %19 : vector<1x128xf32> to vector<1x1x128xf32>
    tpu.vector_store %arg6[%c0_12, %c0_13, %c0_14], %22 {strides = array<i32>} : memref<1x1x128xf32, #tpu.memory_space<vmem>>, vector<1x1x128xf32>,
    return
  }
  func.func @transform_0(%arg0: i32) -> (i32, i32, i32) {
    %c0_i32 = arith.constant 0 : i32
    %c0_i32_0 = arith.constant 0 : i32
    %c0_i32_1 = arith.constant 0 : i32
    return %arg0, %c0_i32, %c0_i32_0 : i32, i32, i32
  }
  func.func @transform_1(%arg0: i32) -> (i32, i32) {
    %c0_i32 = arith.constant 0 : i32
    %c0_i32_0 = arith.constant 0 : i32
    %c0_i32_1 = arith.constant 0 : i32
    return %c0_i32, %c0_i32_0 : i32, i32
  }
  func.func @transform_2(%arg0: i32) -> (i32, i32) {
    %c0_i32 = arith.constant 0 : i32
    %c0_i32_0 = arith.constant 0 : i32
    %c0_i32_1 = arith.constant 0 : i32
    return %c0_i32, %c0_i32_0 : i32, i32
  }
  func.func @transform_3(%arg0: i32) -> (i32, i32) {
    %c0_i32 = arith.constant 0 : i32
    %c0_i32_0 = arith.constant 0 : i32
    %c0_i32_1 = arith.constant 0 : i32
    return %c0_i32, %c0_i32_0 : i32, i32
  }
  func.func @transform_4(%arg0: i32) -> (i32, i32, i32) {
    %c0_i32 = arith.constant 0 : i32
    %c0_i32_0 = arith.constant 0 : i32
    %c0_i32_1 = arith.constant 0 : i32
    return %arg0, %c0_i32, %c0_i32_0 : i32, i32, i32
  }
  func.func @transform_5(%arg0: i32) -> (i32, i32, i32) {
    %c0_i32 = arith.constant 0 : i32
    %c0_i32_0 = arith.constant 0 : i32
    %c0_i32_1 = arith.constant 0 : i32
    return %arg0, %c0_i32, %c0_i32_0 : i32, i32, i32
  }
}

module attributes {stable_mosaic.version = 11 : i64} {
  func.func @kernel(%arg0: i32, %arg1: memref<1x88x64xbf16, #tpu.memory_space<vmem>>, %arg2: memref<4x64x128xbf16, #tpu.memory_space<vmem>>, %arg3: memref<72x1xf32, #tpu.memory_space<vmem>>, %arg4: memref<1x72x128xf32, #tpu.memory_space<vmem>>, %arg5: memref<1x1x128xf32, #tpu.memory_space<vmem>>, %arg6: memref<1x1x128xf32, #tpu.memory_space<vmem>>) attributes {dimension_semantics = [#tpu.dimension_semantics<parallel>], iteration_bounds = array<i64: 2>, scalar_prefetch = 0 : i64, scratch_operands = 0 : i64, tpu.core_type = #tpu.core_type<tc>, window_params = [{transform_indices = @transform_0, window_bounds = array<i64: 1, 88, 64>}, {pipeline_mode = #tpu.pipeline_mode<synchronous>, transform_indices = @transform_1, window_bounds = array<i64: 4, 64, 128>}, {pipeline_mode = #tpu.pipeline_mode<synchronous>, transform_indices = @transform_2, window_bounds = array<i64: 72, 1>}, {transform_indices = @transform_3, window_bounds = array<i64: 1, 72, 128>}, {transform_indices = @transform_4, window_bounds = array<i64: 1, 1, 128>}, {transform_indices = @transform_5, window_bounds = array<i64: 1, 1, 128>}]} {
    %c0 = arith.constant 0 : index
    %c0_0 = arith.constant 0 : index
    %c0_1 = arith.constant 0 : index
    %0 = vector.load %arg1[%c0, %c0_0, %c0_1] : memref<1x88x64xbf16, #tpu.memory_space<vmem>>, vector<1x88x64xbf16>
    %1 = vector.shape_cast %0 : vector<1x88x64xbf16> to vector<88x64xbf16>
    %2 = vector.extract_strided_slice %1 {offsets = [0, 0], sizes = [72, 64], strides = [1, 1]} : vector<88x64xbf16> to vector<72x64xbf16>
    %c0_2 = arith.constant 0 : index
    %c0_3 = arith.constant 0 : index
    %c0_4 = arith.constant 0 : index
    %3 = vector.load %arg2[%c0_2, %c0_3, %c0_4] : memref<4x64x128xbf16, #tpu.memory_space<vmem>>, vector<1x64x128xbf16>
    %4 = vector.shape_cast %3 : vector<1x64x128xbf16> to vector<64x128xbf16>
    %cst = arith.constant dense<0.000000e+00> : vector<72x128xf32>
    %5 = tpu.matmul %2, %4, %cst {dimension_numbers = #tpu.dot_dimension_numbers<[1], [0], [0], [1], [0, 0, 1, 1], [], []>} : vector<72x64xbf16>, vector<64x128xbf16>, vector<72x128xf32> -> vector<72x128xf32>
    %6 = vector.extract_strided_slice %1 {offsets = [1, 0], sizes = [72, 64], strides = [1, 1]} : vector<88x64xbf16> to vector<72x64xbf16>
    %c1 = arith.constant 1 : index
    %c0_5 = arith.constant 0 : index
    %c0_6 = arith.constant 0 : index
    %7 = vector.load %arg2[%c1, %c0_5, %c0_6] : memref<4x64x128xbf16, #tpu.memory_space<vmem>>, vector<1x64x128xbf16>
    %8 = vector.shape_cast %7 : vector<1x64x128xbf16> to vector<64x128xbf16>
    %cst_7 = arith.constant dense<0.000000e+00> : vector<72x128xf32>
    %9 = tpu.matmul %6, %8, %cst_7 {dimension_numbers = #tpu.dot_dimension_numbers<[1], [0], [0], [1], [0, 0, 1, 1], [], []>} : vector<72x64xbf16>, vector<64x128xbf16>, vector<72x128xf32> -> vector<72x128xf32>
    %10 = arith.addf %5, %9 : vector<72x128xf32>
    %11 = vector.extract_strided_slice %1 {offsets = [9, 0], sizes = [72, 64], strides = [1, 1]} : vector<88x64xbf16> to vector<72x64xbf16>
    %c2 = arith.constant 2 : index
    %c0_8 = arith.constant 0 : index
    %c0_9 = arith.constant 0 : index
    %12 = vector.load %arg2[%c2, %c0_8, %c0_9] : memref<4x64x128xbf16, #tpu.memory_space<vmem>>, vector<1x64x128xbf16>
    %13 = vector.shape_cast %12 : vector<1x64x128xbf16> to vector<64x128xbf16>
    %cst_10 = arith.constant dense<0.000000e+00> : vector<72x128xf32>
    %14 = tpu.matmul %11, %13, %cst_10 {dimension_numbers = #tpu.dot_dimension_numbers<[1], [0], [0], [1], [0, 0, 1, 1], [], []>} : vector<72x64xbf16>, vector<64x128xbf16>, vector<72x128xf32> -> vector<72x128xf32>
    %15 = arith.addf %10, %14 : vector<72x128xf32>
    %16 = vector.extract_strided_slice %1 {offsets = [10, 0], sizes = [72, 64], strides = [1, 1]} : vector<88x64xbf16> to vector<72x64xbf16>
    %c3 = arith.constant 3 : index
    %c0_11 = arith.constant 0 : index
    %c0_12 = arith.constant 0 : index
    %17 = vector.load %arg2[%c3, %c0_11, %c0_12] : memref<4x64x128xbf16, #tpu.memory_space<vmem>>, vector<1x64x128xbf16>
    %18 = vector.shape_cast %17 : vector<1x64x128xbf16> to vector<64x128xbf16>
    %cst_13 = arith.constant dense<0.000000e+00> : vector<72x128xf32>
    %19 = tpu.matmul %16, %18, %cst_13 {dimension_numbers = #tpu.dot_dimension_numbers<[1], [0], [0], [1], [0, 0, 1, 1], [], []>} : vector<72x64xbf16>, vector<64x128xbf16>, vector<72x128xf32> -> vector<72x128xf32>
    %20 = arith.addf %15, %19 : vector<72x128xf32>
    %c0_14 = arith.constant 0 : index
    %c0_15 = arith.constant 0 : index
    %c0_16 = arith.constant 0 : index
    %21 = vector.load %arg4[%c0_14, %c0_15, %c0_16] : memref<1x72x128xf32, #tpu.memory_space<vmem>>, vector<1x72x128xf32>
    %22 = vector.shape_cast %21 : vector<1x72x128xf32> to vector<72x128xf32>
    %23 = vector.shape_cast %20 : vector<72x128xf32> to vector<1x72x128xf32>
    tpu.vector_store %arg4[%c0_14, %c0_15, %c0_16], %23 {strides = array<i32>} : memref<1x72x128xf32, #tpu.memory_space<vmem>>, vector<1x72x128xf32>,
    %c0_17 = arith.constant 0 : index
    %c0_18 = arith.constant 0 : index
    %24 = vector.load %arg3[%c0_17, %c0_18] : memref<72x1xf32, #tpu.memory_space<vmem>>, vector<72x1xf32>
    %25 = vector.broadcast %24 : vector<72x1xf32> to vector<72x128xf32>
    %26 = arith.mulf %20, %25 : vector<72x128xf32>
    %cst_19 = arith.constant dense<0.000000e+00> : vector<128xf32>
    %27 = vector.multi_reduction <add>, %26, %cst_19 [0] : vector<72x128xf32> to vector<128xf32>
    %28 = vector.shape_cast %27 : vector<128xf32> to vector<1x128xf32>
    %c0_20 = arith.constant 0 : index
    %c0_21 = arith.constant 0 : index
    %c0_22 = arith.constant 0 : index
    %29 = vector.load %arg5[%c0_20, %c0_21, %c0_22] : memref<1x1x128xf32, #tpu.memory_space<vmem>>, vector<1x1x128xf32>
    %30 = vector.shape_cast %29 : vector<1x1x128xf32> to vector<1x128xf32>
    %31 = vector.shape_cast %28 : vector<1x128xf32> to vector<1x1x128xf32>
    tpu.vector_store %arg5[%c0_20, %c0_21, %c0_22], %31 {strides = array<i32>} : memref<1x1x128xf32, #tpu.memory_space<vmem>>, vector<1x1x128xf32>,
    %32 = arith.mulf %26, %20 : vector<72x128xf32>
    %cst_23 = arith.constant dense<0.000000e+00> : vector<128xf32>
    %33 = vector.multi_reduction <add>, %32, %cst_23 [0] : vector<72x128xf32> to vector<128xf32>
    %34 = vector.shape_cast %33 : vector<128xf32> to vector<1x128xf32>
    %c0_24 = arith.constant 0 : index
    %c0_25 = arith.constant 0 : index
    %c0_26 = arith.constant 0 : index
    %35 = vector.load %arg6[%c0_24, %c0_25, %c0_26] : memref<1x1x128xf32, #tpu.memory_space<vmem>>, vector<1x1x128xf32>
    %36 = vector.shape_cast %35 : vector<1x1x128xf32> to vector<1x128xf32>
    %37 = vector.shape_cast %34 : vector<1x128xf32> to vector<1x1x128xf32>
    tpu.vector_store %arg6[%c0_24, %c0_25, %c0_26], %37 {strides = array<i32>} : memref<1x1x128xf32, #tpu.memory_space<vmem>>, vector<1x1x128xf32>,
    return
  }
  func.func @transform_0(%arg0: i32) -> (i32, i32, i32) {
    %c0_i32 = arith.constant 0 : i32
    %c0_i32_0 = arith.constant 0 : i32
    %c0_i32_1 = arith.constant 0 : i32
    return %arg0, %c0_i32, %c0_i32_0 : i32, i32, i32
  }
  func.func @transform_1(%arg0: i32) -> (i32, i32, i32) {
    %c0_i32 = arith.constant 0 : i32
    %c0_i32_0 = arith.constant 0 : i32
    %c0_i32_1 = arith.constant 0 : i32
    %c0_i32_2 = arith.constant 0 : i32
    return %c0_i32, %c0_i32_0, %c0_i32_1 : i32, i32, i32
  }
  func.func @transform_2(%arg0: i32) -> (i32, i32) {
    %c0_i32 = arith.constant 0 : i32
    %c0_i32_0 = arith.constant 0 : i32
    %c0_i32_1 = arith.constant 0 : i32
    return %c0_i32, %c0_i32_0 : i32, i32
  }
  func.func @transform_3(%arg0: i32) -> (i32, i32, i32) {
    %c0_i32 = arith.constant 0 : i32
    %c0_i32_0 = arith.constant 0 : i32
    %c0_i32_1 = arith.constant 0 : i32
    return %arg0, %c0_i32, %c0_i32_0 : i32, i32, i32
  }
  func.func @transform_4(%arg0: i32) -> (i32, i32, i32) {
    %c0_i32 = arith.constant 0 : i32
    %c0_i32_0 = arith.constant 0 : i32
    %c0_i32_1 = arith.constant 0 : i32
    return %arg0, %c0_i32, %c0_i32_0 : i32, i32, i32
  }
  func.func @transform_5(%arg0: i32) -> (i32, i32, i32) {
    %c0_i32 = arith.constant 0 : i32
    %c0_i32_0 = arith.constant 0 : i32
    %c0_i32_1 = arith.constant 0 : i32
    return %arg0, %c0_i32, %c0_i32_0 : i32, i32, i32
  }
}

module attributes {stable_mosaic.version = 11 : i64} {
  func.func @_bn_lrelu_sum_kernel(%arg0: i32, %arg1: memref<1x72x128xf32, #tpu.memory_space<vmem>>, %arg2: memref<1x128xf32, #tpu.memory_space<vmem>>, %arg3: memref<1x128xf32, #tpu.memory_space<vmem>>, %arg4: memref<72x1xf32, #tpu.memory_space<vmem>>, %arg5: memref<1x72x128xbf16, #tpu.memory_space<vmem>>, %arg6: memref<1x1x128xf32, #tpu.memory_space<vmem>>) attributes {dimension_semantics = [#tpu.dimension_semantics<parallel>], iteration_bounds = array<i64: 2>, scalar_prefetch = 0 : i64, scratch_operands = 0 : i64, tpu.core_type = #tpu.core_type<tc>, window_params = [{transform_indices = @transform_0, window_bounds = array<i64: 1, 72, 128>}, {pipeline_mode = #tpu.pipeline_mode<synchronous>, transform_indices = @transform_1, window_bounds = array<i64: 1, 128>}, {pipeline_mode = #tpu.pipeline_mode<synchronous>, transform_indices = @transform_2, window_bounds = array<i64: 1, 128>}, {pipeline_mode = #tpu.pipeline_mode<synchronous>, transform_indices = @transform_3, window_bounds = array<i64: 72, 1>}, {transform_indices = @transform_4, window_bounds = array<i64: 1, 72, 128>}, {transform_indices = @transform_5, window_bounds = array<i64: 1, 1, 128>}]} {
    %c0 = arith.constant 0 : index
    %c0_0 = arith.constant 0 : index
    %c0_1 = arith.constant 0 : index
    %0 = vector.load %arg1[%c0, %c0_0, %c0_1] : memref<1x72x128xf32, #tpu.memory_space<vmem>>, vector<1x72x128xf32>
    %1 = vector.shape_cast %0 : vector<1x72x128xf32> to vector<72x128xf32>
    %c0_2 = arith.constant 0 : index
    %c0_3 = arith.constant 0 : index
    %2 = vector.load %arg2[%c0_2, %c0_3] : memref<1x128xf32, #tpu.memory_space<vmem>>, vector<1x128xf32>
    %3 = vector.broadcast %2 : vector<1x128xf32> to vector<72x128xf32>
    %4 = arith.mulf %1, %3 : vector<72x128xf32>
    %c0_4 = arith.constant 0 : index
    %c0_5 = arith.constant 0 : index
    %5 = vector.load %arg3[%c0_4, %c0_5] : memref<1x128xf32, #tpu.memory_space<vmem>>, vector<1x128xf32>
    %6 = vector.broadcast %5 : vector<1x128xf32> to vector<72x128xf32>
    %7 = arith.addf %4, %6 : vector<72x128xf32>
    %cst = arith.constant 2.000000e-01 : f32
    %8 = vector.broadcast %cst : f32 to vector<72x128xf32>
    %9 = arith.mulf %8, %7 : vector<72x128xf32>
    %10 = arith.maximumf %7, %9 : vector<72x128xf32>
    %11 = arith.truncf %10 : vector<72x128xf32> to vector<72x128xbf16>
    %c0_6 = arith.constant 0 : index
    %c0_7 = arith.constant 0 : index
    %c0_8 = arith.constant 0 : index
    %12 = vector.load %arg5[%c0_6, %c0_7, %c0_8] : memref<1x72x128xbf16, #tpu.memory_space<vmem>>, vector<1x72x128xbf16>
    %13 = vector.shape_cast %12 : vector<1x72x128xbf16> to vector<72x128xbf16>
    %14 = vector.shape_cast %11 : vector<72x128xbf16> to vector<1x72x128xbf16>
    tpu.vector_store %arg5[%c0_6, %c0_7, %c0_8], %14 {strides = array<i32>} : memref<1x72x128xbf16, #tpu.memory_space<vmem>>, vector<1x72x128xbf16>,
    %c0_9 = arith.constant 0 : index
    %c0_10 = arith.constant 0 : index
    %15 = vector.load %arg4[%c0_9, %c0_10] : memref<72x1xf32, #tpu.memory_space<vmem>>, vector<72x1xf32>
    %16 = vector.broadcast %15 : vector<72x1xf32> to vector<72x128xf32>
    %17 = arith.mulf %10, %16 : vector<72x128xf32>
    %cst_11 = arith.constant dense<0.000000e+00> : vector<128xf32>
    %18 = vector.multi_reduction <add>, %17, %cst_11 [0] : vector<72x128xf32> to vector<128xf32>
    %19 = vector.shape_cast %18 : vector<128xf32> to vector<1x128xf32>
    %c0_12 = arith.constant 0 : index
    %c0_13 = arith.constant 0 : index
    %c0_14 = arith.constant 0 : index
    %20 = vector.load %arg6[%c0_12, %c0_13, %c0_14] : memref<1x1x128xf32, #tpu.memory_space<vmem>>, vector<1x1x128xf32>
    %21 = vector.shape_cast %20 : vector<1x1x128xf32> to vector<1x128xf32>
    %22 = vector.shape_cast %19 : vector<1x128xf32> to vector<1x1x128xf32>
    tpu.vector_store %arg6[%c0_12, %c0_13, %c0_14], %22 {strides = array<i32>} : memref<1x1x128xf32, #tpu.memory_space<vmem>>, vector<1x1x128xf32>,
    return
  }
  func.func @transform_0(%arg0: i32) -> (i32, i32, i32) {
    %c0_i32 = arith.constant 0 : i32
    %c0_i32_0 = arith.constant 0 : i32
    %c0_i32_1 = arith.constant 0 : i32
    return %arg0, %c0_i32, %c0_i32_0 : i32, i32, i32
  }
  func.func @transform_1(%arg0: i32) -> (i32, i32) {
    %c0_i32 = arith.constant 0 : i32
    %c0_i32_0 = arith.constant 0 : i32
    %c0_i32_1 = arith.constant 0 : i32
    return %c0_i32, %c0_i32_0 : i32, i32
  }
  func.func @transform_2(%arg0: i32) -> (i32, i32) {
    %c0_i32 = arith.constant 0 : i32
    %c0_i32_0 = arith.constant 0 : i32
    %c0_i32_1 = arith.constant 0 : i32
    return %c0_i32, %c0_i32_0 : i32, i32
  }
  func.func @transform_3(%arg0: i32) -> (i32, i32) {
    %c0_i32 = arith.constant 0 : i32
    %c0_i32_0 = arith.constant 0 : i32
    %c0_i32_1 = arith.constant 0 : i32
    return %c0_i32, %c0_i32_0 : i32, i32
  }
  func.func @transform_4(%arg0: i32) -> (i32, i32, i32) {
    %c0_i32 = arith.constant 0 : i32
    %c0_i32_0 = arith.constant 0 : i32
    %c0_i32_1 = arith.constant 0 : i32
    return %arg0, %c0_i32, %c0_i32_0 : i32, i32, i32
  }
  func.func @transform_5(%arg0: i32) -> (i32, i32, i32) {
    %c0_i32 = arith.constant 0 : i32
    %c0_i32_0 = arith.constant 0 : i32
    %c0_i32_1 = arith.constant 0 : i32
    return %arg0, %c0_i32, %c0_i32_0 : i32, i32, i32
  }
}

module attributes {stable_mosaic.version = 11 : i64} {
  func.func @kernel(%arg0: i32, %arg1: memref<1x32x128xbf16, #tpu.memory_space<vmem>>, %arg2: memref<4x128x128xbf16, #tpu.memory_space<vmem>>, %arg3: memref<24x1xf32, #tpu.memory_space<vmem>>, %arg4: memref<1x24x128xf32, #tpu.memory_space<vmem>>, %arg5: memref<1x1x128xf32, #tpu.memory_space<vmem>>, %arg6: memref<1x1x128xf32, #tpu.memory_space<vmem>>) attributes {dimension_semantics = [#tpu.dimension_semantics<parallel>], iteration_bounds = array<i64: 2>, scalar_prefetch = 0 : i64, scratch_operands = 0 : i64, tpu.core_type = #tpu.core_type<tc>, window_params = [{transform_indices = @transform_0, window_bounds = array<i64: 1, 32, 128>}, {pipeline_mode = #tpu.pipeline_mode<synchronous>, transform_indices = @transform_1, window_bounds = array<i64: 4, 128, 128>}, {pipeline_mode = #tpu.pipeline_mode<synchronous>, transform_indices = @transform_2, window_bounds = array<i64: 24, 1>}, {transform_indices = @transform_3, window_bounds = array<i64: 1, 24, 128>}, {transform_indices = @transform_4, window_bounds = array<i64: 1, 1, 128>}, {transform_indices = @transform_5, window_bounds = array<i64: 1, 1, 128>}]} {
    %c0 = arith.constant 0 : index
    %c0_0 = arith.constant 0 : index
    %c0_1 = arith.constant 0 : index
    %0 = vector.load %arg1[%c0, %c0_0, %c0_1] : memref<1x32x128xbf16, #tpu.memory_space<vmem>>, vector<1x32x128xbf16>
    %1 = vector.shape_cast %0 : vector<1x32x128xbf16> to vector<32x128xbf16>
    %2 = vector.extract_strided_slice %1 {offsets = [0, 0], sizes = [24, 128], strides = [1, 1]} : vector<32x128xbf16> to vector<24x128xbf16>
    %c0_2 = arith.constant 0 : index
    %c0_3 = arith.constant 0 : index
    %c0_4 = arith.constant 0 : index
    %3 = vector.load %arg2[%c0_2, %c0_3, %c0_4] : memref<4x128x128xbf16, #tpu.memory_space<vmem>>, vector<1x128x128xbf16>
    %4 = vector.shape_cast %3 : vector<1x128x128xbf16> to vector<128x128xbf16>
    %cst = arith.constant dense<0.000000e+00> : vector<24x128xf32>
    %5 = tpu.matmul %2, %4, %cst {dimension_numbers = #tpu.dot_dimension_numbers<[1], [0], [0], [1], [0, 0, 1, 1], [], []>} : vector<24x128xbf16>, vector<128x128xbf16>, vector<24x128xf32> -> vector<24x128xf32>
    %6 = vector.extract_strided_slice %1 {offsets = [1, 0], sizes = [24, 128], strides = [1, 1]} : vector<32x128xbf16> to vector<24x128xbf16>
    %c1 = arith.constant 1 : index
    %c0_5 = arith.constant 0 : index
    %c0_6 = arith.constant 0 : index
    %7 = vector.load %arg2[%c1, %c0_5, %c0_6] : memref<4x128x128xbf16, #tpu.memory_space<vmem>>, vector<1x128x128xbf16>
    %8 = vector.shape_cast %7 : vector<1x128x128xbf16> to vector<128x128xbf16>
    %cst_7 = arith.constant dense<0.000000e+00> : vector<24x128xf32>
    %9 = tpu.matmul %6, %8, %cst_7 {dimension_numbers = #tpu.dot_dimension_numbers<[1], [0], [0], [1], [0, 0, 1, 1], [], []>} : vector<24x128xbf16>, vector<128x128xbf16>, vector<24x128xf32> -> vector<24x128xf32>
    %10 = arith.addf %5, %9 : vector<24x128xf32>
    %11 = vector.extract_strided_slice %1 {offsets = [5, 0], sizes = [24, 128], strides = [1, 1]} : vector<32x128xbf16> to vector<24x128xbf16>
    %c2 = arith.constant 2 : index
    %c0_8 = arith.constant 0 : index
    %c0_9 = arith.constant 0 : index
    %12 = vector.load %arg2[%c2, %c0_8, %c0_9] : memref<4x128x128xbf16, #tpu.memory_space<vmem>>, vector<1x128x128xbf16>
    %13 = vector.shape_cast %12 : vector<1x128x128xbf16> to vector<128x128xbf16>
    %cst_10 = arith.constant dense<0.000000e+00> : vector<24x128xf32>
    %14 = tpu.matmul %11, %13, %cst_10 {dimension_numbers = #tpu.dot_dimension_numbers<[1], [0], [0], [1], [0, 0, 1, 1], [], []>} : vector<24x128xbf16>, vector<128x128xbf16>, vector<24x128xf32> -> vector<24x128xf32>
    %15 = arith.addf %10, %14 : vector<24x128xf32>
    %16 = vector.extract_strided_slice %1 {offsets = [6, 0], sizes = [24, 128], strides = [1, 1]} : vector<32x128xbf16> to vector<24x128xbf16>
    %c3 = arith.constant 3 : index
    %c0_11 = arith.constant 0 : index
    %c0_12 = arith.constant 0 : index
    %17 = vector.load %arg2[%c3, %c0_11, %c0_12] : memref<4x128x128xbf16, #tpu.memory_space<vmem>>, vector<1x128x128xbf16>
    %18 = vector.shape_cast %17 : vector<1x128x128xbf16> to vector<128x128xbf16>
    %cst_13 = arith.constant dense<0.000000e+00> : vector<24x128xf32>
    %19 = tpu.matmul %16, %18, %cst_13 {dimension_numbers = #tpu.dot_dimension_numbers<[1], [0], [0], [1], [0, 0, 1, 1], [], []>} : vector<24x128xbf16>, vector<128x128xbf16>, vector<24x128xf32> -> vector<24x128xf32>
    %20 = arith.addf %15, %19 : vector<24x128xf32>
    %c0_14 = arith.constant 0 : index
    %c0_15 = arith.constant 0 : index
    %c0_16 = arith.constant 0 : index
    %21 = vector.load %arg4[%c0_14, %c0_15, %c0_16] : memref<1x24x128xf32, #tpu.memory_space<vmem>>, vector<1x24x128xf32>
    %22 = vector.shape_cast %21 : vector<1x24x128xf32> to vector<24x128xf32>
    %23 = vector.shape_cast %20 : vector<24x128xf32> to vector<1x24x128xf32>
    tpu.vector_store %arg4[%c0_14, %c0_15, %c0_16], %23 {strides = array<i32>} : memref<1x24x128xf32, #tpu.memory_space<vmem>>, vector<1x24x128xf32>,
    %c0_17 = arith.constant 0 : index
    %c0_18 = arith.constant 0 : index
    %24 = vector.load %arg3[%c0_17, %c0_18] : memref<24x1xf32, #tpu.memory_space<vmem>>, vector<24x1xf32>
    %25 = vector.broadcast %24 : vector<24x1xf32> to vector<24x128xf32>
    %26 = arith.mulf %20, %25 : vector<24x128xf32>
    %cst_19 = arith.constant dense<0.000000e+00> : vector<128xf32>
    %27 = vector.multi_reduction <add>, %26, %cst_19 [0] : vector<24x128xf32> to vector<128xf32>
    %28 = vector.shape_cast %27 : vector<128xf32> to vector<1x128xf32>
    %c0_20 = arith.constant 0 : index
    %c0_21 = arith.constant 0 : index
    %c0_22 = arith.constant 0 : index
    %29 = vector.load %arg5[%c0_20, %c0_21, %c0_22] : memref<1x1x128xf32, #tpu.memory_space<vmem>>, vector<1x1x128xf32>
    %30 = vector.shape_cast %29 : vector<1x1x128xf32> to vector<1x128xf32>
    %31 = vector.shape_cast %28 : vector<1x128xf32> to vector<1x1x128xf32>
    tpu.vector_store %arg5[%c0_20, %c0_21, %c0_22], %31 {strides = array<i32>} : memref<1x1x128xf32, #tpu.memory_space<vmem>>, vector<1x1x128xf32>,
    %32 = arith.mulf %26, %20 : vector<24x128xf32>
    %cst_23 = arith.constant dense<0.000000e+00> : vector<128xf32>
    %33 = vector.multi_reduction <add>, %32, %cst_23 [0] : vector<24x128xf32> to vector<128xf32>
    %34 = vector.shape_cast %33 : vector<128xf32> to vector<1x128xf32>
    %c0_24 = arith.constant 0 : index
    %c0_25 = arith.constant 0 : index
    %c0_26 = arith.constant 0 : index
    %35 = vector.load %arg6[%c0_24, %c0_25, %c0_26] : memref<1x1x128xf32, #tpu.memory_space<vmem>>, vector<1x1x128xf32>
    %36 = vector.shape_cast %35 : vector<1x1x128xf32> to vector<1x128xf32>
    %37 = vector.shape_cast %34 : vector<1x128xf32> to vector<1x1x128xf32>
    tpu.vector_store %arg6[%c0_24, %c0_25, %c0_26], %37 {strides = array<i32>} : memref<1x1x128xf32, #tpu.memory_space<vmem>>, vector<1x1x128xf32>,
    return
  }
  func.func @transform_0(%arg0: i32) -> (i32, i32, i32) {
    %c0_i32 = arith.constant 0 : i32
    %c0_i32_0 = arith.constant 0 : i32
    %c0_i32_1 = arith.constant 0 : i32
    return %arg0, %c0_i32, %c0_i32_0 : i32, i32, i32
  }
  func.func @transform_1(%arg0: i32) -> (i32, i32, i32) {
    %c0_i32 = arith.constant 0 : i32
    %c0_i32_0 = arith.constant 0 : i32
    %c0_i32_1 = arith.constant 0 : i32
    %c0_i32_2 = arith.constant 0 : i32
    return %c0_i32, %c0_i32_0, %c0_i32_1 : i32, i32, i32
  }
  func.func @transform_2(%arg0: i32) -> (i32, i32) {
    %c0_i32 = arith.constant 0 : i32
    %c0_i32_0 = arith.constant 0 : i32
    %c0_i32_1 = arith.constant 0 : i32
    return %c0_i32, %c0_i32_0 : i32, i32
  }
  func.func @transform_3(%arg0: i32) -> (i32, i32, i32) {
    %c0_i32 = arith.constant 0 : i32
    %c0_i32_0 = arith.constant 0 : i32
    %c0_i32_1 = arith.constant 0 : i32
    return %arg0, %c0_i32, %c0_i32_0 : i32, i32, i32
  }
  func.func @transform_4(%arg0: i32) -> (i32, i32, i32) {
    %c0_i32 = arith.constant 0 : i32
    %c0_i32_0 = arith.constant 0 : i32
    %c0_i32_1 = arith.constant 0 : i32
    return %arg0, %c0_i32, %c0_i32_0 : i32, i32, i32
  }
  func.func @transform_5(%arg0: i32) -> (i32, i32, i32) {
    %c0_i32 = arith.constant 0 : i32
    %c0_i32_0 = arith.constant 0 : i32
    %c0_i32_1 = arith.constant 0 : i32
    return %arg0, %c0_i32, %c0_i32_0 : i32, i32, i32
  }
}

module attributes {stable_mosaic.version = 11 : i64} {
  func.func @_bn_lrelu_sum_kernel(%arg0: i32, %arg1: memref<1x24x128xf32, #tpu.memory_space<vmem>>, %arg2: memref<1x128xf32, #tpu.memory_space<vmem>>, %arg3: memref<1x128xf32, #tpu.memory_space<vmem>>, %arg4: memref<24x1xf32, #tpu.memory_space<vmem>>, %arg5: memref<1x24x128xbf16, #tpu.memory_space<vmem>>, %arg6: memref<1x1x128xf32, #tpu.memory_space<vmem>>) attributes {dimension_semantics = [#tpu.dimension_semantics<parallel>], iteration_bounds = array<i64: 2>, scalar_prefetch = 0 : i64, scratch_operands = 0 : i64, tpu.core_type = #tpu.core_type<tc>, window_params = [{transform_indices = @transform_0, window_bounds = array<i64: 1, 24, 128>}, {pipeline_mode = #tpu.pipeline_mode<synchronous>, transform_indices = @transform_1, window_bounds = array<i64: 1, 128>}, {pipeline_mode = #tpu.pipeline_mode<synchronous>, transform_indices = @transform_2, window_bounds = array<i64: 1, 128>}, {pipeline_mode = #tpu.pipeline_mode<synchronous>, transform_indices = @transform_3, window_bounds = array<i64: 24, 1>}, {transform_indices = @transform_4, window_bounds = array<i64: 1, 24, 128>}, {transform_indices = @transform_5, window_bounds = array<i64: 1, 1, 128>}]} {
    %c0 = arith.constant 0 : index
    %c0_0 = arith.constant 0 : index
    %c0_1 = arith.constant 0 : index
    %0 = vector.load %arg1[%c0, %c0_0, %c0_1] : memref<1x24x128xf32, #tpu.memory_space<vmem>>, vector<1x24x128xf32>
    %1 = vector.shape_cast %0 : vector<1x24x128xf32> to vector<24x128xf32>
    %c0_2 = arith.constant 0 : index
    %c0_3 = arith.constant 0 : index
    %2 = vector.load %arg2[%c0_2, %c0_3] : memref<1x128xf32, #tpu.memory_space<vmem>>, vector<1x128xf32>
    %3 = vector.broadcast %2 : vector<1x128xf32> to vector<24x128xf32>
    %4 = arith.mulf %1, %3 : vector<24x128xf32>
    %c0_4 = arith.constant 0 : index
    %c0_5 = arith.constant 0 : index
    %5 = vector.load %arg3[%c0_4, %c0_5] : memref<1x128xf32, #tpu.memory_space<vmem>>, vector<1x128xf32>
    %6 = vector.broadcast %5 : vector<1x128xf32> to vector<24x128xf32>
    %7 = arith.addf %4, %6 : vector<24x128xf32>
    %cst = arith.constant 2.000000e-01 : f32
    %8 = vector.broadcast %cst : f32 to vector<24x128xf32>
    %9 = arith.mulf %8, %7 : vector<24x128xf32>
    %10 = arith.maximumf %7, %9 : vector<24x128xf32>
    %11 = arith.truncf %10 : vector<24x128xf32> to vector<24x128xbf16>
    %c0_6 = arith.constant 0 : index
    %c0_7 = arith.constant 0 : index
    %c0_8 = arith.constant 0 : index
    %12 = vector.load %arg5[%c0_6, %c0_7, %c0_8] : memref<1x24x128xbf16, #tpu.memory_space<vmem>>, vector<1x24x128xbf16>
    %13 = vector.shape_cast %12 : vector<1x24x128xbf16> to vector<24x128xbf16>
    %14 = vector.shape_cast %11 : vector<24x128xbf16> to vector<1x24x128xbf16>
    tpu.vector_store %arg5[%c0_6, %c0_7, %c0_8], %14 {strides = array<i32>} : memref<1x24x128xbf16, #tpu.memory_space<vmem>>, vector<1x24x128xbf16>,
    %c0_9 = arith.constant 0 : index
    %c0_10 = arith.constant 0 : index
    %15 = vector.load %arg4[%c0_9, %c0_10] : memref<24x1xf32, #tpu.memory_space<vmem>>, vector<24x1xf32>
    %16 = vector.broadcast %15 : vector<24x1xf32> to vector<24x128xf32>
    %17 = arith.mulf %10, %16 : vector<24x128xf32>
    %cst_11 = arith.constant dense<0.000000e+00> : vector<128xf32>
    %18 = vector.multi_reduction <add>, %17, %cst_11 [0] : vector<24x128xf32> to vector<128xf32>
    %19 = vector.shape_cast %18 : vector<128xf32> to vector<1x128xf32>
    %c0_12 = arith.constant 0 : index
    %c0_13 = arith.constant 0 : index
    %c0_14 = arith.constant 0 : index
    %20 = vector.load %arg6[%c0_12, %c0_13, %c0_14] : memref<1x1x128xf32, #tpu.memory_space<vmem>>, vector<1x1x128xf32>
    %21 = vector.shape_cast %20 : vector<1x1x128xf32> to vector<1x128xf32>
    %22 = vector.shape_cast %19 : vector<1x128xf32> to vector<1x1x128xf32>
    tpu.vector_store %arg6[%c0_12, %c0_13, %c0_14], %22 {strides = array<i32>} : memref<1x1x128xf32, #tpu.memory_space<vmem>>, vector<1x1x128xf32>,
    return
  }
  func.func @transform_0(%arg0: i32) -> (i32, i32, i32) {
    %c0_i32 = arith.constant 0 : i32
    %c0_i32_0 = arith.constant 0 : i32
    %c0_i32_1 = arith.constant 0 : i32
    return %arg0, %c0_i32, %c0_i32_0 : i32, i32, i32
  }
  func.func @transform_1(%arg0: i32) -> (i32, i32) {
    %c0_i32 = arith.constant 0 : i32
    %c0_i32_0 = arith.constant 0 : i32
    %c0_i32_1 = arith.constant 0 : i32
    return %c0_i32, %c0_i32_0 : i32, i32
  }
  func.func @transform_2(%arg0: i32) -> (i32, i32) {
    %c0_i32 = arith.constant 0 : i32
    %c0_i32_0 = arith.constant 0 : i32
    %c0_i32_1 = arith.constant 0 : i32
    return %c0_i32, %c0_i32_0 : i32, i32
  }
  func.func @transform_3(%arg0: i32) -> (i32, i32) {
    %c0_i32 = arith.constant 0 : i32
    %c0_i32_0 = arith.constant 0 : i32
    %c0_i32_1 = arith.constant 0 : i32
    return %c0_i32, %c0_i32_0 : i32, i32
  }
  func.func @transform_4(%arg0: i32) -> (i32, i32, i32) {
    %c0_i32 = arith.constant 0 : i32
    %c0_i32_0 = arith.constant 0 : i32
    %c0_i32_1 = arith.constant 0 : i32
    return %arg0, %c0_i32, %c0_i32_0 : i32, i32, i32
  }
  func.func @transform_5(%arg0: i32) -> (i32, i32, i32) {
    %c0_i32 = arith.constant 0 : i32
    %c0_i32_0 = arith.constant 0 : i32
    %c0_i32_1 = arith.constant 0 : i32
    return %arg0, %c0_i32, %c0_i32_0 : i32, i32, i32
  }
}

module attributes {stable_mosaic.version = 11 : i64} {
  func.func @kernel(%arg0: i32, %arg1: memref<1x16x256xbf16, #tpu.memory_space<vmem>>, %arg2: memref<4x256x128xbf16, #tpu.memory_space<vmem>>, %arg3: memref<8x1xf32, #tpu.memory_space<vmem>>, %arg4: memref<1x8x128xf32, #tpu.memory_space<vmem>>, %arg5: memref<1x1x128xf32, #tpu.memory_space<vmem>>, %arg6: memref<1x1x128xf32, #tpu.memory_space<vmem>>) attributes {dimension_semantics = [#tpu.dimension_semantics<parallel>], iteration_bounds = array<i64: 2>, scalar_prefetch = 0 : i64, scratch_operands = 0 : i64, tpu.core_type = #tpu.core_type<tc>, window_params = [{transform_indices = @transform_0, window_bounds = array<i64: 1, 16, 256>}, {pipeline_mode = #tpu.pipeline_mode<synchronous>, transform_indices = @transform_1, window_bounds = array<i64: 4, 256, 128>}, {pipeline_mode = #tpu.pipeline_mode<synchronous>, transform_indices = @transform_2, window_bounds = array<i64: 8, 1>}, {transform_indices = @transform_3, window_bounds = array<i64: 1, 8, 128>}, {transform_indices = @transform_4, window_bounds = array<i64: 1, 1, 128>}, {transform_indices = @transform_5, window_bounds = array<i64: 1, 1, 128>}]} {
    %c0 = arith.constant 0 : index
    %c0_0 = arith.constant 0 : index
    %c0_1 = arith.constant 0 : index
    %0 = vector.load %arg1[%c0, %c0_0, %c0_1] : memref<1x16x256xbf16, #tpu.memory_space<vmem>>, vector<1x16x256xbf16>
    %1 = vector.shape_cast %0 : vector<1x16x256xbf16> to vector<16x256xbf16>
    %2 = vector.extract_strided_slice %1 {offsets = [0, 0], sizes = [8, 256], strides = [1, 1]} : vector<16x256xbf16> to vector<8x256xbf16>
    %c0_2 = arith.constant 0 : index
    %c0_3 = arith.constant 0 : index
    %c0_4 = arith.constant 0 : index
    %3 = vector.load %arg2[%c0_2, %c0_3, %c0_4] : memref<4x256x128xbf16, #tpu.memory_space<vmem>>, vector<1x256x128xbf16>
    %4 = vector.shape_cast %3 : vector<1x256x128xbf16> to vector<256x128xbf16>
    %cst = arith.constant dense<0.000000e+00> : vector<8x128xf32>
    %5 = tpu.matmul %2, %4, %cst {dimension_numbers = #tpu.dot_dimension_numbers<[1], [0], [0], [1], [0, 0, 1, 1], [], []>} : vector<8x256xbf16>, vector<256x128xbf16>, vector<8x128xf32> -> vector<8x128xf32>
    %6 = vector.extract_strided_slice %1 {offsets = [1, 0], sizes = [8, 256], strides = [1, 1]} : vector<16x256xbf16> to vector<8x256xbf16>
    %c1 = arith.constant 1 : index
    %c0_5 = arith.constant 0 : index
    %c0_6 = arith.constant 0 : index
    %7 = vector.load %arg2[%c1, %c0_5, %c0_6] : memref<4x256x128xbf16, #tpu.memory_space<vmem>>, vector<1x256x128xbf16>
    %8 = vector.shape_cast %7 : vector<1x256x128xbf16> to vector<256x128xbf16>
    %cst_7 = arith.constant dense<0.000000e+00> : vector<8x128xf32>
    %9 = tpu.matmul %6, %8, %cst_7 {dimension_numbers = #tpu.dot_dimension_numbers<[1], [0], [0], [1], [0, 0, 1, 1], [], []>} : vector<8x256xbf16>, vector<256x128xbf16>, vector<8x128xf32> -> vector<8x128xf32>
    %10 = arith.addf %5, %9 : vector<8x128xf32>
    %11 = vector.extract_strided_slice %1 {offsets = [3, 0], sizes = [8, 256], strides = [1, 1]} : vector<16x256xbf16> to vector<8x256xbf16>
    %c2 = arith.constant 2 : index
    %c0_8 = arith.constant 0 : index
    %c0_9 = arith.constant 0 : index
    %12 = vector.load %arg2[%c2, %c0_8, %c0_9] : memref<4x256x128xbf16, #tpu.memory_space<vmem>>, vector<1x256x128xbf16>
    %13 = vector.shape_cast %12 : vector<1x256x128xbf16> to vector<256x128xbf16>
    %cst_10 = arith.constant dense<0.000000e+00> : vector<8x128xf32>
    %14 = tpu.matmul %11, %13, %cst_10 {dimension_numbers = #tpu.dot_dimension_numbers<[1], [0], [0], [1], [0, 0, 1, 1], [], []>} : vector<8x256xbf16>, vector<256x128xbf16>, vector<8x128xf32> -> vector<8x128xf32>
    %15 = arith.addf %10, %14 : vector<8x128xf32>
    %16 = vector.extract_strided_slice %1 {offsets = [4, 0], sizes = [8, 256], strides = [1, 1]} : vector<16x256xbf16> to vector<8x256xbf16>
    %c3 = arith.constant 3 : index
    %c0_11 = arith.constant 0 : index
    %c0_12 = arith.constant 0 : index
    %17 = vector.load %arg2[%c3, %c0_11, %c0_12] : memref<4x256x128xbf16, #tpu.memory_space<vmem>>, vector<1x256x128xbf16>
    %18 = vector.shape_cast %17 : vector<1x256x128xbf16> to vector<256x128xbf16>
    %cst_13 = arith.constant dense<0.000000e+00> : vector<8x128xf32>
    %19 = tpu.matmul %16, %18, %cst_13 {dimension_numbers = #tpu.dot_dimension_numbers<[1], [0], [0], [1], [0, 0, 1, 1], [], []>} : vector<8x256xbf16>, vector<256x128xbf16>, vector<8x128xf32> -> vector<8x128xf32>
    %20 = arith.addf %15, %19 : vector<8x128xf32>
    %c0_14 = arith.constant 0 : index
    %c0_15 = arith.constant 0 : index
    %c0_16 = arith.constant 0 : index
    %21 = vector.load %arg4[%c0_14, %c0_15, %c0_16] : memref<1x8x128xf32, #tpu.memory_space<vmem>>, vector<1x8x128xf32>
    %22 = vector.shape_cast %21 : vector<1x8x128xf32> to vector<8x128xf32>
    %23 = vector.shape_cast %20 : vector<8x128xf32> to vector<1x8x128xf32>
    tpu.vector_store %arg4[%c0_14, %c0_15, %c0_16], %23 {strides = array<i32>} : memref<1x8x128xf32, #tpu.memory_space<vmem>>, vector<1x8x128xf32>,
    %c0_17 = arith.constant 0 : index
    %c0_18 = arith.constant 0 : index
    %24 = vector.load %arg3[%c0_17, %c0_18] : memref<8x1xf32, #tpu.memory_space<vmem>>, vector<8x1xf32>
    %25 = vector.broadcast %24 : vector<8x1xf32> to vector<8x128xf32>
    %26 = arith.mulf %20, %25 : vector<8x128xf32>
    %cst_19 = arith.constant dense<0.000000e+00> : vector<128xf32>
    %27 = vector.multi_reduction <add>, %26, %cst_19 [0] : vector<8x128xf32> to vector<128xf32>
    %28 = vector.shape_cast %27 : vector<128xf32> to vector<1x128xf32>
    %c0_20 = arith.constant 0 : index
    %c0_21 = arith.constant 0 : index
    %c0_22 = arith.constant 0 : index
    %29 = vector.load %arg5[%c0_20, %c0_21, %c0_22] : memref<1x1x128xf32, #tpu.memory_space<vmem>>, vector<1x1x128xf32>
    %30 = vector.shape_cast %29 : vector<1x1x128xf32> to vector<1x128xf32>
    %31 = vector.shape_cast %28 : vector<1x128xf32> to vector<1x1x128xf32>
    tpu.vector_store %arg5[%c0_20, %c0_21, %c0_22], %31 {strides = array<i32>} : memref<1x1x128xf32, #tpu.memory_space<vmem>>, vector<1x1x128xf32>,
    %32 = arith.mulf %26, %20 : vector<8x128xf32>
    %cst_23 = arith.constant dense<0.000000e+00> : vector<128xf32>
    %33 = vector.multi_reduction <add>, %32, %cst_23 [0] : vector<8x128xf32> to vector<128xf32>
    %34 = vector.shape_cast %33 : vector<128xf32> to vector<1x128xf32>
    %c0_24 = arith.constant 0 : index
    %c0_25 = arith.constant 0 : index
    %c0_26 = arith.constant 0 : index
    %35 = vector.load %arg6[%c0_24, %c0_25, %c0_26] : memref<1x1x128xf32, #tpu.memory_space<vmem>>, vector<1x1x128xf32>
    %36 = vector.shape_cast %35 : vector<1x1x128xf32> to vector<1x128xf32>
    %37 = vector.shape_cast %34 : vector<1x128xf32> to vector<1x1x128xf32>
    tpu.vector_store %arg6[%c0_24, %c0_25, %c0_26], %37 {strides = array<i32>} : memref<1x1x128xf32, #tpu.memory_space<vmem>>, vector<1x1x128xf32>,
    return
  }
  func.func @transform_0(%arg0: i32) -> (i32, i32, i32) {
    %c0_i32 = arith.constant 0 : i32
    %c0_i32_0 = arith.constant 0 : i32
    %c0_i32_1 = arith.constant 0 : i32
    return %arg0, %c0_i32, %c0_i32_0 : i32, i32, i32
  }
  func.func @transform_1(%arg0: i32) -> (i32, i32, i32) {
    %c0_i32 = arith.constant 0 : i32
    %c0_i32_0 = arith.constant 0 : i32
    %c0_i32_1 = arith.constant 0 : i32
    %c0_i32_2 = arith.constant 0 : i32
    return %c0_i32, %c0_i32_0, %c0_i32_1 : i32, i32, i32
  }
  func.func @transform_2(%arg0: i32) -> (i32, i32) {
    %c0_i32 = arith.constant 0 : i32
    %c0_i32_0 = arith.constant 0 : i32
    %c0_i32_1 = arith.constant 0 : i32
    return %c0_i32, %c0_i32_0 : i32, i32
  }
  func.func @transform_3(%arg0: i32) -> (i32, i32, i32) {
    %c0_i32 = arith.constant 0 : i32
    %c0_i32_0 = arith.constant 0 : i32
    %c0_i32_1 = arith.constant 0 : i32
    return %arg0, %c0_i32, %c0_i32_0 : i32, i32, i32
  }
  func.func @transform_4(%arg0: i32) -> (i32, i32, i32) {
    %c0_i32 = arith.constant 0 : i32
    %c0_i32_0 = arith.constant 0 : i32
    %c0_i32_1 = arith.constant 0 : i32
    return %arg0, %c0_i32, %c0_i32_0 : i32, i32, i32
  }
  func.func @transform_5(%arg0: i32) -> (i32, i32, i32) {
    %c0_i32 = arith.constant 0 : i32
    %c0_i32_0 = arith.constant 0 : i32
    %c0_i32_1 = arith.constant 0 : i32
    return %arg0, %c0_i32, %c0_i32_0 : i32, i32, i32
  }
}

module attributes {stable_mosaic.version = 11 : i64} {
  func.func @_bn_lrelu_sum_kernel(%arg0: i32, %arg1: memref<1x8x128xf32, #tpu.memory_space<vmem>>, %arg2: memref<1x128xf32, #tpu.memory_space<vmem>>, %arg3: memref<1x128xf32, #tpu.memory_space<vmem>>, %arg4: memref<8x1xf32, #tpu.memory_space<vmem>>, %arg5: memref<1x8x128xbf16, #tpu.memory_space<vmem>>, %arg6: memref<1x1x128xf32, #tpu.memory_space<vmem>>) attributes {dimension_semantics = [#tpu.dimension_semantics<parallel>], iteration_bounds = array<i64: 2>, scalar_prefetch = 0 : i64, scratch_operands = 0 : i64, tpu.core_type = #tpu.core_type<tc>, window_params = [{transform_indices = @transform_0, window_bounds = array<i64: 1, 8, 128>}, {pipeline_mode = #tpu.pipeline_mode<synchronous>, transform_indices = @transform_1, window_bounds = array<i64: 1, 128>}, {pipeline_mode = #tpu.pipeline_mode<synchronous>, transform_indices = @transform_2, window_bounds = array<i64: 1, 128>}, {pipeline_mode = #tpu.pipeline_mode<synchronous>, transform_indices = @transform_3, window_bounds = array<i64: 8, 1>}, {transform_indices = @transform_4, window_bounds = array<i64: 1, 8, 128>}, {transform_indices = @transform_5, window_bounds = array<i64: 1, 1, 128>}]} {
    %c0 = arith.constant 0 : index
    %c0_0 = arith.constant 0 : index
    %c0_1 = arith.constant 0 : index
    %0 = vector.load %arg1[%c0, %c0_0, %c0_1] : memref<1x8x128xf32, #tpu.memory_space<vmem>>, vector<1x8x128xf32>
    %1 = vector.shape_cast %0 : vector<1x8x128xf32> to vector<8x128xf32>
    %c0_2 = arith.constant 0 : index
    %c0_3 = arith.constant 0 : index
    %2 = vector.load %arg2[%c0_2, %c0_3] : memref<1x128xf32, #tpu.memory_space<vmem>>, vector<1x128xf32>
    %3 = vector.broadcast %2 : vector<1x128xf32> to vector<8x128xf32>
    %4 = arith.mulf %1, %3 : vector<8x128xf32>
    %c0_4 = arith.constant 0 : index
    %c0_5 = arith.constant 0 : index
    %5 = vector.load %arg3[%c0_4, %c0_5] : memref<1x128xf32, #tpu.memory_space<vmem>>, vector<1x128xf32>
    %6 = vector.broadcast %5 : vector<1x128xf32> to vector<8x128xf32>
    %7 = arith.addf %4, %6 : vector<8x128xf32>
    %cst = arith.constant 2.000000e-01 : f32
    %8 = vector.broadcast %cst : f32 to vector<8x128xf32>
    %9 = arith.mulf %8, %7 : vector<8x128xf32>
    %10 = arith.maximumf %7, %9 : vector<8x128xf32>
    %11 = arith.truncf %10 : vector<8x128xf32> to vector<8x128xbf16>
    %c0_6 = arith.constant 0 : index
    %c0_7 = arith.constant 0 : index
    %c0_8 = arith.constant 0 : index
    %12 = vector.load %arg5[%c0_6, %c0_7, %c0_8] : memref<1x8x128xbf16, #tpu.memory_space<vmem>>, vector<1x8x128xbf16>
    %13 = vector.shape_cast %12 : vector<1x8x128xbf16> to vector<8x128xbf16>
    %14 = vector.shape_cast %11 : vector<8x128xbf16> to vector<1x8x128xbf16>
    tpu.vector_store %arg5[%c0_6, %c0_7, %c0_8], %14 {strides = array<i32>} : memref<1x8x128xbf16, #tpu.memory_space<vmem>>, vector<1x8x128xbf16>,
    %c0_9 = arith.constant 0 : index
    %c0_10 = arith.constant 0 : index
    %15 = vector.load %arg4[%c0_9, %c0_10] : memref<8x1xf32, #tpu.memory_space<vmem>>, vector<8x1xf32>
    %16 = vector.broadcast %15 : vector<8x1xf32> to vector<8x128xf32>
    %17 = arith.mulf %10, %16 : vector<8x128xf32>
    %cst_11 = arith.constant dense<0.000000e+00> : vector<128xf32>
    %18 = vector.multi_reduction <add>, %17, %cst_11 [0] : vector<8x128xf32> to vector<128xf32>
    %19 = vector.shape_cast %18 : vector<128xf32> to vector<1x128xf32>
    %c0_12 = arith.constant 0 : index
    %c0_13 = arith.constant 0 : index
    %c0_14 = arith.constant 0 : index
    %20 = vector.load %arg6[%c0_12, %c0_13, %c0_14] : memref<1x1x128xf32, #tpu.memory_space<vmem>>, vector<1x1x128xf32>
    %21 = vector.shape_cast %20 : vector<1x1x128xf32> to vector<1x128xf32>
    %22 = vector.shape_cast %19 : vector<1x128xf32> to vector<1x1x128xf32>
    tpu.vector_store %arg6[%c0_12, %c0_13, %c0_14], %22 {strides = array<i32>} : memref<1x1x128xf32, #tpu.memory_space<vmem>>, vector<1x1x128xf32>,
    return
  }
  func.func @transform_0(%arg0: i32) -> (i32, i32, i32) {
    %c0_i32 = arith.constant 0 : i32
    %c0_i32_0 = arith.constant 0 : i32
    %c0_i32_1 = arith.constant 0 : i32
    return %arg0, %c0_i32, %c0_i32_0 : i32, i32, i32
  }
  func.func @transform_1(%arg0: i32) -> (i32, i32) {
    %c0_i32 = arith.constant 0 : i32
    %c0_i32_0 = arith.constant 0 : i32
    %c0_i32_1 = arith.constant 0 : i32
    return %c0_i32, %c0_i32_0 : i32, i32
  }
  func.func @transform_2(%arg0: i32) -> (i32, i32) {
    %c0_i32 = arith.constant 0 : i32
    %c0_i32_0 = arith.constant 0 : i32
    %c0_i32_1 = arith.constant 0 : i32
    return %c0_i32, %c0_i32_0 : i32, i32
  }
  func.func @transform_3(%arg0: i32) -> (i32, i32) {
    %c0_i32 = arith.constant 0 : i32
    %c0_i32_0 = arith.constant 0 : i32
    %c0_i32_1 = arith.constant 0 : i32
    return %c0_i32, %c0_i32_0 : i32, i32
  }
  func.func @transform_4(%arg0: i32) -> (i32, i32, i32) {
    %c0_i32 = arith.constant 0 : i32
    %c0_i32_0 = arith.constant 0 : i32
    %c0_i32_1 = arith.constant 0 : i32
    return %arg0, %c0_i32, %c0_i32_0 : i32, i32, i32
  }
  func.func @transform_5(%arg0: i32) -> (i32, i32, i32) {
    %c0_i32 = arith.constant 0 : i32
    %c0_i32_0 = arith.constant 0 : i32
    %c0_i32_1 = arith.constant 0 : i32
    return %arg0, %c0_i32, %c0_i32_0 : i32, i32, i32
  }
}

module attributes {stable_mosaic.version = 11 : i64} {
  func.func @_head_kernel(%arg0: memref<2x128xf32, #tpu.memory_space<vmem>>, %arg1: memref<2x6xf32, #tpu.memory_space<vmem>>, %arg2: memref<6x128xf32, #tpu.memory_space<vmem>>, %arg3: memref<2x1xf32, #tpu.memory_space<vmem>>) attributes {dimension_semantics = [], scalar_prefetch = 0 : i64, scratch_operands = 0 : i64, tpu.core_type = #tpu.core_type<tc>} {
    %c0 = arith.constant 0 : index
    %c0_0 = arith.constant 0 : index
    %0 = vector.load %arg1[%c0, %c0_0] : memref<2x6xf32, #tpu.memory_space<vmem>>, vector<2x6xf32>
    %c0_1 = arith.constant 0 : index
    %c0_2 = arith.constant 0 : index
    %1 = vector.load %arg2[%c0_1, %c0_2] : memref<6x128xf32, #tpu.memory_space<vmem>>, vector<6x128xf32>
    %cst = arith.constant dense<0.000000e+00> : vector<2x128xf32>
    %2 = tpu.matmul %0, %1, %cst {dimension_numbers = #tpu.dot_dimension_numbers<[1], [0], [0], [1], [0, 0, 1, 1], [], []>} : vector<2x6xf32>, vector<6x128xf32>, vector<2x128xf32> -> vector<2x128xf32>
    %c0_3 = arith.constant 0 : index
    %c0_4 = arith.constant 0 : index
    %3 = vector.load %arg0[%c0_3, %c0_4] : memref<2x128xf32, #tpu.memory_space<vmem>>, vector<2x128xf32>
    %4 = arith.mulf %2, %3 : vector<2x128xf32>
    %cst_5 = arith.constant dense<0.000000e+00> : vector<2xf32>
    %5 = vector.multi_reduction <add>, %4, %cst_5 [1] : vector<2x128xf32> to vector<2xf32>
    %6 = vector.shape_cast %5 : vector<2xf32> to vector<2x1xf32>
    %c0_6 = arith.constant 0 : index
    %c0_7 = arith.constant 0 : index
    %7 = vector.load %arg3[%c0_6, %c0_7] : memref<2x1xf32, #tpu.memory_space<vmem>>, vector<2x1xf32>
    tpu.vector_store %arg3[%c0_6, %c0_7], %6 {strides = array<i32>} : memref<2x1xf32, #tpu.memory_space<vmem>>, vector<2x1xf32>,
    return
  }
}

</mosaic_0001>

<llo_original>
// kernel: linnet_d_forward.10
$region0: #{linnet_d_forward.10}
  #allocation0 [shape = 'u32[]', space=smem, size = 0x4, offset = 0x4, fixed_abs, tag = 'smem constant byte address 0x4 - core index']
  #allocation1 [shape = 'u32[144,128]{1,0:T(1,128)}', space=vmem, size = 0x12000, scoped, tag = 'internal scratch']
  %s0 = inlined_call_operand.vmem [shape: f32[2,272,128], index: 0, kind: input, shape index: {}]
  %s1 = inlined_call_operand.vmem [shape: f32[1,128], index: 1, kind: input, shape index: {}]
  %s2 = inlined_call_operand.vmem [shape: f32[1,128], index: 2, kind: input, shape index: {}]
  %s3 = inlined_call_operand.vmem [shape: f32[272,1], index: 3, kind: input, shape index: {}]
  %s4 = inlined_call_operand.vmem [shape: bf16[2,272,128], index: 4, kind: output, shape index: {0}]
  %s5 = inlined_call_operand.hbm [shape: f32[2,1,128], index: 5, kind: output, shape index: {1}]
  %6 = xla_tuple %s4, %s5
  %s7 = sld [smem:[#allocation0]]
  $region57: #{linnet_d_forward.10} parent=0
    _
  %s9 = ssub.s32 1, %s7
  %s10 = scalar_select 0, %s9, %s7
  $region1: #{linnet_d_forward.10} parent=0
    #allocation2 [shape = 'u8[1024]{0}', space=vmem, size = 0x400, scoped, tag = 'output window, operand 1']
    #allocation3 [shape = 's32[2]{0}', space=sflag, size = 0x8, scoped, tag = 'scoped memory for linnet_d_forward.10']
    %11 = vsyncpa [#allocation3], 0
    %s12 = scalar_lea.sflag [#allocation3], 1
    %13 = vsyncpa %s12, 0
    loop: start=0, step=1, limit=4
    $region2: #{linnet_d_forward.10} parent=1 // loop_pre_header
      _
    $region3: #{linnet_d_forward.10} parent=1 // loop_header
      %s15 = sphi 0, %s19
      %p16 = scmp.ge.s32.totalorder %s15, 4
      %s25 = sphi 0, %s27
      %s28 = sphi 0, %s25
      %s29 = sphi 0, %s28
      %s45 = sphi 0, %s29
      %s49 = sphi 0, %s49
      %s51 = sphi 0, %s49
      %s52 = sphi 0, %s51
      %s66 = sphi 0, %s52
      %s70 = sphi 0, %s70
      %s72 = sphi 0, %s70
      %s73 = sphi 0, %s72
      %s87 = sphi 0, %s73
      %s91 = sphi 0, %s91
      %s93 = sphi 0, %s91
      %s94 = sphi 0, %s93
      %s108 = sphi 0, %s94
      %s114 = sphi 0, %s116
      %s117 = sphi 0, %s114
      %s118 = sphi 0, %s117
      %s134 = sphi 0, %s118
      %s140 = sphi 0, %s142
      %s143 = sphi 0, %s140
      %s144 = sphi 0, %s143
      %s160 = sphi 0, %s144
    $region4: #{linnet_d_forward.10} parent=1 // loop_header_branch
      %18 = sbr.rel (%p16) target = $region8
    $region5: #{linnet_d_forward.10} parent=1 // loop_body
      %s20 = ssub.s32 %s15, 1
      %s21 = ssub.s32 %s15, 2
      %s22 = sadd.s32 %s15, 1
      %s23 = ssub.s32 %s15, %s22
      %p24 = scmp.eq.s32.totalorder %s23, 0
      %s26 = sadd.s32 %s25, 1
      %s27 = scalar_select %p24, %s25, %s26
      %p30 = pneg %p24
      %p31 = scmp.eq.s32.totalorder %s15, 1
      %p32 = por %p30, %p31
      %p33 = scmp.ne.s32.totalorder %s25, %s28
      %p34 = scmp.eq.s32.totalorder %s15, 0
      %p35 = por %p33, %p34
      %p36 = scmp.ne.s32.totalorder %s25, %s28
      %p37 = scmp.eq.s32.totalorder %s20, 1
      %p38 = por %p36, %p37
      %p39 = scmp.ne.s32.totalorder %s28, %s29
      %p40 = scmp.eq.s32.totalorder %s20, 0
      %p41 = por %p39, %p40
      %p42 = scmp.ne.s32.totalorder %s28, %s29
      %p43 = scmp.eq.s32.totalorder %s21, 1
      %p44 = por %p42, %p43
      %p46 = scmp.ne.s32.totalorder %s29, %s45
      %p47 = scmp.eq.s32.totalorder %s21, 0
      %p48 = por %p46, %p47
      %s50 = sadd.s32 %s49, 1
      %p53 = scmp.eq.s32.totalorder %s15, 1
      %p54 = scmp.ne.s32.totalorder %s49, %s51
      %p55 = scmp.eq.s32.totalorder %s15, 0
      %p56 = por %p54, %p55
      %p57 = scmp.ne.s32.totalorder %s49, %s51
      %p58 = scmp.eq.s32.totalorder %s20, 1
      %p59 = por %p57, %p58
      %p60 = scmp.ne.s32.totalorder %s51, %s52
      %p61 = scmp.eq.s32.totalorder %s20, 0
      %p62 = por %p60, %p61
      %p63 = scmp.ne.s32.totalorder %s51, %s52
      %p64 = scmp.eq.s32.totalorder %s21, 1
      %p65 = por %p63, %p64
      %p67 = scmp.ne.s32.totalorder %s52, %s66
      %p68 = scmp.eq.s32.totalorder %s21, 0
      %p69 = por %p67, %p68
      %s71 = sadd.s32 %s70, 1
      %p74 = scmp.eq.s32.totalorder %s15, 1
      %p75 = scmp.ne.s32.totalorder %s70, %s72
      %p76 = scmp.eq.s32.totalorder %s15, 0
      %p77 = por %p75, %p76
      %p78 = scmp.ne.s32.totalorder %s70, %s72
      %p79 = scmp.eq.s32.totalorder %s20, 1
      %p80 = por %p78, %p79
      %p81 = scmp.ne.s32.totalorder %s72, %s73
      %p82 = scmp.eq.s32.totalorder %s20, 0
      %p83 = por %p81, %p82
      %p84 = scmp.ne.s32.totalorder %s72, %s73
      %p85 = scmp.eq.s32.totalorder %s21, 1
      %p86 = por %p84, %p85
      %p88 = scmp.ne.s32.totalorder %s73, %s87
      %p89 = scmp.eq.s32.totalorder %s21, 0
      %p90 = por %p88, %p89
      %s92 = sadd.s32 %s91, 1
      %p95 = scmp.eq.s32.totalorder %s15, 1
      %p96 = scmp.ne.s32.totalorder %s91, %s93
      %p97 = scmp.eq.s32.totalorder %s15, 0
      %p98 = por %p96, %p97
      %p99 = scmp.ne.s32.totalorder %s91, %s93
      %p100 = scmp.eq.s32.totalorder %s20, 1
      %p101 = por %p99, %p100
      %p102 = scmp.ne.s32.totalorder %s93, %s94
      %p103 = scmp.eq.s32.totalorder %s20, 0
      %p104 = por %p102, %p103
      %p105 = scmp.ne.s32.totalorder %s93, %s94
      %p106 = scmp.eq.s32.totalorder %s21, 1
      %p107 = por %p105, %p106
      %p109 = scmp.ne.s32.totalorder %s94, %s108
      %p110 = scmp.eq.s32.totalorder %s21, 0
      %p111 = por %p109, %p110
      %s112 = ssub.s32 %s15, %s22
      %p113 = scmp.eq.s32.totalorder %s112, 0
      %s115 = sadd.s32 %s114, 1
      %s116 = scalar_select %p113, %s114, %s115
      %p119 = pneg %p113
      %p120 = scmp.eq.s32.totalorder %s15, 1
      %p121 = por %p119, %p120
      %p122 = scmp.ne.s32.totalorder %s114, %s117
      %p123 = scmp.eq.s32.totalorder %s15, 0
      %p124 = por %p122, %p123
      %p125 = scmp.ne.s32.totalorder %s114, %s117
      %p126 = scmp.eq.s32.totalorder %s20, 1
      %p127 = por %p125, %p126
      %p128 = scmp.ne.s32.totalorder %s117, %s118
      %p129 = scmp.eq.s32.totalorder %s20, 0
      %p130 = por %p128, %p129
      %p131 = scmp.ne.s32.totalorder %s117, %s118
      %p132 = scmp.eq.s32.totalorder %s21, 1
      %p133 = por %p131, %p132
      %p135 = scmp.ne.s32.totalorder %s118, %s134
      %p136 = scmp.eq.s32.totalorder %s21, 0
      %p137 = por %p135, %p136
      %s138 = ssub.s32 %s15, %s22
      %p139 = scmp.eq.s32.totalorder %s138, 0
      %s141 = sadd.s32 %s140, 1
      %s142 = scalar_select %p139, %s140, %s141
      %p145 = pneg %p139
      %p146 = scmp.eq.s32.totalorder %s15, 1
      %p147 = por %p145, %p146
      %p148 = scmp.ne.s32.totalorder %s140, %s143
      %p149 = scmp.eq.s32.totalorder %s15, 0
      %p150 = por %p148, %p149
      %p151 = scmp.ne.s32.totalorder %s140, %s143
      %p152 = scmp.eq.s32.totalorder %s20, 1
      %p153 = por %p151, %p152
      %p154 = scmp.ne.s32.totalorder %s143, %s144
      %p155 = scmp.eq.s32.totalorder %s20, 0
      %p156 = por %p154, %p155
      %p157 = scmp.ne.s32.totalorder %s143, %s144
      %p158 = scmp.eq.s32.totalorder %s21, 1
      %p159 = por %p157, %p158
      %p161 = scmp.ne.s32.totalorder %s144, %s160
      %p162 = scmp.eq.s32.totalorder %s21, 0
      %p163 = por %p161, %p162
      %p164 = scmp.le.s32.totalorder 1, %s15
      %p165 = scmp.lt.s32.totalorder %s15, 3
      %p166 = pnand %p164, %p165
      %p167 = pneg %p166
      // Predicated region
      $region9: #{linnet_d_forward.10} parent=5 // pred_check
        _
      $region10: #{linnet_d_forward.10} parent=5 // pred_check_branch
        %169 = sbr.rel (%p166) target = $region12
      $region11: #{linnet_d_forward.10} parent=5 // pred_region
        %s170 = ssub.s32 %s15, 1
        // Predicated region
        $region13: #{linnet_d_forward.10} parent=11 // pred_check
          %p171 = pneg %p62
        $region14: #{linnet_d_forward.10} parent=11 // pred_check_branch
          %173 = sbr.rel (%p171) target = $region16
        $region15: #{linnet_d_forward.10} parent=11 // pred_region
          _
        $region16: #{linnet_d_forward.10} parent=11 // pred_fallthru
          _
        // Predicated region
        $region17: #{linnet_d_forward.10} parent=11 // pred_check
          %p174 = pneg %p83
        $region18: #{linnet_d_forward.10} parent=11 // pred_check_branch
          %176 = sbr.rel (%p174) target = $region20
        $region19: #{linnet_d_forward.10} parent=11 // pred_region
          _
        $region20: #{linnet_d_forward.10} parent=11 // pred_fallthru
          _
        // Predicated region
        $region21: #{linnet_d_forward.10} parent=11 // pred_check
          %p177 = pneg %p104
        $region22: #{linnet_d_forward.10} parent=11 // pred_check_branch
          %179 = sbr.rel (%p177) target = $region24
        $region23: #{linnet_d_forward.10} parent=11 // pred_region
          _
        $region24: #{linnet_d_forward.10} parent=11 // pred_fallthru
          _
      $region12: #{linnet_d_forward.10} parent=5 // pred_fallthru
        _
      %p180 = scmp.lt.s32.totalorder %s15, 2
      // Predicated region
      $region25: #{linnet_d_forward.10} parent=5 // pred_check
        %p181 = pneg %p180
      $region26: #{linnet_d_forward.10} parent=5 // pred_check_branch
        %183 = sbr.rel (%p181) target = $region28
      $region27: #{linnet_d_forward.10} parent=5 // pred_region
        // Predicated region
        $region29: #{linnet_d_forward.10} parent=27 // pred_check
          %p184 = pneg %p35
        $region30: #{linnet_d_forward.10} parent=27 // pred_check_branch
          %186 = sbr.rel (%p184) target = $region32
        $region31: #{linnet_d_forward.10} parent=27 // pred_region
          %p187 = scmp.lt.s32.totalorder %s15, 1
          %s188 = scalar_select %p187, %s15, 1
          %s189 = smul.addr %s188, 34
          %s190 = smul.addr %s189, 8
          %s191 = scalar_lea.vmem %s0, %s190
        $region32: #{linnet_d_forward.10} parent=27 // pred_fallthru
          _
      $region28: #{linnet_d_forward.10} parent=5 // pred_fallthru
        _
      %p192 = scmp.le.s32.totalorder 1, %s15
      %p193 = scmp.lt.s32.totalorder %s15, 3
      %p194 = pnand %p192, %p193
      %p195 = pneg %p194
      // Predicated region
      $region33: #{linnet_d_forward.10} parent=5 // pred_check
        _
      $region34: #{linnet_d_forward.10} parent=5 // pred_check_branch
        %197 = sbr.rel (%p194) target = $region36
      $region35: #{linnet_d_forward.10} parent=5 // pred_region
        %s198 = ssub.s32 %s15, 1
        %p199 = scmp.lt.s32.totalorder %s20, 1
        %s200 = scalar_select %p199, %s20, 1
        %s201 = smul.addr %s200, 34
        %s202 = smul.addr %s201, 8
        %s203 = scalar_lea.vmem %s0, %s202
        %p204 = pneg %p41
        %p205 = pneg %p38
        %p206 = pneg %p62
        %p207 = pneg %p59
        %p208 = pneg %p83
        %p209 = pneg %p80
        %p210 = pneg %p104
        %p211 = pneg %p101
        %p212 = pneg %p130
        %p213 = pneg %p127
        %p214 = scmp.lt.s32.totalorder %s20, 1
        %s215 = scalar_select %p214, %s20, 1
        %s216 = smul.addr %s215, 34
        %s217 = smul.addr %s216, 4
        %s218 = scalar_lea.vmem %s4, %s217
        %p219 = pneg %p156
        %p220 = pneg %p153
        %s221 = sand.u32 %s143, 1
        %s222 = scalar_lea.sflag [#allocation3], %s221
        %s223 = sand.u32 %s143, 1
        %s224 = scalar_lea.vmem [#allocation2], %s223
        %p225 = scmp.lt.s32.totalorder %s20, 1
        %s226 = scalar_select %p225, %s20, 1
        %s227 = smul.addr %s226, 34
        %s228 = smul.addr %s227, 8
        %s229 = scalar_lea.vmem %s0, %s228
        %p230 = scmp.lt.s32.totalorder %s20, 1
        %s231 = scalar_select %p230, %s20, 1
        %s232 = smul.addr %s231, 34
        %s233 = smul.addr %s232, 4
        %s234 = scalar_lea.vmem %s4, %s233
        %v235 = vld [vmem:[%s229] sm:$0xff]
        %v236 = vld [vmem:[%s229 + $0x8] sm:$0xff]
        %v237 = vld [vmem:[%s229 + $0x10] sm:$0xff]
        %v238 = vld [vmem:[%s229 + $0x18] sm:$0xff]
        %v239 = vld [vmem:[%s229 + $0x20] sm:$0xff]
        %v240 = vld [vmem:[%s229 + $0x28] sm:$0xff]
        %v241 = vld [vmem:[%s229 + $0x30] sm:$0xff]
        %v242 = vld [vmem:[%s229 + $0x38] sm:$0xff]
        %v243 = vld [vmem:[%s229 + $0x40] sm:$0xff]
        %v244 = vld [vmem:[%s229 + $0x48] sm:$0xff]
        %v245 = vld [vmem:[%s229 + $0x50] sm:$0xff]
        %v246 = vld [vmem:[%s229 + $0x58] sm:$0xff]
        %v247 = vld [vmem:[%s229 + $0x60] sm:$0xff]
        %v248 = vld [vmem:[%s229 + $0x68] sm:$0xff]
        %v249 = vld [vmem:[%s229 + $0x70] sm:$0xff]
        %v250 = vld [vmem:[%s229 + $0x78] sm:$0xff]
        %v251 = vld [vmem:[%s229 + $0x80] sm:$0xff]
        %v252 = vld [vmem:[%s229 + $0x88] sm:$0xff]
        %v253 = vld [vmem:[%s229 + $0x90] sm:$0xff]
        %v254 = vld [vmem:[%s229 + $0x98] sm:$0xff]
        %v255 = vld [vmem:[%s229 + $0xa0] sm:$0xff]
        %v256 = vld [vmem:[%s229 + $0xa8] sm:$0xff]
        %v257 = vld [vmem:[%s229 + $0xb0] sm:$0xff]
        %v258 = vld [vmem:[%s229 + $0xb8] sm:$0xff]
        %v259 = vld [vmem:[%s229 + $0xc0] sm:$0xff]
        %v260 = vld [vmem:[%s229 + $0xc8] sm:$0xff]
        %v261 = vld [vmem:[%s229 + $0xd0] sm:$0xff]
        %v262 = vld [vmem:[%s229 + $0xd8] sm:$0xff]
        %v263 = vld [vmem:[%s229 + $0xe0] sm:$0xff]
        %v264 = vld [vmem:[%s229 + $0xe8] sm:$0xff]
        %v265 = vld [vmem:[%s229 + $0xf0] sm:$0xff]
        %v266 = vld [vmem:[%s229 + $0xf8] sm:$0xff]
        %v267 = vld [vmem:[%s229 + $0x100] sm:$0xff]
        %v268 = vld [vmem:[%s229 + $0x108] sm:$0xff]
        %v269 = vld [vmem:[%s1] sm:$0x1]
        %v271 = vlaneseq
        %v272 = vshrl.u32 %v271, 7
        %v273 = vsub.s32 0, %v272
        %v274 = vrot.slane %v269, %v273
        %v276 = vmul.f32 %v235, %v274
        %v277 = vmul.f32 %v236, %v274
        %v278 = vmul.f32 %v237, %v274
        %v279 = vmul.f32 %v238, %v274
        %v280 = vmul.f32 %v239, %v274
        %v281 = vmul.f32 %v240, %v274
        %v282 = vmul.f32 %v241, %v274
        %v283 = vmul.f32 %v242, %v274
        %v284 = vmul.f32 %v243, %v274
        %v285 = vmul.f32 %v244, %v274
        %v286 = vmul.f32 %v245, %v274
        %v287 = vmul.f32 %v246, %v274
        %v288 = vmul.f32 %v247, %v274
        %v289 = vmul.f32 %v248, %v274
        %v290 = vmul.f32 %v249, %v274
        %v291 = vmul.f32 %v250, %v274
        %v292 = vmul.f32 %v251, %v274
        %v293 = vmul.f32 %v252, %v274
        %v294 = vmul.f32 %v253, %v274
        %v295 = vmul.f32 %v254, %v274
        %v296 = vmul.f32 %v255, %v274
        %v297 = vmul.f32 %v256, %v274
        %v298 = vmul.f32 %v257, %v274
        %v299 = vmul.f32 %v258, %v274
        %v300 = vmul.f32 %v259, %v274
        %v301 = vmul.f32 %v260, %v274
        %v302 = vmul.f32 %v261, %v274
        %v303 = vmul.f32 %v262, %v274
        %v304 = vmul.f32 %v263, %v274
        %v305 = vmul.f32 %v264, %v274
        %v306 = vmul.f32 %v265, %v274
        %v307 = vmul.f32 %v266, %v274
        %v308 = vmul.f32 %v267, %v274
        %v309 = vmul.f32 %v268, %v274
        %v310 = vld [vmem:[%s2] sm:$0x1]
        %v312 = vlaneseq
        %v313 = vshrl.u32 %v312, 7
        %v314 = vsub.s32 0, %v313
        %v315 = vrot.slane %v310, %v314
        %v317 = vadd.f32 %v276, %v315
        %v318 = vadd.f32 %v277, %v315
        %v319 = vadd.f32 %v278, %v315
        %v320 = vadd.f32 %v279, %v315
        %v321 = vadd.f32 %v280, %v315
        %v322 = vadd.f32 %v281, %v315
        %v323 = vadd.f32 %v282, %v315
        %v324 = vadd.f32 %v283, %v315
        %v325 = vadd.f32 %v284, %v315
        %v326 = vadd.f32 %v285, %v315
        %v327 = vadd.f32 %v286, %v315
        %v328 = vadd.f32 %v287, %v315
        %v329 = vadd.f32 %v288, %v315
        %v330 = vadd.f32 %v289, %v315
        %v331 = vadd.f32 %v290, %v315
        %v332 = vadd.f32 %v291, %v315
        %v333 = vadd.f32 %v292, %v315
        %v334 = vadd.f32 %v293, %v315
        %v335 = vadd.f32 %v294, %v315
        %v336 = vadd.f32 %v295, %v315
        %v337 = vadd.f32 %v296, %v315
        %v338 = vadd.f32 %v297, %v315
        %v339 = vadd.f32 %v298, %v315
        %v340 = vadd.f32 %v299, %v315
        %v341 = vadd.f32 %v300, %v315
        %v342 = vadd.f32 %v301, %v315
        %v343 = vadd.f32 %v302, %v315
        %v344 = vadd.f32 %v303, %v315
        %v345 = vadd.f32 %v304, %v315
        %v346 = vadd.f32 %v305, %v315
        %v347 = vadd.f32 %v306, %v315
        %v348 = vadd.f32 %v307, %v315
        %v349 = vadd.f32 %v308, %v315
        %v350 = vadd.f32 %v309, %v315
        %v351 = vmul.f32 %v317, 0.2
        %v352 = vmul.f32 %v318, 0.2
        %v353 = vmul.f32 %v319, 0.2
        %v354 = vmul.f32 %v320, 0.2
        %v355 = vmul.f32 %v321, 0.2
        %v356 = vmul.f32 %v322, 0.2
        %v357 = vmul.f32 %v323, 0.2
        %v358 = vmul.f32 %v324, 0.2
        %v359 = vmul.f32 %v325, 0.2
        %v360 = vmul.f32 %v326, 0.2
        %v361 = vmul.f32 %v327, 0.2
        %v362 = vmul.f32 %v328, 0.2
        %v363 = vmul.f32 %v329, 0.2
        %v364 = vmul.f32 %v330, 0.2
        %v365 = vmul.f32 %v331, 0.2
        %v366 = vmul.f32 %v332, 0.2
        %v367 = vmul.f32 %v333, 0.2
        %v368 = vmul.f32 %v334, 0.2
        %v369 = vmul.f32 %v335, 0.2
        %v370 = vmul.f32 %v336, 0.2
        %v371 = vmul.f32 %v337, 0.2
        %v372 = vmul.f32 %v338, 0.2
        %v373 = vmul.f32 %v339, 0.2
        %v374 = vmul.f32 %v340, 0.2
        %v375 = vmul.f32 %v341, 0.2
        %v376 = vmul.f32 %v342, 0.2
        %v377 = vmul.f32 %v343, 0.2
        %v378 = vmul.f32 %v344, 0.2
        %v379 = vmul.f32 %v345, 0.2
        %v380 = vmul.f32 %v346, 0.2
        %v381 = vmul.f32 %v347, 0.2
        %v382 = vmul.f32 %v348, 0.2
        %v383 = vmul.f32 %v349, 0.2
        %v384 = vmul.f32 %v350, 0.2
        %v385 = vmax.f32 %v317, %v351
        %v386 = vmax.f32 %v318, %v352
        %v387 = vmax.f32 %v319, %v353
        %v388 = vmax.f32 %v320, %v354
        %v389 = vmax.f32 %v321, %v355
        %v390 = vmax.f32 %v322, %v356
        %v391 = vmax.f32 %v323, %v357
        %v392 = vmax.f32 %v324, %v358
        %v393 = vmax.f32 %v325, %v359
        %v394 = vmax.f32 %v326, %v360
        %v395 = vmax.f32 %v327, %v361
        %v396 = vmax.f32 %v328, %v362
        %v397 = vmax.f32 %v329, %v363
        %v398 = vmax.f32 %v330, %v364
        %v399 = vmax.f32 %v331, %v365
        %v400 = vmax.f32 %v332, %v366
        %v401 = vmax.f32 %v333, %v367
        %v402 = vmax.f32 %v334, %v368
        %v403 = vmax.f32 %v335, %v369
        %v404 = vmax.f32 %v336, %v370
        %v405 = vmax.f32 %v337, %v371
        %v406 = vmax.f32 %v338, %v372
        %v407 = vmax.f32 %v339, %v373
        %v408 = vmax.f32 %v340, %v374
        %v409 = vmax.f32 %v341, %v375
        %v410 = vmax.f32 %v342, %v376
        %v411 = vmax.f32 %v343, %v377
        %v412 = vmax.f32 %v344, %v378
        %v413 = vmax.f32 %v345, %v379
        %v414 = vmax.f32 %v346, %v380
        %v415 = vmax.f32 %v347, %v381
        %v416 = vmax.f32 %v348, %v382
        %v417 = vmax.f32 %v349, %v383
        %v418 = vmax.f32 %v350, %v384
        %v419 = vpack.c.bf16 %v386, %v385
        %v420 = vpack.c.bf16 %v388, %v387
        %v421 = vpack.c.bf16 %v390, %v389
        %v422 = vpack.c.bf16 %v392, %v391
        %v423 = vpack.c.bf16 %v394, %v393
        %v424 = vpack.c.bf16 %v396, %v395
        %v425 = vpack.c.bf16 %v398, %v397
        %v426 = vpack.c.bf16 %v400, %v399
        %v427 = vpack.c.bf16 %v402, %v401
        %v428 = vpack.c.bf16 %v404, %v403
        %v429 = vpack.c.bf16 %v406, %v405
        %v430 = vpack.c.bf16 %v408, %v407
        %v431 = vpack.c.bf16 %v410, %v409
        %v432 = vpack.c.bf16 %v412, %v411
        %v433 = vpack.c.bf16 %v414, %v413
        %v434 = vpack.c.bf16 %v416, %v415
        %v435 = vpack.c.bf16 %v418, %v417
        %v453 = vunpack.c.l.b16 %v419
        %v454 = vunpack.c.h.b16 %v419
        %v455 = vunpack.c.l.b16 %v420
        %v456 = vunpack.c.h.b16 %v420
        %v457 = vunpack.c.l.b16 %v421
        %v458 = vunpack.c.h.b16 %v421
        %v459 = vunpack.c.l.b16 %v422
        %v460 = vunpack.c.h.b16 %v422
        %v461 = vunpack.c.l.b16 %v423
        %v462 = vunpack.c.h.b16 %v423
        %v463 = vunpack.c.l.b16 %v424
        %v464 = vunpack.c.h.b16 %v424
        %v465 = vunpack.c.l.b16 %v425
        %v466 = vunpack.c.h.b16 %v425
        %v467 = vunpack.c.l.b16 %v426
        %v468 = vunpack.c.h.b16 %v426
        %v469 = vunpack.c.l.b16 %v427
        %v470 = vunpack.c.h.b16 %v427
        %v471 = vunpack.c.l.b16 %v428
        %v472 = vunpack.c.h.b16 %v428
        %v473 = vunpack.c.l.b16 %v429
        %v474 = vunpack.c.h.b16 %v429
        %v475 = vunpack.c.l.b16 %v430
        %v476 = vunpack.c.h.b16 %v430
        %v477 = vunpack.c.l.b16 %v431
        %v478 = vunpack.c.h.b16 %v431
        %v479 = vunpack.c.l.b16 %v432
        %v480 = vunpack.c.h.b16 %v432
        %v481 = vunpack.c.l.b16 %v433
        %v482 = vunpack.c.h.b16 %v433
        %v483 = vunpack.c.l.b16 %v434
        %v484 = vunpack.c.h.b16 %v434
        %v485 = vunpack.c.l.b16 %v435
        %v486 = vunpack.c.h.b16 %v435
        %v487 = vpack.c.b16 %v453, %v453
        %v488 = vpack.c.b16 %v454, %v454
        %v489 = vpack.c.b16 %v455, %v455
        %v490 = vpack.c.b16 %v456, %v456
        %v491 = vpack.c.b16 %v457, %v457
        %v492 = vpack.c.b16 %v458, %v458
        %v493 = vpack.c.b16 %v459, %v459
        %v494 = vpack.c.b16 %v460, %v460
        %v495 = vpack.c.b16 %v461, %v461
        %v496 = vpack.c.b16 %v462, %v462
        %v497 = vpack.c.b16 %v463, %v463
        %v498 = vpack.c.b16 %v464, %v464
        %v499 = vpack.c.b16 %v465, %v465
        %v500 = vpack.c.b16 %v466, %v466
        %v501 = vpack.c.b16 %v467, %v467
        %v502 = vpack.c.b16 %v468, %v468
        %v503 = vpack.c.b16 %v469, %v469
        %v504 = vpack.c.b16 %v470, %v470
        %v505 = vpack.c.b16 %v471, %v471
        %v506 = vpack.c.b16 %v472, %v472
        %v507 = vpack.c.b16 %v473, %v473
        %v508 = vpack.c.b16 %v474, %v474
        %v509 = vpack.c.b16 %v475, %v475
        %v510 = vpack.c.b16 %v476, %v476
        %v511 = vpack.c.b16 %v477, %v477
        %v512 = vpack.c.b16 %v478, %v478
        %v513 = vpack.c.b16 %v479, %v479
        %v514 = vpack.c.b16 %v480, %v480
        %v515 = vpack.c.b16 %v481, %v481
        %v516 = vpack.c.b16 %v482, %v482
        %v517 = vpack.c.b16 %v483, %v483
        %v518 = vpack.c.b16 %v484, %v484
        %v519 = vpack.c.b16 %v485, %v485
        %v520 = vpack.c.b16 %v486, %v486
        %555 = vst [vmem:[%s234] sm:$0xf] %v487
        %556 = vst [vmem:[%s234 + $0x4] sm:$0xf] %v488
        %557 = vst [vmem:[%s234 + $0x8] sm:$0xf] %v489
        %558 = vst [vmem:[%s234 + $0xc] sm:$0xf] %v490
        %559 = vst [vmem:[%s234 + $0x10] sm:$0xf] %v491
        %560 = vst [vmem:[%s234 + $0x14] sm:$0xf] %v492
        %561 = vst [vmem:[%s234 + $0x18] sm:$0xf] %v493
        %562 = vst [vmem:[%s234 + $0x1c] sm:$0xf] %v494
        %563 = vst [vmem:[%s234 + $0x20] sm:$0xf] %v495
        %564 = vst [vmem:[%s234 + $0x24] sm:$0xf] %v496
        %565 = vst [vmem:[%s234 + $0x28] sm:$0xf] %v497
        %566 = vst [vmem:[%s234 + $0x2c] sm:$0xf] %v498
        %567 = vst [vmem:[%s234 + $0x30] sm:$0xf] %v499
        %568 = vst [vmem:[%s234 + $0x34] sm:$0xf] %v500
        %569 = vst [vmem:[%s234 + $0x38] sm:$0xf] %v501
        %570 = vst [vmem:[%s234 + $0x3c] sm:$0xf] %v502
        %571 = vst [vmem:[%s234 + $0x40] sm:$0xf] %v503
        %572 = vst [vmem:[%s234 + $0x44] sm:$0xf] %v504
        %573 = vst [vmem:[%s234 + $0x48] sm:$0xf] %v505
        %574 = vst [vmem:[%s234 + $0x4c] sm:$0xf] %v506
        %575 = vst [vmem:[%s234 + $0x50] sm:$0xf] %v507
        %576 = vst [vmem:[%s234 + $0x54] sm:$0xf] %v508
        %577 = vst [vmem:[%s234 + $0x58] sm:$0xf] %v509
        %578 = vst [vmem:[%s234 + $0x5c] sm:$0xf] %v510
        %579 = vst [vmem:[%s234 + $0x60] sm:$0xf] %v511
        %580 = vst [vmem:[%s234 + $0x64] sm:$0xf] %v512
        %581 = vst [vmem:[%s234 + $0x68] sm:$0xf] %v513
        %582 = vst [vmem:[%s234 + $0x6c] sm:$0xf] %v514
        %583 = vst [vmem:[%s234 + $0x70] sm:$0xf] %v515
        %584 = vst [vmem:[%s234 + $0x74] sm:$0xf] %v516
        %585 = vst [vmem:[%s234 + $0x78] sm:$0xf] %v517
        %586 = vst [vmem:[%s234 + $0x7c] sm:$0xf] %v518
        %587 = vst [vmem:[%s234 + $0x80] sm:$0xf] %v519
        %588 = vst [vmem:[%s234 + $0x84] sm:$0xf] %v520
        %v589 = vld [vmem:[%s3] sm:$0xff]
        %v590 = vld [vmem:[%s3 + $0x8] sm:$0xff]
        %v591 = vld [vmem:[%s3 + $0x10] sm:$0xff]
        %v592 = vld [vmem:[%s3 + $0x18] sm:$0xff]
        %v593 = vld [vmem:[%s3 + $0x20] sm:$0xff]
        %v594 = vld [vmem:[%s3 + $0x28] sm:$0xff]
        %v595 = vld [vmem:[%s3 + $0x30] sm:$0xff]
        %v596 = vld [vmem:[%s3 + $0x38] sm:$0xff]
        %v597 = vld [vmem:[%s3 + $0x40] sm:$0xff]
        %v598 = vld [vmem:[%s3 + $0x48] sm:$0xff]
        %v599 = vld [vmem:[%s3 + $0x50] sm:$0xff]
        %v600 = vld [vmem:[%s3 + $0x58] sm:$0xff]
        %v601 = vld [vmem:[%s3 + $0x60] sm:$0xff]
        %v602 = vld [vmem:[%s3 + $0x68] sm:$0xff]
        %v603 = vld [vmem:[%s3 + $0x70] sm:$0xff]
        %v604 = vld [vmem:[%s3 + $0x78] sm:$0xff]
        %v605 = vld [vmem:[%s3 + $0x80] sm:$0xff]
        %v606 = vld [vmem:[%s3 + $0x88] sm:$0xff]
        %v607 = vld [vmem:[%s3 + $0x90] sm:$0xff]
        %v608 = vld [vmem:[%s3 + $0x98] sm:$0xff]
        %v609 = vld [vmem:[%s3 + $0xa0] sm:$0xff]
        %v610 = vld [vmem:[%s3 + $0xa8] sm:$0xff]
        %v611 = vld [vmem:[%s3 + $0xb0] sm:$0xff]
        %v612 = vld [vmem:[%s3 + $0xb8] sm:$0xff]
        %v613 = vld [vmem:[%s3 + $0xc0] sm:$0xff]
        %v614 = vld [vmem:[%s3 + $0xc8] sm:$0xff]
        %v615 = vld [vmem:[%s3 + $0xd0] sm:$0xff]
        %v616 = vld [vmem:[%s3 + $0xd8] sm:$0xff]
        %v617 = vld [vmem:[%s3 + $0xe0] sm:$0xff]
        %v618 = vld [vmem:[%s3 + $0xe8] sm:$0xff]
        %v619 = vld [vmem:[%s3 + $0xf0] sm:$0xff]
        %v620 = vld [vmem:[%s3 + $0xf8] sm:$0xff]
        %v621 = vld [vmem:[%s3 + $0x100] sm:$0xff]
        %v622 = vld [vmem:[%s3 + $0x108] sm:$0xff]
        %624 = vset.pattern.permute.xlu0 0
        %625 = vperm.xlu0 %624, %v589
        %v626 = vpop.permute.xlu0 %625
        %629 = vset.pattern.permute.xlu0 0
        %630 = vperm.xlu0 %629, %v590
        %v631 = vpop.permute.xlu0 %630
        %634 = vset.pattern.permute.xlu0 0
        %635 = vperm.xlu0 %634, %v591
        %v636 = vpop.permute.xlu0 %635
        %639 = vset.pattern.permute.xlu0 0
        %640 = vperm.xlu0 %639, %v592
        %v641 = vpop.permute.xlu0 %640
        %644 = vset.pattern.permute.xlu0 0
        %645 = vperm.xlu0 %644, %v593
        %v646 = vpop.permute.xlu0 %645
        %649 = vset.pattern.permute.xlu0 0
        %650 = vperm.xlu0 %649, %v594
        %v651 = vpop.permute.xlu0 %650
        %654 = vset.pattern.permute.xlu0 0
        %655 = vperm.xlu0 %654, %v595
        %v656 = vpop.permute.xlu0 %655
        %659 = vset.pattern.permute.xlu0 0
        %660 = vperm.xlu0 %659, %v596
        %v661 = vpop.permute.xlu0 %660
        %664 = vset.pattern.permute.xlu0 0
        %665 = vperm.xlu0 %664, %v597
        %v666 = vpop.permute.xlu0 %665
        %669 = vset.pattern.permute.xlu0 0
        %670 = vperm.xlu0 %669, %v598
        %v671 = vpop.permute.xlu0 %670
        %674 = vset.pattern.permute.xlu0 0
        %675 = vperm.xlu0 %674, %v599
        %v676 = vpop.permute.xlu0 %675
        %679 = vset.pattern.permute.xlu0 0
        %680 = vperm.xlu0 %679, %v600
        %v681 = vpop.permute.xlu0 %680
        %684 = vset.pattern.permute.xlu0 0
        %685 = vperm.xlu0 %684, %v601
        %v686 = vpop.permute.xlu0 %685
        %689 = vset.pattern.permute.xlu0 0
        %690 = vperm.xlu0 %689, %v602
        %v691 = vpop.permute.xlu0 %690
        %694 = vset.pattern.permute.xlu0 0
        %695 = vperm.xlu0 %694, %v603
        %v696 = vpop.permute.xlu0 %695
        %699 = vset.pattern.permute.xlu0 0
        %700 = vperm.xlu0 %699, %v604
        %v701 = vpop.permute.xlu0 %700
        %704 = vset.pattern.permute.xlu0 0
        %705 = vperm.xlu0 %704, %v605
        %v706 = vpop.permute.xlu0 %705
        %709 = vset.pattern.permute.xlu0 0
        %710 = vperm.xlu0 %709, %v606
        %v711 = vpop.permute.xlu0 %710
        %714 = vset.pattern.permute.xlu0 0
        %715 = vperm.xlu0 %714, %v607
        %v716 = vpop.permute.xlu0 %715
        %719 = vset.pattern.permute.xlu0 0
        %720 = vperm.xlu0 %719, %v608
        %v721 = vpop.permute.xlu0 %720
        %724 = vset.pattern.permute.xlu0 0
        %725 = vperm.xlu0 %724, %v609
        %v726 = vpop.permute.xlu0 %725
        %729 = vset.pattern.permute.xlu0 0
        %730 = vperm.xlu0 %729, %v610
        %v731 = vpop.permute.xlu0 %730
        %734 = vset.pattern.permute.xlu0 0
        %735 = vperm.xlu0 %734, %v611
        %v736 = vpop.permute.xlu0 %735
        %739 = vset.pattern.permute.xlu0 0
        %740 = vperm.xlu0 %739, %v612
        %v741 = vpop.permute.xlu0 %740
        %744 = vset.pattern.permute.xlu0 0
        %745 = vperm.xlu0 %744, %v613
        %v746 = vpop.permute.xlu0 %745
        %749 = vset.pattern.permute.xlu0 0
        %750 = vperm.xlu0 %749, %v614
        %v751 = vpop.permute.xlu0 %750
        %754 = vset.pattern.permute.xlu0 0
        %755 = vperm.xlu0 %754, %v615
        %v756 = vpop.permute.xlu0 %755
        %759 = vset.pattern.permute.xlu0 0
        %760 = vperm.xlu0 %759, %v616
        %v761 = vpop.permute.xlu0 %760
        %764 = vset.pattern.permute.xlu0 0
        %765 = vperm.xlu0 %764, %v617
        %v766 = vpop.permute.xlu0 %765
        %769 = vset.pattern.permute.xlu0 0
        %770 = vperm.xlu0 %769, %v618
        %v771 = vpop.permute.xlu0 %770
        %774 = vset.pattern.permute.xlu0 0
        %775 = vperm.xlu0 %774, %v619
        %v776 = vpop.permute.xlu0 %775
        %779 = vset.pattern.permute.xlu0 0
        %780 = vperm.xlu0 %779, %v620
        %v781 = vpop.permute.xlu0 %780
        %784 = vset.pattern.permute.xlu0 0
        %785 = vperm.xlu0 %784, %v621
        %v786 = vpop.permute.xlu0 %785
        %789 = vset.pattern.permute.xlu0 0
        %790 = vperm.xlu0 %789, %v622
        %v791 = vpop.permute.xlu0 %790
        %v793 = vmul.f32 %v385, %v626
        %v794 = vmul.f32 %v386, %v631
        %v795 = vmul.f32 %v387, %v636
        %v796 = vmul.f32 %v388, %v641
        %v797 = vmul.f32 %v389, %v646
        %v798 = vmul.f32 %v390, %v651
        %v799 = vmul.f32 %v391, %v656
        %v800 = vmul.f32 %v392, %v661
        %v801 = vmul.f32 %v393, %v666
        %v802 = vmul.f32 %v394, %v671
        %v803 = vmul.f32 %v395, %v676
        %v804 = vmul.f32 %v396, %v681
        %v805 = vmul.f32 %v397, %v686
        %v806 = vmul.f32 %v398, %v691
        %v807 = vmul.f32 %v399, %v696
        %v808 = vmul.f32 %v400, %v701
        %v809 = vmul.f32 %v401, %v706
        %v810 = vmul.f32 %v402, %v711
        %v811 = vmul.f32 %v403, %v716
        %v812 = vmul.f32 %v404, %v721
        %v813 = vmul.f32 %v405, %v726
        %v814 = vmul.f32 %v406, %v731
        %v815 = vmul.f32 %v407, %v736
        %v816 = vmul.f32 %v408, %v741
        %v817 = vmul.f32 %v409, %v746
        %v818 = vmul.f32 %v410, %v751
        %v819 = vmul.f32 %v411, %v756
        %v820 = vmul.f32 %v412, %v761
        %v821 = vmul.f32 %v413, %v766
        %v822 = vmul.f32 %v414, %v771
        %v823 = vmul.f32 %v415, %v776
        %v824 = vmul.f32 %v416, %v781
        %v825 = vmul.f32 %v417, %v786
        %v826 = vmul.f32 %v418, %v791
        %v827 = vadd.f32 %v793, %v794
        %v828 = vadd.f32 %v827, %v795
        %v829 = vadd.f32 %v828, %v796
        %v830 = vadd.f32 %v829, %v797
        %v831 = vadd.f32 %v830, %v798
        %v832 = vadd.f32 %v831, %v799
        %v833 = vadd.f32 %v832, %v800
        %v834 = vadd.f32 %v833, %v801
        %v835 = vadd.f32 %v834, %v802
        %v836 = vadd.f32 %v835, %v803
        %v837 = vadd.f32 %v836, %v804
        %v838 = vadd.f32 %v837, %v805
        %v839 = vadd.f32 %v838, %v806
        %v840 = vadd.f32 %v839, %v807
        %v841 = vadd.f32 %v840, %v808
        %v842 = vadd.f32 %v841, %v809
        %v843 = vadd.f32 %v842, %v810
        %v844 = vadd.f32 %v843, %v811
        %v845 = vadd.f32 %v844, %v812
        %v846 = vadd.f32 %v845, %v813
        %v847 = vadd.f32 %v846, %v814
        %v848 = vadd.f32 %v847, %v815
        %v849 = vadd.f32 %v848, %v816
        %v850 = vadd.f32 %v849, %v817
        %v851 = vadd.f32 %v850, %v818
        %v852 = vadd.f32 %v851, %v819
        %v853 = vadd.f32 %v852, %v820
        %v854 = vadd.f32 %v853, %v821
        %v855 = vadd.f32 %v854, %v822
        %v856 = vadd.f32 %v855, %v823
        %v857 = vadd.f32 %v856, %v824
        %v858 = vadd.f32 %v857, %v825
        %v859 = vadd.f32 %v858, %v826
        %v860 = vrot.slane %v859, 4
        %v861 = vadd.f32 %v859, %v860
        %v862 = vrot.slane %v861, 2
        %v863 = vadd.f32 %v861, %v862
        %v864 = vrot.slane %v863, 1
        %v865 = vadd.f32 %v863, %v864
        %866 = vst [vmem:[%s224] sm:$0x1] %v865
        %p867 = scmp.lt.s32.totalorder %s20, 1
        %s868 = scalar_select %p867, %s20, 1
        %s869 = smul.addr %s868, 34
        %s870 = smul.addr %s869, 4
        %s871 = scalar_lea.vmem %s4, %s870
        %s872 = sand.u32 %s143, 1
        %s873 = scalar_lea.sflag [#allocation3], %s872
        %s874 = sand.u32 %s143, 1
        %s875 = scalar_lea.vmem [#allocation2], %s874
        // Predicated region
        $region37: #{linnet_d_forward.10} parent=35 // pred_check
          %p876 = pneg %p127
        $region38: #{linnet_d_forward.10} parent=35 // pred_check_branch
          %878 = sbr.rel (%p876) target = $region40
        $region39: #{linnet_d_forward.10} parent=35 // pred_region
          _
        $region40: #{linnet_d_forward.10} parent=35 // pred_fallthru
          _
        // Predicated region
        $region41: #{linnet_d_forward.10} parent=35 // pred_check
          %p879 = pneg %p153
        $region42: #{linnet_d_forward.10} parent=35 // pred_check_branch
          %881 = sbr.rel (%p879) target = $region44
        $region43: #{linnet_d_forward.10} parent=35 // pred_region
          %s883 = ssub.s32 16, 16
          %884 = vsyncadd %s873, %s883
          %s885 = smul.addr %s20, 16
          %s886 = scalar_lea.hbm %s5, %s885
          %s888 = sshll.u32 %s875, 4
          %s889 = int_to_ptr.vmem [resolvable:$true] %s888
          %891 = dma.vmem_to_hbm [thread:$0]  %s889, 16, %s886, %s873
        $region44: #{linnet_d_forward.10} parent=35 // pred_fallthru
          _
      $region36: #{linnet_d_forward.10} parent=5 // pred_fallthru
        _
      %p892 = scmp.le.s32.totalorder 2, %s15
      // Predicated region
      $region45: #{linnet_d_forward.10} parent=5 // pred_check
        %p893 = pneg %p892
      $region46: #{linnet_d_forward.10} parent=5 // pred_check_branch
        %895 = sbr.rel (%p893) target = $region48
      $region47: #{linnet_d_forward.10} parent=5 // pred_region
        %s896 = ssub.s32 %s15, 2
        // Predicated region
        $region49: #{linnet_d_forward.10} parent=47 // pred_check
          %p897 = pneg %p133
        $region50: #{linnet_d_forward.10} parent=47 // pred_check_branch
          %899 = sbr.rel (%p897) target = $region52
        $region51: #{linnet_d_forward.10} parent=47 // pred_region
          %p900 = scmp.lt.s32.totalorder %s21, 1
          %s901 = scalar_select %p900, %s21, 1
          %s902 = smul.addr %s901, 34
          %s903 = smul.addr %s902, 4
          %s904 = scalar_lea.vmem %s4, %s903
        $region52: #{linnet_d_forward.10} parent=47 // pred_fallthru
          _
        // Predicated region
        $region53: #{linnet_d_forward.10} parent=47 // pred_check
          %p905 = pneg %p159
        $region54: #{linnet_d_forward.10} parent=47 // pred_check_branch
          %907 = sbr.rel (%p905) target = $region56
        $region55: #{linnet_d_forward.10} parent=47 // pred_region
          %s908 = sand.u32 %s144, 1
          %s909 = scalar_lea.sflag [#allocation3], %s908
          %s910 = sand.u32 %s144, 1
          %s911 = scalar_lea.vmem [#allocation2], %s910
          %912 = dma.done %s909, 16
        $region56: #{linnet_d_forward.10} parent=47 // pred_fallthru
          _
      $region48: #{linnet_d_forward.10} parent=5 // pred_fallthru
        _
    $region6: #{linnet_d_forward.10} parent=1 // loop_footer
      %s19 = sadd.s32 1, %s15
    $region7: #{linnet_d_forward.10} parent=1 // loop_footer_branch
      %14 = sbr.rel target = $region3
    $region8: #{linnet_d_forward.10} parent=1 // loop_exit
      _
    %913 = vsyncpa [#allocation3], 1
    %s914 = scalar_lea.sflag [#allocation3], 1
    %915 = vsyncpa %s914, 1

// kernel: linnet_d_forward.9
$region0: #{linnet_d_forward.9}
  #allocation0 [shape = 'u32[]', space=smem, size = 0x4, offset = 0x4, fixed_abs, tag = 'smem constant byte address 0x4 - core index']
  #allocation1 [shape = 'u32[144,128]{1,0:T(1,128)}', space=vmem, size = 0x12000, scoped, tag = 'internal scratch']
  %s0 = inlined_call_operand.vmem [shape: bf16[2,296,4], index: 0, kind: input, shape index: {}]
  %s1 = inlined_call_operand.vmem [shape: bf16[4,4,128], index: 1, kind: input, shape index: {}]
  %s2 = inlined_call_operand.vmem [shape: f32[272,1], index: 2, kind: input, shape index: {}]
  %s3 = inlined_call_operand.vmem [shape: f32[2,272,128], index: 3, kind: output, shape index: {0}]
  %s4 = inlined_call_operand.vmem [shape: f32[2,1,128], index: 4, kind: output, shape index: {1}]
  %s5 = inlined_call_operand.vmem [shape: f32[2,1,128], index: 5, kind: output, shape index: {2}]
  %6 = xla_tuple %s3, %s4, %s5
  %s7 = sld [smem:[#allocation0]]
  $region61: #{linnet_d_forward.9} parent=0
    _
  %s9 = ssub.s32 1, %s7
  %s10 = scalar_select 0, %s9, %s7
  loop: start=0, step=1, limit=4
  $region2: #{linnet_d_forward.9} parent=0 // loop_pre_header
    _
  $region3: #{linnet_d_forward.9} parent=0 // loop_header
    %s12 = sphi 0, %s16
    %p13 = scmp.ge.s32.totalorder %s12, 4
    %s22 = sphi 0, %s24
    %s25 = sphi 0, %s22
    %s26 = sphi 0, %s25
    %s42 = sphi 0, %s26
    %s46 = sphi 0, %s46
    %s48 = sphi 0, %s46
    %s49 = sphi 0, %s48
    %s63 = sphi 0, %s49
    %s67 = sphi 0, %s67
    %s69 = sphi 0, %s67
    %s70 = sphi 0, %s69
    %s84 = sphi 0, %s70
    %s90 = sphi 0, %s92
    %s93 = sphi 0, %s90
    %s94 = sphi 0, %s93
    %s110 = sphi 0, %s94
    %s116 = sphi 0, %s118
    %s119 = sphi 0, %s116
    %s120 = sphi 0, %s119
    %s136 = sphi 0, %s120
    %s142 = sphi 0, %s144
    %s145 = sphi 0, %s142
    %s146 = sphi 0, %s145
    %s162 = sphi 0, %s146
  $region4: #{linnet_d_forward.9} parent=0 // loop_header_branch
    %15 = sbr.rel (%p13) target = $region8
  $region5: #{linnet_d_forward.9} parent=0 // loop_body
    %s17 = ssub.s32 %s12, 1
    %s18 = ssub.s32 %s12, 2
    %s19 = sadd.s32 %s12, 1
    %s20 = ssub.s32 %s12, %s19
    %p21 = scmp.eq.s32.totalorder %s20, 0
    %s23 = sadd.s32 %s22, 1
    %s24 = scalar_select %p21, %s22, %s23
    %p27 = pneg %p21
    %p28 = scmp.eq.s32.totalorder %s12, 1
    %p29 = por %p27, %p28
    %p30 = scmp.ne.s32.totalorder %s22, %s25
    %p31 = scmp.eq.s32.totalorder %s12, 0
    %p32 = por %p30, %p31
    %p33 = scmp.ne.s32.totalorder %s22, %s25
    %p34 = scmp.eq.s32.totalorder %s17, 1
    %p35 = por %p33, %p34
    %p36 = scmp.ne.s32.totalorder %s25, %s26
    %p37 = scmp.eq.s32.totalorder %s17, 0
    %p38 = por %p36, %p37
    %p39 = scmp.ne.s32.totalorder %s25, %s26
    %p40 = scmp.eq.s32.totalorder %s18, 1
    %p41 = por %p39, %p40
    %p43 = scmp.ne.s32.totalorder %s26, %s42
    %p44 = scmp.eq.s32.totalorder %s18, 0
    %p45 = por %p43, %p44
    %s47 = sadd.s32 %s46, 1
    %p50 = scmp.eq.s32.totalorder %s12, 1
    %p51 = scmp.ne.s32.totalorder %s46, %s48
    %p52 = scmp.eq.s32.totalorder %s12, 0
    %p53 = por %p51, %p52
    %p54 = scmp.ne.s32.totalorder %s46, %s48
    %p55 = scmp.eq.s32.totalorder %s17, 1
    %p56 = por %p54, %p55
    %p57 = scmp.ne.s32.totalorder %s48, %s49
    %p58 = scmp.eq.s32.totalorder %s17, 0
    %p59 = por %p57, %p58
    %p60 = scmp.ne.s32.totalorder %s48, %s49
    %p61 = scmp.eq.s32.totalorder %s18, 1
    %p62 = por %p60, %p61
    %p64 = scmp.ne.s32.totalorder %s49, %s63
    %p65 = scmp.eq.s32.totalorder %s18, 0
    %p66 = por %p64, %p65
    %s68 = sadd.s32 %s67, 1
    %p71 = scmp.eq.s32.totalorder %s12, 1
    %p72 = scmp.ne.s32.totalorder %s67, %s69
    %p73 = scmp.eq.s32.totalorder %s12, 0
    %p74 = por %p72, %p73
    %p75 = scmp.ne.s32.totalorder %s67, %s69
    %p76 = scmp.eq.s32.totalorder %s17, 1
    %p77 = por %p75, %p76
    %p78 = scmp.ne.s32.totalorder %s69, %s70
    %p79 = scmp.eq.s32.totalorder %s17, 0
    %p80 = por %p78, %p79
    %p81 = scmp.ne.s32.totalorder %s69, %s70
    %p82 = scmp.eq.s32.totalorder %s18, 1
    %p83 = por %p81, %p82
    %p85 = scmp.ne.s32.totalorder %s70, %s84
    %p86 = scmp.eq.s32.totalorder %s18, 0
    %p87 = por %p85, %p86
    %s88 = ssub.s32 %s12, %s19
    %p89 = scmp.eq.s32.totalorder %s88, 0
    %s91 = sadd.s32 %s90, 1
    %s92 = scalar_select %p89, %s90, %s91
    %p95 = pneg %p89
    %p96 = scmp.eq.s32.totalorder %s12, 1
    %p97 = por %p95, %p96
    %p98 = scmp.ne.s32.totalorder %s90, %s93
    %p99 = scmp.eq.s32.totalorder %s12, 0
    %p100 = por %p98, %p99
    %p101 = scmp.ne.s32.totalorder %s90, %s93
    %p102 = scmp.eq.s32.totalorder %s17, 1
    %p103 = por %p101, %p102
    %p104 = scmp.ne.s32.totalorder %s93, %s94
    %p105 = scmp.eq.s32.totalorder %s17, 0
    %p106 = por %p104, %p105
    %p107 = scmp.ne.s32.totalorder %s93, %s94
    %p108 = scmp.eq.s32.totalorder %s18, 1
    %p109 = por %p107, %p108
    %p111 = scmp.ne.s32.totalorder %s94, %s110
    %p112 = scmp.eq.s32.totalorder %s18, 0
    %p113 = por %p111, %p112
    %s114 = ssub.s32 %s12, %s19
    %p115 = scmp.eq.s32.totalorder %s114, 0
    %s117 = sadd.s32 %s116, 1
    %s118 = scalar_select %p115, %s116, %s117
    %p121 = pneg %p115
    %p122 = scmp.eq.s32.totalorder %s12, 1
    %p123 = por %p121, %p122
    %p124 = scmp.ne.s32.totalorder %s116, %s119
    %p125 = scmp.eq.s32.totalorder %s12, 0
    %p126 = por %p124, %p125
    %p127 = scmp.ne.s32.totalorder %s116, %s119
    %p128 = scmp.eq.s32.totalorder %s17, 1
    %p129 = por %p127, %p128
    %p130 = scmp.ne.s32.totalorder %s119, %s120
    %p131 = scmp.eq.s32.totalorder %s17, 0
    %p132 = por %p130, %p131
    %p133 = scmp.ne.s32.totalorder %s119, %s120
    %p134 = scmp.eq.s32.totalorder %s18, 1
    %p135 = por %p133, %p134
    %p137 = scmp.ne.s32.totalorder %s120, %s136
    %p138 = scmp.eq.s32.totalorder %s18, 0
    %p139 = por %p137, %p138
    %s140 = ssub.s32 %s12, %s19
    %p141 = scmp.eq.s32.totalorder %s140, 0
    %s143 = sadd.s32 %s142, 1
    %s144 = scalar_select %p141, %s142, %s143
    %p147 = pneg %p141
    %p148 = scmp.eq.s32.totalorder %s12, 1
    %p149 = por %p147, %p148
    %p150 = scmp.ne.s32.totalorder %s142, %s145
    %p151 = scmp.eq.s32.totalorder %s12, 0
    %p152 = por %p150, %p151
    %p153 = scmp.ne.s32.totalorder %s142, %s145
    %p154 = scmp.eq.s32.totalorder %s17, 1
    %p155 = por %p153, %p154
    %p156 = scmp.ne.s32.totalorder %s145, %s146
    %p157 = scmp.eq.s32.totalorder %s17, 0
    %p158 = por %p156, %p157
    %p159 = scmp.ne.s32.totalorder %s145, %s146
    %p160 = scmp.eq.s32.totalorder %s18, 1
    %p161 = por %p159, %p160
    %p163 = scmp.ne.s32.totalorder %s146, %s162
    %p164 = scmp.eq.s32.totalorder %s18, 0
    %p165 = por %p163, %p164
    %p166 = scmp.le.s32.totalorder 1, %s12
    %p167 = scmp.lt.s32.totalorder %s12, 3
    %p168 = pnand %p166, %p167
    %p169 = pneg %p168
    // Predicated region
    $region9: #{linnet_d_forward.9} parent=5 // pred_check
      _
    $region10: #{linnet_d_forward.9} parent=5 // pred_check_branch
      %171 = sbr.rel (%p168) target = $region12
    $region11: #{linnet_d_forward.9} parent=5 // pred_region
      %s172 = ssub.s32 %s12, 1
      // Predicated region
      $region13: #{linnet_d_forward.9} parent=11 // pred_check
        %p173 = pneg %p59
      $region14: #{linnet_d_forward.9} parent=11 // pred_check_branch
        %175 = sbr.rel (%p173) target = $region16
      $region15: #{linnet_d_forward.9} parent=11 // pred_region
        _
      $region16: #{linnet_d_forward.9} parent=11 // pred_fallthru
        _
      // Predicated region
      $region17: #{linnet_d_forward.9} parent=11 // pred_check
        %p176 = pneg %p80
      $region18: #{linnet_d_forward.9} parent=11 // pred_check_branch
        %178 = sbr.rel (%p176) target = $region20
      $region19: #{linnet_d_forward.9} parent=11 // pred_region
        _
      $region20: #{linnet_d_forward.9} parent=11 // pred_fallthru
        _
    $region12: #{linnet_d_forward.9} parent=5 // pred_fallthru
      _
    %p179 = scmp.lt.s32.totalorder %s12, 2
    // Predicated region
    $region21: #{linnet_d_forward.9} parent=5 // pred_check
      %p180 = pneg %p179
    $region22: #{linnet_d_forward.9} parent=5 // pred_check_branch
      %182 = sbr.rel (%p180) target = $region24
    $region23: #{linnet_d_forward.9} parent=5 // pred_region
      // Predicated region
      $region25: #{linnet_d_forward.9} parent=23 // pred_check
        %p183 = pneg %p32
      $region26: #{linnet_d_forward.9} parent=23 // pred_check_branch
        %185 = sbr.rel (%p183) target = $region28
      $region27: #{linnet_d_forward.9} parent=23 // pred_region
        %p186 = scmp.lt.s32.totalorder %s12, 1
        %s187 = scalar_select %p186, %s12, 1
        %s188 = smul.addr %s187, 37
        %s189 = smul.addr %s188, 4
        %s190 = scalar_lea.vmem %s0, %s189
      $region28: #{linnet_d_forward.9} parent=23 // pred_fallthru
        _
    $region24: #{linnet_d_forward.9} parent=5 // pred_fallthru
      _
    %p191 = scmp.le.s32.totalorder 1, %s12
    %p192 = scmp.lt.s32.totalorder %s12, 3
    %p193 = pnand %p191, %p192
    %p194 = pneg %p193
    // Predicated region
    $region29: #{linnet_d_forward.9} parent=5 // pred_check
      _
    $region30: #{linnet_d_forward.9} parent=5 // pred_check_branch
      %196 = sbr.rel (%p193) target = $region32
    $region31: #{linnet_d_forward.9} parent=5 // pred_region
      %s197 = ssub.s32 %s12, 1
      %p198 = scmp.lt.s32.totalorder %s17, 1
      %s199 = scalar_select %p198, %s17, 1
      %s200 = smul.addr %s199, 37
      %s201 = smul.addr %s200, 4
      %s202 = scalar_lea.vmem %s0, %s201
      %p203 = pneg %p38
      %p204 = pneg %p35
      %p205 = pneg %p59
      %p206 = pneg %p56
      %p207 = pneg %p80
      %p208 = pneg %p77
      %p209 = pneg %p106
      %p210 = pneg %p103
      %p211 = scmp.lt.s32.totalorder %s17, 1
      %s212 = scalar_select %p211, %s17, 1
      %s213 = smul.addr %s212, 34
      %s214 = smul.addr %s213, 8
      %s215 = scalar_lea.vmem %s3, %s214
      %p216 = pneg %p132
      %p217 = pneg %p129
      %p218 = scmp.lt.s32.totalorder %s17, 1
      %s219 = scalar_select %p218, %s17, 1
      %s220 = scalar_lea.vmem %s4, %s219
      %p221 = pneg %p158
      %p222 = pneg %p155
      %p223 = scmp.lt.s32.totalorder %s17, 1
      %s224 = scalar_select %p223, %s17, 1
      %s225 = scalar_lea.vmem %s5, %s224
      %p226 = scmp.lt.s32.totalorder %s17, 1
      %s227 = scalar_select %p226, %s17, 1
      %s228 = smul.addr %s227, 37
      %s229 = smul.addr %s228, 4
      %s230 = scalar_lea.vmem %s0, %s229
      %p231 = scmp.lt.s32.totalorder %s17, 1
      %s232 = scalar_select %p231, %s17, 1
      %s233 = smul.addr %s232, 34
      %s234 = smul.addr %s233, 8
      %s235 = scalar_lea.vmem %s3, %s234
      %p236 = scmp.lt.s32.totalorder %s17, 1
      %s237 = scalar_select %p236, %s17, 1
      %s238 = scalar_lea.vmem %s4, %s237
      %p239 = scmp.lt.s32.totalorder %s17, 1
      %s240 = scalar_select %p239, %s17, 1
      %s241 = scalar_lea.vmem %s5, %s240
      %v243 = vld [vmem:[%s230] sm:$0xf]
      %v244 = vld [vmem:[%s230 + $0x4] sm:$0xf]
      %v245 = vld [vmem:[%s230 + $0x8] sm:$0xf]
      %v246 = vld [vmem:[%s230 + $0xc] sm:$0xf]
      %v247 = vld [vmem:[%s230 + $0x10] sm:$0xf]
      %v248 = vld [vmem:[%s230 + $0x14] sm:$0xf]
      %v249 = vld [vmem:[%s230 + $0x18] sm:$0xf]
      %v250 = vld [vmem:[%s230 + $0x1c] sm:$0xf]
      %v251 = vld [vmem:[%s230 + $0x20] sm:$0xf]
      %v252 = vld [vmem:[%s230 + $0x24] sm:$0xf]
      %v253 = vld [vmem:[%s230 + $0x28] sm:$0xf]
      %v254 = vld [vmem:[%s230 + $0x2c] sm:$0xf]
      %v255 = vld [vmem:[%s230 + $0x30] sm:$0xf]
      %v256 = vld [vmem:[%s230 + $0x34] sm:$0xf]
      %v257 = vld [vmem:[%s230 + $0x38] sm:$0xf]
      %v258 = vld [vmem:[%s230 + $0x3c] sm:$0xf]
      %v259 = vld [vmem:[%s230 + $0x40] sm:$0xf]
      %v260 = vld [vmem:[%s230 + $0x44] sm:$0xf]
      %v261 = vld [vmem:[%s230 + $0x48] sm:$0xf]
      %v262 = vld [vmem:[%s230 + $0x4c] sm:$0xf]
      %v263 = vld [vmem:[%s230 + $0x50] sm:$0xf]
      %v264 = vld [vmem:[%s230 + $0x54] sm:$0xf]
      %v265 = vld [vmem:[%s230 + $0x58] sm:$0xf]
      %v266 = vld [vmem:[%s230 + $0x5c] sm:$0xf]
      %v267 = vld [vmem:[%s230 + $0x60] sm:$0xf]
      %v268 = vld [vmem:[%s230 + $0x64] sm:$0xf]
      %v269 = vld [vmem:[%s230 + $0x68] sm:$0xf]
      %v270 = vld [vmem:[%s230 + $0x6c] sm:$0xf]
      %v271 = vld [vmem:[%s230 + $0x70] sm:$0xf]
      %v272 = vld [vmem:[%s230 + $0x74] sm:$0xf]
      %v273 = vld [vmem:[%s230 + $0x78] sm:$0xf]
      %v274 = vld [vmem:[%s230 + $0x7c] sm:$0xf]
      %v275 = vld [vmem:[%s230 + $0x80] sm:$0xf]
      %v276 = vld [vmem:[%s230 + $0x84] sm:$0xf]
      %v277 = vld [vmem:[%s230 + $0x88] sm:$0xf]
      %v278 = vld [vmem:[%s230 + $0x8c] sm:$0xf]
      %v279 = vld [vmem:[%s230 + $0x90] sm:$0xf]
      %v280 = vld [vmem:[%s1] sm:$0x3]
      %s281 = scalar_lea.vmem %s1, 2
      %v282 = vld [vmem:[%s281] sm:$0x3]
      %v318 = vunpack.c.l.b16 %v243
      %v319 = vunpack.c.l.b16 %v244
      %v320 = vunpack.c.l.b16 %v245
      %v321 = vunpack.c.l.b16 %v246
      %v322 = vunpack.c.l.b16 %v247
      %v323 = vunpack.c.l.b16 %v248
      %v324 = vunpack.c.l.b16 %v249
      %v325 = vunpack.c.l.b16 %v250
      %v326 = vunpack.c.l.b16 %v251
      %v327 = vunpack.c.l.b16 %v252
      %v328 = vunpack.c.l.b16 %v253
      %v329 = vunpack.c.l.b16 %v254
      %v330 = vunpack.c.l.b16 %v255
      %v331 = vunpack.c.l.b16 %v256
      %v332 = vunpack.c.l.b16 %v257
      %v333 = vunpack.c.l.b16 %v258
      %v334 = vunpack.c.l.b16 %v259
      %v335 = vunpack.c.l.b16 %v260
      %v336 = vunpack.c.l.b16 %v261
      %v337 = vunpack.c.l.b16 %v262
      %v338 = vunpack.c.l.b16 %v263
      %v339 = vunpack.c.l.b16 %v264
      %v340 = vunpack.c.l.b16 %v265
      %v341 = vunpack.c.l.b16 %v266
      %v342 = vunpack.c.l.b16 %v267
      %v343 = vunpack.c.l.b16 %v268
      %v344 = vunpack.c.l.b16 %v269
      %v345 = vunpack.c.l.b16 %v270
      %v346 = vunpack.c.l.b16 %v271
      %v347 = vunpack.c.l.b16 %v272
      %v348 = vunpack.c.l.b16 %v273
      %v349 = vunpack.c.l.b16 %v274
      %v350 = vunpack.c.l.b16 %v275
      %v351 = vunpack.c.l.b16 %v276
      %v352 = vunpack.c.l.b16 %v277
      %v353 = vpack.c.b16 %v319, %v318
      %v354 = vpack.c.b16 %v321, %v320
      %v355 = vpack.c.b16 %v323, %v322
      %v356 = vpack.c.b16 %v325, %v324
      %v357 = vpack.c.b16 %v327, %v326
      %v358 = vpack.c.b16 %v329, %v328
      %v359 = vpack.c.b16 %v331, %v330
      %v360 = vpack.c.b16 %v333, %v332
      %v361 = vpack.c.b16 %v335, %v334
      %v362 = vpack.c.b16 %v337, %v336
      %v363 = vpack.c.b16 %v339, %v338
      %v364 = vpack.c.b16 %v341, %v340
      %v365 = vpack.c.b16 %v343, %v342
      %v366 = vpack.c.b16 %v345, %v344
      %v367 = vpack.c.b16 %v347, %v346
      %v368 = vpack.c.b16 %v349, %v348
      %v369 = vpack.c.b16 %v351, %v350
      %v370 = vpack.c.b16 %v352, %v352
      %vm371 = vsmask.f32 7424
      %v373 = vshrl.u32 %v353, 16
      %v375 = vshll.u32 %v353, 16
      %v377 = vrot.slane %v375, 1
      %v378 = vor.u32 %v373, %v377
      %v380 = vshll.u32 %v354, 16
      %v382 = vrot.slane %v380, 1
      %v383 = vsel %vm371, %v378, %v382
      %v384 = vshrl.u32 %v354, 16
      %v386 = vor.u32 %v384, %v382
      %v388 = vshll.u32 %v355, 16
      %v390 = vrot.slane %v388, 1
      %v391 = vsel %vm371, %v386, %v390
      %v392 = vshrl.u32 %v355, 16
      %v394 = vor.u32 %v392, %v390
      %v396 = vshll.u32 %v356, 16
      %v398 = vrot.slane %v396, 1
      %v399 = vsel %vm371, %v394, %v398
      %v400 = vshrl.u32 %v356, 16
      %v402 = vor.u32 %v400, %v398
      %v404 = vshll.u32 %v357, 16
      %v406 = vrot.slane %v404, 1
      %v407 = vsel %vm371, %v402, %v406
      %v408 = vshrl.u32 %v357, 16
      %v410 = vor.u32 %v408, %v406
      %v412 = vshll.u32 %v358, 16
      %v414 = vrot.slane %v412, 1
      %v415 = vsel %vm371, %v410, %v414
      %v416 = vshrl.u32 %v358, 16
      %v418 = vor.u32 %v416, %v414
      %v420 = vshll.u32 %v359, 16
      %v422 = vrot.slane %v420, 1
      %v423 = vsel %vm371, %v418, %v422
      %v424 = vshrl.u32 %v359, 16
      %v426 = vor.u32 %v424, %v422
      %v428 = vshll.u32 %v360, 16
      %v430 = vrot.slane %v428, 1
      %v431 = vsel %vm371, %v426, %v430
      %v432 = vshrl.u32 %v360, 16
      %v434 = vor.u32 %v432, %v430
      %v436 = vshll.u32 %v361, 16
      %v438 = vrot.slane %v436, 1
      %v439 = vsel %vm371, %v434, %v438
      %v440 = vshrl.u32 %v361, 16
      %v442 = vor.u32 %v440, %v438
      %v444 = vshll.u32 %v362, 16
      %v446 = vrot.slane %v444, 1
      %v447 = vsel %vm371, %v442, %v446
      %v448 = vshrl.u32 %v362, 16
      %v450 = vor.u32 %v448, %v446
      %v452 = vshll.u32 %v363, 16
      %v454 = vrot.slane %v452, 1
      %v455 = vsel %vm371, %v450, %v454
      %v456 = vshrl.u32 %v363, 16
      %v458 = vor.u32 %v456, %v454
      %v460 = vshll.u32 %v364, 16
      %v462 = vrot.slane %v460, 1
      %v463 = vsel %vm371, %v458, %v462
      %v464 = vshrl.u32 %v364, 16
      %v466 = vor.u32 %v464, %v462
      %v468 = vshll.u32 %v365, 16
      %v470 = vrot.slane %v468, 1
      %v471 = vsel %vm371, %v466, %v470
      %v472 = vshrl.u32 %v365, 16
      %v474 = vor.u32 %v472, %v470
      %v476 = vshll.u32 %v366, 16
      %v478 = vrot.slane %v476, 1
      %v479 = vsel %vm371, %v474, %v478
      %v480 = vshrl.u32 %v366, 16
      %v482 = vor.u32 %v480, %v478
      %v484 = vshll.u32 %v367, 16
      %v486 = vrot.slane %v484, 1
      %v487 = vsel %vm371, %v482, %v486
      %v488 = vshrl.u32 %v367, 16
      %v490 = vor.u32 %v488, %v486
      %v492 = vshll.u32 %v368, 16
      %v494 = vrot.slane %v492, 1
      %v495 = vsel %vm371, %v490, %v494
      %v496 = vshrl.u32 %v368, 16
      %v498 = vor.u32 %v496, %v494
      %v500 = vshll.u32 %v369, 16
      %v502 = vrot.slane %v500, 1
      %v503 = vsel %vm371, %v498, %v502
      %v504 = vshrl.u32 %v369, 16
      %v506 = vor.u32 %v504, %v502
      %v508 = vshll.u32 %v370, 16
      %v510 = vrot.slane %v508, 1
      %v511 = vsel %vm371, %v506, %v510
      %vm512 = vcmask 31744
      %v514 = vsel %vm512, %v383, 0
      %v517 = vsel %vm512, %v391, 0
      %v520 = vsel %vm512, %v399, 0
      %v523 = vsel %vm512, %v407, 0
      %v526 = vsel %vm512, %v415, 0
      %v529 = vsel %vm512, %v423, 0
      %v532 = vsel %vm512, %v431, 0
      %v535 = vsel %vm512, %v439, 0
      %v538 = vsel %vm512, %v447, 0
      %v541 = vsel %vm512, %v455, 0
      %v544 = vsel %vm512, %v463, 0
      %v547 = vsel %vm512, %v471, 0
      %v550 = vsel %vm512, %v479, 0
      %v553 = vsel %vm512, %v487, 0
      %v556 = vsel %vm512, %v495, 0
      %v559 = vsel %vm512, %v503, 0
      %v562 = vsel %vm512, %v511, 0
      %vm564 = vcmask 1041408
      %v566 = vsel %vm564, %v282, 0
      %568 = vmatprep.subr.bf16.mxu0 0
      %569 = vmatpush1.bf16.msra.mxu0 %v566
      %570 = vmatprep.subr.bf16.mxu0 0
      %571 = vmatpush1.bf16.msra.mxu0 0
      %572 = vmatprep.subr.bf16.mxu0 0
      %573 = vmatpush1.bf16.msra.mxu0 0
      %574 = vmatprep.subr.bf16.mxu0 0
      %575 = vmatpush1.bf16.msra.mxu0 0
      %576 = vmatprep.subr.bf16.mxu0 0
      %577 = vmatpush1.bf16.msra.mxu0 0
      %578 = vmatprep.subr.bf16.mxu0 0
      %579 = vmatpush1.bf16.msra.mxu0 0
      %580 = vmatprep.subr.bf16.mxu0 0
      %581 = vmatpush1.bf16.msra.mxu0 0
      %582 = vmatprep.subr.bf16.mxu0 0
      %583 = vmatpush1.bf16.msra.mxu0 0
      %584 = vmatprep.subr.bf16.mxu0 0
      %585 = vmatpush1.bf16.msra.mxu0 0
      %586 = vmatprep.subr.bf16.mxu0 0
      %587 = vmatpush1.bf16.msra.mxu0 0
      %588 = vmatprep.subr.bf16.mxu0 0
      %589 = vmatpush1.bf16.msra.mxu0 0
      %590 = vmatprep.subr.bf16.mxu0 0
      %591 = vmatpush1.bf16.msra.mxu0 0
      %592 = vmatprep.subr.bf16.mxu0 0
      %593 = vmatpush1.bf16.msra.mxu0 0
      %594 = vmatprep.subr.bf16.mxu0 0
      %595 = vmatpush1.bf16.msra.mxu0 0
      %596 = vmatprep.subr.bf16.mxu0 0
      %597 = vmatpush1.bf16.msra.mxu0 0
      %598 = vmatprep.subr.bf16.mxu0 0
      %599 = vmatpush1.bf16.msra.mxu0 0
      %600 = vmatprep.mubr.bf16.mxu0 0
      %601 = vmatmul.mubr.bf16.gmra.mrb[0].mxu0 %v514
      %v602 = vpop.f32.mrb[0].mxu0
      %v603 = vadd.f32 0.0, %v602
      %v604 = vpop.f32.mrb[0].mxu0
      %v605 = vpop.f32.mrb[0].mxu0
      %v606 = vadd.f32 0.0, %v605
      %v607 = vpop.f32.mrb[0].mxu0
      %608 = vmatprep.mubr.bf16.mxu0 0
      %609 = vmatmul.mubr.bf16.gmra.mrb[0].mxu0 %v517
      %v610 = vpop.f32.mrb[0].mxu0
      %v611 = vadd.f32 0.0, %v610
      %v612 = vpop.f32.mrb[0].mxu0
      %v613 = vpop.f32.mrb[0].mxu0
      %v614 = vadd.f32 0.0, %v613
      %v615 = vpop.f32.mrb[0].mxu0
      %616 = vmatprep.mubr.bf16.mxu0 0
      %617 = vmatmul.mubr.bf16.gmra.mrb[0].mxu0 %v520
      %v618 = vpop.f32.mrb[0].mxu0
      %v619 = vadd.f32 0.0, %v618
      %v620 = vpop.f32.mrb[0].mxu0
      %v621 = vpop.f32.mrb[0].mxu0
      %v622 = vadd.f32 0.0, %v621
      %v623 = vpop.f32.mrb[0].mxu0
      %624 = vmatprep.mubr.bf16.mxu0 0
      %625 = vmatmul.mubr.bf16.gmra.mrb[0].mxu0 %v523
      %v626 = vpop.f32.mrb[0].mxu0
      %v627 = vadd.f32 0.0, %v626
      %v628 = vpop.f32.mrb[0].mxu0
      %v629 = vpop.f32.mrb[0].mxu0
      %v630 = vadd.f32 0.0, %v629
      %v631 = vpop.f32.mrb[0].mxu0
      %632 = vmatprep.mubr.bf16.mxu0 0
      %633 = vmatmul.mubr.bf16.gmra.mrb[0].mxu0 %v526
      %v634 = vpop.f32.mrb[0].mxu0
      %v635 = vadd.f32 0.0, %v634
      %v636 = vpop.f32.mrb[0].mxu0
      %v637 = vpop.f32.mrb[0].mxu0
      %v638 = vadd.f32 0.0, %v637
      %v639 = vpop.f32.mrb[0].mxu0
      %640 = vmatprep.mubr.bf16.mxu0 0
      %641 = vmatmul.mubr.bf16.gmra.mrb[0].mxu0 %v529
      %v642 = vpop.f32.mrb[0].mxu0
      %v643 = vadd.f32 0.0, %v642
      %v644 = vpop.f32.mrb[0].mxu0
      %v645 = vpop.f32.mrb[0].mxu0
      %v646 = vadd.f32 0.0, %v645
      %v647 = vpop.f32.mrb[0].mxu0
      %648 = vmatprep.mubr.bf16.mxu0 0
      %649 = vmatmul.mubr.bf16.gmra.mrb[0].mxu0 %v532
      %v650 = vpop.f32.mrb[0].mxu0
      %v651 = vadd.f32 0.0, %v650
      %v652 = vpop.f32.mrb[0].mxu0
      %v653 = vpop.f32.mrb[0].mxu0
      %v654 = vadd.f32 0.0, %v653
      %v655 = vpop.f32.mrb[0].mxu0
      %656 = vmatprep.mubr.bf16.mxu0 0
      %657 = vmatmul.mubr.bf16.gmra.mrb[0].mxu0 %v535
      %v658 = vpop.f32.mrb[0].mxu0
      %v659 = vadd.f32 0.0, %v658
      %v660 = vpop.f32.mrb[0].mxu0
      %v661 = vpop.f32.mrb[0].mxu0
      %v662 = vadd.f32 0.0, %v661
      %v663 = vpop.f32.mrb[0].mxu0
      %664 = vmatprep.mubr.bf16.mxu0 0
      %665 = vmatmul.mubr.bf16.gmra.mrb[0].mxu0 %v538
      %v666 = vpop.f32.mrb[0].mxu0
      %v667 = vadd.f32 0.0, %v666
      %v668 = vpop.f32.mrb[0].mxu0
      %v669 = vpop.f32.mrb[0].mxu0
      %v670 = vadd.f32 0.0, %v669
      %v671 = vpop.f32.mrb[0].mxu0
      %672 = vmatprep.mubr.bf16.mxu0 0
      %673 = vmatmul.mubr.bf16.gmra.mrb[0].mxu0 %v541
      %v674 = vpop.f32.mrb[0].mxu0
      %v675 = vadd.f32 0.0, %v674
      %v676 = vpop.f32.mrb[0].mxu0
      %v677 = vpop.f32.mrb[0].mxu0
      %v678 = vadd.f32 0.0, %v677
      %v679 = vpop.f32.mrb[0].mxu0
      %680 = vmatprep.mubr.bf16.mxu0 0
      %681 = vmatmul.mubr.bf16.gmra.mrb[0].mxu0 %v544
      %v682 = vpop.f32.mrb[0].mxu0
      %v683 = vadd.f32 0.0, %v682
      %v684 = vpop.f32.mrb[0].mxu0
      %v685 = vpop.f32.mrb[0].mxu0
      %v686 = vadd.f32 0.0, %v685
      %v687 = vpop.f32.mrb[0].mxu0
      %688 = vmatprep.mubr.bf16.mxu0 0
      %689 = vmatmul.mubr.bf16.gmra.mrb[0].mxu0 %v547
      %v690 = vpop.f32.mrb[0].mxu0
      %v691 = vadd.f32 0.0, %v690
      %v692 = vpop.f32.mrb[0].mxu0
      %v693 = vpop.f32.mrb[0].mxu0
      %v694 = vadd.f32 0.0, %v693
      %v695 = vpop.f32.mrb[0].mxu0
      %696 = vmatprep.mubr.bf16.mxu0 0
      %697 = vmatmul.mubr.bf16.gmra.mrb[0].mxu0 %v550
      %v698 = vpop.f32.mrb[0].mxu0
      %v699 = vadd.f32 0.0, %v698
      %v700 = vpop.f32.mrb[0].mxu0
      %v701 = vpop.f32.mrb[0].mxu0
      %v702 = vadd.f32 0.0, %v701
      %v703 = vpop.f32.mrb[0].mxu0
      %704 = vmatprep.mubr.bf16.mxu0 0
      %705 = vmatmul.mubr.bf16.gmra.mrb[0].mxu0 %v553
      %v706 = vpop.f32.mrb[0].mxu0
      %v707 = vadd.f32 0.0, %v706
      %v708 = vpop.f32.mrb[0].mxu0
      %v709 = vpop.f32.mrb[0].mxu0
      %v710 = vadd.f32 0.0, %v709
      %v711 = vpop.f32.mrb[0].mxu0
      %712 = vmatprep.mubr.bf16.mxu0 0
      %713 = vmatmul.mubr.bf16.gmra.mrb[0].mxu0 %v556
      %v714 = vpop.f32.mrb[0].mxu0
      %v715 = vadd.f32 0.0, %v714
      %v716 = vpop.f32.mrb[0].mxu0
      %v717 = vpop.f32.mrb[0].mxu0
      %v718 = vadd.f32 0.0, %v717
      %v719 = vpop.f32.mrb[0].mxu0
      %720 = vmatprep.mubr.bf16.mxu0 0
      %721 = vmatmul.mubr.bf16.gmra.mrb[0].mxu0 %v559
      %v722 = vpop.f32.mrb[0].mxu0
      %v723 = vadd.f32 0.0, %v722
      %v724 = vpop.f32.mrb[0].mxu0
      %v725 = vpop.f32.mrb[0].mxu0
      %v726 = vadd.f32 0.0, %v725
      %v727 = vpop.f32.mrb[0].mxu0
      %728 = vmatprep.mubr.bf16.mxu0 0
      %729 = vmatmul.mubr.bf16.gmra.mrb[0].mxu0 %v562
      %v730 = vpop.f32.mrb[0].mxu0
      %v731 = vadd.f32 0.0, %v730
      %v732 = vpop.f32.mrb[0].mxu0
      %v733 = vpop.f32.mrb[0].mxu0
      %v734 = vadd.f32 0.0, %v733
      %v735 = vpop.f32.mrb[0].mxu0
      %736 = vdwg.mxu0
      %v737 = vsel %vm512, %v353, 0
      %v739 = vsel %vm512, %v354, 0
      %v741 = vsel %vm512, %v355, 0
      %v743 = vsel %vm512, %v356, 0
      %v745 = vsel %vm512, %v357, 0
      %v747 = vsel %vm512, %v358, 0
      %v749 = vsel %vm512, %v359, 0
      %v751 = vsel %vm512, %v360, 0
      %v753 = vsel %vm512, %v361, 0
      %v755 = vsel %vm512, %v362, 0
      %v757 = vsel %vm512, %v363, 0
      %v759 = vsel %vm512, %v364, 0
      %v761 = vsel %vm512, %v365, 0
      %v763 = vsel %vm512, %v366, 0
      %v765 = vsel %vm512, %v367, 0
      %v767 = vsel %vm512, %v368, 0
      %v769 = vsel %vm512, %v369, 0
      %v772 = vsel %vm564, %v280, 0
      %774 = vmatprep.subr.bf16.mxu0 0
      %775 = vmatpush1.bf16.msra.mxu0 %v772
      %776 = vmatprep.subr.bf16.mxu0 0
      %777 = vmatpush1.bf16.msra.mxu0 0
      %778 = vmatprep.subr.bf16.mxu0 0
      %779 = vmatpush1.bf16.msra.mxu0 0
      %780 = vmatprep.subr.bf16.mxu0 0
      %781 = vmatpush1.bf16.msra.mxu0 0
      %782 = vmatprep.subr.bf16.mxu0 0
      %783 = vmatpush1.bf16.msra.mxu0 0
      %784 = vmatprep.subr.bf16.mxu0 0
      %785 = vmatpush1.bf16.msra.mxu0 0
      %786 = vmatprep.subr.bf16.mxu0 0
      %787 = vmatpush1.bf16.msra.mxu0 0
      %788 = vmatprep.subr.bf16.mxu0 0
      %789 = vmatpush1.bf16.msra.mxu0 0
      %790 = vmatprep.subr.bf16.mxu0 0
      %791 = vmatpush1.bf16.msra.mxu0 0
      %792 = vmatprep.subr.bf16.mxu0 0
      %793 = vmatpush1.bf16.msra.mxu0 0
      %794 = vmatprep.subr.bf16.mxu0 0
      %795 = vmatpush1.bf16.msra.mxu0 0
      %796 = vmatprep.subr.bf16.mxu0 0
      %797 = vmatpush1.bf16.msra.mxu0 0
      %798 = vmatprep.subr.bf16.mxu0 0
      %799 = vmatpush1.bf16.msra.mxu0 0
      %800 = vmatprep.subr.bf16.mxu0 0
      %801 = vmatpush1.bf16.msra.mxu0 0
      %802 = vmatprep.subr.bf16.mxu0 0
      %803 = vmatpush1.bf16.msra.mxu0 0
      %804 = vmatprep.subr.bf16.mxu0 0
      %805 = vmatpush1.bf16.msra.mxu0 0
      %806 = vmatprep.mubr.bf16.mxu0 0
      %807 = vmatmul.mubr.bf16.gmra.mrb[0].mxu0 %v737
      %v808 = vpop.f32.mrb[0].mxu0
      %v809 = vadd.f32 %v603, %v808
      %v810 = vpop.f32.mrb[0].mxu0
      %v811 = vpop.f32.mrb[0].mxu0
      %v812 = vadd.f32 %v606, %v811
      %v813 = vpop.f32.mrb[0].mxu0
      %814 = vmatprep.mubr.bf16.mxu0 0
      %815 = vmatmul.mubr.bf16.gmra.mrb[0].mxu0 %v739
      %v816 = vpop.f32.mrb[0].mxu0
      %v817 = vadd.f32 %v611, %v816
      %v818 = vpop.f32.mrb[0].mxu0
      %v819 = vpop.f32.mrb[0].mxu0
      %v820 = vadd.f32 %v614, %v819
      %v821 = vpop.f32.mrb[0].mxu0
      %822 = vmatprep.mubr.bf16.mxu0 0
      %823 = vmatmul.mubr.bf16.gmra.mrb[0].mxu0 %v741
      %v824 = vpop.f32.mrb[0].mxu0
      %v825 = vadd.f32 %v619, %v824
      %v826 = vpop.f32.mrb[0].mxu0
      %v827 = vpop.f32.mrb[0].mxu0
      %v828 = vadd.f32 %v622, %v827
      %v829 = vpop.f32.mrb[0].mxu0
      %830 = vmatprep.mubr.bf16.mxu0 0
      %831 = vmatmul.mubr.bf16.gmra.mrb[0].mxu0 %v743
      %v832 = vpop.f32.mrb[0].mxu0
      %v833 = vadd.f32 %v627, %v832
      %v834 = vpop.f32.mrb[0].mxu0
      %v835 = vpop.f32.mrb[0].mxu0
      %v836 = vadd.f32 %v630, %v835
      %v837 = vpop.f32.mrb[0].mxu0
      %838 = vmatprep.mubr.bf16.mxu0 0
      %839 = vmatmul.mubr.bf16.gmra.mrb[0].mxu0 %v745
      %v840 = vpop.f32.mrb[0].mxu0
      %v841 = vadd.f32 %v635, %v840
      %v842 = vpop.f32.mrb[0].mxu0
      %v843 = vpop.f32.mrb[0].mxu0
      %v844 = vadd.f32 %v638, %v843
      %v845 = vpop.f32.mrb[0].mxu0
      %846 = vmatprep.mubr.bf16.mxu0 0
      %847 = vmatmul.mubr.bf16.gmra.mrb[0].mxu0 %v747
      %v848 = vpop.f32.mrb[0].mxu0
      %v849 = vadd.f32 %v643, %v848
      %v850 = vpop.f32.mrb[0].mxu0
      %v851 = vpop.f32.mrb[0].mxu0
      %v852 = vadd.f32 %v646, %v851
      %v853 = vpop.f32.mrb[0].mxu0
      %854 = vmatprep.mubr.bf16.mxu0 0
      %855 = vmatmul.mubr.bf16.gmra.mrb[0].mxu0 %v749
      %v856 = vpop.f32.mrb[0].mxu0
      %v857 = vadd.f32 %v651, %v856
      %v858 = vpop.f32.mrb[0].mxu0
      %v859 = vpop.f32.mrb[0].mxu0
      %v860 = vadd.f32 %v654, %v859
      %v861 = vpop.f32.mrb[0].mxu0
      %862 = vmatprep.mubr.bf16.mxu0 0
      %863 = vmatmul.mubr.bf16.gmra.mrb[0].mxu0 %v751
      %v864 = vpop.f32.mrb[0].mxu0
      %v865 = vadd.f32 %v659, %v864
      %v866 = vpop.f32.mrb[0].mxu0
      %v867 = vpop.f32.mrb[0].mxu0
      %v868 = vadd.f32 %v662, %v867
      %v869 = vpop.f32.mrb[0].mxu0
      %870 = vmatprep.mubr.bf16.mxu0 0
      %871 = vmatmul.mubr.bf16.gmra.mrb[0].mxu0 %v753
      %v872 = vpop.f32.mrb[0].mxu0
      %v873 = vadd.f32 %v667, %v872
      %v874 = vpop.f32.mrb[0].mxu0
      %v875 = vpop.f32.mrb[0].mxu0
      %v876 = vadd.f32 %v670, %v875
      %v877 = vpop.f32.mrb[0].mxu0
      %878 = vmatprep.mubr.bf16.mxu0 0
      %879 = vmatmul.mubr.bf16.gmra.mrb[0].mxu0 %v755
      %v880 = vpop.f32.mrb[0].mxu0
      %v881 = vadd.f32 %v675, %v880
      %v882 = vpop.f32.mrb[0].mxu0
      %v883 = vpop.f32.mrb[0].mxu0
      %v884 = vadd.f32 %v678, %v883
      %v885 = vpop.f32.mrb[0].mxu0
      %886 = vmatprep.mubr.bf16.mxu0 0
      %887 = vmatmul.mubr.bf16.gmra.mrb[0].mxu0 %v757
      %v888 = vpop.f32.mrb[0].mxu0
      %v889 = vadd.f32 %v683, %v888
      %v890 = vpop.f32.mrb[0].mxu0
      %v891 = vpop.f32.mrb[0].mxu0
      %v892 = vadd.f32 %v686, %v891
      %v893 = vpop.f32.mrb[0].mxu0
      %894 = vmatprep.mubr.bf16.mxu0 0
      %895 = vmatmul.mubr.bf16.gmra.mrb[0].mxu0 %v759
      %v896 = vpop.f32.mrb[0].mxu0
      %v897 = vadd.f32 %v691, %v896
      %v898 = vpop.f32.mrb[0].mxu0
      %v899 = vpop.f32.mrb[0].mxu0
      %v900 = vadd.f32 %v694, %v899
      %v901 = vpop.f32.mrb[0].mxu0
      %902 = vmatprep.mubr.bf16.mxu0 0
      %903 = vmatmul.mubr.bf16.gmra.mrb[0].mxu0 %v761
      %v904 = vpop.f32.mrb[0].mxu0
      %v905 = vadd.f32 %v699, %v904
      %v906 = vpop.f32.mrb[0].mxu0
      %v907 = vpop.f32.mrb[0].mxu0
      %v908 = vadd.f32 %v702, %v907
      %v909 = vpop.f32.mrb[0].mxu0
      %910 = vmatprep.mubr.bf16.mxu0 0
      %911 = vmatmul.mubr.bf16.gmra.mrb[0].mxu0 %v763
      %v912 = vpop.f32.mrb[0].mxu0
      %v913 = vadd.f32 %v707, %v912
      %v914 = vpop.f32.mrb[0].mxu0
      %v915 = vpop.f32.mrb[0].mxu0
      %v916 = vadd.f32 %v710, %v915
      %v917 = vpop.f32.mrb[0].mxu0
      %918 = vmatprep.mubr.bf16.mxu0 0
      %919 = vmatmul.mubr.bf16.gmra.mrb[0].mxu0 %v765
      %v920 = vpop.f32.mrb[0].mxu0
      %v921 = vadd.f32 %v715, %v920
      %v922 = vpop.f32.mrb[0].mxu0
      %v923 = vpop.f32.mrb[0].mxu0
      %v924 = vadd.f32 %v718, %v923
      %v925 = vpop.f32.mrb[0].mxu0
      %926 = vmatprep.mubr.bf16.mxu0 0
      %927 = vmatmul.mubr.bf16.gmra.mrb[0].mxu0 %v767
      %v928 = vpop.f32.mrb[0].mxu0
      %v929 = vadd.f32 %v723, %v928
      %v930 = vpop.f32.mrb[0].mxu0
      %v931 = vpop.f32.mrb[0].mxu0
      %v932 = vadd.f32 %v726, %v931
      %v933 = vpop.f32.mrb[0].mxu0
      %934 = vmatprep.mubr.bf16.mxu0 0
      %935 = vmatmul.mubr.bf16.gmra.mrb[0].mxu0 %v769
      %v936 = vpop.f32.mrb[0].mxu0
      %v937 = vadd.f32 %v731, %v936
      %v938 = vpop.f32.mrb[0].mxu0
      %v939 = vpop.f32.mrb[0].mxu0
      %v940 = vadd.f32 %v734, %v939
      %v941 = vpop.f32.mrb[0].mxu0
      %942 = vdwg.mxu0
      %s943 = scalar_lea.vmem %s1, 4
      %v944 = vld [vmem:[%s943] sm:$0x3]
      %v947 = vunpack.c.l.b16 %v278
      %v948 = vunpack.c.l.b16 %v279
      %v949 = vpack.c.b16 %v947, %v352
      %v950 = vpack.c.b16 %v948, %v948
      %v952 = vshll.u32 %v949, 16
      %v954 = vrot.slane %v952, 1
      %v955 = vsel %vm371, %v506, %v954
      %v956 = vshrl.u32 %v949, 16
      %v958 = vor.u32 %v956, %v954
      %v960 = vshll.u32 %v950, 16
      %v962 = vrot.slane %v960, 1
      %v963 = vsel %vm371, %v958, %v962
      %v965 = vsel %vm512, %v955, 0
      %v968 = vsel %vm512, %v963, 0
      %v971 = vsel %vm564, %v944, 0
      %973 = vmatprep.subr.bf16.mxu0 0
      %974 = vmatpush1.bf16.msra.mxu0 %v971
      %975 = vmatprep.subr.bf16.mxu0 0
      %976 = vmatpush1.bf16.msra.mxu0 0
      %977 = vmatprep.subr.bf16.mxu0 0
      %978 = vmatpush1.bf16.msra.mxu0 0
      %979 = vmatprep.subr.bf16.mxu0 0
      %980 = vmatpush1.bf16.msra.mxu0 0
      %981 = vmatprep.subr.bf16.mxu0 0
      %982 = vmatpush1.bf16.msra.mxu0 0
      %983 = vmatprep.subr.bf16.mxu0 0
      %984 = vmatpush1.bf16.msra.mxu0 0
      %985 = vmatprep.subr.bf16.mxu0 0
      %986 = vmatpush1.bf16.msra.mxu0 0
      %987 = vmatprep.subr.bf16.mxu0 0
      %988 = vmatpush1.bf16.msra.mxu0 0
      %989 = vmatprep.subr.bf16.mxu0 0
      %990 = vmatpush1.bf16.msra.mxu0 0
      %991 = vmatprep.subr.bf16.mxu0 0
      %992 = vmatpush1.bf16.msra.mxu0 0
      %993 = vmatprep.subr.bf16.mxu0 0
      %994 = vmatpush1.bf16.msra.mxu0 0
      %995 = vmatprep.subr.bf16.mxu0 0
      %996 = vmatpush1.bf16.msra.mxu0 0
      %997 = vmatprep.subr.bf16.mxu0 0
      %998 = vmatpush1.bf16.msra.mxu0 0
      %999 = vmatprep.subr.bf16.mxu0 0
      %1000 = vmatpush1.bf16.msra.mxu0 0
      %1001 = vmatprep.subr.bf16.mxu0 0
      %1002 = vmatpush1.bf16.msra.mxu0 0
      %1003 = vmatprep.subr.bf16.mxu0 0
      %1004 = vmatpush1.bf16.msra.mxu0 0
      %1005 = vmatprep.mubr.bf16.mxu0 0
      %1006 = vmatmul.mubr.bf16.gmra.mrb[0].mxu0 %v517
      %v1007 = vpop.f32.mrb[0].mxu0
      %v1008 = vadd.f32 0.0, %v1007
      %v1009 = vpop.f32.mrb[0].mxu0
      %v1010 = vpop.f32.mrb[0].mxu0
      %v1011 = vadd.f32 0.0, %v1010
      %v1012 = vpop.f32.mrb[0].mxu0
      %1013 = vmatprep.mubr.bf16.mxu0 0
      %1014 = vmatmul.mubr.bf16.gmra.mrb[0].mxu0 %v520
      %v1015 = vpop.f32.mrb[0].mxu0
      %v1016 = vadd.f32 0.0, %v1015
      %v1017 = vpop.f32.mrb[0].mxu0
      %v1018 = vpop.f32.mrb[0].mxu0
      %v1019 = vadd.f32 0.0, %v1018
      %v1020 = vpop.f32.mrb[0].mxu0
      %1021 = vmatprep.mubr.bf16.mxu0 0
      %1022 = vmatmul.mubr.bf16.gmra.mrb[0].mxu0 %v523
      %v1023 = vpop.f32.mrb[0].mxu0
      %v1024 = vadd.f32 0.0, %v1023
      %v1025 = vpop.f32.mrb[0].mxu0
      %v1026 = vpop.f32.mrb[0].mxu0
      %v1027 = vadd.f32 0.0, %v1026
      %v1028 = vpop.f32.mrb[0].mxu0
      %1029 = vmatprep.mubr.bf16.mxu0 0
      %1030 = vmatmul.mubr.bf16.gmra.mrb[0].mxu0 %v526
      %v1031 = vpop.f32.mrb[0].mxu0
      %v1032 = vadd.f32 0.0, %v1031
      %v1033 = vpop.f32.mrb[0].mxu0
      %v1034 = vpop.f32.mrb[0].mxu0
      %v1035 = vadd.f32 0.0, %v1034
      %v1036 = vpop.f32.mrb[0].mxu0
      %1037 = vmatprep.mubr.bf16.mxu0 0
      %1038 = vmatmul.mubr.bf16.gmra.mrb[0].mxu0 %v529
      %v1039 = vpop.f32.mrb[0].mxu0
      %v1040 = vadd.f32 0.0, %v1039
      %v1041 = vpop.f32.mrb[0].mxu0
      %v1042 = vpop.f32.mrb[0].mxu0
      %v1043 = vadd.f32 0.0, %v1042
      %v1044 = vpop.f32.mrb[0].mxu0
      %1045 = vmatprep.mubr.bf16.mxu0 0
      %1046 = vmatmul.mubr.bf16.gmra.mrb[0].mxu0 %v532
      %v1047 = vpop.f32.mrb[0].mxu0
      %v1048 = vadd.f32 0.0, %v1047
      %v1049 = vpop.f32.mrb[0].mxu0
      %v1050 = vpop.f32.mrb[0].mxu0
      %v1051 = vadd.f32 0.0, %v1050
      %v1052 = vpop.f32.mrb[0].mxu0
      %1053 = vmatprep.mubr.bf16.mxu0 0
      %1054 = vmatmul.mubr.bf16.gmra.mrb[0].mxu0 %v535
      %v1055 = vpop.f32.mrb[0].mxu0
      %v1056 = vadd.f32 0.0, %v1055
      %v1057 = vpop.f32.mrb[0].mxu0
      %v1058 = vpop.f32.mrb[0].mxu0
      %v1059 = vadd.f32 0.0, %v1058
      %v1060 = vpop.f32.mrb[0].mxu0
      %1061 = vmatprep.mubr.bf16.mxu0 0
      %1062 = vmatmul.mubr.bf16.gmra.mrb[0].mxu0 %v538
      %v1063 = vpop.f32.mrb[0].mxu0
      %v1064 = vadd.f32 0.0, %v1063
      %v1065 = vpop.f32.mrb[0].mxu0
      %v1066 = vpop.f32.mrb[0].mxu0
      %v1067 = vadd.f32 0.0, %v1066
      %v1068 = vpop.f32.mrb[0].mxu0
      %1069 = vmatprep.mubr.bf16.mxu0 0
      %1070 = vmatmul.mubr.bf16.gmra.mrb[0].mxu0 %v541
      %v1071 = vpop.f32.mrb[0].mxu0
      %v1072 = vadd.f32 0.0, %v1071
      %v1073 = vpop.f32.mrb[0].mxu0
      %v1074 = vpop.f32.mrb[0].mxu0
      %v1075 = vadd.f32 0.0, %v1074
      %v1076 = vpop.f32.mrb[0].mxu0
      %1077 = vmatprep.mubr.bf16.mxu0 0
      %1078 = vmatmul.mubr.bf16.gmra.mrb[0].mxu0 %v544
      %v1079 = vpop.f32.mrb[0].mxu0
      %v1080 = vadd.f32 0.0, %v1079
      %v1081 = vpop.f32.mrb[0].mxu0
      %v1082 = vpop.f32.mrb[0].mxu0
      %v1083 = vadd.f32 0.0, %v1082
      %v1084 = vpop.f32.mrb[0].mxu0
      %1085 = vmatprep.mubr.bf16.mxu0 0
      %1086 = vmatmul.mubr.bf16.gmra.mrb[0].mxu0 %v547
      %v1087 = vpop.f32.mrb[0].mxu0
      %v1088 = vadd.f32 0.0, %v1087
      %v1089 = vpop.f32.mrb[0].mxu0
      %v1090 = vpop.f32.mrb[0].mxu0
      %v1091 = vadd.f32 0.0, %v1090
      %v1092 = vpop.f32.mrb[0].mxu0
      %1093 = vmatprep.mubr.bf16.mxu0 0
      %1094 = vmatmul.mubr.bf16.gmra.mrb[0].mxu0 %v550
      %v1095 = vpop.f32.mrb[0].mxu0
      %v1096 = vadd.f32 0.0, %v1095
      %v1097 = vpop.f32.mrb[0].mxu0
      %v1098 = vpop.f32.mrb[0].mxu0
      %v1099 = vadd.f32 0.0, %v1098
      %v1100 = vpop.f32.mrb[0].mxu0
      %1101 = vmatprep.mubr.bf16.mxu0 0
      %1102 = vmatmul.mubr.bf16.gmra.mrb[0].mxu0 %v553
      %v1103 = vpop.f32.mrb[0].mxu0
      %v1104 = vadd.f32 0.0, %v1103
      %v1105 = vpop.f32.mrb[0].mxu0
      %v1106 = vpop.f32.mrb[0].mxu0
      %v1107 = vadd.f32 0.0, %v1106
      %v1108 = vpop.f32.mrb[0].mxu0
      %1109 = vmatprep.mubr.bf16.mxu0 0
      %1110 = vmatmul.mubr.bf16.gmra.mrb[0].mxu0 %v556
      %v1111 = vpop.f32.mrb[0].mxu0
      %v1112 = vadd.f32 0.0, %v1111
      %v1113 = vpop.f32.mrb[0].mxu0
      %v1114 = vpop.f32.mrb[0].mxu0
      %v1115 = vadd.f32 0.0, %v1114
      %v1116 = vpop.f32.mrb[0].mxu0
      %1117 = vmatprep.mubr.bf16.mxu0 0
      %1118 = vmatmul.mubr.bf16.gmra.mrb[0].mxu0 %v559
      %v1119 = vpop.f32.mrb[0].mxu0
      %v1120 = vadd.f32 0.0, %v1119
      %v1121 = vpop.f32.mrb[0].mxu0
      %v1122 = vpop.f32.mrb[0].mxu0
      %v1123 = vadd.f32 0.0, %v1122
      %v1124 = vpop.f32.mrb[0].mxu0
      %1125 = vmatprep.mubr.bf16.mxu0 0
      %1126 = vmatmul.mubr.bf16.gmra.mrb[0].mxu0 %v965
      %v1127 = vpop.f32.mrb[0].mxu0
      %v1128 = vadd.f32 0.0, %v1127
      %v1129 = vpop.f32.mrb[0].mxu0
      %v1130 = vpop.f32.mrb[0].mxu0
      %v1131 = vadd.f32 0.0, %v1130
      %v1132 = vpop.f32.mrb[0].mxu0
      %1133 = vmatprep.mubr.bf16.mxu0 0
      %1134 = vmatmul.mubr.bf16.gmra.mrb[0].mxu0 %v968
      %v1135 = vpop.f32.mrb[0].mxu0
      %v1136 = vadd.f32 0.0, %v1135
      %v1137 = vpop.f32.mrb[0].mxu0
      %v1138 = vpop.f32.mrb[0].mxu0
      %v1139 = vadd.f32 0.0, %v1138
      %v1140 = vpop.f32.mrb[0].mxu0
      %1141 = vdwg.mxu0
      %v1142 = vadd.f32 %v809, %v1008
      %v1143 = vadd.f32 %v812, %v1011
      %v1144 = vadd.f32 %v817, %v1016
      %v1145 = vadd.f32 %v820, %v1019
      %v1146 = vadd.f32 %v825, %v1024
      %v1147 = vadd.f32 %v828, %v1027
      %v1148 = vadd.f32 %v833, %v1032
      %v1149 = vadd.f32 %v836, %v1035
      %v1150 = vadd.f32 %v841, %v1040
      %v1151 = vadd.f32 %v844, %v1043
      %v1152 = vadd.f32 %v849, %v1048
      %v1153 = vadd.f32 %v852, %v1051
      %v1154 = vadd.f32 %v857, %v1056
      %v1155 = vadd.f32 %v860, %v1059
      %v1156 = vadd.f32 %v865, %v1064
      %v1157 = vadd.f32 %v868, %v1067
      %v1158 = vadd.f32 %v873, %v1072
      %v1159 = vadd.f32 %v876, %v1075
      %v1160 = vadd.f32 %v881, %v1080
      %v1161 = vadd.f32 %v884, %v1083
      %v1162 = vadd.f32 %v889, %v1088
      %v1163 = vadd.f32 %v892, %v1091
      %v1164 = vadd.f32 %v897, %v1096
      %v1165 = vadd.f32 %v900, %v1099
      %v1166 = vadd.f32 %v905, %v1104
      %v1167 = vadd.f32 %v908, %v1107
      %v1168 = vadd.f32 %v913, %v1112
      %v1169 = vadd.f32 %v916, %v1115
      %v1170 = vadd.f32 %v921, %v1120
      %v1171 = vadd.f32 %v924, %v1123
      %v1172 = vadd.f32 %v929, %v1128
      %v1173 = vadd.f32 %v932, %v1131
      %v1174 = vadd.f32 %v937, %v1136
      %v1175 = vadd.f32 %v940, %v1139
      %s1176 = scalar_lea.vmem %s1, 6
      %v1177 = vld [vmem:[%s1176] sm:$0x3]
      %vm1178 = vcmask 1046528
      %v1179 = vrot.slane %v354, 1
      %v1180 = vrot.slane %v355, 1
      %v1181 = vsel %vm1178, %v1179, %v1180
      %v1182 = vrot.slane %v356, 1
      %v1183 = vsel %vm1178, %v1180, %v1182
      %v1184 = vrot.slane %v357, 1
      %v1185 = vsel %vm1178, %v1182, %v1184
      %v1186 = vrot.slane %v358, 1
      %v1187 = vsel %vm1178, %v1184, %v1186
      %v1188 = vrot.slane %v359, 1
      %v1189 = vsel %vm1178, %v1186, %v1188
      %v1190 = vrot.slane %v360, 1
      %v1191 = vsel %vm1178, %v1188, %v1190
      %v1192 = vrot.slane %v361, 1
      %v1193 = vsel %vm1178, %v1190, %v1192
      %v1194 = vrot.slane %v362, 1
      %v1195 = vsel %vm1178, %v1192, %v1194
      %v1196 = vrot.slane %v363, 1
      %v1197 = vsel %vm1178, %v1194, %v1196
      %v1198 = vrot.slane %v364, 1
      %v1199 = vsel %vm1178, %v1196, %v1198
      %v1200 = vrot.slane %v365, 1
      %v1201 = vsel %vm1178, %v1198, %v1200
      %v1202 = vrot.slane %v366, 1
      %v1203 = vsel %vm1178, %v1200, %v1202
      %v1204 = vrot.slane %v367, 1
      %v1205 = vsel %vm1178, %v1202, %v1204
      %v1206 = vrot.slane %v368, 1
      %v1207 = vsel %vm1178, %v1204, %v1206
      %v1208 = vrot.slane %v369, 1
      %v1209 = vsel %vm1178, %v1206, %v1208
      %v1210 = vrot.slane %v949, 1
      %v1211 = vsel %vm1178, %v1208, %v1210
      %v1212 = vrot.slane %v950, 1
      %v1213 = vsel %vm1178, %v1210, %v1212
      %v1215 = vsel %vm512, %v1181, 0
      %v1218 = vsel %vm512, %v1183, 0
      %v1221 = vsel %vm512, %v1185, 0
      %v1224 = vsel %vm512, %v1187, 0
      %v1227 = vsel %vm512, %v1189, 0
      %v1230 = vsel %vm512, %v1191, 0
      %v1233 = vsel %vm512, %v1193, 0
      %v1236 = vsel %vm512, %v1195, 0
      %v1239 = vsel %vm512, %v1197, 0
      %v1242 = vsel %vm512, %v1199, 0
      %v1245 = vsel %vm512, %v1201, 0
      %v1248 = vsel %vm512, %v1203, 0
      %v1251 = vsel %vm512, %v1205, 0
      %v1254 = vsel %vm512, %v1207, 0
      %v1257 = vsel %vm512, %v1209, 0
      %v1260 = vsel %vm512, %v1211, 0
      %v1263 = vsel %vm512, %v1213, 0
      %v1266 = vsel %vm564, %v1177, 0
      %1268 = vmatprep.subr.bf16.mxu0 0
      %1269 = vmatpush1.bf16.msra.mxu0 %v1266
      %1270 = vmatprep.subr.bf16.mxu0 0
      %1271 = vmatpush1.bf16.msra.mxu0 0
      %1272 = vmatprep.subr.bf16.mxu0 0
      %1273 = vmatpush1.bf16.msra.mxu0 0
      %1274 = vmatprep.subr.bf16.mxu0 0
      %1275 = vmatpush1.bf16.msra.mxu0 0
      %1276 = vmatprep.subr.bf16.mxu0 0
      %1277 = vmatpush1.bf16.msra.mxu0 0
      %1278 = vmatprep.subr.bf16.mxu0 0
      %1279 = vmatpush1.bf16.msra.mxu0 0
      %1280 = vmatprep.subr.bf16.mxu0 0
      %1281 = vmatpush1.bf16.msra.mxu0 0
      %1282 = vmatprep.subr.bf16.mxu0 0
      %1283 = vmatpush1.bf16.msra.mxu0 0
      %1284 = vmatprep.subr.bf16.mxu0 0
      %1285 = vmatpush1.bf16.msra.mxu0 0
      %1286 = vmatprep.subr.bf16.mxu0 0
      %1287 = vmatpush1.bf16.msra.mxu0 0
      %1288 = vmatprep.subr.bf16.mxu0 0
      %1289 = vmatpush1.bf16.msra.mxu0 0
      %1290 = vmatprep.subr.bf16.mxu0 0
      %1291 = vmatpush1.bf16.msra.mxu0 0
      %1292 = vmatprep.subr.bf16.mxu0 0
      %1293 = vmatpush1.bf16.msra.mxu0 0
      %1294 = vmatprep.subr.bf16.mxu0 0
      %1295 = vmatpush1.bf16.msra.mxu0 0
      %1296 = vmatprep.subr.bf16.mxu0 0
      %1297 = vmatpush1.bf16.msra.mxu0 0
      %1298 = vmatprep.subr.bf16.mxu0 0
      %1299 = vmatpush1.bf16.msra.mxu0 0
      %1300 = vmatprep.mubr.bf16.mxu0 0
      %1301 = vmatmul.mubr.bf16.gmra.mrb[0].mxu0 %v1215
      %v1302 = vpop.f32.mrb[0].mxu0
      %v1303 = vadd.f32 0.0, %v1302
      %v1304 = vpop.f32.mrb[0].mxu0
      %v1305 = vpop.f32.mrb[0].mxu0
      %v1306 = vadd.f32 0.0, %v1305
      %v1307 = vpop.f32.mrb[0].mxu0
      %1308 = vmatprep.mubr.bf16.mxu0 0
      %1309 = vmatmul.mubr.bf16.gmra.mrb[0].mxu0 %v1218
      %v1310 = vpop.f32.mrb[0].mxu0
      %v1311 = vadd.f32 0.0, %v1310
      %v1312 = vpop.f32.mrb[0].mxu0
      %v1313 = vpop.f32.mrb[0].mxu0
      %v1314 = vadd.f32 0.0, %v1313
      %v1315 = vpop.f32.mrb[0].mxu0
      %1316 = vmatprep.mubr.bf16.mxu0 0
      %1317 = vmatmul.mubr.bf16.gmra.mrb[0].mxu0 %v1221
      %v1318 = vpop.f32.mrb[0].mxu0
      %v1319 = vadd.f32 0.0, %v1318
      %v1320 = vpop.f32.mrb[0].mxu0
      %v1321 = vpop.f32.mrb[0].mxu0
      %v1322 = vadd.f32 0.0, %v1321
      %v1323 = vpop.f32.mrb[0].mxu0
      %1324 = vmatprep.mubr.bf16.mxu0 0
      %1325 = vmatmul.mubr.bf16.gmra.mrb[0].mxu0 %v1224
      %v1326 = vpop.f32.mrb[0].mxu0
      %v1327 = vadd.f32 0.0, %v1326
      %v1328 = vpop.f32.mrb[0].mxu0
      %v1329 = vpop.f32.mrb[0].mxu0
      %v1330 = vadd.f32 0.0, %v1329
      %v1331 = vpop.f32.mrb[0].mxu0
      %1332 = vmatprep.mubr.bf16.mxu0 0
      %1333 = vmatmul.mubr.bf16.gmra.mrb[0].mxu0 %v1227
      %v1334 = vpop.f32.mrb[0].mxu0
      %v1335 = vadd.f32 0.0, %v1334
      %v1336 = vpop.f32.mrb[0].mxu0
      %v1337 = vpop.f32.mrb[0].mxu0
      %v1338 = vadd.f32 0.0, %v1337
      %v1339 = vpop.f32.mrb[0].mxu0
      %1340 = vmatprep.mubr.bf16.mxu0 0
      %1341 = vmatmul.mubr.bf16.gmra.mrb[0].mxu0 %v1230
      %v1342 = vpop.f32.mrb[0].mxu0
      %v1343 = vadd.f32 0.0, %v1342
      %v1344 = vpop.f32.mrb[0].mxu0
      %v1345 = vpop.f32.mrb[0].mxu0
      %v1346 = vadd.f32 0.0, %v1345
      %v1347 = vpop.f32.mrb[0].mxu0
      %1348 = vmatprep.mubr.bf16.mxu0 0
      %1349 = vmatmul.mubr.bf16.gmra.mrb[0].mxu0 %v1233
      %v1350 = vpop.f32.mrb[0].mxu0
      %v1351 = vadd.f32 0.0, %v1350
      %v1352 = vpop.f32.mrb[0].mxu0
      %v1353 = vpop.f32.mrb[0].mxu0
      %v1354 = vadd.f32 0.0, %v1353
      %v1355 = vpop.f32.mrb[0].mxu0
      %1356 = vmatprep.mubr.bf16.mxu0 0
      %1357 = vmatmul.mubr.bf16.gmra.mrb[0].mxu0 %v1236
      %v1358 = vpop.f32.mrb[0].mxu0
      %v1359 = vadd.f32 0.0, %v1358
      %v1360 = vpop.f32.mrb[0].mxu0
      %v1361 = vpop.f32.mrb[0].mxu0
      %v1362 = vadd.f32 0.0, %v1361
      %v1363 = vpop.f32.mrb[0].mxu0
      %1364 = vmatprep.mubr.bf16.mxu0 0
      %1365 = vmatmul.mubr.bf16.gmra.mrb[0].mxu0 %v1239
      %v1366 = vpop.f32.mrb[0].mxu0
      %v1367 = vadd.f32 0.0, %v1366
      %v1368 = vpop.f32.mrb[0].mxu0
      %v1369 = vpop.f32.mrb[0].mxu0
      %v1370 = vadd.f32 0.0, %v1369
      %v1371 = vpop.f32.mrb[0].mxu0
      %1372 = vmatprep.mubr.bf16.mxu0 0
      %1373 = vmatmul.mubr.bf16.gmra.mrb[0].mxu0 %v1242
      %v1374 = vpop.f32.mrb[0].mxu0
      %v1375 = vadd.f32 0.0, %v1374
      %v1376 = vpop.f32.mrb[0].mxu0
      %v1377 = vpop.f32.mrb[0].mxu0
      %v1378 = vadd.f32 0.0, %v1377
      %v1379 = vpop.f32.mrb[0].mxu0
      %1380 = vmatprep.mubr.bf16.mxu0 0
      %1381 = vmatmul.mubr.bf16.gmra.mrb[0].mxu0 %v1245
      %v1382 = vpop.f32.mrb[0].mxu0
      %v1383 = vadd.f32 0.0, %v1382
      %v1384 = vpop.f32.mrb[0].mxu0
      %v1385 = vpop.f32.mrb[0].mxu0
      %v1386 = vadd.f32 0.0, %v1385
      %v1387 = vpop.f32.mrb[0].mxu0
      %1388 = vmatprep.mubr.bf16.mxu0 0
      %1389 = vmatmul.mubr.bf16.gmra.mrb[0].mxu0 %v1248
      %v1390 = vpop.f32.mrb[0].mxu0
      %v1391 = vadd.f32 0.0, %v1390
      %v1392 = vpop.f32.mrb[0].mxu0
      %v1393 = vpop.f32.mrb[0].mxu0
      %v1394 = vadd.f32 0.0, %v1393
      %v1395 = vpop.f32.mrb[0].mxu0
      %1396 = vmatprep.mubr.bf16.mxu0 0
      %1397 = vmatmul.mubr.bf16.gmra.mrb[0].mxu0 %v1251
      %v1398 = vpop.f32.mrb[0].mxu0
      %v1399 = vadd.f32 0.0, %v1398
      %v1400 = vpop.f32.mrb[0].mxu0
      %v1401 = vpop.f32.mrb[0].mxu0
      %v1402 = vadd.f32 0.0, %v1401
      %v1403 = vpop.f32.mrb[0].mxu0
      %1404 = vmatprep.mubr.bf16.mxu0 0
      %1405 = vmatmul.mubr.bf16.gmra.mrb[0].mxu0 %v1254
      %v1406 = vpop.f32.mrb[0].mxu0
      %v1407 = vadd.f32 0.0, %v1406
      %v1408 = vpop.f32.mrb[0].mxu0
      %v1409 = vpop.f32.mrb[0].mxu0
      %v1410 = vadd.f32 0.0, %v1409
      %v1411 = vpop.f32.mrb[0].mxu0
      %1412 = vmatprep.mubr.bf16.mxu0 0
      %1413 = vmatmul.mubr.bf16.gmra.mrb[0].mxu0 %v1257
      %v1414 = vpop.f32.mrb[0].mxu0
      %v1415 = vadd.f32 0.0, %v1414
      %v1416 = vpop.f32.mrb[0].mxu0
      %v1417 = vpop.f32.mrb[0].mxu0
      %v1418 = vadd.f32 0.0, %v1417
      %v1419 = vpop.f32.mrb[0].mxu0
      %1420 = vmatprep.mubr.bf16.mxu0 0
      %1421 = vmatmul.mubr.bf16.gmra.mrb[0].mxu0 %v1260
      %v1422 = vpop.f32.mrb[0].mxu0
      %v1423 = vadd.f32 0.0, %v1422
      %v1424 = vpop.f32.mrb[0].mxu0
      %v1425 = vpop.f32.mrb[0].mxu0
      %v1426 = vadd.f32 0.0, %v1425
      %v1427 = vpop.f32.mrb[0].mxu0
      %1428 = vmatprep.mubr.bf16.mxu0 0
      %1429 = vmatmul.mubr.bf16.gmra.mrb[0].mxu0 %v1263
      %v1430 = vpop.f32.mrb[0].mxu0
      %v1431 = vadd.f32 0.0, %v1430
      %v1432 = vpop.f32.mrb[0].mxu0
      %v1433 = vpop.f32.mrb[0].mxu0
      %v1434 = vadd.f32 0.0, %v1433
      %v1435 = vpop.f32.mrb[0].mxu0
      %1436 = vdwg.mxu0
      %v1437 = vadd.f32 %v1142, %v1303
      %v1438 = vadd.f32 %v1143, %v1306
      %v1439 = vadd.f32 %v1144, %v1311
      %v1440 = vadd.f32 %v1145, %v1314
      %v1441 = vadd.f32 %v1146, %v1319
      %v1442 = vadd.f32 %v1147, %v1322
      %v1443 = vadd.f32 %v1148, %v1327
      %v1444 = vadd.f32 %v1149, %v1330
      %v1445 = vadd.f32 %v1150, %v1335
      %v1446 = vadd.f32 %v1151, %v1338
      %v1447 = vadd.f32 %v1152, %v1343
      %v1448 = vadd.f32 %v1153, %v1346
      %v1449 = vadd.f32 %v1154, %v1351
      %v1450 = vadd.f32 %v1155, %v1354
      %v1451 = vadd.f32 %v1156, %v1359
      %v1452 = vadd.f32 %v1157, %v1362
      %v1453 = vadd.f32 %v1158, %v1367
      %v1454 = vadd.f32 %v1159, %v1370
      %v1455 = vadd.f32 %v1160, %v1375
      %v1456 = vadd.f32 %v1161, %v1378
      %v1457 = vadd.f32 %v1162, %v1383
      %v1458 = vadd.f32 %v1163, %v1386
      %v1459 = vadd.f32 %v1164, %v1391
      %v1460 = vadd.f32 %v1165, %v1394
      %v1461 = vadd.f32 %v1166, %v1399
      %v1462 = vadd.f32 %v1167, %v1402
      %v1463 = vadd.f32 %v1168, %v1407
      %v1464 = vadd.f32 %v1169, %v1410
      %v1465 = vadd.f32 %v1170, %v1415
      %v1466 = vadd.f32 %v1171, %v1418
      %v1467 = vadd.f32 %v1172, %v1423
      %v1468 = vadd.f32 %v1173, %v1426
      %v1469 = vadd.f32 %v1174, %v1431
      %v1470 = vadd.f32 %v1175, %v1434
      %1471 = vst [vmem:[%s235] sm:$0xff] %v1437
      %1472 = vst [vmem:[%s235 + $0x8] sm:$0xff] %v1438
      %1473 = vst [vmem:[%s235 + $0x10] sm:$0xff] %v1439
      %1474 = vst [vmem:[%s235 + $0x18] sm:$0xff] %v1440
      %1475 = vst [vmem:[%s235 + $0x20] sm:$0xff] %v1441
      %1476 = vst [vmem:[%s235 + $0x28] sm:$0xff] %v1442
      %1477 = vst [vmem:[%s235 + $0x30] sm:$0xff] %v1443
      %1478 = vst [vmem:[%s235 + $0x38] sm:$0xff] %v1444
      %1479 = vst [vmem:[%s235 + $0x40] sm:$0xff] %v1445
      %1480 = vst [vmem:[%s235 + $0x48] sm:$0xff] %v1446
      %1481 = vst [vmem:[%s235 + $0x50] sm:$0xff] %v1447
      %1482 = vst [vmem:[%s235 + $0x58] sm:$0xff] %v1448
      %1483 = vst [vmem:[%s235 + $0x60] sm:$0xff] %v1449
      %1484 = vst [vmem:[%s235 + $0x68] sm:$0xff] %v1450
      %1485 = vst [vmem:[%s235 + $0x70] sm:$0xff] %v1451
      %1486 = vst [vmem:[%s235 + $0x78] sm:$0xff] %v1452
      %1487 = vst [vmem:[%s235 + $0x80] sm:$0xff] %v1453
      %1488 = vst [vmem:[%s235 + $0x88] sm:$0xff] %v1454
      %1489 = vst [vmem:[%s235 + $0x90] sm:$0xff] %v1455
      %1490 = vst [vmem:[%s235 + $0x98] sm:$0xff] %v1456
      %1491 = vst [vmem:[%s235 + $0xa0] sm:$0xff] %v1457
      %1492 = vst [vmem:[%s235 + $0xa8] sm:$0xff] %v1458
      %1493 = vst [vmem:[%s235 + $0xb0] sm:$0xff] %v1459
      %1494 = vst [vmem:[%s235 + $0xb8] sm:$0xff] %v1460
      %1495 = vst [vmem:[%s235 + $0xc0] sm:$0xff] %v1461
      %1496 = vst [vmem:[%s235 + $0xc8] sm:$0xff] %v1462
      %1497 = vst [vmem:[%s235 + $0xd0] sm:$0xff] %v1463
      %1498 = vst [vmem:[%s235 + $0xd8] sm:$0xff] %v1464
      %1499 = vst [vmem:[%s235 + $0xe0] sm:$0xff] %v1465
      %1500 = vst [vmem:[%s235 + $0xe8] sm:$0xff] %v1466
      %1501 = vst [vmem:[%s235 + $0xf0] sm:$0xff] %v1467
      %1502 = vst [vmem:[%s235 + $0xf8] sm:$0xff] %v1468
      %1503 = vst [vmem:[%s235 + $0x100] sm:$0xff] %v1469
      %1504 = vst [vmem:[%s235 + $0x108] sm:$0xff] %v1470
      %v1505 = vld [vmem:[%s2] sm:$0xff]
      %v1506 = vld [vmem:[%s2 + $0x8] sm:$0xff]
      %v1507 = vld [vmem:[%s2 + $0x10] sm:$0xff]
      %v1508 = vld [vmem:[%s2 + $0x18] sm:$0xff]
      %v1509 = vld [vmem:[%s2 + $0x20] sm:$0xff]
      %v1510 = vld [vmem:[%s2 + $0x28] sm:$0xff]
      %v1511 = vld [vmem:[%s2 + $0x30] sm:$0xff]
      %v1512 = vld [vmem:[%s2 + $0x38] sm:$0xff]
      %v1513 = vld [vmem:[%s2 + $0x40] sm:$0xff]
      %v1514 = vld [vmem:[%s2 + $0x48] sm:$0xff]
      %v1515 = vld [vmem:[%s2 + $0x50] sm:$0xff]
      %v1516 = vld [vmem:[%s2 + $0x58] sm:$0xff]
      %v1517 = vld [vmem:[%s2 + $0x60] sm:$0xff]
      %v1518 = vld [vmem:[%s2 + $0x68] sm:$0xff]
      %v1519 = vld [vmem:[%s2 + $0x70] sm:$0xff]
      %v1520 = vld [vmem:[%s2 + $0x78] sm:$0xff]
      %v1521 = vld [vmem:[%s2 + $0x80] sm:$0xff]
      %v1522 = vld [vmem:[%s2 + $0x88] sm:$0xff]
      %v1523 = vld [vmem:[%s2 + $0x90] sm:$0xff]
      %v1524 = vld [vmem:[%s2 + $0x98] sm:$0xff]
      %v1525 = vld [vmem:[%s2 + $0xa0] sm:$0xff]
      %v1526 = vld [vmem:[%s2 + $0xa8] sm:$0xff]
      %v1527 = vld [vmem:[%s2 + $0xb0] sm:$0xff]
      %v1528 = vld [vmem:[%s2 + $0xb8] sm:$0xff]
      %v1529 = vld [vmem:[%s2 + $0xc0] sm:$0xff]
      %v1530 = vld [vmem:[%s2 + $0xc8] sm:$0xff]
      %v1531 = vld [vmem:[%s2 + $0xd0] sm:$0xff]
      %v1532 = vld [vmem:[%s2 + $0xd8] sm:$0xff]
      %v1533 = vld [vmem:[%s2 + $0xe0] sm:$0xff]
      %v1534 = vld [vmem:[%s2 + $0xe8] sm:$0xff]
      %v1535 = vld [vmem:[%s2 + $0xf0] sm:$0xff]
      %v1536 = vld [vmem:[%s2 + $0xf8] sm:$0xff]
      %v1537 = vld [vmem:[%s2 + $0x100] sm:$0xff]
      %v1538 = vld [vmem:[%s2 + $0x108] sm:$0xff]
      %1540 = vset.pattern.permute.xlu0 0
      %1541 = vperm.xlu0 %1540, %v1505
      %v1542 = vpop.permute.xlu0 %1541
      %1545 = vset.pattern.permute.xlu0 0
      %1546 = vperm.xlu0 %1545, %v1506
      %v1547 = vpop.permute.xlu0 %1546
      %1550 = vset.pattern.permute.xlu0 0
      %1551 = vperm.xlu0 %1550, %v1507
      %v1552 = vpop.permute.xlu0 %1551
      %1555 = vset.pattern.permute.xlu0 0
      %1556 = vperm.xlu0 %1555, %v1508
      %v1557 = vpop.permute.xlu0 %1556
      %1560 = vset.pattern.permute.xlu0 0
      %1561 = vperm.xlu0 %1560, %v1509
      %v1562 = vpop.permute.xlu0 %1561
      %1565 = vset.pattern.permute.xlu0 0
      %1566 = vperm.xlu0 %1565, %v1510
      %v1567 = vpop.permute.xlu0 %1566
      %1570 = vset.pattern.permute.xlu0 0
      %1571 = vperm.xlu0 %1570, %v1511
      %v1572 = vpop.permute.xlu0 %1571
      %1575 = vset.pattern.permute.xlu0 0
      %1576 = vperm.xlu0 %1575, %v1512
      %v1577 = vpop.permute.xlu0 %1576
      %1580 = vset.pattern.permute.xlu0 0
      %1581 = vperm.xlu0 %1580, %v1513
      %v1582 = vpop.permute.xlu0 %1581
      %1585 = vset.pattern.permute.xlu0 0
      %1586 = vperm.xlu0 %1585, %v1514
      %v1587 = vpop.permute.xlu0 %1586
      %1590 = vset.pattern.permute.xlu0 0
      %1591 = vperm.xlu0 %1590, %v1515
      %v1592 = vpop.permute.xlu0 %1591
      %1595 = vset.pattern.permute.xlu0 0
      %1596 = vperm.xlu0 %1595, %v1516
      %v1597 = vpop.permute.xlu0 %1596
      %1600 = vset.pattern.permute.xlu0 0
      %1601 = vperm.xlu0 %1600, %v1517
      %v1602 = vpop.permute.xlu0 %1601
      %1605 = vset.pattern.permute.xlu0 0
      %1606 = vperm.xlu0 %1605, %v1518
      %v1607 = vpop.permute.xlu0 %1606
      %1610 = vset.pattern.permute.xlu0 0
      %1611 = vperm.xlu0 %1610, %v1519
      %v1612 = vpop.permute.xlu0 %1611
      %1615 = vset.pattern.permute.xlu0 0
      %1616 = vperm.xlu0 %1615, %v1520
      %v1617 = vpop.permute.xlu0 %1616
      %1620 = vset.pattern.permute.xlu0 0
      %1621 = vperm.xlu0 %1620, %v1521
      %v1622 = vpop.permute.xlu0 %1621
      %1625 = vset.pattern.permute.xlu0 0
      %1626 = vperm.xlu0 %1625, %v1522
      %v1627 = vpop.permute.xlu0 %1626
      %1630 = vset.pattern.permute.xlu0 0
      %1631 = vperm.xlu0 %1630, %v1523
      %v1632 = vpop.permute.xlu0 %1631
      %1635 = vset.pattern.permute.xlu0 0
      %1636 = vperm.xlu0 %1635, %v1524
      %v1637 = vpop.permute.xlu0 %1636
      %1640 = vset.pattern.permute.xlu0 0
      %1641 = vperm.xlu0 %1640, %v1525
      %v1642 = vpop.permute.xlu0 %1641
      %1645 = vset.pattern.permute.xlu0 0
      %1646 = vperm.xlu0 %1645, %v1526
      %v1647 = vpop.permute.xlu0 %1646
      %1650 = vset.pattern.permute.xlu0 0
      %1651 = vperm.xlu0 %1650, %v1527
      %v1652 = vpop.permute.xlu0 %1651
      %1655 = vset.pattern.permute.xlu0 0
      %1656 = vperm.xlu0 %1655, %v1528
      %v1657 = vpop.permute.xlu0 %1656
      %1660 = vset.pattern.permute.xlu0 0
      %1661 = vperm.xlu0 %1660, %v1529
      %v1662 = vpop.permute.xlu0 %1661
      %1665 = vset.pattern.permute.xlu0 0
      %1666 = vperm.xlu0 %1665, %v1530
      %v1667 = vpop.permute.xlu0 %1666
      %1670 = vset.pattern.permute.xlu0 0
      %1671 = vperm.xlu0 %1670, %v1531
      %v1672 = vpop.permute.xlu0 %1671
      %1675 = vset.pattern.permute.xlu0 0
      %1676 = vperm.xlu0 %1675, %v1532
      %v1677 = vpop.permute.xlu0 %1676
      %1680 = vset.pattern.permute.xlu0 0
      %1681 = vperm.xlu0 %1680, %v1533
      %v1682 = vpop.permute.xlu0 %1681
      %1685 = vset.pattern.permute.xlu0 0
      %1686 = vperm.xlu0 %1685, %v1534
      %v1687 = vpop.permute.xlu0 %1686
      %1690 = vset.pattern.permute.xlu0 0
      %1691 = vperm.xlu0 %1690, %v1535
      %v1692 = vpop.permute.xlu0 %1691
      %1695 = vset.pattern.permute.xlu0 0
      %1696 = vperm.xlu0 %1695, %v1536
      %v1697 = vpop.permute.xlu0 %1696
      %1700 = vset.pattern.permute.xlu0 0
      %1701 = vperm.xlu0 %1700, %v1537
      %v1702 = vpop.permute.xlu0 %1701
      %1705 = vset.pattern.permute.xlu0 0
      %1706 = vperm.xlu0 %1705, %v1538
      %v1707 = vpop.permute.xlu0 %1706
      %v1709 = vmul.f32 %v1437, %v1542
      %v1710 = vmul.f32 %v1438, %v1547
      %v1711 = vmul.f32 %v1439, %v1552
      %v1712 = vmul.f32 %v1440, %v1557
      %v1713 = vmul.f32 %v1441, %v1562
      %v1714 = vmul.f32 %v1442, %v1567
      %v1715 = vmul.f32 %v1443, %v1572
      %v1716 = vmul.f32 %v1444, %v1577
      %v1717 = vmul.f32 %v1445, %v1582
      %v1718 = vmul.f32 %v1446, %v1587
      %v1719 = vmul.f32 %v1447, %v1592
      %v1720 = vmul.f32 %v1448, %v1597
      %v1721 = vmul.f32 %v1449, %v1602
      %v1722 = vmul.f32 %v1450, %v1607
      %v1723 = vmul.f32 %v1451, %v1612
      %v1724 = vmul.f32 %v1452, %v1617
      %v1725 = vmul.f32 %v1453, %v1622
      %v1726 = vmul.f32 %v1454, %v1627
      %v1727 = vmul.f32 %v1455, %v1632
      %v1728 = vmul.f32 %v1456, %v1637
      %v1729 = vmul.f32 %v1457, %v1642
      %v1730 = vmul.f32 %v1458, %v1647
      %v1731 = vmul.f32 %v1459, %v1652
      %v1732 = vmul.f32 %v1460, %v1657
      %v1733 = vmul.f32 %v1461, %v1662
      %v1734 = vmul.f32 %v1462, %v1667
      %v1735 = vmul.f32 %v1463, %v1672
      %v1736 = vmul.f32 %v1464, %v1677
      %v1737 = vmul.f32 %v1465, %v1682
      %v1738 = vmul.f32 %v1466, %v1687
      %v1739 = vmul.f32 %v1467, %v1692
      %v1740 = vmul.f32 %v1468, %v1697
      %v1741 = vmul.f32 %v1469, %v1702
      %v1742 = vmul.f32 %v1470, %v1707
      %v1743 = vadd.f32 %v1709, %v1710
      %v1744 = vadd.f32 %v1743, %v1711
      %v1745 = vadd.f32 %v1744, %v1712
      %v1746 = vadd.f32 %v1745, %v1713
      %v1747 = vadd.f32 %v1746, %v1714
      %v1748 = vadd.f32 %v1747, %v1715
      %v1749 = vadd.f32 %v1748, %v1716
      %v1750 = vadd.f32 %v1749, %v1717
      %v1751 = vadd.f32 %v1750, %v1718
      %v1752 = vadd.f32 %v1751, %v1719
      %v1753 = vadd.f32 %v1752, %v1720
      %v1754 = vadd.f32 %v1753, %v1721
      %v1755 = vadd.f32 %v1754, %v1722
      %v1756 = vadd.f32 %v1755, %v1723
      %v1757 = vadd.f32 %v1756, %v1724
      %v1758 = vadd.f32 %v1757, %v1725
      %v1759 = vadd.f32 %v1758, %v1726
      %v1760 = vadd.f32 %v1759, %v1727
      %v1761 = vadd.f32 %v1760, %v1728
      %v1762 = vadd.f32 %v1761, %v1729
      %v1763 = vadd.f32 %v1762, %v1730
      %v1764 = vadd.f32 %v1763, %v1731
      %v1765 = vadd.f32 %v1764, %v1732
      %v1766 = vadd.f32 %v1765, %v1733
      %v1767 = vadd.f32 %v1766, %v1734
      %v1768 = vadd.f32 %v1767, %v1735
      %v1769 = vadd.f32 %v1768, %v1736
      %v1770 = vadd.f32 %v1769, %v1737
      %v1771 = vadd.f32 %v1770, %v1738
      %v1772 = vadd.f32 %v1771, %v1739
      %v1773 = vadd.f32 %v1772, %v1740
      %v1774 = vadd.f32 %v1773, %v1741
      %v1775 = vadd.f32 %v1774, %v1742
      %v1776 = vrot.slane %v1775, 4
      %v1777 = vadd.f32 %v1775, %v1776
      %v1778 = vrot.slane %v1777, 2
      %v1779 = vadd.f32 %v1777, %v1778
      %v1780 = vrot.slane %v1779, 1
      %v1781 = vadd.f32 %v1779, %v1780
      %1782 = vst [vmem:[%s238] sm:$0x1] %v1781
      %v1783 = vmul.f32 %v1709, %v1437
      %v1784 = vmul.f32 %v1710, %v1438
      %v1785 = vmul.f32 %v1711, %v1439
      %v1786 = vmul.f32 %v1712, %v1440
      %v1787 = vmul.f32 %v1713, %v1441
      %v1788 = vmul.f32 %v1714, %v1442
      %v1789 = vmul.f32 %v1715, %v1443
      %v1790 = vmul.f32 %v1716, %v1444
      %v1791 = vmul.f32 %v1717, %v1445
      %v1792 = vmul.f32 %v1718, %v1446
      %v1793 = vmul.f32 %v1719, %v1447
      %v1794 = vmul.f32 %v1720, %v1448
      %v1795 = vmul.f32 %v1721, %v1449
      %v1796 = vmul.f32 %v1722, %v1450
      %v1797 = vmul.f32 %v1723, %v1451
      %v1798 = vmul.f32 %v1724, %v1452
      %v1799 = vmul.f32 %v1725, %v1453
      %v1800 = vmul.f32 %v1726, %v1454
      %v1801 = vmul.f32 %v1727, %v1455
      %v1802 = vmul.f32 %v1728, %v1456
      %v1803 = vmul.f32 %v1729, %v1457
      %v1804 = vmul.f32 %v1730, %v1458
      %v1805 = vmul.f32 %v1731, %v1459
      %v1806 = vmul.f32 %v1732, %v1460
      %v1807 = vmul.f32 %v1733, %v1461
      %v1808 = vmul.f32 %v1734, %v1462
      %v1809 = vmul.f32 %v1735, %v1463
      %v1810 = vmul.f32 %v1736, %v1464
      %v1811 = vmul.f32 %v1737, %v1465
      %v1812 = vmul.f32 %v1738, %v1466
      %v1813 = vmul.f32 %v1739, %v1467
      %v1814 = vmul.f32 %v1740, %v1468
      %v1815 = vmul.f32 %v1741, %v1469
      %v1816 = vmul.f32 %v1742, %v1470
      %v1817 = vadd.f32 %v1783, %v1784
      %v1818 = vadd.f32 %v1817, %v1785
      %v1819 = vadd.f32 %v1818, %v1786
      %v1820 = vadd.f32 %v1819, %v1787
      %v1821 = vadd.f32 %v1820, %v1788
      %v1822 = vadd.f32 %v1821, %v1789
      %v1823 = vadd.f32 %v1822, %v1790
      %v1824 = vadd.f32 %v1823, %v1791
      %v1825 = vadd.f32 %v1824, %v1792
      %v1826 = vadd.f32 %v1825, %v1793
      %v1827 = vadd.f32 %v1826, %v1794
      %v1828 = vadd.f32 %v1827, %v1795
      %v1829 = vadd.f32 %v1828, %v1796
      %v1830 = vadd.f32 %v1829, %v1797
      %v1831 = vadd.f32 %v1830, %v1798
      %v1832 = vadd.f32 %v1831, %v1799
      %v1833 = vadd.f32 %v1832, %v1800
      %v1834 = vadd.f32 %v1833, %v1801
      %v1835 = vadd.f32 %v1834, %v1802
      %v1836 = vadd.f32 %v1835, %v1803
      %v1837 = vadd.f32 %v1836, %v1804
      %v1838 = vadd.f32 %v1837, %v1805
      %v1839 = vadd.f32 %v1838, %v1806
      %v1840 = vadd.f32 %v1839, %v1807
      %v1841 = vadd.f32 %v1840, %v1808
      %v1842 = vadd.f32 %v1841, %v1809
      %v1843 = vadd.f32 %v1842, %v1810
      %v1844 = vadd.f32 %v1843, %v1811
      %v1845 = vadd.f32 %v1844, %v1812
      %v1846 = vadd.f32 %v1845, %v1813
      %v1847 = vadd.f32 %v1846, %v1814
      %v1848 = vadd.f32 %v1847, %v1815
      %v1849 = vadd.f32 %v1848, %v1816
      %v1850 = vrot.slane %v1849, 4
      %v1851 = vadd.f32 %v1849, %v1850
      %v1852 = vrot.slane %v1851, 2
      %v1853 = vadd.f32 %v1851, %v1852
      %v1854 = vrot.slane %v1853, 1
      %v1855 = vadd.f32 %v1853, %v1854
      %1856 = vst [vmem:[%s241] sm:$0x1] %v1855
      %p1857 = scmp.lt.s32.totalorder %s17, 1
      %s1858 = scalar_select %p1857, %s17, 1
      %s1859 = smul.addr %s1858, 34
      %s1860 = smul.addr %s1859, 8
      %s1861 = scalar_lea.vmem %s3, %s1860
      %p1862 = scmp.lt.s32.totalorder %s17, 1
      %s1863 = scalar_select %p1862, %s17, 1
      %s1864 = scalar_lea.vmem %s4, %s1863
      %p1865 = scmp.lt.s32.totalorder %s17, 1
      %s1866 = scalar_select %p1865, %s17, 1
      %s1867 = scalar_lea.vmem %s5, %s1866
      // Predicated region
      $region33: #{linnet_d_forward.9} parent=31 // pred_check
        %p1868 = pneg %p103
      $region34: #{linnet_d_forward.9} parent=31 // pred_check_branch
        %1870 = sbr.rel (%p1868) target = $region36
      $region35: #{linnet_d_forward.9} parent=31 // pred_region
        _
      $region36: #{linnet_d_forward.9} parent=31 // pred_fallthru
        _
      // Predicated region
      $region37: #{linnet_d_forward.9} parent=31 // pred_check
        %p1871 = pneg %p129
      $region38: #{linnet_d_forward.9} parent=31 // pred_check_branch
        %1873 = sbr.rel (%p1871) target = $region40
      $region39: #{linnet_d_forward.9} parent=31 // pred_region
        _
      $region40: #{linnet_d_forward.9} parent=31 // pred_fallthru
        _
      // Predicated region
      $region41: #{linnet_d_forward.9} parent=31 // pred_check
        %p1874 = pneg %p155
      $region42: #{linnet_d_forward.9} parent=31 // pred_check_branch
        %1876 = sbr.rel (%p1874) target = $region44
      $region43: #{linnet_d_forward.9} parent=31 // pred_region
        _
      $region44: #{linnet_d_forward.9} parent=31 // pred_fallthru
        _
    $region32: #{linnet_d_forward.9} parent=5 // pred_fallthru
      _
    %p1877 = scmp.le.s32.totalorder 2, %s12
    // Predicated region
    $region45: #{linnet_d_forward.9} parent=5 // pred_check
      %p1878 = pneg %p1877
    $region46: #{linnet_d_forward.9} parent=5 // pred_check_branch
      %1880 = sbr.rel (%p1878) target = $region48
    $region47: #{linnet_d_forward.9} parent=5 // pred_region
      %s1881 = ssub.s32 %s12, 2
      // Predicated region
      $region49: #{linnet_d_forward.9} parent=47 // pred_check
        %p1882 = pneg %p109
      $region50: #{linnet_d_forward.9} parent=47 // pred_check_branch
        %1884 = sbr.rel (%p1882) target = $region52
      $region51: #{linnet_d_forward.9} parent=47 // pred_region
        %p1885 = scmp.lt.s32.totalorder %s18, 1
        %s1886 = scalar_select %p1885, %s18, 1
        %s1887 = smul.addr %s1886, 34
        %s1888 = smul.addr %s1887, 8
        %s1889 = scalar_lea.vmem %s3, %s1888
      $region52: #{linnet_d_forward.9} parent=47 // pred_fallthru
        _
      // Predicated region
      $region53: #{linnet_d_forward.9} parent=47 // pred_check
        %p1890 = pneg %p135
      $region54: #{linnet_d_forward.9} parent=47 // pred_check_branch
        %1892 = sbr.rel (%p1890) target = $region56
      $region55: #{linnet_d_forward.9} parent=47 // pred_region
        %p1893 = scmp.lt.s32.totalorder %s18, 1
        %s1894 = scalar_select %p1893, %s18, 1
        %s1895 = scalar_lea.vmem %s4, %s1894
      $region56: #{linnet_d_forward.9} parent=47 // pred_fallthru
        _
      // Predicated region
      $region57: #{linnet_d_forward.9} parent=47 // pred_check
        %p1896 = pneg %p161
      $region58: #{linnet_d_forward.9} parent=47 // pred_check_branch
        %1898 = sbr.rel (%p1896) target = $region60
      $region59: #{linnet_d_forward.9} parent=47 // pred_region
        %p1899 = scmp.lt.s32.totalorder %s18, 1
        %s1900 = scalar_select %p1899, %s18, 1
        %s1901 = scalar_lea.vmem %s5, %s1900
      $region60: #{linnet_d_forward.9} parent=47 // pred_fallthru
        _
    $region48: #{linnet_d_forward.9} parent=5 // pred_fallthru
      _
  $region6: #{linnet_d_forward.9} parent=0 // loop_footer
    %s16 = sadd.s32 1, %s12
  $region7: #{linnet_d_forward.9} parent=0 // loop_footer_branch
    %11 = sbr.rel target = $region3
  $region8: #{linnet_d_forward.9} parent=0 // loop_exit
    _

// kernel: linnet_d_forward.12
$region0: #{linnet_d_forward.12}
  #allocation0 [shape = 'u32[]', space=smem, size = 0x4, offset = 0x4, fixed_abs, tag = 'smem constant byte address 0x4 - core index']
  #allocation1 [shape = 'u32[144,128]{1,0:T(1,128)}', space=vmem, size = 0x12000, scoped, tag = 'internal scratch']
  %s0 = inlined_call_operand.vmem [shape: f32[2,72,128], index: 0, kind: input, shape index: {}]
  %s1 = inlined_call_operand.vmem [shape: f32[1,128], index: 1, kind: input, shape index: {}]
  %s2 = inlined_call_operand.vmem [shape: f32[1,128], index: 2, kind: input, shape index: {}]
  %s3 = inlined_call_operand.vmem [shape: f32[72,1], index: 3, kind: input, shape index: {}]
  %s4 = inlined_call_operand.vmem [shape: bf16[2,72,128], index: 4, kind: output, shape index: {0}]
  %s5 = inlined_call_operand.hbm [shape: f32[2,1,128], index: 5, kind: output, shape index: {1}]
  %6 = xla_tuple %s4, %s5
  %s7 = sld [smem:[#allocation0]]
  $region57: #{linnet_d_forward.12} parent=0
    _
  %s9 = ssub.s32 1, %s7
  %s10 = scalar_select 0, %s9, %s7
  $region1: #{linnet_d_forward.12} parent=0
    #allocation2 [shape = 'u8[1024]{0}', space=vmem, size = 0x400, scoped, tag = 'output window, operand 1']
    #allocation3 [shape = 's32[2]{0}', space=sflag, size = 0x8, scoped, tag = 'scoped memory for linnet_d_forward.12']
    %11 = vsyncpa [#allocation3], 0
    %s12 = scalar_lea.sflag [#allocation3], 1
    %13 = vsyncpa %s12, 0
    loop: start=0, step=1, limit=4
    $region2: #{linnet_d_forward.12} parent=1 // loop_pre_header
      _
    $region3: #{linnet_d_forward.12} parent=1 // loop_header
      %s15 = sphi 0, %s19
      %p16 = scmp.ge.s32.totalorder %s15, 4
      %s25 = sphi 0, %s27
      %s28 = sphi 0, %s25
      %s29 = sphi 0, %s28
      %s45 = sphi 0, %s29
      %s49 = sphi 0, %s49
      %s51 = sphi 0, %s49
      %s52 = sphi 0, %s51
      %s66 = sphi 0, %s52
      %s70 = sphi 0, %s70
      %s72 = sphi 0, %s70
      %s73 = sphi 0, %s72
      %s87 = sphi 0, %s73
      %s91 = sphi 0, %s91
      %s93 = sphi 0, %s91
      %s94 = sphi 0, %s93
      %s108 = sphi 0, %s94
      %s114 = sphi 0, %s116
      %s117 = sphi 0, %s114
      %s118 = sphi 0, %s117
      %s134 = sphi 0, %s118
      %s140 = sphi 0, %s142
      %s143 = sphi 0, %s140
      %s144 = sphi 0, %s143
      %s160 = sphi 0, %s144
    $region4: #{linnet_d_forward.12} parent=1 // loop_header_branch
      %18 = sbr.rel (%p16) target = $region8
    $region5: #{linnet_d_forward.12} parent=1 // loop_body
      %s20 = ssub.s32 %s15, 1
      %s21 = ssub.s32 %s15, 2
      %s22 = sadd.s32 %s15, 1
      %s23 = ssub.s32 %s15, %s22
      %p24 = scmp.eq.s32.totalorder %s23, 0
      %s26 = sadd.s32 %s25, 1
      %s27 = scalar_select %p24, %s25, %s26
      %p30 = pneg %p24
      %p31 = scmp.eq.s32.totalorder %s15, 1
      %p32 = por %p30, %p31
      %p33 = scmp.ne.s32.totalorder %s25, %s28
      %p34 = scmp.eq.s32.totalorder %s15, 0
      %p35 = por %p33, %p34
      %p36 = scmp.ne.s32.totalorder %s25, %s28
      %p37 = scmp.eq.s32.totalorder %s20, 1
      %p38 = por %p36, %p37
      %p39 = scmp.ne.s32.totalorder %s28, %s29
      %p40 = scmp.eq.s32.totalorder %s20, 0
      %p41 = por %p39, %p40
      %p42 = scmp.ne.s32.totalorder %s28, %s29
      %p43 = scmp.eq.s32.totalorder %s21, 1
      %p44 = por %p42, %p43
      %p46 = scmp.ne.s32.totalorder %s29, %s45
      %p47 = scmp.eq.s32.totalorder %s21, 0
      %p48 = por %p46, %p47
      %s50 = sadd.s32 %s49, 1
      %p53 = scmp.eq.s32.totalorder %s15, 1
      %p54 = scmp.ne.s32.totalorder %s49, %s51
      %p55 = scmp.eq.s32.totalorder %s15, 0
      %p56 = por %p54, %p55
      %p57 = scmp.ne.s32.totalorder %s49, %s51
      %p58 = scmp.eq.s32.totalorder %s20, 1
      %p59 = por %p57, %p58
      %p60 = scmp.ne.s32.totalorder %s51, %s52
      %p61 = scmp.eq.s32.totalorder %s20, 0
      %p62 = por %p60, %p61
      %p63 = scmp.ne.s32.totalorder %s51, %s52
      %p64 = scmp.eq.s32.totalorder %s21, 1
      %p65 = por %p63, %p64
      %p67 = scmp.ne.s32.totalorder %s52, %s66
      %p68 = scmp.eq.s32.totalorder %s21, 0
      %p69 = por %p67, %p68
      %s71 = sadd.s32 %s70, 1
      %p74 = scmp.eq.s32.totalorder %s15, 1
      %p75 = scmp.ne.s32.totalorder %s70, %s72
      %p76 = scmp.eq.s32.totalorder %s15, 0
      %p77 = por %p75, %p76
      %p78 = scmp.ne.s32.totalorder %s70, %s72
      %p79 = scmp.eq.s32.totalorder %s20, 1
      %p80 = por %p78, %p79
      %p81 = scmp.ne.s32.totalorder %s72, %s73
      %p82 = scmp.eq.s32.totalorder %s20, 0
      %p83 = por %p81, %p82
      %p84 = scmp.ne.s32.totalorder %s72, %s73
      %p85 = scmp.eq.s32.totalorder %s21, 1
      %p86 = por %p84, %p85
      %p88 = scmp.ne.s32.totalorder %s73, %s87
      %p89 = scmp.eq.s32.totalorder %s21, 0
      %p90 = por %p88, %p89
      %s92 = sadd.s32 %s91, 1
      %p95 = scmp.eq.s32.totalorder %s15, 1
      %p96 = scmp.ne.s32.totalorder %s91, %s93
      %p97 = scmp.eq.s32.totalorder %s15, 0
      %p98 = por %p96, %p97
      %p99 = scmp.ne.s32.totalorder %s91, %s93
      %p100 = scmp.eq.s32.totalorder %s20, 1
      %p101 = por %p99, %p100
      %p102 = scmp.ne.s32.totalorder %s93, %s94
      %p103 = scmp.eq.s32.totalorder %s20, 0
      %p104 = por %p102, %p103
      %p105 = scmp.ne.s32.totalorder %s93, %s94
      %p106 = scmp.eq.s32.totalorder %s21, 1
      %p107 = por %p105, %p106
      %p109 = scmp.ne.s32.totalorder %s94, %s108
      %p110 = scmp.eq.s32.totalorder %s21, 0
      %p111 = por %p109, %p110
      %s112 = ssub.s32 %s15, %s22
      %p113 = scmp.eq.s32.totalorder %s112, 0
      %s115 = sadd.s32 %s114, 1
      %s116 = scalar_select %p113, %s114, %s115
      %p119 = pneg %p113
      %p120 = scmp.eq.s32.totalorder %s15, 1
      %p121 = por %p119, %p120
      %p122 = scmp.ne.s32.totalorder %s114, %s117
      %p123 = scmp.eq.s32.totalorder %s15, 0
      %p124 = por %p122, %p123
      %p125 = scmp.ne.s32.totalorder %s114, %s117
      %p126 = scmp.eq.s32.totalorder %s20, 1
      %p127 = por %p125, %p126
      %p128 = scmp.ne.s32.totalorder %s117, %s118
      %p129 = scmp.eq.s32.totalorder %s20, 0
      %p130 = por %p128, %p129
      %p131 = scmp.ne.s32.totalorder %s117, %s118
      %p132 = scmp.eq.s32.totalorder %s21, 1
      %p133 = por %p131, %p132
      %p135 = scmp.ne.s32.totalorder %s118, %s134
      %p136 = scmp.eq.s32.totalorder %s21, 0
      %p137 = por %p135, %p136
      %s138 = ssub.s32 %s15, %s22
      %p139 = scmp.eq.s32.totalorder %s138, 0
      %s141 = sadd.s32 %s140, 1
      %s142 = scalar_select %p139, %s140, %s141
      %p145 = pneg %p139
      %p146 = scmp.eq.s32.totalorder %s15, 1
      %p147 = por %p145, %p146
      %p148 = scmp.ne.s32.totalorder %s140, %s143
      %p149 = scmp.eq.s32.totalorder %s15, 0
      %p150 = por %p148, %p149
      %p151 = scmp.ne.s32.totalorder %s140, %s143
      %p152 = scmp.eq.s32.totalorder %s20, 1
      %p153 = por %p151, %p152
      %p154 = scmp.ne.s32.totalorder %s143, %s144
      %p155 = scmp.eq.s32.totalorder %s20, 0
      %p156 = por %p154, %p155
      %p157 = scmp.ne.s32.totalorder %s143, %s144
      %p158 = scmp.eq.s32.totalorder %s21, 1
      %p159 = por %p157, %p158
      %p161 = scmp.ne.s32.totalorder %s144, %s160
      %p162 = scmp.eq.s32.totalorder %s21, 0
      %p163 = por %p161, %p162
      %p164 = scmp.le.s32.totalorder 1, %s15
      %p165 = scmp.lt.s32.totalorder %s15, 3
      %p166 = pnand %p164, %p165
      %p167 = pneg %p166
      // Predicated region
      $region9: #{linnet_d_forward.12} parent=5 // pred_check
        _
      $region10: #{linnet_d_forward.12} parent=5 // pred_check_branch
        %169 = sbr.rel (%p166) target = $region12
      $region11: #{linnet_d_forward.12} parent=5 // pred_region
        %s170 = ssub.s32 %s15, 1
        // Predicated region
        $region13: #{linnet_d_forward.12} parent=11 // pred_check
          %p171 = pneg %p62
        $region14: #{linnet_d_forward.12} parent=11 // pred_check_branch
          %173 = sbr.rel (%p171) target = $region16
        $region15: #{linnet_d_forward.12} parent=11 // pred_region
          _
        $region16: #{linnet_d_forward.12} parent=11 // pred_fallthru
          _
        // Predicated region
        $region17: #{linnet_d_forward.12} parent=11 // pred_check
          %p174 = pneg %p83
        $region18: #{linnet_d_forward.12} parent=11 // pred_check_branch
          %176 = sbr.rel (%p174) target = $region20
        $region19: #{linnet_d_forward.12} parent=11 // pred_region
          _
        $region20: #{linnet_d_forward.12} parent=11 // pred_fallthru
          _
        // Predicated region
        $region21: #{linnet_d_forward.12} parent=11 // pred_check
          %p177 = pneg %p104
        $region22: #{linnet_d_forward.12} parent=11 // pred_check_branch
          %179 = sbr.rel (%p177) target = $region24
        $region23: #{linnet_d_forward.12} parent=11 // pred_region
          _
        $region24: #{linnet_d_forward.12} parent=11 // pred_fallthru
          _
      $region12: #{linnet_d_forward.12} parent=5 // pred_fallthru
        _
      %p180 = scmp.lt.s32.totalorder %s15, 2
      // Predicated region
      $region25: #{linnet_d_forward.12} parent=5 // pred_check
        %p181 = pneg %p180
      $region26: #{linnet_d_forward.12} parent=5 // pred_check_branch
        %183 = sbr.rel (%p181) target = $region28
      $region27: #{linnet_d_forward.12} parent=5 // pred_region
        // Predicated region
        $region29: #{linnet_d_forward.12} parent=27 // pred_check
          %p184 = pneg %p35
        $region30: #{linnet_d_forward.12} parent=27 // pred_check_branch
          %186 = sbr.rel (%p184) target = $region32
        $region31: #{linnet_d_forward.12} parent=27 // pred_region
          %p187 = scmp.lt.s32.totalorder %s15, 1
          %s188 = scalar_select %p187, %s15, 1
          %s189 = smul.addr %s188, 9
          %s190 = smul.addr %s189, 8
          %s191 = scalar_lea.vmem %s0, %s190
        $region32: #{linnet_d_forward.12} parent=27 // pred_fallthru
          _
      $region28: #{linnet_d_forward.12} parent=5 // pred_fallthru
        _
      %p192 = scmp.le.s32.totalorder 1, %s15
      %p193 = scmp.lt.s32.totalorder %s15, 3
      %p194 = pnand %p192, %p193
      %p195 = pneg %p194
      // Predicated region
      $region33: #{linnet_d_forward.12} parent=5 // pred_check
        _
      $region34: #{linnet_d_forward.12} parent=5 // pred_check_branch
        %197 = sbr.rel (%p194) target = $region36
      $region35: #{linnet_d_forward.12} parent=5 // pred_region
        %s198 = ssub.s32 %s15, 1
        %p199 = scmp.lt.s32.totalorder %s20, 1
        %s200 = scalar_select %p199, %s20, 1
        %s201 = smul.addr %s200, 9
        %s202 = smul.addr %s201, 8
        %s203 = scalar_lea.vmem %s0, %s202
        %p204 = pneg %p41
        %p205 = pneg %p38
        %p206 = pneg %p62
        %p207 = pneg %p59
        %p208 = pneg %p83
        %p209 = pneg %p80
        %p210 = pneg %p104
        %p211 = pneg %p101
        %p212 = pneg %p130
        %p213 = pneg %p127
        %p214 = scmp.lt.s32.totalorder %s20, 1
        %s215 = scalar_select %p214, %s20, 1
        %s216 = smul.addr %s215, 9
        %s217 = smul.addr %s216, 4
        %s218 = scalar_lea.vmem %s4, %s217
        %p219 = pneg %p156
        %p220 = pneg %p153
        %s221 = sand.u32 %s143, 1
        %s222 = scalar_lea.sflag [#allocation3], %s221
        %s223 = sand.u32 %s143, 1
        %s224 = scalar_lea.vmem [#allocation2], %s223
        %p225 = scmp.lt.s32.totalorder %s20, 1
        %s226 = scalar_select %p225, %s20, 1
        %s227 = smul.addr %s226, 9
        %s228 = smul.addr %s227, 8
        %s229 = scalar_lea.vmem %s0, %s228
        %p230 = scmp.lt.s32.totalorder %s20, 1
        %s231 = scalar_select %p230, %s20, 1
        %s232 = smul.addr %s231, 9
        %s233 = smul.addr %s232, 4
        %s234 = scalar_lea.vmem %s4, %s233
        %v235 = vld [vmem:[%s229] sm:$0xff]
        %v236 = vld [vmem:[%s229 + $0x8] sm:$0xff]
        %v237 = vld [vmem:[%s229 + $0x10] sm:$0xff]
        %v238 = vld [vmem:[%s229 + $0x18] sm:$0xff]
        %v239 = vld [vmem:[%s229 + $0x20] sm:$0xff]
        %v240 = vld [vmem:[%s229 + $0x28] sm:$0xff]
        %v241 = vld [vmem:[%s229 + $0x30] sm:$0xff]
        %v242 = vld [vmem:[%s229 + $0x38] sm:$0xff]
        %v243 = vld [vmem:[%s229 + $0x40] sm:$0xff]
        %v244 = vld [vmem:[%s1] sm:$0x1]
        %v246 = vlaneseq
        %v247 = vshrl.u32 %v246, 7
        %v248 = vsub.s32 0, %v247
        %v249 = vrot.slane %v244, %v248
        %v251 = vmul.f32 %v235, %v249
        %v252 = vmul.f32 %v236, %v249
        %v253 = vmul.f32 %v237, %v249
        %v254 = vmul.f32 %v238, %v249
        %v255 = vmul.f32 %v239, %v249
        %v256 = vmul.f32 %v240, %v249
        %v257 = vmul.f32 %v241, %v249
        %v258 = vmul.f32 %v242, %v249
        %v259 = vmul.f32 %v243, %v249
        %v260 = vld [vmem:[%s2] sm:$0x1]
        %v262 = vlaneseq
        %v263 = vshrl.u32 %v262, 7
        %v264 = vsub.s32 0, %v263
        %v265 = vrot.slane %v260, %v264
        %v267 = vadd.f32 %v251, %v265
        %v268 = vadd.f32 %v252, %v265
        %v269 = vadd.f32 %v253, %v265
        %v270 = vadd.f32 %v254, %v265
        %v271 = vadd.f32 %v255, %v265
        %v272 = vadd.f32 %v256, %v265
        %v273 = vadd.f32 %v257, %v265
        %v274 = vadd.f32 %v258, %v265
        %v275 = vadd.f32 %v259, %v265
        %v276 = vmul.f32 %v267, 0.2
        %v277 = vmul.f32 %v268, 0.2
        %v278 = vmul.f32 %v269, 0.2
        %v279 = vmul.f32 %v270, 0.2
        %v280 = vmul.f32 %v271, 0.2
        %v281 = vmul.f32 %v272, 0.2
        %v282 = vmul.f32 %v273, 0.2
        %v283 = vmul.f32 %v274, 0.2
        %v284 = vmul.f32 %v275, 0.2
        %v285 = vmax.f32 %v267, %v276
        %v286 = vmax.f32 %v268, %v277
        %v287 = vmax.f32 %v269, %v278
        %v288 = vmax.f32 %v270, %v279
        %v289 = vmax.f32 %v271, %v280
        %v290 = vmax.f32 %v272, %v281
        %v291 = vmax.f32 %v273, %v282
        %v292 = vmax.f32 %v274, %v283
        %v293 = vmax.f32 %v275, %v284
        %v294 = vpack.c.bf16 %v286, %v285
        %v295 = vpack.c.bf16 %v288, %v287
        %v296 = vpack.c.bf16 %v290, %v289
        %v297 = vpack.c.bf16 %v292, %v291
        %v298 = vpack.c.bf16 %v293, %v293
        %v304 = vunpack.c.l.b16 %v294
        %v305 = vunpack.c.h.b16 %v294
        %v306 = vunpack.c.l.b16 %v295
        %v307 = vunpack.c.h.b16 %v295
        %v308 = vunpack.c.l.b16 %v296
        %v309 = vunpack.c.h.b16 %v296
        %v310 = vunpack.c.l.b16 %v297
        %v311 = vunpack.c.h.b16 %v297
        %v312 = vunpack.c.l.b16 %v298
        %v313 = vpack.c.b16 %v304, %v304
        %v314 = vpack.c.b16 %v305, %v305
        %v315 = vpack.c.b16 %v306, %v306
        %v316 = vpack.c.b16 %v307, %v307
        %v317 = vpack.c.b16 %v308, %v308
        %v318 = vpack.c.b16 %v309, %v309
        %v319 = vpack.c.b16 %v310, %v310
        %v320 = vpack.c.b16 %v311, %v311
        %v321 = vpack.c.b16 %v312, %v312
        %331 = vst [vmem:[%s234] sm:$0xf] %v313
        %332 = vst [vmem:[%s234 + $0x4] sm:$0xf] %v314
        %333 = vst [vmem:[%s234 + $0x8] sm:$0xf] %v315
        %334 = vst [vmem:[%s234 + $0xc] sm:$0xf] %v316
        %335 = vst [vmem:[%s234 + $0x10] sm:$0xf] %v317
        %336 = vst [vmem:[%s234 + $0x14] sm:$0xf] %v318
        %337 = vst [vmem:[%s234 + $0x18] sm:$0xf] %v319
        %338 = vst [vmem:[%s234 + $0x1c] sm:$0xf] %v320
        %339 = vst [vmem:[%s234 + $0x20] sm:$0xf] %v321
        %v340 = vld [vmem:[%s3] sm:$0xff]
        %v341 = vld [vmem:[%s3 + $0x8] sm:$0xff]
        %v342 = vld [vmem:[%s3 + $0x10] sm:$0xff]
        %v343 = vld [vmem:[%s3 + $0x18] sm:$0xff]
        %v344 = vld [vmem:[%s3 + $0x20] sm:$0xff]
        %v345 = vld [vmem:[%s3 + $0x28] sm:$0xff]
        %v346 = vld [vmem:[%s3 + $0x30] sm:$0xff]
        %v347 = vld [vmem:[%s3 + $0x38] sm:$0xff]
        %v348 = vld [vmem:[%s3 + $0x40] sm:$0xff]
        %350 = vset.pattern.permute.xlu0 0
        %351 = vperm.xlu0 %350, %v340
        %v352 = vpop.permute.xlu0 %351
        %355 = vset.pattern.permute.xlu0 0
        %356 = vperm.xlu0 %355, %v341
        %v357 = vpop.permute.xlu0 %356
        %360 = vset.pattern.permute.xlu0 0
        %361 = vperm.xlu0 %360, %v342
        %v362 = vpop.permute.xlu0 %361
        %365 = vset.pattern.permute.xlu0 0
        %366 = vperm.xlu0 %365, %v343
        %v367 = vpop.permute.xlu0 %366
        %370 = vset.pattern.permute.xlu0 0
        %371 = vperm.xlu0 %370, %v344
        %v372 = vpop.permute.xlu0 %371
        %375 = vset.pattern.permute.xlu0 0
        %376 = vperm.xlu0 %375, %v345
        %v377 = vpop.permute.xlu0 %376
        %380 = vset.pattern.permute.xlu0 0
        %381 = vperm.xlu0 %380, %v346
        %v382 = vpop.permute.xlu0 %381
        %385 = vset.pattern.permute.xlu0 0
        %386 = vperm.xlu0 %385, %v347
        %v387 = vpop.permute.xlu0 %386
        %390 = vset.pattern.permute.xlu0 0
        %391 = vperm.xlu0 %390, %v348
        %v392 = vpop.permute.xlu0 %391
        %v394 = vmul.f32 %v285, %v352
        %v395 = vmul.f32 %v286, %v357
        %v396 = vmul.f32 %v287, %v362
        %v397 = vmul.f32 %v288, %v367
        %v398 = vmul.f32 %v289, %v372
        %v399 = vmul.f32 %v290, %v377
        %v400 = vmul.f32 %v291, %v382
        %v401 = vmul.f32 %v292, %v387
        %v402 = vmul.f32 %v293, %v392
        %v403 = vadd.f32 %v394, %v395
        %v404 = vadd.f32 %v403, %v396
        %v405 = vadd.f32 %v404, %v397
        %v406 = vadd.f32 %v405, %v398
        %v407 = vadd.f32 %v406, %v399
        %v408 = vadd.f32 %v407, %v400
        %v409 = vadd.f32 %v408, %v401
        %v410 = vadd.f32 %v409, %v402
        %v411 = vrot.slane %v410, 4
        %v412 = vadd.f32 %v410, %v411
        %v413 = vrot.slane %v412, 2
        %v414 = vadd.f32 %v412, %v413
        %v415 = vrot.slane %v414, 1
        %v416 = vadd.f32 %v414, %v415
        %417 = vst [vmem:[%s224] sm:$0x1] %v416
        %p418 = scmp.lt.s32.totalorder %s20, 1
        %s419 = scalar_select %p418, %s20, 1
        %s420 = smul.addr %s419, 9
        %s421 = smul.addr %s420, 4
        %s422 = scalar_lea.vmem %s4, %s421
        %s423 = sand.u32 %s143, 1
        %s424 = scalar_lea.sflag [#allocation3], %s423
        %s425 = sand.u32 %s143, 1
        %s426 = scalar_lea.vmem [#allocation2], %s425
        // Predicated region
        $region37: #{linnet_d_forward.12} parent=35 // pred_check
          %p427 = pneg %p127
        $region38: #{linnet_d_forward.12} parent=35 // pred_check_branch
          %429 = sbr.rel (%p427) target = $region40
        $region39: #{linnet_d_forward.12} parent=35 // pred_region
          _
        $region40: #{linnet_d_forward.12} parent=35 // pred_fallthru
          _
        // Predicated region
        $region41: #{linnet_d_forward.12} parent=35 // pred_check
          %p430 = pneg %p153
        $region42: #{linnet_d_forward.12} parent=35 // pred_check_branch
          %432 = sbr.rel (%p430) target = $region44
        $region43: #{linnet_d_forward.12} parent=35 // pred_region
          %s434 = ssub.s32 16, 16
          %435 = vsyncadd %s424, %s434
          %s436 = smul.addr %s20, 16
          %s437 = scalar_lea.hbm %s5, %s436
          %s439 = sshll.u32 %s426, 4
          %s440 = int_to_ptr.vmem [resolvable:$true] %s439
          %442 = dma.vmem_to_hbm [thread:$0]  %s440, 16, %s437, %s424
        $region44: #{linnet_d_forward.12} parent=35 // pred_fallthru
          _
      $region36: #{linnet_d_forward.12} parent=5 // pred_fallthru
        _
      %p443 = scmp.le.s32.totalorder 2, %s15
      // Predicated region
      $region45: #{linnet_d_forward.12} parent=5 // pred_check
        %p444 = pneg %p443
      $region46: #{linnet_d_forward.12} parent=5 // pred_check_branch
        %446 = sbr.rel (%p444) target = $region48
      $region47: #{linnet_d_forward.12} parent=5 // pred_region
        %s447 = ssub.s32 %s15, 2
        // Predicated region
        $region49: #{linnet_d_forward.12} parent=47 // pred_check
          %p448 = pneg %p133
        $region50: #{linnet_d_forward.12} parent=47 // pred_check_branch
          %450 = sbr.rel (%p448) target = $region52
        $region51: #{linnet_d_forward.12} parent=47 // pred_region
          %p451 = scmp.lt.s32.totalorder %s21, 1
          %s452 = scalar_select %p451, %s21, 1
          %s453 = smul.addr %s452, 9
          %s454 = smul.addr %s453, 4
          %s455 = scalar_lea.vmem %s4, %s454
        $region52: #{linnet_d_forward.12} parent=47 // pred_fallthru
          _
        // Predicated region
        $region53: #{linnet_d_forward.12} parent=47 // pred_check
          %p456 = pneg %p159
        $region54: #{linnet_d_forward.12} parent=47 // pred_check_branch
          %458 = sbr.rel (%p456) target = $region56
        $region55: #{linnet_d_forward.12} parent=47 // pred_region
          %s459 = sand.u32 %s144, 1
          %s460 = scalar_lea.sflag [#allocation3], %s459
          %s461 = sand.u32 %s144, 1
          %s462 = scalar_lea.vmem [#allocation2], %s461
          %463 = dma.done %s460, 16
        $region56: #{linnet_d_forward.12} parent=47 // pred_fallthru
          _
      $region48: #{linnet_d_forward.12} parent=5 // pred_fallthru
        _
    $region6: #{linnet_d_forward.12} parent=1 // loop_footer
      %s19 = sadd.s32 1, %s15
    $region7: #{linnet_d_forward.12} parent=1 // loop_footer_branch
      %14 = sbr.rel target = $region3
    $region8: #{linnet_d_forward.12} parent=1 // loop_exit
      _
    %464 = vsyncpa [#allocation3], 1
    %s465 = scalar_lea.sflag [#allocation3], 1
    %466 = vsyncpa %s465, 1

// kernel: linnet_d_forward.11
$region0: #{linnet_d_forward.11}
  #allocation0 [shape = 'u32[]', space=smem, size = 0x4, offset = 0x4, fixed_abs, tag = 'smem constant byte address 0x4 - core index']
  #allocation1 [shape = 'u32[144,128]{1,0:T(1,128)}', space=vmem, size = 0x12000, scoped, tag = 'internal scratch']
  %s0 = inlined_call_operand.vmem [shape: bf16[2,88,64], index: 0, kind: input, shape index: {}]
  %s1 = inlined_call_operand.vmem [shape: bf16[4,64,128], index: 1, kind: input, shape index: {}]
  %s2 = inlined_call_operand.vmem [shape: f32[72,1], index: 2, kind: input, shape index: {}]
  %s3 = inlined_call_operand.vmem [shape: f32[2,72,128], index: 3, kind: output, shape index: {0}]
  %s4 = inlined_call_operand.vmem [shape: f32[2,1,128], index: 4, kind: output, shape index: {1}]
  %s5 = inlined_call_operand.vmem [shape: f32[2,1,128], index: 5, kind: output, shape index: {2}]
  %6 = xla_tuple %s3, %s4, %s5
  %s7 = sld [smem:[#allocation0]]
  $region61: #{linnet_d_forward.11} parent=0
    _
  %s9 = ssub.s32 1, %s7
  %s10 = scalar_select 0, %s9, %s7
  loop: start=0, step=1, limit=4
  $region2: #{linnet_d_forward.11} parent=0 // loop_pre_header
    _
  $region3: #{linnet_d_forward.11} parent=0 // loop_header
    %s12 = sphi 0, %s16
    %p13 = scmp.ge.s32.totalorder %s12, 4
    %s22 = sphi 0, %s24
    %s25 = sphi 0, %s22
    %s26 = sphi 0, %s25
    %s42 = sphi 0, %s26
    %s46 = sphi 0, %s46
    %s48 = sphi 0, %s46
    %s49 = sphi 0, %s48
    %s63 = sphi 0, %s49
    %s67 = sphi 0, %s67
    %s69 = sphi 0, %s67
    %s70 = sphi 0, %s69
    %s84 = sphi 0, %s70
    %s90 = sphi 0, %s92
    %s93 = sphi 0, %s90
    %s94 = sphi 0, %s93
    %s110 = sphi 0, %s94
    %s116 = sphi 0, %s118
    %s119 = sphi 0, %s116
    %s120 = sphi 0, %s119
    %s136 = sphi 0, %s120
    %s142 = sphi 0, %s144
    %s145 = sphi 0, %s142
    %s146 = sphi 0, %s145
    %s162 = sphi 0, %s146
  $region4: #{linnet_d_forward.11} parent=0 // loop_header_branch
    %15 = sbr.rel (%p13) target = $region8
  $region5: #{linnet_d_forward.11} parent=0 // loop_body
    %s17 = ssub.s32 %s12, 1
    %s18 = ssub.s32 %s12, 2
    %s19 = sadd.s32 %s12, 1
    %s20 = ssub.s32 %s12, %s19
    %p21 = scmp.eq.s32.totalorder %s20, 0
    %s23 = sadd.s32 %s22, 1
    %s24 = scalar_select %p21, %s22, %s23
    %p27 = pneg %p21
    %p28 = scmp.eq.s32.totalorder %s12, 1
    %p29 = por %p27, %p28
    %p30 = scmp.ne.s32.totalorder %s22, %s25
    %p31 = scmp.eq.s32.totalorder %s12, 0
    %p32 = por %p30, %p31
    %p33 = scmp.ne.s32.totalorder %s22, %s25
    %p34 = scmp.eq.s32.totalorder %s17, 1
    %p35 = por %p33, %p34
    %p36 = scmp.ne.s32.totalorder %s25, %s26
    %p37 = scmp.eq.s32.totalorder %s17, 0
    %p38 = por %p36, %p37
    %p39 = scmp.ne.s32.totalorder %s25, %s26
    %p40 = scmp.eq.s32.totalorder %s18, 1
    %p41 = por %p39, %p40
    %p43 = scmp.ne.s32.totalorder %s26, %s42
    %p44 = scmp.eq.s32.totalorder %s18, 0
    %p45 = por %p43, %p44
    %s47 = sadd.s32 %s46, 1
    %p50 = scmp.eq.s32.totalorder %s12, 1
    %p51 = scmp.ne.s32.totalorder %s46, %s48
    %p52 = scmp.eq.s32.totalorder %s12, 0
    %p53 = por %p51, %p52
    %p54 = scmp.ne.s32.totalorder %s46, %s48
    %p55 = scmp.eq.s32.totalorder %s17, 1
    %p56 = por %p54, %p55
    %p57 = scmp.ne.s32.totalorder %s48, %s49
    %p58 = scmp.eq.s32.totalorder %s17, 0
    %p59 = por %p57, %p58
    %p60 = scmp.ne.s32.totalorder %s48, %s49
    %p61 = scmp.eq.s32.totalorder %s18, 1
    %p62 = por %p60, %p61
    %p64 = scmp.ne.s32.totalorder %s49, %s63
    %p65 = scmp.eq.s32.totalorder %s18, 0
    %p66 = por %p64, %p65
    %s68 = sadd.s32 %s67, 1
    %p71 = scmp.eq.s32.totalorder %s12, 1
    %p72 = scmp.ne.s32.totalorder %s67, %s69
    %p73 = scmp.eq.s32.totalorder %s12, 0
    %p74 = por %p72, %p73
    %p75 = scmp.ne.s32.totalorder %s67, %s69
    %p76 = scmp.eq.s32.totalorder %s17, 1
    %p77 = por %p75, %p76
    %p78 = scmp.ne.s32.totalorder %s69, %s70
    %p79 = scmp.eq.s32.totalorder %s17, 0
    %p80 = por %p78, %p79
    %p81 = scmp.ne.s32.totalorder %s69, %s70
    %p82 = scmp.eq.s32.totalorder %s18, 1
    %p83 = por %p81, %p82
    %p85 = scmp.ne.s32.totalorder %s70, %s84
    %p86 = scmp.eq.s32.totalorder %s18, 0
    %p87 = por %p85, %p86
    %s88 = ssub.s32 %s12, %s19
    %p89 = scmp.eq.s32.totalorder %s88, 0
    %s91 = sadd.s32 %s90, 1
    %s92 = scalar_select %p89, %s90, %s91
    %p95 = pneg %p89
    %p96 = scmp.eq.s32.totalorder %s12, 1
    %p97 = por %p95, %p96
    %p98 = scmp.ne.s32.totalorder %s90, %s93
    %p99 = scmp.eq.s32.totalorder %s12, 0
    %p100 = por %p98, %p99
    %p101 = scmp.ne.s32.totalorder %s90, %s93
    %p102 = scmp.eq.s32.totalorder %s17, 1
    %p103 = por %p101, %p102
    %p104 = scmp.ne.s32.totalorder %s93, %s94
    %p105 = scmp.eq.s32.totalorder %s17, 0
    %p106 = por %p104, %p105
    %p107 = scmp.ne.s32.totalorder %s93, %s94
    %p108 = scmp.eq.s32.totalorder %s18, 1
    %p109 = por %p107, %p108
    %p111 = scmp.ne.s32.totalorder %s94, %s110
    %p112 = scmp.eq.s32.totalorder %s18, 0
    %p113 = por %p111, %p112
    %s114 = ssub.s32 %s12, %s19
    %p115 = scmp.eq.s32.totalorder %s114, 0
    %s117 = sadd.s32 %s116, 1
    %s118 = scalar_select %p115, %s116, %s117
    %p121 = pneg %p115
    %p122 = scmp.eq.s32.totalorder %s12, 1
    %p123 = por %p121, %p122
    %p124 = scmp.ne.s32.totalorder %s116, %s119
    %p125 = scmp.eq.s32.totalorder %s12, 0
    %p126 = por %p124, %p125
    %p127 = scmp.ne.s32.totalorder %s116, %s119
    %p128 = scmp.eq.s32.totalorder %s17, 1
    %p129 = por %p127, %p128
    %p130 = scmp.ne.s32.totalorder %s119, %s120
    %p131 = scmp.eq.s32.totalorder %s17, 0
    %p132 = por %p130, %p131
    %p133 = scmp.ne.s32.totalorder %s119, %s120
    %p134 = scmp.eq.s32.totalorder %s18, 1
    %p135 = por %p133, %p134
    %p137 = scmp.ne.s32.totalorder %s120, %s136
    %p138 = scmp.eq.s32.totalorder %s18, 0
    %p139 = por %p137, %p138
    %s140 = ssub.s32 %s12, %s19
    %p141 = scmp.eq.s32.totalorder %s140, 0
    %s143 = sadd.s32 %s142, 1
    %s144 = scalar_select %p141, %s142, %s143
    %p147 = pneg %p141
    %p148 = scmp.eq.s32.totalorder %s12, 1
    %p149 = por %p147, %p148
    %p150 = scmp.ne.s32.totalorder %s142, %s145
    %p151 = scmp.eq.s32.totalorder %s12, 0
    %p152 = por %p150, %p151
    %p153 = scmp.ne.s32.totalorder %s142, %s145
    %p154 = scmp.eq.s32.totalorder %s17, 1
    %p155 = por %p153, %p154
    %p156 = scmp.ne.s32.totalorder %s145, %s146
    %p157 = scmp.eq.s32.totalorder %s17, 0
    %p158 = por %p156, %p157
    %p159 = scmp.ne.s32.totalorder %s145, %s146
    %p160 = scmp.eq.s32.totalorder %s18, 1
    %p161 = por %p159, %p160
    %p163 = scmp.ne.s32.totalorder %s146, %s162
    %p164 = scmp.eq.s32.totalorder %s18, 0
    %p165 = por %p163, %p164
    %p166 = scmp.le.s32.totalorder 1, %s12
    %p167 = scmp.lt.s32.totalorder %s12, 3
    %p168 = pnand %p166, %p167
    %p169 = pneg %p168
    // Predicated region
    $region9: #{linnet_d_forward.11} parent=5 // pred_check
      _
    $region10: #{linnet_d_forward.11} parent=5 // pred_check_branch
      %171 = sbr.rel (%p168) target = $region12
    $region11: #{linnet_d_forward.11} parent=5 // pred_region
      %s172 = ssub.s32 %s12, 1
      // Predicated region
      $region13: #{linnet_d_forward.11} parent=11 // pred_check
        %p173 = pneg %p59
      $region14: #{linnet_d_forward.11} parent=11 // pred_check_branch
        %175 = sbr.rel (%p173) target = $region16
      $region15: #{linnet_d_forward.11} parent=11 // pred_region
        _
      $region16: #{linnet_d_forward.11} parent=11 // pred_fallthru
        _
      // Predicated region
      $region17: #{linnet_d_forward.11} parent=11 // pred_check
        %p176 = pneg %p80
      $region18: #{linnet_d_forward.11} parent=11 // pred_check_branch
        %178 = sbr.rel (%p176) target = $region20
      $region19: #{linnet_d_forward.11} parent=11 // pred_region
        _
      $region20: #{linnet_d_forward.11} parent=11 // pred_fallthru
        _
    $region12: #{linnet_d_forward.11} parent=5 // pred_fallthru
      _
    %p179 = scmp.lt.s32.totalorder %s12, 2
    // Predicated region
    $region21: #{linnet_d_forward.11} parent=5 // pred_check
      %p180 = pneg %p179
    $region22: #{linnet_d_forward.11} parent=5 // pred_check_branch
      %182 = sbr.rel (%p180) target = $region24
    $region23: #{linnet_d_forward.11} parent=5 // pred_region
      // Predicated region
      $region25: #{linnet_d_forward.11} parent=23 // pred_check
        %p183 = pneg %p32
      $region26: #{linnet_d_forward.11} parent=23 // pred_check_branch
        %185 = sbr.rel (%p183) target = $region28
      $region27: #{linnet_d_forward.11} parent=23 // pred_region
        %p186 = scmp.lt.s32.totalorder %s12, 1
        %s187 = scalar_select %p186, %s12, 1
        %s188 = smul.addr %s187, 11
        %s189 = smul.addr %s188, 4
        %s190 = scalar_lea.vmem %s0, %s189
      $region28: #{linnet_d_forward.11} parent=23 // pred_fallthru
        _
    $region24: #{linnet_d_forward.11} parent=5 // pred_fallthru
      _
    %p191 = scmp.le.s32.totalorder 1, %s12
    %p192 = scmp.lt.s32.totalorder %s12, 3
    %p193 = pnand %p191, %p192
    %p194 = pneg %p193
    // Predicated region
    $region29: #{linnet_d_forward.11} parent=5 // pred_check
      _
    $region30: #{linnet_d_forward.11} parent=5 // pred_check_branch
      %196 = sbr.rel (%p193) target = $region32
    $region31: #{linnet_d_forward.11} parent=5 // pred_region
      %s197 = ssub.s32 %s12, 1
      %p198 = scmp.lt.s32.totalorder %s17, 1
      %s199 = scalar_select %p198, %s17, 1
      %s200 = smul.addr %s199, 11
      %s201 = smul.addr %s200, 4
      %s202 = scalar_lea.vmem %s0, %s201
      %p203 = pneg %p38
      %p204 = pneg %p35
      %p205 = pneg %p59
      %p206 = pneg %p56
      %p207 = pneg %p80
      %p208 = pneg %p77
      %p209 = pneg %p106
      %p210 = pneg %p103
      %p211 = scmp.lt.s32.totalorder %s17, 1
      %s212 = scalar_select %p211, %s17, 1
      %s213 = smul.addr %s212, 9
      %s214 = smul.addr %s213, 8
      %s215 = scalar_lea.vmem %s3, %s214
      %p216 = pneg %p132
      %p217 = pneg %p129
      %p218 = scmp.lt.s32.totalorder %s17, 1
      %s219 = scalar_select %p218, %s17, 1
      %s220 = scalar_lea.vmem %s4, %s219
      %p221 = pneg %p158
      %p222 = pneg %p155
      %p223 = scmp.lt.s32.totalorder %s17, 1
      %s224 = scalar_select %p223, %s17, 1
      %s225 = scalar_lea.vmem %s5, %s224
      %p226 = scmp.lt.s32.totalorder %s17, 1
      %s227 = scalar_select %p226, %s17, 1
      %s228 = smul.addr %s227, 11
      %s229 = smul.addr %s228, 4
      %s230 = scalar_lea.vmem %s0, %s229
      %p231 = scmp.lt.s32.totalorder %s17, 1
      %s232 = scalar_select %p231, %s17, 1
      %s233 = smul.addr %s232, 9
      %s234 = smul.addr %s233, 8
      %s235 = scalar_lea.vmem %s3, %s234
      %p236 = scmp.lt.s32.totalorder %s17, 1
      %s237 = scalar_select %p236, %s17, 1
      %s238 = scalar_lea.vmem %s4, %s237
      %p239 = scmp.lt.s32.totalorder %s17, 1
      %s240 = scalar_select %p239, %s17, 1
      %s241 = scalar_lea.vmem %s5, %s240
      %v243 = vld [vmem:[%s230] sm:$0xf]
      %v244 = vld [vmem:[%s230 + $0x4] sm:$0xf]
      %v245 = vld [vmem:[%s230 + $0x8] sm:$0xf]
      %v246 = vld [vmem:[%s230 + $0xc] sm:$0xf]
      %v247 = vld [vmem:[%s230 + $0x10] sm:$0xf]
      %v248 = vld [vmem:[%s230 + $0x14] sm:$0xf]
      %v249 = vld [vmem:[%s230 + $0x18] sm:$0xf]
      %v250 = vld [vmem:[%s230 + $0x1c] sm:$0xf]
      %v251 = vld [vmem:[%s230 + $0x20] sm:$0xf]
      %v252 = vld [vmem:[%s230 + $0x24] sm:$0xf]
      %v253 = vld [vmem:[%s230 + $0x28] sm:$0xf]
      %v254 = vld [vmem:[%s1] sm:$0xf]
      %v255 = vld [vmem:[%s1 + $0x4] sm:$0xf]
      %v256 = vld [vmem:[%s1 + $0x8] sm:$0xf]
      %v257 = vld [vmem:[%s1 + $0xc] sm:$0xf]
      %v258 = vld [vmem:[%s1 + $0x10] sm:$0xf]
      %v259 = vld [vmem:[%s1 + $0x14] sm:$0xf]
      %v260 = vld [vmem:[%s1 + $0x18] sm:$0xf]
      %v261 = vld [vmem:[%s1 + $0x1c] sm:$0xf]
      %s262 = scalar_lea.vmem %s1, 32
      %v263 = vld [vmem:[%s262] sm:$0xf]
      %v264 = vld [vmem:[%s262 + $0x4] sm:$0xf]
      %v265 = vld [vmem:[%s262 + $0x8] sm:$0xf]
      %v266 = vld [vmem:[%s262 + $0xc] sm:$0xf]
      %v267 = vld [vmem:[%s262 + $0x10] sm:$0xf]
      %v268 = vld [vmem:[%s262 + $0x14] sm:$0xf]
      %v269 = vld [vmem:[%s262 + $0x18] sm:$0xf]
      %v270 = vld [vmem:[%s262 + $0x1c] sm:$0xf]
      %v281 = vunpack.c.l.b16 %v243
      %v282 = vunpack.c.l.b16 %v244
      %v283 = vunpack.c.l.b16 %v245
      %v284 = vunpack.c.l.b16 %v246
      %v285 = vunpack.c.l.b16 %v247
      %v286 = vunpack.c.l.b16 %v248
      %v287 = vunpack.c.l.b16 %v249
      %v288 = vunpack.c.l.b16 %v250
      %v289 = vunpack.c.l.b16 %v251
      %v290 = vunpack.c.l.b16 %v252
      %v291 = vpack.c.b16 %v282, %v281
      %v292 = vpack.c.b16 %v284, %v283
      %v293 = vpack.c.b16 %v286, %v285
      %v294 = vpack.c.b16 %v288, %v287
      %v295 = vpack.c.b16 %v290, %v289
      %vm296 = vsmask.f32 7424
      %v298 = vshrl.u32 %v291, 16
      %v300 = vshll.u32 %v291, 16
      %v302 = vrot.slane %v300, 1
      %v303 = vor.u32 %v298, %v302
      %v305 = vshll.u32 %v292, 16
      %v307 = vrot.slane %v305, 1
      %v308 = vsel %vm296, %v303, %v307
      %v309 = vshrl.u32 %v292, 16
      %v311 = vor.u32 %v309, %v307
      %v313 = vshll.u32 %v293, 16
      %v315 = vrot.slane %v313, 1
      %v316 = vsel %vm296, %v311, %v315
      %v317 = vshrl.u32 %v293, 16
      %v319 = vor.u32 %v317, %v315
      %v321 = vshll.u32 %v294, 16
      %v323 = vrot.slane %v321, 1
      %v324 = vsel %vm296, %v319, %v323
      %v325 = vshrl.u32 %v294, 16
      %v327 = vor.u32 %v325, %v323
      %v329 = vshll.u32 %v295, 16
      %v331 = vrot.slane %v329, 1
      %v332 = vsel %vm296, %v327, %v331
      %v333 = vshrl.u32 %v295, 16
      %v335 = vor.u32 %v333, %v331
      %v344 = vunpack.c.l.b16 %v263
      %v345 = vunpack.c.l.b16 %v264
      %v346 = vunpack.c.l.b16 %v265
      %v347 = vunpack.c.l.b16 %v266
      %v348 = vunpack.c.l.b16 %v267
      %v349 = vunpack.c.l.b16 %v268
      %v350 = vunpack.c.l.b16 %v269
      %v351 = vunpack.c.l.b16 %v270
      %v352 = vpack.c.b16 %v345, %v344
      %v353 = vpack.c.b16 %v347, %v346
      %v354 = vpack.c.b16 %v349, %v348
      %v355 = vpack.c.b16 %v351, %v350
      %vm360 = vcmask 523264
      %v362 = vsel %vm360, %v308, 0
      %v365 = vsel %vm360, %v316, 0
      %v368 = vsel %vm360, %v324, 0
      %v371 = vsel %vm360, %v332, 0
      %v374 = vsel %vm360, %v335, 0
      %376 = vmatprep.subr.bf16.mxu0 0
      %377 = vmatpush1.bf16.msra.mxu0 %v352
      %378 = vmatprep.subr.bf16.mxu0 0
      %379 = vmatpush1.bf16.msra.mxu0 %v353
      %380 = vmatprep.subr.bf16.mxu0 0
      %381 = vmatpush1.bf16.msra.mxu0 %v354
      %382 = vmatprep.subr.bf16.mxu0 0
      %383 = vmatpush1.bf16.msra.mxu0 %v355
      %384 = vmatprep.subr.bf16.mxu0 0
      %385 = vmatpush1.bf16.msra.mxu0 0
      %386 = vmatprep.subr.bf16.mxu0 0
      %387 = vmatpush1.bf16.msra.mxu0 0
      %388 = vmatprep.subr.bf16.mxu0 0
      %389 = vmatpush1.bf16.msra.mxu0 0
      %390 = vmatprep.subr.bf16.mxu0 0
      %391 = vmatpush1.bf16.msra.mxu0 0
      %392 = vmatprep.subr.bf16.mxu0 0
      %393 = vmatpush1.bf16.msra.mxu0 0
      %394 = vmatprep.subr.bf16.mxu0 0
      %395 = vmatpush1.bf16.msra.mxu0 0
      %396 = vmatprep.subr.bf16.mxu0 0
      %397 = vmatpush1.bf16.msra.mxu0 0
      %398 = vmatprep.subr.bf16.mxu0 0
      %399 = vmatpush1.bf16.msra.mxu0 0
      %400 = vmatprep.subr.bf16.mxu0 0
      %401 = vmatpush1.bf16.msra.mxu0 0
      %402 = vmatprep.subr.bf16.mxu0 0
      %403 = vmatpush1.bf16.msra.mxu0 0
      %404 = vmatprep.subr.bf16.mxu0 0
      %405 = vmatpush1.bf16.msra.mxu0 0
      %406 = vmatprep.subr.bf16.mxu0 0
      %407 = vmatpush1.bf16.msra.mxu0 0
      %408 = vmatprep.mubr.bf16.mxu0 0
      %409 = vmatmul.mubr.bf16.gmra.mrb[0].mxu0 %v362
      %v410 = vpop.f32.mrb[0].mxu0
      %v411 = vadd.f32 0.0, %v410
      %v412 = vpop.f32.mrb[0].mxu0
      %v413 = vpop.f32.mrb[0].mxu0
      %v414 = vadd.f32 0.0, %v413
      %v415 = vpop.f32.mrb[0].mxu0
      %416 = vmatprep.mubr.bf16.mxu0 0
      %417 = vmatmul.mubr.bf16.gmra.mrb[0].mxu0 %v365
      %v418 = vpop.f32.mrb[0].mxu0
      %v419 = vadd.f32 0.0, %v418
      %v420 = vpop.f32.mrb[0].mxu0
      %v421 = vpop.f32.mrb[0].mxu0
      %v422 = vadd.f32 0.0, %v421
      %v423 = vpop.f32.mrb[0].mxu0
      %424 = vmatprep.mubr.bf16.mxu0 0
      %425 = vmatmul.mubr.bf16.gmra.mrb[0].mxu0 %v368
      %v426 = vpop.f32.mrb[0].mxu0
      %v427 = vadd.f32 0.0, %v426
      %v428 = vpop.f32.mrb[0].mxu0
      %v429 = vpop.f32.mrb[0].mxu0
      %v430 = vadd.f32 0.0, %v429
      %v431 = vpop.f32.mrb[0].mxu0
      %432 = vmatprep.mubr.bf16.mxu0 0
      %433 = vmatmul.mubr.bf16.gmra.mrb[0].mxu0 %v371
      %v434 = vpop.f32.mrb[0].mxu0
      %v435 = vadd.f32 0.0, %v434
      %v436 = vpop.f32.mrb[0].mxu0
      %v437 = vpop.f32.mrb[0].mxu0
      %v438 = vadd.f32 0.0, %v437
      %v439 = vpop.f32.mrb[0].mxu0
      %440 = vmatprep.mubr.bf16.mxu0 0
      %441 = vmatmul.mubr.bf16.gmra.mrb[0].mxu0 %v374
      %v442 = vpop.f32.mrb[0].mxu0
      %v443 = vadd.f32 0.0, %v442
      %v444 = vpop.f32.mrb[0].mxu0
      %v445 = vpop.f32.mrb[0].mxu0
      %v446 = vpop.f32.mrb[0].mxu0
      %447 = vdwg.mxu0
      %v448 = vpack.c.b16 %v289, %v289
      %v457 = vunpack.c.l.b16 %v254
      %v458 = vunpack.c.l.b16 %v255
      %v459 = vunpack.c.l.b16 %v256
      %v460 = vunpack.c.l.b16 %v257
      %v461 = vunpack.c.l.b16 %v258
      %v462 = vunpack.c.l.b16 %v259
      %v463 = vunpack.c.l.b16 %v260
      %v464 = vunpack.c.l.b16 %v261
      %v465 = vpack.c.b16 %v458, %v457
      %v466 = vpack.c.b16 %v460, %v459
      %v467 = vpack.c.b16 %v462, %v461
      %v468 = vpack.c.b16 %v464, %v463
      %v473 = vsel %vm360, %v291, 0
      %v475 = vsel %vm360, %v292, 0
      %v477 = vsel %vm360, %v293, 0
      %v479 = vsel %vm360, %v294, 0
      %v482 = vsel %vm360, %v448, 0
      %484 = vmatprep.subr.bf16.mxu0 0
      %485 = vmatpush1.bf16.msra.mxu0 %v465
      %486 = vmatprep.subr.bf16.mxu0 0
      %487 = vmatpush1.bf16.msra.mxu0 %v466
      %488 = vmatprep.subr.bf16.mxu0 0
      %489 = vmatpush1.bf16.msra.mxu0 %v467
      %490 = vmatprep.subr.bf16.mxu0 0
      %491 = vmatpush1.bf16.msra.mxu0 %v468
      %492 = vmatprep.subr.bf16.mxu0 0
      %493 = vmatpush1.bf16.msra.mxu0 0
      %494 = vmatprep.subr.bf16.mxu0 0
      %495 = vmatpush1.bf16.msra.mxu0 0
      %496 = vmatprep.subr.bf16.mxu0 0
      %497 = vmatpush1.bf16.msra.mxu0 0
      %498 = vmatprep.subr.bf16.mxu0 0
      %499 = vmatpush1.bf16.msra.mxu0 0
      %500 = vmatprep.subr.bf16.mxu0 0
      %501 = vmatpush1.bf16.msra.mxu0 0
      %502 = vmatprep.subr.bf16.mxu0 0
      %503 = vmatpush1.bf16.msra.mxu0 0
      %504 = vmatprep.subr.bf16.mxu0 0
      %505 = vmatpush1.bf16.msra.mxu0 0
      %506 = vmatprep.subr.bf16.mxu0 0
      %507 = vmatpush1.bf16.msra.mxu0 0
      %508 = vmatprep.subr.bf16.mxu0 0
      %509 = vmatpush1.bf16.msra.mxu0 0
      %510 = vmatprep.subr.bf16.mxu0 0
      %511 = vmatpush1.bf16.msra.mxu0 0
      %512 = vmatprep.subr.bf16.mxu0 0
      %513 = vmatpush1.bf16.msra.mxu0 0
      %514 = vmatprep.subr.bf16.mxu0 0
      %515 = vmatpush1.bf16.msra.mxu0 0
      %516 = vmatprep.mubr.bf16.mxu0 0
      %517 = vmatmul.mubr.bf16.gmra.mrb[0].mxu0 %v473
      %v518 = vpop.f32.mrb[0].mxu0
      %v519 = vadd.f32 %v411, %v518
      %v520 = vpop.f32.mrb[0].mxu0
      %v521 = vpop.f32.mrb[0].mxu0
      %v522 = vadd.f32 %v414, %v521
      %v523 = vpop.f32.mrb[0].mxu0
      %524 = vmatprep.mubr.bf16.mxu0 0
      %525 = vmatmul.mubr.bf16.gmra.mrb[0].mxu0 %v475
      %v526 = vpop.f32.mrb[0].mxu0
      %v527 = vadd.f32 %v419, %v526
      %v528 = vpop.f32.mrb[0].mxu0
      %v529 = vpop.f32.mrb[0].mxu0
      %v530 = vadd.f32 %v422, %v529
      %v531 = vpop.f32.mrb[0].mxu0
      %532 = vmatprep.mubr.bf16.mxu0 0
      %533 = vmatmul.mubr.bf16.gmra.mrb[0].mxu0 %v477
      %v534 = vpop.f32.mrb[0].mxu0
      %v535 = vadd.f32 %v427, %v534
      %v536 = vpop.f32.mrb[0].mxu0
      %v537 = vpop.f32.mrb[0].mxu0
      %v538 = vadd.f32 %v430, %v537
      %v539 = vpop.f32.mrb[0].mxu0
      %540 = vmatprep.mubr.bf16.mxu0 0
      %541 = vmatmul.mubr.bf16.gmra.mrb[0].mxu0 %v479
      %v542 = vpop.f32.mrb[0].mxu0
      %v543 = vadd.f32 %v435, %v542
      %v544 = vpop.f32.mrb[0].mxu0
      %v545 = vpop.f32.mrb[0].mxu0
      %v546 = vadd.f32 %v438, %v545
      %v547 = vpop.f32.mrb[0].mxu0
      %548 = vmatprep.mubr.bf16.mxu0 0
      %549 = vmatmul.mubr.bf16.gmra.mrb[0].mxu0 %v482
      %v550 = vpop.f32.mrb[0].mxu0
      %v551 = vadd.f32 %v443, %v550
      %v552 = vpop.f32.mrb[0].mxu0
      %v553 = vpop.f32.mrb[0].mxu0
      %v554 = vpop.f32.mrb[0].mxu0
      %555 = vdwg.mxu0
      %s556 = scalar_lea.vmem %s1, 64
      %v557 = vld [vmem:[%s556] sm:$0xf]
      %v558 = vld [vmem:[%s556 + $0x4] sm:$0xf]
      %v559 = vld [vmem:[%s556 + $0x8] sm:$0xf]
      %v560 = vld [vmem:[%s556 + $0xc] sm:$0xf]
      %v561 = vld [vmem:[%s556 + $0x10] sm:$0xf]
      %v562 = vld [vmem:[%s556 + $0x14] sm:$0xf]
      %v563 = vld [vmem:[%s556 + $0x18] sm:$0xf]
      %v564 = vld [vmem:[%s556 + $0x1c] sm:$0xf]
      %v566 = vunpack.c.l.b16 %v253
      %v567 = vpack.c.b16 %v283, %v282
      %v568 = vpack.c.b16 %v285, %v284
      %v569 = vpack.c.b16 %v287, %v286
      %v570 = vpack.c.b16 %v289, %v288
      %v571 = vpack.c.b16 %v566, %v290
      %v573 = vshrl.u32 %v567, 16
      %v575 = vshll.u32 %v567, 16
      %v577 = vrot.slane %v575, 1
      %v578 = vor.u32 %v573, %v577
      %v580 = vshll.u32 %v568, 16
      %v582 = vrot.slane %v580, 1
      %v583 = vsel %vm296, %v578, %v582
      %v584 = vshrl.u32 %v568, 16
      %v586 = vor.u32 %v584, %v582
      %v588 = vshll.u32 %v569, 16
      %v590 = vrot.slane %v588, 1
      %v591 = vsel %vm296, %v586, %v590
      %v592 = vshrl.u32 %v569, 16
      %v594 = vor.u32 %v592, %v590
      %v596 = vshll.u32 %v570, 16
      %v598 = vrot.slane %v596, 1
      %v599 = vsel %vm296, %v594, %v598
      %v600 = vshrl.u32 %v570, 16
      %v602 = vor.u32 %v600, %v598
      %v604 = vshll.u32 %v571, 16
      %v606 = vrot.slane %v604, 1
      %v607 = vsel %vm296, %v602, %v606
      %v608 = vshrl.u32 %v571, 16
      %v610 = vor.u32 %v608, %v606
      %v619 = vunpack.c.l.b16 %v557
      %v620 = vunpack.c.l.b16 %v558
      %v621 = vunpack.c.l.b16 %v559
      %v622 = vunpack.c.l.b16 %v560
      %v623 = vunpack.c.l.b16 %v561
      %v624 = vunpack.c.l.b16 %v562
      %v625 = vunpack.c.l.b16 %v563
      %v626 = vunpack.c.l.b16 %v564
      %v627 = vpack.c.b16 %v620, %v619
      %v628 = vpack.c.b16 %v622, %v621
      %v629 = vpack.c.b16 %v624, %v623
      %v630 = vpack.c.b16 %v626, %v625
      %v636 = vsel %vm360, %v583, 0
      %v639 = vsel %vm360, %v591, 0
      %v642 = vsel %vm360, %v599, 0
      %v645 = vsel %vm360, %v607, 0
      %v648 = vsel %vm360, %v610, 0
      %650 = vmatprep.subr.bf16.mxu0 0
      %651 = vmatpush1.bf16.msra.mxu0 %v627
      %652 = vmatprep.subr.bf16.mxu0 0
      %653 = vmatpush1.bf16.msra.mxu0 %v628
      %654 = vmatprep.subr.bf16.mxu0 0
      %655 = vmatpush1.bf16.msra.mxu0 %v629
      %656 = vmatprep.subr.bf16.mxu0 0
      %657 = vmatpush1.bf16.msra.mxu0 %v630
      %658 = vmatprep.subr.bf16.mxu0 0
      %659 = vmatpush1.bf16.msra.mxu0 0
      %660 = vmatprep.subr.bf16.mxu0 0
      %661 = vmatpush1.bf16.msra.mxu0 0
      %662 = vmatprep.subr.bf16.mxu0 0
      %663 = vmatpush1.bf16.msra.mxu0 0
      %664 = vmatprep.subr.bf16.mxu0 0
      %665 = vmatpush1.bf16.msra.mxu0 0
      %666 = vmatprep.subr.bf16.mxu0 0
      %667 = vmatpush1.bf16.msra.mxu0 0
      %668 = vmatprep.subr.bf16.mxu0 0
      %669 = vmatpush1.bf16.msra.mxu0 0
      %670 = vmatprep.subr.bf16.mxu0 0
      %671 = vmatpush1.bf16.msra.mxu0 0
      %672 = vmatprep.subr.bf16.mxu0 0
      %673 = vmatpush1.bf16.msra.mxu0 0
      %674 = vmatprep.subr.bf16.mxu0 0
      %675 = vmatpush1.bf16.msra.mxu0 0
      %676 = vmatprep.subr.bf16.mxu0 0
      %677 = vmatpush1.bf16.msra.mxu0 0
      %678 = vmatprep.subr.bf16.mxu0 0
      %679 = vmatpush1.bf16.msra.mxu0 0
      %680 = vmatprep.subr.bf16.mxu0 0
      %681 = vmatpush1.bf16.msra.mxu0 0
      %682 = vmatprep.mubr.bf16.mxu0 0
      %683 = vmatmul.mubr.bf16.gmra.mrb[0].mxu0 %v636
      %v684 = vpop.f32.mrb[0].mxu0
      %v685 = vadd.f32 0.0, %v684
      %v686 = vpop.f32.mrb[0].mxu0
      %v687 = vpop.f32.mrb[0].mxu0
      %v688 = vadd.f32 0.0, %v687
      %v689 = vpop.f32.mrb[0].mxu0
      %690 = vmatprep.mubr.bf16.mxu0 0
      %691 = vmatmul.mubr.bf16.gmra.mrb[0].mxu0 %v639
      %v692 = vpop.f32.mrb[0].mxu0
      %v693 = vadd.f32 0.0, %v692
      %v694 = vpop.f32.mrb[0].mxu0
      %v695 = vpop.f32.mrb[0].mxu0
      %v696 = vadd.f32 0.0, %v695
      %v697 = vpop.f32.mrb[0].mxu0
      %698 = vmatprep.mubr.bf16.mxu0 0
      %699 = vmatmul.mubr.bf16.gmra.mrb[0].mxu0 %v642
      %v700 = vpop.f32.mrb[0].mxu0
      %v701 = vadd.f32 0.0, %v700
      %v702 = vpop.f32.mrb[0].mxu0
      %v703 = vpop.f32.mrb[0].mxu0
      %v704 = vadd.f32 0.0, %v703
      %v705 = vpop.f32.mrb[0].mxu0
      %706 = vmatprep.mubr.bf16.mxu0 0
      %707 = vmatmul.mubr.bf16.gmra.mrb[0].mxu0 %v645
      %v708 = vpop.f32.mrb[0].mxu0
      %v709 = vadd.f32 0.0, %v708
      %v710 = vpop.f32.mrb[0].mxu0
      %v711 = vpop.f32.mrb[0].mxu0
      %v712 = vadd.f32 0.0, %v711
      %v713 = vpop.f32.mrb[0].mxu0
      %714 = vmatprep.mubr.bf16.mxu0 0
      %715 = vmatmul.mubr.bf16.gmra.mrb[0].mxu0 %v648
      %v716 = vpop.f32.mrb[0].mxu0
      %v717 = vadd.f32 0.0, %v716
      %v718 = vpop.f32.mrb[0].mxu0
      %v719 = vpop.f32.mrb[0].mxu0
      %v720 = vpop.f32.mrb[0].mxu0
      %721 = vdwg.mxu0
      %v722 = vadd.f32 %v519, %v685
      %v723 = vadd.f32 %v522, %v688
      %v724 = vadd.f32 %v527, %v693
      %v725 = vadd.f32 %v530, %v696
      %v726 = vadd.f32 %v535, %v701
      %v727 = vadd.f32 %v538, %v704
      %v728 = vadd.f32 %v543, %v709
      %v729 = vadd.f32 %v546, %v712
      %v730 = vadd.f32 %v551, %v717
      %s731 = scalar_lea.vmem %s1, 96
      %v732 = vld [vmem:[%s731] sm:$0xf]
      %v733 = vld [vmem:[%s731 + $0x4] sm:$0xf]
      %v734 = vld [vmem:[%s731 + $0x8] sm:$0xf]
      %v735 = vld [vmem:[%s731 + $0xc] sm:$0xf]
      %v736 = vld [vmem:[%s731 + $0x10] sm:$0xf]
      %v737 = vld [vmem:[%s731 + $0x14] sm:$0xf]
      %v738 = vld [vmem:[%s731 + $0x18] sm:$0xf]
      %v739 = vld [vmem:[%s731 + $0x1c] sm:$0xf]
      %vm740 = vcmask 1046528
      %v741 = vrot.slane %v567, 1
      %v742 = vrot.slane %v568, 1
      %v743 = vsel %vm740, %v741, %v742
      %v744 = vrot.slane %v569, 1
      %v745 = vsel %vm740, %v742, %v744
      %v746 = vrot.slane %v570, 1
      %v747 = vsel %vm740, %v744, %v746
      %v748 = vrot.slane %v571, 1
      %v749 = vsel %vm740, %v746, %v748
      %v758 = vunpack.c.l.b16 %v732
      %v759 = vunpack.c.l.b16 %v733
      %v760 = vunpack.c.l.b16 %v734
      %v761 = vunpack.c.l.b16 %v735
      %v762 = vunpack.c.l.b16 %v736
      %v763 = vunpack.c.l.b16 %v737
      %v764 = vunpack.c.l.b16 %v738
      %v765 = vunpack.c.l.b16 %v739
      %v766 = vpack.c.b16 %v759, %v758
      %v767 = vpack.c.b16 %v761, %v760
      %v768 = vpack.c.b16 %v763, %v762
      %v769 = vpack.c.b16 %v765, %v764
      %v775 = vsel %vm360, %v743, 0
      %v778 = vsel %vm360, %v745, 0
      %v781 = vsel %vm360, %v747, 0
      %v784 = vsel %vm360, %v749, 0
      %v787 = vsel %vm360, %v748, 0
      %789 = vmatprep.subr.bf16.mxu0 0
      %790 = vmatpush1.bf16.msra.mxu0 %v766
      %791 = vmatprep.subr.bf16.mxu0 0
      %792 = vmatpush1.bf16.msra.mxu0 %v767
      %793 = vmatprep.subr.bf16.mxu0 0
      %794 = vmatpush1.bf16.msra.mxu0 %v768
      %795 = vmatprep.subr.bf16.mxu0 0
      %796 = vmatpush1.bf16.msra.mxu0 %v769
      %797 = vmatprep.subr.bf16.mxu0 0
      %798 = vmatpush1.bf16.msra.mxu0 0
      %799 = vmatprep.subr.bf16.mxu0 0
      %800 = vmatpush1.bf16.msra.mxu0 0
      %801 = vmatprep.subr.bf16.mxu0 0
      %802 = vmatpush1.bf16.msra.mxu0 0
      %803 = vmatprep.subr.bf16.mxu0 0
      %804 = vmatpush1.bf16.msra.mxu0 0
      %805 = vmatprep.subr.bf16.mxu0 0
      %806 = vmatpush1.bf16.msra.mxu0 0
      %807 = vmatprep.subr.bf16.mxu0 0
      %808 = vmatpush1.bf16.msra.mxu0 0
      %809 = vmatprep.subr.bf16.mxu0 0
      %810 = vmatpush1.bf16.msra.mxu0 0
      %811 = vmatprep.subr.bf16.mxu0 0
      %812 = vmatpush1.bf16.msra.mxu0 0
      %813 = vmatprep.subr.bf16.mxu0 0
      %814 = vmatpush1.bf16.msra.mxu0 0
      %815 = vmatprep.subr.bf16.mxu0 0
      %816 = vmatpush1.bf16.msra.mxu0 0
      %817 = vmatprep.subr.bf16.mxu0 0
      %818 = vmatpush1.bf16.msra.mxu0 0
      %819 = vmatprep.subr.bf16.mxu0 0
      %820 = vmatpush1.bf16.msra.mxu0 0
      %821 = vmatprep.mubr.bf16.mxu0 0
      %822 = vmatmul.mubr.bf16.gmra.mrb[0].mxu0 %v775
      %v823 = vpop.f32.mrb[0].mxu0
      %v824 = vadd.f32 0.0, %v823
      %v825 = vpop.f32.mrb[0].mxu0
      %v826 = vpop.f32.mrb[0].mxu0
      %v827 = vadd.f32 0.0, %v826
      %v828 = vpop.f32.mrb[0].mxu0
      %829 = vmatprep.mubr.bf16.mxu0 0
      %830 = vmatmul.mubr.bf16.gmra.mrb[0].mxu0 %v778
      %v831 = vpop.f32.mrb[0].mxu0
      %v832 = vadd.f32 0.0, %v831
      %v833 = vpop.f32.mrb[0].mxu0
      %v834 = vpop.f32.mrb[0].mxu0
      %v835 = vadd.f32 0.0, %v834
      %v836 = vpop.f32.mrb[0].mxu0
      %837 = vmatprep.mubr.bf16.mxu0 0
      %838 = vmatmul.mubr.bf16.gmra.mrb[0].mxu0 %v781
      %v839 = vpop.f32.mrb[0].mxu0
      %v840 = vadd.f32 0.0, %v839
      %v841 = vpop.f32.mrb[0].mxu0
      %v842 = vpop.f32.mrb[0].mxu0
      %v843 = vadd.f32 0.0, %v842
      %v844 = vpop.f32.mrb[0].mxu0
      %845 = vmatprep.mubr.bf16.mxu0 0
      %846 = vmatmul.mubr.bf16.gmra.mrb[0].mxu0 %v784
      %v847 = vpop.f32.mrb[0].mxu0
      %v848 = vadd.f32 0.0, %v847
      %v849 = vpop.f32.mrb[0].mxu0
      %v850 = vpop.f32.mrb[0].mxu0
      %v851 = vadd.f32 0.0, %v850
      %v852 = vpop.f32.mrb[0].mxu0
      %853 = vmatprep.mubr.bf16.mxu0 0
      %854 = vmatmul.mubr.bf16.gmra.mrb[0].mxu0 %v787
      %v855 = vpop.f32.mrb[0].mxu0
      %v856 = vadd.f32 0.0, %v855
      %v857 = vpop.f32.mrb[0].mxu0
      %v858 = vpop.f32.mrb[0].mxu0
      %v859 = vpop.f32.mrb[0].mxu0
      %860 = vdwg.mxu0
      %v861 = vadd.f32 %v722, %v824
      %v862 = vadd.f32 %v723, %v827
      %v863 = vadd.f32 %v724, %v832
      %v864 = vadd.f32 %v725, %v835
      %v865 = vadd.f32 %v726, %v840
      %v866 = vadd.f32 %v727, %v843
      %v867 = vadd.f32 %v728, %v848
      %v868 = vadd.f32 %v729, %v851
      %v869 = vadd.f32 %v730, %v856
      %870 = vst [vmem:[%s235] sm:$0xff] %v861
      %871 = vst [vmem:[%s235 + $0x8] sm:$0xff] %v862
      %872 = vst [vmem:[%s235 + $0x10] sm:$0xff] %v863
      %873 = vst [vmem:[%s235 + $0x18] sm:$0xff] %v864
      %874 = vst [vmem:[%s235 + $0x20] sm:$0xff] %v865
      %875 = vst [vmem:[%s235 + $0x28] sm:$0xff] %v866
      %876 = vst [vmem:[%s235 + $0x30] sm:$0xff] %v867
      %877 = vst [vmem:[%s235 + $0x38] sm:$0xff] %v868
      %878 = vst [vmem:[%s235 + $0x40] sm:$0xff] %v869
      %v879 = vld [vmem:[%s2] sm:$0xff]
      %v880 = vld [vmem:[%s2 + $0x8] sm:$0xff]
      %v881 = vld [vmem:[%s2 + $0x10] sm:$0xff]
      %v882 = vld [vmem:[%s2 + $0x18] sm:$0xff]
      %v883 = vld [vmem:[%s2 + $0x20] sm:$0xff]
      %v884 = vld [vmem:[%s2 + $0x28] sm:$0xff]
      %v885 = vld [vmem:[%s2 + $0x30] sm:$0xff]
      %v886 = vld [vmem:[%s2 + $0x38] sm:$0xff]
      %v887 = vld [vmem:[%s2 + $0x40] sm:$0xff]
      %889 = vset.pattern.permute.xlu0 0
      %890 = vperm.xlu0 %889, %v879
      %v891 = vpop.permute.xlu0 %890
      %894 = vset.pattern.permute.xlu0 0
      %895 = vperm.xlu0 %894, %v880
      %v896 = vpop.permute.xlu0 %895
      %899 = vset.pattern.permute.xlu0 0
      %900 = vperm.xlu0 %899, %v881
      %v901 = vpop.permute.xlu0 %900
      %904 = vset.pattern.permute.xlu0 0
      %905 = vperm.xlu0 %904, %v882
      %v906 = vpop.permute.xlu0 %905
      %909 = vset.pattern.permute.xlu0 0
      %910 = vperm.xlu0 %909, %v883
      %v911 = vpop.permute.xlu0 %910
      %914 = vset.pattern.permute.xlu0 0
      %915 = vperm.xlu0 %914, %v884
      %v916 = vpop.permute.xlu0 %915
      %919 = vset.pattern.permute.xlu0 0
      %920 = vperm.xlu0 %919, %v885
      %v921 = vpop.permute.xlu0 %920
      %924 = vset.pattern.permute.xlu0 0
      %925 = vperm.xlu0 %924, %v886
      %v926 = vpop.permute.xlu0 %925
      %929 = vset.pattern.permute.xlu0 0
      %930 = vperm.xlu0 %929, %v887
      %v931 = vpop.permute.xlu0 %930
      %v933 = vmul.f32 %v861, %v891
      %v934 = vmul.f32 %v862, %v896
      %v935 = vmul.f32 %v863, %v901
      %v936 = vmul.f32 %v864, %v906
      %v937 = vmul.f32 %v865, %v911
      %v938 = vmul.f32 %v866, %v916
      %v939 = vmul.f32 %v867, %v921
      %v940 = vmul.f32 %v868, %v926
      %v941 = vmul.f32 %v869, %v931
      %v942 = vadd.f32 %v933, %v934
      %v943 = vadd.f32 %v942, %v935
      %v944 = vadd.f32 %v943, %v936
      %v945 = vadd.f32 %v944, %v937
      %v946 = vadd.f32 %v945, %v938
      %v947 = vadd.f32 %v946, %v939
      %v948 = vadd.f32 %v947, %v940
      %v949 = vadd.f32 %v948, %v941
      %v950 = vrot.slane %v949, 4
      %v951 = vadd.f32 %v949, %v950
      %v952 = vrot.slane %v951, 2
      %v953 = vadd.f32 %v951, %v952
      %v954 = vrot.slane %v953, 1
      %v955 = vadd.f32 %v953, %v954
      %956 = vst [vmem:[%s238] sm:$0x1] %v955
      %v957 = vmul.f32 %v933, %v861
      %v958 = vmul.f32 %v934, %v862
      %v959 = vmul.f32 %v935, %v863
      %v960 = vmul.f32 %v936, %v864
      %v961 = vmul.f32 %v937, %v865
      %v962 = vmul.f32 %v938, %v866
      %v963 = vmul.f32 %v939, %v867
      %v964 = vmul.f32 %v940, %v868
      %v965 = vmul.f32 %v941, %v869
      %v966 = vadd.f32 %v957, %v958
      %v967 = vadd.f32 %v966, %v959
      %v968 = vadd.f32 %v967, %v960
      %v969 = vadd.f32 %v968, %v961
      %v970 = vadd.f32 %v969, %v962
      %v971 = vadd.f32 %v970, %v963
      %v972 = vadd.f32 %v971, %v964
      %v973 = vadd.f32 %v972, %v965
      %v974 = vrot.slane %v973, 4
      %v975 = vadd.f32 %v973, %v974
      %v976 = vrot.slane %v975, 2
      %v977 = vadd.f32 %v975, %v976
      %v978 = vrot.slane %v977, 1
      %v979 = vadd.f32 %v977, %v978
      %980 = vst [vmem:[%s241] sm:$0x1] %v979
      %p981 = scmp.lt.s32.totalorder %s17, 1
      %s982 = scalar_select %p981, %s17, 1
      %s983 = smul.addr %s982, 9
      %s984 = smul.addr %s983, 8
      %s985 = scalar_lea.vmem %s3, %s984
      %p986 = scmp.lt.s32.totalorder %s17, 1
      %s987 = scalar_select %p986, %s17, 1
      %s988 = scalar_lea.vmem %s4, %s987
      %p989 = scmp.lt.s32.totalorder %s17, 1
      %s990 = scalar_select %p989, %s17, 1
      %s991 = scalar_lea.vmem %s5, %s990
      // Predicated region
      $region33: #{linnet_d_forward.11} parent=31 // pred_check
        %p992 = pneg %p103
      $region34: #{linnet_d_forward.11} parent=31 // pred_check_branch
        %994 = sbr.rel (%p992) target = $region36
      $region35: #{linnet_d_forward.11} parent=31 // pred_region
        _
      $region36: #{linnet_d_forward.11} parent=31 // pred_fallthru
        _
      // Predicated region
      $region37: #{linnet_d_forward.11} parent=31 // pred_check
        %p995 = pneg %p129
      $region38: #{linnet_d_forward.11} parent=31 // pred_check_branch
        %997 = sbr.rel (%p995) target = $region40
      $region39: #{linnet_d_forward.11} parent=31 // pred_region
        _
      $region40: #{linnet_d_forward.11} parent=31 // pred_fallthru
        _
      // Predicated region
      $region41: #{linnet_d_forward.11} parent=31 // pred_check
        %p998 = pneg %p155
      $region42: #{linnet_d_forward.11} parent=31 // pred_check_branch
        %1000 = sbr.rel (%p998) target = $region44
      $region43: #{linnet_d_forward.11} parent=31 // pred_region
        _
      $region44: #{linnet_d_forward.11} parent=31 // pred_fallthru
        _
    $region32: #{linnet_d_forward.11} parent=5 // pred_fallthru
      _
    %p1001 = scmp.le.s32.totalorder 2, %s12
    // Predicated region
    $region45: #{linnet_d_forward.11} parent=5 // pred_check
      %p1002 = pneg %p1001
    $region46: #{linnet_d_forward.11} parent=5 // pred_check_branch
      %1004 = sbr.rel (%p1002) target = $region48
    $region47: #{linnet_d_forward.11} parent=5 // pred_region
      %s1005 = ssub.s32 %s12, 2
      // Predicated region
      $region49: #{linnet_d_forward.11} parent=47 // pred_check
        %p1006 = pneg %p109
      $region50: #{linnet_d_forward.11} parent=47 // pred_check_branch
        %1008 = sbr.rel (%p1006) target = $region52
      $region51: #{linnet_d_forward.11} parent=47 // pred_region
        %p1009 = scmp.lt.s32.totalorder %s18, 1
        %s1010 = scalar_select %p1009, %s18, 1
        %s1011 = smul.addr %s1010, 9
        %s1012 = smul.addr %s1011, 8
        %s1013 = scalar_lea.vmem %s3, %s1012
      $region52: #{linnet_d_forward.11} parent=47 // pred_fallthru
        _
      // Predicated region
      $region53: #{linnet_d_forward.11} parent=47 // pred_check
        %p1014 = pneg %p135
      $region54: #{linnet_d_forward.11} parent=47 // pred_check_branch
        %1016 = sbr.rel (%p1014) target = $region56
      $region55: #{linnet_d_forward.11} parent=47 // pred_region
        %p1017 = scmp.lt.s32.totalorder %s18, 1
        %s1018 = scalar_select %p1017, %s18, 1
        %s1019 = scalar_lea.vmem %s4, %s1018
      $region56: #{linnet_d_forward.11} parent=47 // pred_fallthru
        _
      // Predicated region
      $region57: #{linnet_d_forward.11} parent=47 // pred_check
        %p1020 = pneg %p161
      $region58: #{linnet_d_forward.11} parent=47 // pred_check_branch
        %1022 = sbr.rel (%p1020) target = $region60
      $region59: #{linnet_d_forward.11} parent=47 // pred_region
        %p1023 = scmp.lt.s32.totalorder %s18, 1
        %s1024 = scalar_select %p1023, %s18, 1
        %s1025 = scalar_lea.vmem %s5, %s1024
      $region60: #{linnet_d_forward.11} parent=47 // pred_fallthru
        _
    $region48: #{linnet_d_forward.11} parent=5 // pred_fallthru
      _
  $region6: #{linnet_d_forward.11} parent=0 // loop_footer
    %s16 = sadd.s32 1, %s12
  $region7: #{linnet_d_forward.11} parent=0 // loop_footer_branch
    %11 = sbr.rel target = $region3
  $region8: #{linnet_d_forward.11} parent=0 // loop_exit
    _

// kernel: linnet_d_forward.14
$region0: #{linnet_d_forward.14}
  #allocation0 [shape = 'u32[]', space=smem, size = 0x4, offset = 0x4, fixed_abs, tag = 'smem constant byte address 0x4 - core index']
  #allocation1 [shape = 'u32[144,128]{1,0:T(1,128)}', space=vmem, size = 0x12000, scoped, tag = 'internal scratch']
  %s0 = inlined_call_operand.vmem [shape: f32[2,24,128], index: 0, kind: input, shape index: {}]
  %s1 = inlined_call_operand.vmem [shape: f32[1,128], index: 1, kind: input, shape index: {}]
  %s2 = inlined_call_operand.vmem [shape: f32[1,128], index: 2, kind: input, shape index: {}]
  %s3 = inlined_call_operand.vmem [shape: f32[24,1], index: 3, kind: input, shape index: {}]
  %s4 = inlined_call_operand.vmem [shape: bf16[2,24,128], index: 4, kind: output, shape index: {0}]
  %s5 = inlined_call_operand.hbm [shape: f32[2,1,128], index: 5, kind: output, shape index: {1}]
  %6 = xla_tuple %s4, %s5
  %s7 = sld [smem:[#allocation0]]
  $region57: #{linnet_d_forward.14} parent=0
    _
  %s9 = ssub.s32 1, %s7
  %s10 = scalar_select 0, %s9, %s7
  $region1: #{linnet_d_forward.14} parent=0
    #allocation2 [shape = 'u8[1024]{0}', space=vmem, size = 0x400, scoped, tag = 'output window, operand 1']
    #allocation3 [shape = 's32[2]{0}', space=sflag, size = 0x8, scoped, tag = 'scoped memory for linnet_d_forward.14']
    %11 = vsyncpa [#allocation3], 0
    %s12 = scalar_lea.sflag [#allocation3], 1
    %13 = vsyncpa %s12, 0
    loop: start=0, step=1, limit=4
    $region2: #{linnet_d_forward.14} parent=1 // loop_pre_header
      _
    $region3: #{linnet_d_forward.14} parent=1 // loop_header
      %s15 = sphi 0, %s19
      %p16 = scmp.ge.s32.totalorder %s15, 4
      %s25 = sphi 0, %s27
      %s28 = sphi 0, %s25
      %s29 = sphi 0, %s28
      %s45 = sphi 0, %s29
      %s49 = sphi 0, %s49
      %s51 = sphi 0, %s49
      %s52 = sphi 0, %s51
      %s66 = sphi 0, %s52
      %s70 = sphi 0, %s70
      %s72 = sphi 0, %s70
      %s73 = sphi 0, %s72
      %s87 = sphi 0, %s73
      %s91 = sphi 0, %s91
      %s93 = sphi 0, %s91
      %s94 = sphi 0, %s93
      %s108 = sphi 0, %s94
      %s114 = sphi 0, %s116
      %s117 = sphi 0, %s114
      %s118 = sphi 0, %s117
      %s134 = sphi 0, %s118
      %s140 = sphi 0, %s142
      %s143 = sphi 0, %s140
      %s144 = sphi 0, %s143
      %s160 = sphi 0, %s144
    $region4: #{linnet_d_forward.14} parent=1 // loop_header_branch
      %18 = sbr.rel (%p16) target = $region8
    $region5: #{linnet_d_forward.14} parent=1 // loop_body
      %s20 = ssub.s32 %s15, 1
      %s21 = ssub.s32 %s15, 2
      %s22 = sadd.s32 %s15, 1
      %s23 = ssub.s32 %s15, %s22
      %p24 = scmp.eq.s32.totalorder %s23, 0
      %s26 = sadd.s32 %s25, 1
      %s27 = scalar_select %p24, %s25, %s26
      %p30 = pneg %p24
      %p31 = scmp.eq.s32.totalorder %s15, 1
      %p32 = por %p30, %p31
      %p33 = scmp.ne.s32.totalorder %s25, %s28
      %p34 = scmp.eq.s32.totalorder %s15, 0
      %p35 = por %p33, %p34
      %p36 = scmp.ne.s32.totalorder %s25, %s28
      %p37 = scmp.eq.s32.totalorder %s20, 1
      %p38 = por %p36, %p37
      %p39 = scmp.ne.s32.totalorder %s28, %s29
      %p40 = scmp.eq.s32.totalorder %s20, 0
      %p41 = por %p39, %p40
      %p42 = scmp.ne.s32.totalorder %s28, %s29
      %p43 = scmp.eq.s32.totalorder %s21, 1
      %p44 = por %p42, %p43
      %p46 = scmp.ne.s32.totalorder %s29, %s45
      %p47 = scmp.eq.s32.totalorder %s21, 0
      %p48 = por %p46, %p47
      %s50 = sadd.s32 %s49, 1
      %p53 = scmp.eq.s32.totalorder %s15, 1
      %p54 = scmp.ne.s32.totalorder %s49, %s51
      %p55 = scmp.eq.s32.totalorder %s15, 0
      %p56 = por %p54, %p55
      %p57 = scmp.ne.s32.totalorder %s49, %s51
      %p58 = scmp.eq.s32.totalorder %s20, 1
      %p59 = por %p57, %p58
      %p60 = scmp.ne.s32.totalorder %s51, %s52
      %p61 = scmp.eq.s32.totalorder %s20, 0
      %p62 = por %p60, %p61
      %p63 = scmp.ne.s32.totalorder %s51, %s52
      %p64 = scmp.eq.s32.totalorder %s21, 1
      %p65 = por %p63, %p64
      %p67 = scmp.ne.s32.totalorder %s52, %s66
      %p68 = scmp.eq.s32.totalorder %s21, 0
      %p69 = por %p67, %p68
      %s71 = sadd.s32 %s70, 1
      %p74 = scmp.eq.s32.totalorder %s15, 1
      %p75 = scmp.ne.s32.totalorder %s70, %s72
      %p76 = scmp.eq.s32.totalorder %s15, 0
      %p77 = por %p75, %p76
      %p78 = scmp.ne.s32.totalorder %s70, %s72
      %p79 = scmp.eq.s32.totalorder %s20, 1
      %p80 = por %p78, %p79
      %p81 = scmp.ne.s32.totalorder %s72, %s73
      %p82 = scmp.eq.s32.totalorder %s20, 0
      %p83 = por %p81, %p82
      %p84 = scmp.ne.s32.totalorder %s72, %s73
      %p85 = scmp.eq.s32.totalorder %s21, 1
      %p86 = por %p84, %p85
      %p88 = scmp.ne.s32.totalorder %s73, %s87
      %p89 = scmp.eq.s32.totalorder %s21, 0
      %p90 = por %p88, %p89
      %s92 = sadd.s32 %s91, 1
      %p95 = scmp.eq.s32.totalorder %s15, 1
      %p96 = scmp.ne.s32.totalorder %s91, %s93
      %p97 = scmp.eq.s32.totalorder %s15, 0
      %p98 = por %p96, %p97
      %p99 = scmp.ne.s32.totalorder %s91, %s93
      %p100 = scmp.eq.s32.totalorder %s20, 1
      %p101 = por %p99, %p100
      %p102 = scmp.ne.s32.totalorder %s93, %s94
      %p103 = scmp.eq.s32.totalorder %s20, 0
      %p104 = por %p102, %p103
      %p105 = scmp.ne.s32.totalorder %s93, %s94
      %p106 = scmp.eq.s32.totalorder %s21, 1
      %p107 = por %p105, %p106
      %p109 = scmp.ne.s32.totalorder %s94, %s108
      %p110 = scmp.eq.s32.totalorder %s21, 0
      %p111 = por %p109, %p110
      %s112 = ssub.s32 %s15, %s22
      %p113 = scmp.eq.s32.totalorder %s112, 0
      %s115 = sadd.s32 %s114, 1
      %s116 = scalar_select %p113, %s114, %s115
      %p119 = pneg %p113
      %p120 = scmp.eq.s32.totalorder %s15, 1
      %p121 = por %p119, %p120
      %p122 = scmp.ne.s32.totalorder %s114, %s117
      %p123 = scmp.eq.s32.totalorder %s15, 0
      %p124 = por %p122, %p123
      %p125 = scmp.ne.s32.totalorder %s114, %s117
      %p126 = scmp.eq.s32.totalorder %s20, 1
      %p127 = por %p125, %p126
      %p128 = scmp.ne.s32.totalorder %s117, %s118
      %p129 = scmp.eq.s32.totalorder %s20, 0
      %p130 = por %p128, %p129
      %p131 = scmp.ne.s32.totalorder %s117, %s118
      %p132 = scmp.eq.s32.totalorder %s21, 1
      %p133 = por %p131, %p132
      %p135 = scmp.ne.s32.totalorder %s118, %s134
      %p136 = scmp.eq.s32.totalorder %s21, 0
      %p137 = por %p135, %p136
      %s138 = ssub.s32 %s15, %s22
      %p139 = scmp.eq.s32.totalorder %s138, 0
      %s141 = sadd.s32 %s140, 1
      %s142 = scalar_select %p139, %s140, %s141
      %p145 = pneg %p139
      %p146 = scmp.eq.s32.totalorder %s15, 1
      %p147 = por %p145, %p146
      %p148 = scmp.ne.s32.totalorder %s140, %s143
      %p149 = scmp.eq.s32.totalorder %s15, 0
      %p150 = por %p148, %p149
      %p151 = scmp.ne.s32.totalorder %s140, %s143
      %p152 = scmp.eq.s32.totalorder %s20, 1
      %p153 = por %p151, %p152
      %p154 = scmp.ne.s32.totalorder %s143, %s144
      %p155 = scmp.eq.s32.totalorder %s20, 0
      %p156 = por %p154, %p155
      %p157 = scmp.ne.s32.totalorder %s143, %s144
      %p158 = scmp.eq.s32.totalorder %s21, 1
      %p159 = por %p157, %p158
      %p161 = scmp.ne.s32.totalorder %s144, %s160
      %p162 = scmp.eq.s32.totalorder %s21, 0
      %p163 = por %p161, %p162
      %p164 = scmp.le.s32.totalorder 1, %s15
      %p165 = scmp.lt.s32.totalorder %s15, 3
      %p166 = pnand %p164, %p165
      %p167 = pneg %p166
      // Predicated region
      $region9: #{linnet_d_forward.14} parent=5 // pred_check
        _
      $region10: #{linnet_d_forward.14} parent=5 // pred_check_branch
        %169 = sbr.rel (%p166) target = $region12
      $region11: #{linnet_d_forward.14} parent=5 // pred_region
        %s170 = ssub.s32 %s15, 1
        // Predicated region
        $region13: #{linnet_d_forward.14} parent=11 // pred_check
          %p171 = pneg %p62
        $region14: #{linnet_d_forward.14} parent=11 // pred_check_branch
          %173 = sbr.rel (%p171) target = $region16
        $region15: #{linnet_d_forward.14} parent=11 // pred_region
          _
        $region16: #{linnet_d_forward.14} parent=11 // pred_fallthru
          _
        // Predicated region
        $region17: #{linnet_d_forward.14} parent=11 // pred_check
          %p174 = pneg %p83
        $region18: #{linnet_d_forward.14} parent=11 // pred_check_branch
          %176 = sbr.rel (%p174) target = $region20
        $region19: #{linnet_d_forward.14} parent=11 // pred_region
          _
        $region20: #{linnet_d_forward.14} parent=11 // pred_fallthru
          _
        // Predicated region
        $region21: #{linnet_d_forward.14} parent=11 // pred_check
          %p177 = pneg %p104
        $region22: #{linnet_d_forward.14} parent=11 // pred_check_branch
          %179 = sbr.rel (%p177) target = $region24
        $region23: #{linnet_d_forward.14} parent=11 // pred_region
          _
        $region24: #{linnet_d_forward.14} parent=11 // pred_fallthru
          _
      $region12: #{linnet_d_forward.14} parent=5 // pred_fallthru
        _
      %p180 = scmp.lt.s32.totalorder %s15, 2
      // Predicated region
      $region25: #{linnet_d_forward.14} parent=5 // pred_check
        %p181 = pneg %p180
      $region26: #{linnet_d_forward.14} parent=5 // pred_check_branch
        %183 = sbr.rel (%p181) target = $region28
      $region27: #{linnet_d_forward.14} parent=5 // pred_region
        // Predicated region
        $region29: #{linnet_d_forward.14} parent=27 // pred_check
          %p184 = pneg %p35
        $region30: #{linnet_d_forward.14} parent=27 // pred_check_branch
          %186 = sbr.rel (%p184) target = $region32
        $region31: #{linnet_d_forward.14} parent=27 // pred_region
          %p187 = scmp.lt.s32.totalorder %s15, 1
          %s188 = scalar_select %p187, %s15, 1
          %s189 = smul.addr %s188, 3
          %s190 = smul.addr %s189, 8
          %s191 = scalar_lea.vmem %s0, %s190
        $region32: #{linnet_d_forward.14} parent=27 // pred_fallthru
          _
      $region28: #{linnet_d_forward.14} parent=5 // pred_fallthru
        _
      %p192 = scmp.le.s32.totalorder 1, %s15
      %p193 = scmp.lt.s32.totalorder %s15, 3
      %p194 = pnand %p192, %p193
      %p195 = pneg %p194
      // Predicated region
      $region33: #{linnet_d_forward.14} parent=5 // pred_check
        _
      $region34: #{linnet_d_forward.14} parent=5 // pred_check_branch
        %197 = sbr.rel (%p194) target = $region36
      $region35: #{linnet_d_forward.14} parent=5 // pred_region
        %s198 = ssub.s32 %s15, 1
        %p199 = scmp.lt.s32.totalorder %s20, 1
        %s200 = scalar_select %p199, %s20, 1
        %s201 = smul.addr %s200, 3
        %s202 = smul.addr %s201, 8
        %s203 = scalar_lea.vmem %s0, %s202
        %p204 = pneg %p41
        %p205 = pneg %p38
        %p206 = pneg %p62
        %p207 = pneg %p59
        %p208 = pneg %p83
        %p209 = pneg %p80
        %p210 = pneg %p104
        %p211 = pneg %p101
        %p212 = pneg %p130
        %p213 = pneg %p127
        %p214 = scmp.lt.s32.totalorder %s20, 1
        %s215 = scalar_select %p214, %s20, 1
        %s216 = smul.addr %s215, 3
        %s217 = smul.addr %s216, 4
        %s218 = scalar_lea.vmem %s4, %s217
        %p219 = pneg %p156
        %p220 = pneg %p153
        %s221 = sand.u32 %s143, 1
        %s222 = scalar_lea.sflag [#allocation3], %s221
        %s223 = sand.u32 %s143, 1
        %s224 = scalar_lea.vmem [#allocation2], %s223
        %p225 = scmp.lt.s32.totalorder %s20, 1
        %s226 = scalar_select %p225, %s20, 1
        %s227 = smul.addr %s226, 3
        %s228 = smul.addr %s227, 8
        %s229 = scalar_lea.vmem %s0, %s228
        %p230 = scmp.lt.s32.totalorder %s20, 1
        %s231 = scalar_select %p230, %s20, 1
        %s232 = smul.addr %s231, 3
        %s233 = smul.addr %s232, 4
        %s234 = scalar_lea.vmem %s4, %s233
        %v235 = vld [vmem:[%s229] sm:$0xff]
        %v236 = vld [vmem:[%s229 + $0x8] sm:$0xff]
        %v237 = vld [vmem:[%s229 + $0x10] sm:$0xff]
        %v238 = vld [vmem:[%s1] sm:$0x1]
        %v240 = vlaneseq
        %v241 = vshrl.u32 %v240, 7
        %v242 = vsub.s32 0, %v241
        %v243 = vrot.slane %v238, %v242
        %v245 = vmul.f32 %v235, %v243
        %v246 = vmul.f32 %v236, %v243
        %v247 = vmul.f32 %v237, %v243
        %v248 = vld [vmem:[%s2] sm:$0x1]
        %v250 = vlaneseq
        %v251 = vshrl.u32 %v250, 7
        %v252 = vsub.s32 0, %v251
        %v253 = vrot.slane %v248, %v252
        %v255 = vadd.f32 %v245, %v253
        %v256 = vadd.f32 %v246, %v253
        %v257 = vadd.f32 %v247, %v253
        %v258 = vmul.f32 %v255, 0.2
        %v259 = vmul.f32 %v256, 0.2
        %v260 = vmul.f32 %v257, 0.2
        %v261 = vmax.f32 %v255, %v258
        %v262 = vmax.f32 %v256, %v259
        %v263 = vmax.f32 %v257, %v260
        %v264 = vpack.c.bf16 %v262, %v261
        %v265 = vpack.c.bf16 %v263, %v263
        %v268 = vunpack.c.l.b16 %v264
        %v269 = vunpack.c.h.b16 %v264
        %v270 = vunpack.c.l.b16 %v265
        %v271 = vpack.c.b16 %v268, %v268
        %v272 = vpack.c.b16 %v269, %v269
        %v273 = vpack.c.b16 %v270, %v270
        %277 = vst [vmem:[%s234] sm:$0xf] %v271
        %278 = vst [vmem:[%s234 + $0x4] sm:$0xf] %v272
        %279 = vst [vmem:[%s234 + $0x8] sm:$0xf] %v273
        %v280 = vld [vmem:[%s3] sm:$0xff]
        %v281 = vld [vmem:[%s3 + $0x8] sm:$0xff]
        %v282 = vld [vmem:[%s3 + $0x10] sm:$0xff]
        %284 = vset.pattern.permute.xlu0 0
        %285 = vperm.xlu0 %284, %v280
        %v286 = vpop.permute.xlu0 %285
        %289 = vset.pattern.permute.xlu0 0
        %290 = vperm.xlu0 %289, %v281
        %v291 = vpop.permute.xlu0 %290
        %294 = vset.pattern.permute.xlu0 0
        %295 = vperm.xlu0 %294, %v282
        %v296 = vpop.permute.xlu0 %295
        %v298 = vmul.f32 %v261, %v286
        %v299 = vmul.f32 %v262, %v291
        %v300 = vmul.f32 %v263, %v296
        %v301 = vadd.f32 %v298, %v299
        %v302 = vadd.f32 %v301, %v300
        %v303 = vrot.slane %v302, 4
        %v304 = vadd.f32 %v302, %v303
        %v305 = vrot.slane %v304, 2
        %v306 = vadd.f32 %v304, %v305
        %v307 = vrot.slane %v306, 1
        %v308 = vadd.f32 %v306, %v307
        %309 = vst [vmem:[%s224] sm:$0x1] %v308
        %p310 = scmp.lt.s32.totalorder %s20, 1
        %s311 = scalar_select %p310, %s20, 1
        %s312 = smul.addr %s311, 3
        %s313 = smul.addr %s312, 4
        %s314 = scalar_lea.vmem %s4, %s313
        %s315 = sand.u32 %s143, 1
        %s316 = scalar_lea.sflag [#allocation3], %s315
        %s317 = sand.u32 %s143, 1
        %s318 = scalar_lea.vmem [#allocation2], %s317
        // Predicated region
        $region37: #{linnet_d_forward.14} parent=35 // pred_check
          %p319 = pneg %p127
        $region38: #{linnet_d_forward.14} parent=35 // pred_check_branch
          %321 = sbr.rel (%p319) target = $region40
        $region39: #{linnet_d_forward.14} parent=35 // pred_region
          _
        $region40: #{linnet_d_forward.14} parent=35 // pred_fallthru
          _
        // Predicated region
        $region41: #{linnet_d_forward.14} parent=35 // pred_check
          %p322 = pneg %p153
        $region42: #{linnet_d_forward.14} parent=35 // pred_check_branch
          %324 = sbr.rel (%p322) target = $region44
        $region43: #{linnet_d_forward.14} parent=35 // pred_region
          %s326 = ssub.s32 16, 16
          %327 = vsyncadd %s316, %s326
          %s328 = smul.addr %s20, 16
          %s329 = scalar_lea.hbm %s5, %s328
          %s331 = sshll.u32 %s318, 4
          %s332 = int_to_ptr.vmem [resolvable:$true] %s331
          %334 = dma.vmem_to_hbm [thread:$0]  %s332, 16, %s329, %s316
        $region44: #{linnet_d_forward.14} parent=35 // pred_fallthru
          _
      $region36: #{linnet_d_forward.14} parent=5 // pred_fallthru
        _
      %p335 = scmp.le.s32.totalorder 2, %s15
      // Predicated region
      $region45: #{linnet_d_forward.14} parent=5 // pred_check
        %p336 = pneg %p335
      $region46: #{linnet_d_forward.14} parent=5 // pred_check_branch
        %338 = sbr.rel (%p336) target = $region48
      $region47: #{linnet_d_forward.14} parent=5 // pred_region
        %s339 = ssub.s32 %s15, 2
        // Predicated region
        $region49: #{linnet_d_forward.14} parent=47 // pred_check
          %p340 = pneg %p133
        $region50: #{linnet_d_forward.14} parent=47 // pred_check_branch
          %342 = sbr.rel (%p340) target = $region52
        $region51: #{linnet_d_forward.14} parent=47 // pred_region
          %p343 = scmp.lt.s32.totalorder %s21, 1
          %s344 = scalar_select %p343, %s21, 1
          %s345 = smul.addr %s344, 3
          %s346 = smul.addr %s345, 4
          %s347 = scalar_lea.vmem %s4, %s346
        $region52: #{linnet_d_forward.14} parent=47 // pred_fallthru
          _
        // Predicated region
        $region53: #{linnet_d_forward.14} parent=47 // pred_check
          %p348 = pneg %p159
        $region54: #{linnet_d_forward.14} parent=47 // pred_check_branch
          %350 = sbr.rel (%p348) target = $region56
        $region55: #{linnet_d_forward.14} parent=47 // pred_region
          %s351 = sand.u32 %s144, 1
          %s352 = scalar_lea.sflag [#allocation3], %s351
          %s353 = sand.u32 %s144, 1
          %s354 = scalar_lea.vmem [#allocation2], %s353
          %355 = dma.done %s352, 16
        $region56: #{linnet_d_forward.14} parent=47 // pred_fallthru
          _
      $region48: #{linnet_d_forward.14} parent=5 // pred_fallthru
        _
    $region6: #{linnet_d_forward.14} parent=1 // loop_footer
      %s19 = sadd.s32 1, %s15
    $region7: #{linnet_d_forward.14} parent=1 // loop_footer_branch
      %14 = sbr.rel target = $region3
    $region8: #{linnet_d_forward.14} parent=1 // loop_exit
      _
    %356 = vsyncpa [#allocation3], 1
    %s357 = scalar_lea.sflag [#allocation3], 1
    %358 = vsyncpa %s357, 1

// kernel: linnet_d_forward.13
$region0: #{linnet_d_forward.13}
  #allocation0 [shape = 'u32[]', space=smem, size = 0x4, offset = 0x4, fixed_abs, tag = 'smem constant byte address 0x4 - core index']
  #allocation1 [shape = 'u32[144,128]{1,0:T(1,128)}', space=vmem, size = 0x12000, scoped, tag = 'internal scratch']
  %s0 = inlined_call_operand.vmem [shape: bf16[2,32,128], index: 0, kind: input, shape index: {}]
  %s1 = inlined_call_operand.vmem [shape: bf16[4,128,128], index: 1, kind: input, shape index: {}]
  %s2 = inlined_call_operand.vmem [shape: f32[24,1], index: 2, kind: input, shape index: {}]
  %s3 = inlined_call_operand.vmem [shape: f32[2,24,128], index: 3, kind: output, shape index: {0}]
  %s4 = inlined_call_operand.vmem [shape: f32[2,1,128], index: 4, kind: output, shape index: {1}]
  %s5 = inlined_call_operand.vmem [shape: f32[2,1,128], index: 5, kind: output, shape index: {2}]
  %6 = xla_tuple %s3, %s4, %s5
  %s7 = sld [smem:[#allocation0]]
  $region61: #{linnet_d_forward.13} parent=0
    _
  %s9 = ssub.s32 1, %s7
  %s10 = scalar_select 0, %s9, %s7
  loop: start=0, step=1, limit=4
  $region2: #{linnet_d_forward.13} parent=0 // loop_pre_header
    _
  $region3: #{linnet_d_forward.13} parent=0 // loop_header
    %s12 = sphi 0, %s16
    %p13 = scmp.ge.s32.totalorder %s12, 4
    %s22 = sphi 0, %s24
    %s25 = sphi 0, %s22
    %s26 = sphi 0, %s25
    %s42 = sphi 0, %s26
    %s46 = sphi 0, %s46
    %s48 = sphi 0, %s46
    %s49 = sphi 0, %s48
    %s63 = sphi 0, %s49
    %s67 = sphi 0, %s67
    %s69 = sphi 0, %s67
    %s70 = sphi 0, %s69
    %s84 = sphi 0, %s70
    %s90 = sphi 0, %s92
    %s93 = sphi 0, %s90
    %s94 = sphi 0, %s93
    %s110 = sphi 0, %s94
    %s116 = sphi 0, %s118
    %s119 = sphi 0, %s116
    %s120 = sphi 0, %s119
    %s136 = sphi 0, %s120
    %s142 = sphi 0, %s144
    %s145 = sphi 0, %s142
    %s146 = sphi 0, %s145
    %s162 = sphi 0, %s146
  $region4: #{linnet_d_forward.13} parent=0 // loop_header_branch
    %15 = sbr.rel (%p13) target = $region8
  $region5: #{linnet_d_forward.13} parent=0 // loop_body
    %s17 = ssub.s32 %s12, 1
    %s18 = ssub.s32 %s12, 2
    %s19 = sadd.s32 %s12, 1
    %s20 = ssub.s32 %s12, %s19
    %p21 = scmp.eq.s32.totalorder %s20, 0
    %s23 = sadd.s32 %s22, 1
    %s24 = scalar_select %p21, %s22, %s23
    %p27 = pneg %p21
    %p28 = scmp.eq.s32.totalorder %s12, 1
    %p29 = por %p27, %p28
    %p30 = scmp.ne.s32.totalorder %s22, %s25
    %p31 = scmp.eq.s32.totalorder %s12, 0
    %p32 = por %p30, %p31
    %p33 = scmp.ne.s32.totalorder %s22, %s25
    %p34 = scmp.eq.s32.totalorder %s17, 1
    %p35 = por %p33, %p34
    %p36 = scmp.ne.s32.totalorder %s25, %s26
    %p37 = scmp.eq.s32.totalorder %s17, 0
    %p38 = por %p36, %p37
    %p39 = scmp.ne.s32.totalorder %s25, %s26
    %p40 = scmp.eq.s32.totalorder %s18, 1
    %p41 = por %p39, %p40
    %p43 = scmp.ne.s32.totalorder %s26, %s42
    %p44 = scmp.eq.s32.totalorder %s18, 0
    %p45 = por %p43, %p44
    %s47 = sadd.s32 %s46, 1
    %p50 = scmp.eq.s32.totalorder %s12, 1
    %p51 = scmp.ne.s32.totalorder %s46, %s48
    %p52 = scmp.eq.s32.totalorder %s12, 0
    %p53 = por %p51, %p52
    %p54 = scmp.ne.s32.totalorder %s46, %s48
    %p55 = scmp.eq.s32.totalorder %s17, 1
    %p56 = por %p54, %p55
    %p57 = scmp.ne.s32.totalorder %s48, %s49
    %p58 = scmp.eq.s32.totalorder %s17, 0
    %p59 = por %p57, %p58
    %p60 = scmp.ne.s32.totalorder %s48, %s49
    %p61 = scmp.eq.s32.totalorder %s18, 1
    %p62 = por %p60, %p61
    %p64 = scmp.ne.s32.totalorder %s49, %s63
    %p65 = scmp.eq.s32.totalorder %s18, 0
    %p66 = por %p64, %p65
    %s68 = sadd.s32 %s67, 1
    %p71 = scmp.eq.s32.totalorder %s12, 1
    %p72 = scmp.ne.s32.totalorder %s67, %s69
    %p73 = scmp.eq.s32.totalorder %s12, 0
    %p74 = por %p72, %p73
    %p75 = scmp.ne.s32.totalorder %s67, %s69
    %p76 = scmp.eq.s32.totalorder %s17, 1
    %p77 = por %p75, %p76
    %p78 = scmp.ne.s32.totalorder %s69, %s70
    %p79 = scmp.eq.s32.totalorder %s17, 0
    %p80 = por %p78, %p79
    %p81 = scmp.ne.s32.totalorder %s69, %s70
    %p82 = scmp.eq.s32.totalorder %s18, 1
    %p83 = por %p81, %p82
    %p85 = scmp.ne.s32.totalorder %s70, %s84
    %p86 = scmp.eq.s32.totalorder %s18, 0
    %p87 = por %p85, %p86
    %s88 = ssub.s32 %s12, %s19
    %p89 = scmp.eq.s32.totalorder %s88, 0
    %s91 = sadd.s32 %s90, 1
    %s92 = scalar_select %p89, %s90, %s91
    %p95 = pneg %p89
    %p96 = scmp.eq.s32.totalorder %s12, 1
    %p97 = por %p95, %p96
    %p98 = scmp.ne.s32.totalorder %s90, %s93
    %p99 = scmp.eq.s32.totalorder %s12, 0
    %p100 = por %p98, %p99
    %p101 = scmp.ne.s32.totalorder %s90, %s93
    %p102 = scmp.eq.s32.totalorder %s17, 1
    %p103 = por %p101, %p102
    %p104 = scmp.ne.s32.totalorder %s93, %s94
    %p105 = scmp.eq.s32.totalorder %s17, 0
    %p106 = por %p104, %p105
    %p107 = scmp.ne.s32.totalorder %s93, %s94
    %p108 = scmp.eq.s32.totalorder %s18, 1
    %p109 = por %p107, %p108
    %p111 = scmp.ne.s32.totalorder %s94, %s110
    %p112 = scmp.eq.s32.totalorder %s18, 0
    %p113 = por %p111, %p112
    %s114 = ssub.s32 %s12, %s19
    %p115 = scmp.eq.s32.totalorder %s114, 0
    %s117 = sadd.s32 %s116, 1
    %s118 = scalar_select %p115, %s116, %s117
    %p121 = pneg %p115
    %p122 = scmp.eq.s32.totalorder %s12, 1
    %p123 = por %p121, %p122
    %p124 = scmp.ne.s32.totalorder %s116, %s119
    %p125 = scmp.eq.s32.totalorder %s12, 0
    %p126 = por %p124, %p125
    %p127 = scmp.ne.s32.totalorder %s116, %s119
    %p128 = scmp.eq.s32.totalorder %s17, 1
    %p129 = por %p127, %p128
    %p130 = scmp.ne.s32.totalorder %s119, %s120
    %p131 = scmp.eq.s32.totalorder %s17, 0
    %p132 = por %p130, %p131
    %p133 = scmp.ne.s32.totalorder %s119, %s120
    %p134 = scmp.eq.s32.totalorder %s18, 1
    %p135 = por %p133, %p134
    %p137 = scmp.ne.s32.totalorder %s120, %s136
    %p138 = scmp.eq.s32.totalorder %s18, 0
    %p139 = por %p137, %p138
    %s140 = ssub.s32 %s12, %s19
    %p141 = scmp.eq.s32.totalorder %s140, 0
    %s143 = sadd.s32 %s142, 1
    %s144 = scalar_select %p141, %s142, %s143
    %p147 = pneg %p141
    %p148 = scmp.eq.s32.totalorder %s12, 1
    %p149 = por %p147, %p148
    %p150 = scmp.ne.s32.totalorder %s142, %s145
    %p151 = scmp.eq.s32.totalorder %s12, 0
    %p152 = por %p150, %p151
    %p153 = scmp.ne.s32.totalorder %s142, %s145
    %p154 = scmp.eq.s32.totalorder %s17, 1
    %p155 = por %p153, %p154
    %p156 = scmp.ne.s32.totalorder %s145, %s146
    %p157 = scmp.eq.s32.totalorder %s17, 0
    %p158 = por %p156, %p157
    %p159 = scmp.ne.s32.totalorder %s145, %s146
    %p160 = scmp.eq.s32.totalorder %s18, 1
    %p161 = por %p159, %p160
    %p163 = scmp.ne.s32.totalorder %s146, %s162
    %p164 = scmp.eq.s32.totalorder %s18, 0
    %p165 = por %p163, %p164
    %p166 = scmp.le.s32.totalorder 1, %s12
    %p167 = scmp.lt.s32.totalorder %s12, 3
    %p168 = pnand %p166, %p167
    %p169 = pneg %p168
    // Predicated region
    $region9: #{linnet_d_forward.13} parent=5 // pred_check
      _
    $region10: #{linnet_d_forward.13} parent=5 // pred_check_branch
      %171 = sbr.rel (%p168) target = $region12
    $region11: #{linnet_d_forward.13} parent=5 // pred_region
      %s172 = ssub.s32 %s12, 1
      // Predicated region
      $region13: #{linnet_d_forward.13} parent=11 // pred_check
        %p173 = pneg %p59
      $region14: #{linnet_d_forward.13} parent=11 // pred_check_branch
        %175 = sbr.rel (%p173) target = $region16
      $region15: #{linnet_d_forward.13} parent=11 // pred_region
        _
      $region16: #{linnet_d_forward.13} parent=11 // pred_fallthru
        _
      // Predicated region
      $region17: #{linnet_d_forward.13} parent=11 // pred_check
        %p176 = pneg %p80
      $region18: #{linnet_d_forward.13} parent=11 // pred_check_branch
        %178 = sbr.rel (%p176) target = $region20
      $region19: #{linnet_d_forward.13} parent=11 // pred_region
        _
      $region20: #{linnet_d_forward.13} parent=11 // pred_fallthru
        _
    $region12: #{linnet_d_forward.13} parent=5 // pred_fallthru
      _
    %p179 = scmp.lt.s32.totalorder %s12, 2
    // Predicated region
    $region21: #{linnet_d_forward.13} parent=5 // pred_check
      %p180 = pneg %p179
    $region22: #{linnet_d_forward.13} parent=5 // pred_check_branch
      %182 = sbr.rel (%p180) target = $region24
    $region23: #{linnet_d_forward.13} parent=5 // pred_region
      // Predicated region
      $region25: #{linnet_d_forward.13} parent=23 // pred_check
        %p183 = pneg %p32
      $region26: #{linnet_d_forward.13} parent=23 // pred_check_branch
        %185 = sbr.rel (%p183) target = $region28
      $region27: #{linnet_d_forward.13} parent=23 // pred_region
        %p186 = scmp.lt.s32.totalorder %s12, 1
        %s187 = scalar_select %p186, %s12, 1
        %s188 = smul.addr %s187, 4
        %s189 = smul.addr %s188, 4
        %s190 = scalar_lea.vmem %s0, %s189
      $region28: #{linnet_d_forward.13} parent=23 // pred_fallthru
        _
    $region24: #{linnet_d_forward.13} parent=5 // pred_fallthru
      _
    %p191 = scmp.le.s32.totalorder 1, %s12
    %p192 = scmp.lt.s32.totalorder %s12, 3
    %p193 = pnand %p191, %p192
    %p194 = pneg %p193
    // Predicated region
    $region29: #{linnet_d_forward.13} parent=5 // pred_check
      _
    $region30: #{linnet_d_forward.13} parent=5 // pred_check_branch
      %196 = sbr.rel (%p193) target = $region32
    $region31: #{linnet_d_forward.13} parent=5 // pred_region
      %s197 = ssub.s32 %s12, 1
      %p198 = scmp.lt.s32.totalorder %s17, 1
      %s199 = scalar_select %p198, %s17, 1
      %s200 = smul.addr %s199, 4
      %s201 = smul.addr %s200, 4
      %s202 = scalar_lea.vmem %s0, %s201
      %p203 = pneg %p38
      %p204 = pneg %p35
      %p205 = pneg %p59
      %p206 = pneg %p56
      %p207 = pneg %p80
      %p208 = pneg %p77
      %p209 = pneg %p106
      %p210 = pneg %p103
      %p211 = scmp.lt.s32.totalorder %s17, 1
      %s212 = scalar_select %p211, %s17, 1
      %s213 = smul.addr %s212, 3
      %s214 = smul.addr %s213, 8
      %s215 = scalar_lea.vmem %s3, %s214
      %p216 = pneg %p132
      %p217 = pneg %p129
      %p218 = scmp.lt.s32.totalorder %s17, 1
      %s219 = scalar_select %p218, %s17, 1
      %s220 = scalar_lea.vmem %s4, %s219
      %p221 = pneg %p158
      %p222 = pneg %p155
      %p223 = scmp.lt.s32.totalorder %s17, 1
      %s224 = scalar_select %p223, %s17, 1
      %s225 = scalar_lea.vmem %s5, %s224
      %p226 = scmp.lt.s32.totalorder %s17, 1
      %s227 = scalar_select %p226, %s17, 1
      %s228 = smul.addr %s227, 4
      %s229 = smul.addr %s228, 4
      %s230 = scalar_lea.vmem %s0, %s229
      %p231 = scmp.lt.s32.totalorder %s17, 1
      %s232 = scalar_select %p231, %s17, 1
      %s233 = smul.addr %s232, 3
      %s234 = smul.addr %s233, 8
      %s235 = scalar_lea.vmem %s3, %s234
      %p236 = scmp.lt.s32.totalorder %s17, 1
      %s237 = scalar_select %p236, %s17, 1
      %s238 = scalar_lea.vmem %s4, %s237
      %p239 = scmp.lt.s32.totalorder %s17, 1
      %s240 = scalar_select %p239, %s17, 1
      %s241 = scalar_lea.vmem %s5, %s240
      %v243 = vld [vmem:[%s230] sm:$0xf]
      %v244 = vld [vmem:[%s230 + $0x4] sm:$0xf]
      %v245 = vld [vmem:[%s230 + $0x8] sm:$0xf]
      %v246 = vld [vmem:[%s230 + $0xc] sm:$0xf]
      %v247 = vld [vmem:[%s1] sm:$0xf]
      %v248 = vld [vmem:[%s1 + $0x4] sm:$0xf]
      %v249 = vld [vmem:[%s1 + $0x8] sm:$0xf]
      %v250 = vld [vmem:[%s1 + $0xc] sm:$0xf]
      %v251 = vld [vmem:[%s1 + $0x10] sm:$0xf]
      %v252 = vld [vmem:[%s1 + $0x14] sm:$0xf]
      %v253 = vld [vmem:[%s1 + $0x18] sm:$0xf]
      %v254 = vld [vmem:[%s1 + $0x1c] sm:$0xf]
      %v255 = vld [vmem:[%s1 + $0x20] sm:$0xf]
      %v256 = vld [vmem:[%s1 + $0x24] sm:$0xf]
      %v257 = vld [vmem:[%s1 + $0x28] sm:$0xf]
      %v258 = vld [vmem:[%s1 + $0x2c] sm:$0xf]
      %v259 = vld [vmem:[%s1 + $0x30] sm:$0xf]
      %v260 = vld [vmem:[%s1 + $0x34] sm:$0xf]
      %v261 = vld [vmem:[%s1 + $0x38] sm:$0xf]
      %v262 = vld [vmem:[%s1 + $0x3c] sm:$0xf]
      %s263 = scalar_lea.vmem %s1, 64
      %v264 = vld [vmem:[%s263] sm:$0xf]
      %v265 = vld [vmem:[%s263 + $0x4] sm:$0xf]
      %v266 = vld [vmem:[%s263 + $0x8] sm:$0xf]
      %v267 = vld [vmem:[%s263 + $0xc] sm:$0xf]
      %v268 = vld [vmem:[%s263 + $0x10] sm:$0xf]
      %v269 = vld [vmem:[%s263 + $0x14] sm:$0xf]
      %v270 = vld [vmem:[%s263 + $0x18] sm:$0xf]
      %v271 = vld [vmem:[%s263 + $0x1c] sm:$0xf]
      %v272 = vld [vmem:[%s263 + $0x20] sm:$0xf]
      %v273 = vld [vmem:[%s263 + $0x24] sm:$0xf]
      %v274 = vld [vmem:[%s263 + $0x28] sm:$0xf]
      %v275 = vld [vmem:[%s263 + $0x2c] sm:$0xf]
      %v276 = vld [vmem:[%s263 + $0x30] sm:$0xf]
      %v277 = vld [vmem:[%s263 + $0x34] sm:$0xf]
      %v278 = vld [vmem:[%s263 + $0x38] sm:$0xf]
      %v279 = vld [vmem:[%s263 + $0x3c] sm:$0xf]
      %v284 = vunpack.c.l.b16 %v243
      %v285 = vunpack.c.l.b16 %v244
      %v286 = vunpack.c.l.b16 %v245
      %v287 = vunpack.c.l.b16 %v246
      %v288 = vpack.c.b16 %v285, %v284
      %v289 = vpack.c.b16 %v287, %v286
      %vm290 = vsmask.f32 7424
      %v292 = vshrl.u32 %v288, 16
      %v294 = vshll.u32 %v288, 16
      %v296 = vrot.slane %v294, 1
      %v297 = vor.u32 %v292, %v296
      %v299 = vshll.u32 %v289, 16
      %v301 = vrot.slane %v299, 1
      %v302 = vsel %vm290, %v297, %v301
      %v303 = vshrl.u32 %v289, 16
      %v305 = vor.u32 %v303, %v301
      %v324 = vunpack.c.l.b16 %v264
      %v325 = vunpack.c.l.b16 %v265
      %v326 = vunpack.c.l.b16 %v266
      %v327 = vunpack.c.l.b16 %v267
      %v328 = vunpack.c.l.b16 %v268
      %v329 = vunpack.c.l.b16 %v269
      %v330 = vunpack.c.l.b16 %v270
      %v331 = vunpack.c.l.b16 %v271
      %v332 = vunpack.c.l.b16 %v272
      %v333 = vunpack.c.l.b16 %v273
      %v334 = vunpack.c.l.b16 %v274
      %v335 = vunpack.c.l.b16 %v275
      %v336 = vunpack.c.l.b16 %v276
      %v337 = vunpack.c.l.b16 %v277
      %v338 = vunpack.c.l.b16 %v278
      %v339 = vunpack.c.l.b16 %v279
      %v340 = vpack.c.b16 %v325, %v324
      %v341 = vpack.c.b16 %v327, %v326
      %v342 = vpack.c.b16 %v329, %v328
      %v343 = vpack.c.b16 %v331, %v330
      %v344 = vpack.c.b16 %v333, %v332
      %v345 = vpack.c.b16 %v335, %v334
      %v346 = vpack.c.b16 %v337, %v336
      %v347 = vpack.c.b16 %v339, %v338
      %356 = vmatprep.subr.bf16.mxu0 0
      %357 = vmatpush1.bf16.msra.mxu0 %v340
      %358 = vmatprep.subr.bf16.mxu0 0
      %359 = vmatpush1.bf16.msra.mxu0 %v341
      %360 = vmatprep.subr.bf16.mxu0 0
      %361 = vmatpush1.bf16.msra.mxu0 %v342
      %362 = vmatprep.subr.bf16.mxu0 0
      %363 = vmatpush1.bf16.msra.mxu0 %v343
      %364 = vmatprep.subr.bf16.mxu0 0
      %365 = vmatpush1.bf16.msra.mxu0 %v344
      %366 = vmatprep.subr.bf16.mxu0 0
      %367 = vmatpush1.bf16.msra.mxu0 %v345
      %368 = vmatprep.subr.bf16.mxu0 0
      %369 = vmatpush1.bf16.msra.mxu0 %v346
      %370 = vmatprep.subr.bf16.mxu0 0
      %371 = vmatpush1.bf16.msra.mxu0 %v347
      %372 = vmatprep.subr.bf16.mxu0 0
      %373 = vmatpush1.bf16.msra.mxu0 0
      %374 = vmatprep.subr.bf16.mxu0 0
      %375 = vmatpush1.bf16.msra.mxu0 0
      %376 = vmatprep.subr.bf16.mxu0 0
      %377 = vmatpush1.bf16.msra.mxu0 0
      %378 = vmatprep.subr.bf16.mxu0 0
      %379 = vmatpush1.bf16.msra.mxu0 0
      %380 = vmatprep.subr.bf16.mxu0 0
      %381 = vmatpush1.bf16.msra.mxu0 0
      %382 = vmatprep.subr.bf16.mxu0 0
      %383 = vmatpush1.bf16.msra.mxu0 0
      %384 = vmatprep.subr.bf16.mxu0 0
      %385 = vmatpush1.bf16.msra.mxu0 0
      %386 = vmatprep.subr.bf16.mxu0 0
      %387 = vmatpush1.bf16.msra.mxu0 0
      %388 = vmatprep.mubr.bf16.mxu0 0
      %389 = vmatmul.mubr.bf16.gmra.mrb[0].mxu0 %v302
      %v390 = vpop.f32.mrb[0].mxu0
      %v391 = vadd.f32 0.0, %v390
      %v392 = vpop.f32.mrb[0].mxu0
      %v393 = vpop.f32.mrb[0].mxu0
      %v394 = vadd.f32 0.0, %v393
      %v395 = vpop.f32.mrb[0].mxu0
      %396 = vmatprep.mubr.bf16.mxu0 0
      %397 = vmatmul.mubr.bf16.gmra.mrb[0].mxu0 %v305
      %v398 = vpop.f32.mrb[0].mxu0
      %v399 = vadd.f32 0.0, %v398
      %v400 = vpop.f32.mrb[0].mxu0
      %v401 = vpop.f32.mrb[0].mxu0
      %v402 = vpop.f32.mrb[0].mxu0
      %403 = vdwg.mxu0
      %v404 = vpack.c.b16 %v286, %v286
      %v423 = vunpack.c.l.b16 %v247
      %v424 = vunpack.c.l.b16 %v248
      %v425 = vunpack.c.l.b16 %v249
      %v426 = vunpack.c.l.b16 %v250
      %v427 = vunpack.c.l.b16 %v251
      %v428 = vunpack.c.l.b16 %v252
      %v429 = vunpack.c.l.b16 %v253
      %v430 = vunpack.c.l.b16 %v254
      %v431 = vunpack.c.l.b16 %v255
      %v432 = vunpack.c.l.b16 %v256
      %v433 = vunpack.c.l.b16 %v257
      %v434 = vunpack.c.l.b16 %v258
      %v435 = vunpack.c.l.b16 %v259
      %v436 = vunpack.c.l.b16 %v260
      %v437 = vunpack.c.l.b16 %v261
      %v438 = vunpack.c.l.b16 %v262
      %v439 = vpack.c.b16 %v424, %v423
      %v440 = vpack.c.b16 %v426, %v425
      %v441 = vpack.c.b16 %v428, %v427
      %v442 = vpack.c.b16 %v430, %v429
      %v443 = vpack.c.b16 %v432, %v431
      %v444 = vpack.c.b16 %v434, %v433
      %v445 = vpack.c.b16 %v436, %v435
      %v446 = vpack.c.b16 %v438, %v437
      %455 = vmatprep.subr.bf16.mxu0 0
      %456 = vmatpush1.bf16.msra.mxu0 %v439
      %457 = vmatprep.subr.bf16.mxu0 0
      %458 = vmatpush1.bf16.msra.mxu0 %v440
      %459 = vmatprep.subr.bf16.mxu0 0
      %460 = vmatpush1.bf16.msra.mxu0 %v441
      %461 = vmatprep.subr.bf16.mxu0 0
      %462 = vmatpush1.bf16.msra.mxu0 %v442
      %463 = vmatprep.subr.bf16.mxu0 0
      %464 = vmatpush1.bf16.msra.mxu0 %v443
      %465 = vmatprep.subr.bf16.mxu0 0
      %466 = vmatpush1.bf16.msra.mxu0 %v444
      %467 = vmatprep.subr.bf16.mxu0 0
      %468 = vmatpush1.bf16.msra.mxu0 %v445
      %469 = vmatprep.subr.bf16.mxu0 0
      %470 = vmatpush1.bf16.msra.mxu0 %v446
      %471 = vmatprep.subr.bf16.mxu0 0
      %472 = vmatpush1.bf16.msra.mxu0 0
      %473 = vmatprep.subr.bf16.mxu0 0
      %474 = vmatpush1.bf16.msra.mxu0 0
      %475 = vmatprep.subr.bf16.mxu0 0
      %476 = vmatpush1.bf16.msra.mxu0 0
      %477 = vmatprep.subr.bf16.mxu0 0
      %478 = vmatpush1.bf16.msra.mxu0 0
      %479 = vmatprep.subr.bf16.mxu0 0
      %480 = vmatpush1.bf16.msra.mxu0 0
      %481 = vmatprep.subr.bf16.mxu0 0
      %482 = vmatpush1.bf16.msra.mxu0 0
      %483 = vmatprep.subr.bf16.mxu0 0
      %484 = vmatpush1.bf16.msra.mxu0 0
      %485 = vmatprep.subr.bf16.mxu0 0
      %486 = vmatpush1.bf16.msra.mxu0 0
      %487 = vmatprep.mubr.bf16.mxu0 0
      %488 = vmatmul.mubr.bf16.gmra.mrb[0].mxu0 %v288
      %v489 = vpop.f32.mrb[0].mxu0
      %v490 = vadd.f32 %v391, %v489
      %v491 = vpop.f32.mrb[0].mxu0
      %v492 = vpop.f32.mrb[0].mxu0
      %v493 = vadd.f32 %v394, %v492
      %v494 = vpop.f32.mrb[0].mxu0
      %495 = vmatprep.mubr.bf16.mxu0 0
      %496 = vmatmul.mubr.bf16.gmra.mrb[0].mxu0 %v404
      %v497 = vpop.f32.mrb[0].mxu0
      %v498 = vadd.f32 %v399, %v497
      %v499 = vpop.f32.mrb[0].mxu0
      %v500 = vpop.f32.mrb[0].mxu0
      %v501 = vpop.f32.mrb[0].mxu0
      %502 = vdwg.mxu0
      %s503 = scalar_lea.vmem %s1, 128
      %v504 = vld [vmem:[%s503] sm:$0xf]
      %v505 = vld [vmem:[%s503 + $0x4] sm:$0xf]
      %v506 = vld [vmem:[%s503 + $0x8] sm:$0xf]
      %v507 = vld [vmem:[%s503 + $0xc] sm:$0xf]
      %v508 = vld [vmem:[%s503 + $0x10] sm:$0xf]
      %v509 = vld [vmem:[%s503 + $0x14] sm:$0xf]
      %v510 = vld [vmem:[%s503 + $0x18] sm:$0xf]
      %v511 = vld [vmem:[%s503 + $0x1c] sm:$0xf]
      %v512 = vld [vmem:[%s503 + $0x20] sm:$0xf]
      %v513 = vld [vmem:[%s503 + $0x24] sm:$0xf]
      %v514 = vld [vmem:[%s503 + $0x28] sm:$0xf]
      %v515 = vld [vmem:[%s503 + $0x2c] sm:$0xf]
      %v516 = vld [vmem:[%s503 + $0x30] sm:$0xf]
      %v517 = vld [vmem:[%s503 + $0x34] sm:$0xf]
      %v518 = vld [vmem:[%s503 + $0x38] sm:$0xf]
      %v519 = vld [vmem:[%s503 + $0x3c] sm:$0xf]
      %vm520 = vsmask.f32 5376
      %v521 = vrot.slane %v292, 2
      %v522 = vrot.slane %v294, 3
      %v523 = vor.u32 %v521, %v522
      %v524 = vrot.slane %v303, 2
      %v525 = vrot.slane %v299, 3
      %v526 = vor.u32 %v524, %v525
      %v527 = vsel %vm520, %v523, %v526
      %v546 = vunpack.c.l.b16 %v504
      %v547 = vunpack.c.l.b16 %v505
      %v548 = vunpack.c.l.b16 %v506
      %v549 = vunpack.c.l.b16 %v507
      %v550 = vunpack.c.l.b16 %v508
      %v551 = vunpack.c.l.b16 %v509
      %v552 = vunpack.c.l.b16 %v510
      %v553 = vunpack.c.l.b16 %v511
      %v554 = vunpack.c.l.b16 %v512
      %v555 = vunpack.c.l.b16 %v513
      %v556 = vunpack.c.l.b16 %v514
      %v557 = vunpack.c.l.b16 %v515
      %v558 = vunpack.c.l.b16 %v516
      %v559 = vunpack.c.l.b16 %v517
      %v560 = vunpack.c.l.b16 %v518
      %v561 = vunpack.c.l.b16 %v519
      %v562 = vpack.c.b16 %v547, %v546
      %v563 = vpack.c.b16 %v549, %v548
      %v564 = vpack.c.b16 %v551, %v550
      %v565 = vpack.c.b16 %v553, %v552
      %v566 = vpack.c.b16 %v555, %v554
      %v567 = vpack.c.b16 %v557, %v556
      %v568 = vpack.c.b16 %v559, %v558
      %v569 = vpack.c.b16 %v561, %v560
      %578 = vmatprep.subr.bf16.mxu0 0
      %579 = vmatpush1.bf16.msra.mxu0 %v562
      %580 = vmatprep.subr.bf16.mxu0 0
      %581 = vmatpush1.bf16.msra.mxu0 %v563
      %582 = vmatprep.subr.bf16.mxu0 0
      %583 = vmatpush1.bf16.msra.mxu0 %v564
      %584 = vmatprep.subr.bf16.mxu0 0
      %585 = vmatpush1.bf16.msra.mxu0 %v565
      %586 = vmatprep.subr.bf16.mxu0 0
      %587 = vmatpush1.bf16.msra.mxu0 %v566
      %588 = vmatprep.subr.bf16.mxu0 0
      %589 = vmatpush1.bf16.msra.mxu0 %v567
      %590 = vmatprep.subr.bf16.mxu0 0
      %591 = vmatpush1.bf16.msra.mxu0 %v568
      %592 = vmatprep.subr.bf16.mxu0 0
      %593 = vmatpush1.bf16.msra.mxu0 %v569
      %594 = vmatprep.subr.bf16.mxu0 0
      %595 = vmatpush1.bf16.msra.mxu0 0
      %596 = vmatprep.subr.bf16.mxu0 0
      %597 = vmatpush1.bf16.msra.mxu0 0
      %598 = vmatprep.subr.bf16.mxu0 0
      %599 = vmatpush1.bf16.msra.mxu0 0
      %600 = vmatprep.subr.bf16.mxu0 0
      %601 = vmatpush1.bf16.msra.mxu0 0
      %602 = vmatprep.subr.bf16.mxu0 0
      %603 = vmatpush1.bf16.msra.mxu0 0
      %604 = vmatprep.subr.bf16.mxu0 0
      %605 = vmatpush1.bf16.msra.mxu0 0
      %606 = vmatprep.subr.bf16.mxu0 0
      %607 = vmatpush1.bf16.msra.mxu0 0
      %608 = vmatprep.subr.bf16.mxu0 0
      %609 = vmatpush1.bf16.msra.mxu0 0
      %610 = vmatprep.mubr.bf16.mxu0 0
      %611 = vmatmul.mubr.bf16.gmra.mrb[0].mxu0 %v527
      %v612 = vpop.f32.mrb[0].mxu0
      %v613 = vadd.f32 0.0, %v612
      %v614 = vpop.f32.mrb[0].mxu0
      %v615 = vpop.f32.mrb[0].mxu0
      %v616 = vadd.f32 0.0, %v615
      %v617 = vpop.f32.mrb[0].mxu0
      %618 = vmatprep.mubr.bf16.mxu0 0
      %619 = vmatmul.mubr.bf16.gmra.mrb[0].mxu0 %v526
      %v620 = vpop.f32.mrb[0].mxu0
      %v621 = vadd.f32 0.0, %v620
      %v622 = vpop.f32.mrb[0].mxu0
      %v623 = vpop.f32.mrb[0].mxu0
      %v624 = vpop.f32.mrb[0].mxu0
      %625 = vdwg.mxu0
      %v626 = vadd.f32 %v490, %v613
      %v627 = vadd.f32 %v493, %v616
      %v628 = vadd.f32 %v498, %v621
      %s629 = scalar_lea.vmem %s1, 192
      %v630 = vld [vmem:[%s629] sm:$0xf]
      %v631 = vld [vmem:[%s629 + $0x4] sm:$0xf]
      %v632 = vld [vmem:[%s629 + $0x8] sm:$0xf]
      %v633 = vld [vmem:[%s629 + $0xc] sm:$0xf]
      %v634 = vld [vmem:[%s629 + $0x10] sm:$0xf]
      %v635 = vld [vmem:[%s629 + $0x14] sm:$0xf]
      %v636 = vld [vmem:[%s629 + $0x18] sm:$0xf]
      %v637 = vld [vmem:[%s629 + $0x1c] sm:$0xf]
      %v638 = vld [vmem:[%s629 + $0x20] sm:$0xf]
      %v639 = vld [vmem:[%s629 + $0x24] sm:$0xf]
      %v640 = vld [vmem:[%s629 + $0x28] sm:$0xf]
      %v641 = vld [vmem:[%s629 + $0x2c] sm:$0xf]
      %v642 = vld [vmem:[%s629 + $0x30] sm:$0xf]
      %v643 = vld [vmem:[%s629 + $0x34] sm:$0xf]
      %v644 = vld [vmem:[%s629 + $0x38] sm:$0xf]
      %v645 = vld [vmem:[%s629 + $0x3c] sm:$0xf]
      %vm646 = vcmask 1044480
      %v647 = vrot.slane %v288, 3
      %v648 = vrot.slane %v289, 3
      %v649 = vsel %vm646, %v647, %v648
      %v668 = vunpack.c.l.b16 %v630
      %v669 = vunpack.c.l.b16 %v631
      %v670 = vunpack.c.l.b16 %v632
      %v671 = vunpack.c.l.b16 %v633
      %v672 = vunpack.c.l.b16 %v634
      %v673 = vunpack.c.l.b16 %v635
      %v674 = vunpack.c.l.b16 %v636
      %v675 = vunpack.c.l.b16 %v637
      %v676 = vunpack.c.l.b16 %v638
      %v677 = vunpack.c.l.b16 %v639
      %v678 = vunpack.c.l.b16 %v640
      %v679 = vunpack.c.l.b16 %v641
      %v680 = vunpack.c.l.b16 %v642
      %v681 = vunpack.c.l.b16 %v643
      %v682 = vunpack.c.l.b16 %v644
      %v683 = vunpack.c.l.b16 %v645
      %v684 = vpack.c.b16 %v669, %v668
      %v685 = vpack.c.b16 %v671, %v670
      %v686 = vpack.c.b16 %v673, %v672
      %v687 = vpack.c.b16 %v675, %v674
      %v688 = vpack.c.b16 %v677, %v676
      %v689 = vpack.c.b16 %v679, %v678
      %v690 = vpack.c.b16 %v681, %v680
      %v691 = vpack.c.b16 %v683, %v682
      %700 = vmatprep.subr.bf16.mxu0 0
      %701 = vmatpush1.bf16.msra.mxu0 %v684
      %702 = vmatprep.subr.bf16.mxu0 0
      %703 = vmatpush1.bf16.msra.mxu0 %v685
      %704 = vmatprep.subr.bf16.mxu0 0
      %705 = vmatpush1.bf16.msra.mxu0 %v686
      %706 = vmatprep.subr.bf16.mxu0 0
      %707 = vmatpush1.bf16.msra.mxu0 %v687
      %708 = vmatprep.subr.bf16.mxu0 0
      %709 = vmatpush1.bf16.msra.mxu0 %v688
      %710 = vmatprep.subr.bf16.mxu0 0
      %711 = vmatpush1.bf16.msra.mxu0 %v689
      %712 = vmatprep.subr.bf16.mxu0 0
      %713 = vmatpush1.bf16.msra.mxu0 %v690
      %714 = vmatprep.subr.bf16.mxu0 0
      %715 = vmatpush1.bf16.msra.mxu0 %v691
      %716 = vmatprep.subr.bf16.mxu0 0
      %717 = vmatpush1.bf16.msra.mxu0 0
      %718 = vmatprep.subr.bf16.mxu0 0
      %719 = vmatpush1.bf16.msra.mxu0 0
      %720 = vmatprep.subr.bf16.mxu0 0
      %721 = vmatpush1.bf16.msra.mxu0 0
      %722 = vmatprep.subr.bf16.mxu0 0
      %723 = vmatpush1.bf16.msra.mxu0 0
      %724 = vmatprep.subr.bf16.mxu0 0
      %725 = vmatpush1.bf16.msra.mxu0 0
      %726 = vmatprep.subr.bf16.mxu0 0
      %727 = vmatpush1.bf16.msra.mxu0 0
      %728 = vmatprep.subr.bf16.mxu0 0
      %729 = vmatpush1.bf16.msra.mxu0 0
      %730 = vmatprep.subr.bf16.mxu0 0
      %731 = vmatpush1.bf16.msra.mxu0 0
      %732 = vmatprep.mubr.bf16.mxu0 0
      %733 = vmatmul.mubr.bf16.gmra.mrb[0].mxu0 %v649
      %v734 = vpop.f32.mrb[0].mxu0
      %v735 = vadd.f32 0.0, %v734
      %v736 = vpop.f32.mrb[0].mxu0
      %v737 = vpop.f32.mrb[0].mxu0
      %v738 = vadd.f32 0.0, %v737
      %v739 = vpop.f32.mrb[0].mxu0
      %740 = vmatprep.mubr.bf16.mxu0 0
      %741 = vmatmul.mubr.bf16.gmra.mrb[0].mxu0 %v648
      %v742 = vpop.f32.mrb[0].mxu0
      %v743 = vadd.f32 0.0, %v742
      %v744 = vpop.f32.mrb[0].mxu0
      %v745 = vpop.f32.mrb[0].mxu0
      %v746 = vpop.f32.mrb[0].mxu0
      %747 = vdwg.mxu0
      %v748 = vadd.f32 %v626, %v735
      %v749 = vadd.f32 %v627, %v738
      %v750 = vadd.f32 %v628, %v743
      %751 = vst [vmem:[%s235] sm:$0xff] %v748
      %752 = vst [vmem:[%s235 + $0x8] sm:$0xff] %v749
      %753 = vst [vmem:[%s235 + $0x10] sm:$0xff] %v750
      %v754 = vld [vmem:[%s2] sm:$0xff]
      %v755 = vld [vmem:[%s2 + $0x8] sm:$0xff]
      %v756 = vld [vmem:[%s2 + $0x10] sm:$0xff]
      %758 = vset.pattern.permute.xlu0 0
      %759 = vperm.xlu0 %758, %v754
      %v760 = vpop.permute.xlu0 %759
      %763 = vset.pattern.permute.xlu0 0
      %764 = vperm.xlu0 %763, %v755
      %v765 = vpop.permute.xlu0 %764
      %768 = vset.pattern.permute.xlu0 0
      %769 = vperm.xlu0 %768, %v756
      %v770 = vpop.permute.xlu0 %769
      %v772 = vmul.f32 %v748, %v760
      %v773 = vmul.f32 %v749, %v765
      %v774 = vmul.f32 %v750, %v770
      %v775 = vadd.f32 %v772, %v773
      %v776 = vadd.f32 %v775, %v774
      %v777 = vrot.slane %v776, 4
      %v778 = vadd.f32 %v776, %v777
      %v779 = vrot.slane %v778, 2
      %v780 = vadd.f32 %v778, %v779
      %v781 = vrot.slane %v780, 1
      %v782 = vadd.f32 %v780, %v781
      %783 = vst [vmem:[%s238] sm:$0x1] %v782
      %v784 = vmul.f32 %v772, %v748
      %v785 = vmul.f32 %v773, %v749
      %v786 = vmul.f32 %v774, %v750
      %v787 = vadd.f32 %v784, %v785
      %v788 = vadd.f32 %v787, %v786
      %v789 = vrot.slane %v788, 4
      %v790 = vadd.f32 %v788, %v789
      %v791 = vrot.slane %v790, 2
      %v792 = vadd.f32 %v790, %v791
      %v793 = vrot.slane %v792, 1
      %v794 = vadd.f32 %v792, %v793
      %795 = vst [vmem:[%s241] sm:$0x1] %v794
      %p796 = scmp.lt.s32.totalorder %s17, 1
      %s797 = scalar_select %p796, %s17, 1
      %s798 = smul.addr %s797, 3
      %s799 = smul.addr %s798, 8
      %s800 = scalar_lea.vmem %s3, %s799
      %p801 = scmp.lt.s32.totalorder %s17, 1
      %s802 = scalar_select %p801, %s17, 1
      %s803 = scalar_lea.vmem %s4, %s802
      %p804 = scmp.lt.s32.totalorder %s17, 1
      %s805 = scalar_select %p804, %s17, 1
      %s806 = scalar_lea.vmem %s5, %s805
      // Predicated region
      $region33: #{linnet_d_forward.13} parent=31 // pred_check
        %p807 = pneg %p103
      $region34: #{linnet_d_forward.13} parent=31 // pred_check_branch
        %809 = sbr.rel (%p807) target = $region36
      $region35: #{linnet_d_forward.13} parent=31 // pred_region
        _
      $region36: #{linnet_d_forward.13} parent=31 // pred_fallthru
        _
      // Predicated region
      $region37: #{linnet_d_forward.13} parent=31 // pred_check
        %p810 = pneg %p129
      $region38: #{linnet_d_forward.13} parent=31 // pred_check_branch
        %812 = sbr.rel (%p810) target = $region40
      $region39: #{linnet_d_forward.13} parent=31 // pred_region
        _
      $region40: #{linnet_d_forward.13} parent=31 // pred_fallthru
        _
      // Predicated region
      $region41: #{linnet_d_forward.13} parent=31 // pred_check
        %p813 = pneg %p155
      $region42: #{linnet_d_forward.13} parent=31 // pred_check_branch
        %815 = sbr.rel (%p813) target = $region44
      $region43: #{linnet_d_forward.13} parent=31 // pred_region
        _
      $region44: #{linnet_d_forward.13} parent=31 // pred_fallthru
        _
    $region32: #{linnet_d_forward.13} parent=5 // pred_fallthru
      _
    %p816 = scmp.le.s32.totalorder 2, %s12
    // Predicated region
    $region45: #{linnet_d_forward.13} parent=5 // pred_check
      %p817 = pneg %p816
    $region46: #{linnet_d_forward.13} parent=5 // pred_check_branch
      %819 = sbr.rel (%p817) target = $region48
    $region47: #{linnet_d_forward.13} parent=5 // pred_region
      %s820 = ssub.s32 %s12, 2
      // Predicated region
      $region49: #{linnet_d_forward.13} parent=47 // pred_check
        %p821 = pneg %p109
      $region50: #{linnet_d_forward.13} parent=47 // pred_check_branch
        %823 = sbr.rel (%p821) target = $region52
      $region51: #{linnet_d_forward.13} parent=47 // pred_region
        %p824 = scmp.lt.s32.totalorder %s18, 1
        %s825 = scalar_select %p824, %s18, 1
        %s826 = smul.addr %s825, 3
        %s827 = smul.addr %s826, 8
        %s828 = scalar_lea.vmem %s3, %s827
      $region52: #{linnet_d_forward.13} parent=47 // pred_fallthru
        _
      // Predicated region
      $region53: #{linnet_d_forward.13} parent=47 // pred_check
        %p829 = pneg %p135
      $region54: #{linnet_d_forward.13} parent=47 // pred_check_branch
        %831 = sbr.rel (%p829) target = $region56
      $region55: #{linnet_d_forward.13} parent=47 // pred_region
        %p832 = scmp.lt.s32.totalorder %s18, 1
        %s833 = scalar_select %p832, %s18, 1
        %s834 = scalar_lea.vmem %s4, %s833
      $region56: #{linnet_d_forward.13} parent=47 // pred_fallthru
        _
      // Predicated region
      $region57: #{linnet_d_forward.13} parent=47 // pred_check
        %p835 = pneg %p161
      $region58: #{linnet_d_forward.13} parent=47 // pred_check_branch
        %837 = sbr.rel (%p835) target = $region60
      $region59: #{linnet_d_forward.13} parent=47 // pred_region
        %p838 = scmp.lt.s32.totalorder %s18, 1
        %s839 = scalar_select %p838, %s18, 1
        %s840 = scalar_lea.vmem %s5, %s839
      $region60: #{linnet_d_forward.13} parent=47 // pred_fallthru
        _
    $region48: #{linnet_d_forward.13} parent=5 // pred_fallthru
      _
  $region6: #{linnet_d_forward.13} parent=0 // loop_footer
    %s16 = sadd.s32 1, %s12
  $region7: #{linnet_d_forward.13} parent=0 // loop_footer_branch
    %11 = sbr.rel target = $region3
  $region8: #{linnet_d_forward.13} parent=0 // loop_exit
    _

// kernel: linnet_d_forward.16
$region0: #{linnet_d_forward.16}
  #allocation0 [shape = 'u32[]', space=smem, size = 0x4, offset = 0x4, fixed_abs, tag = 'smem constant byte address 0x4 - core index']
  #allocation1 [shape = 'u32[144,128]{1,0:T(1,128)}', space=vmem, size = 0x12000, scoped, tag = 'internal scratch']
  %s0 = inlined_call_operand.vmem [shape: f32[2,8,128], index: 0, kind: input, shape index: {}]
  %s1 = inlined_call_operand.vmem [shape: f32[1,128], index: 1, kind: input, shape index: {}]
  %s2 = inlined_call_operand.vmem [shape: f32[1,128], index: 2, kind: input, shape index: {}]
  %s3 = inlined_call_operand.vmem [shape: f32[8,1], index: 3, kind: input, shape index: {}]
  %s4 = inlined_call_operand.hbm [shape: bf16[2,8,128], index: 4, kind: output, shape index: {0}]
  %s5 = inlined_call_operand.vmem [shape: f32[2,1,128], index: 5, kind: output, shape index: {1}]
  %6 = xla_tuple %s4, %s5
  %s7 = sld [smem:[#allocation0]]
  $region57: #{linnet_d_forward.16} parent=0
    _
  %s9 = ssub.s32 1, %s7
  %s10 = scalar_select 0, %s9, %s7
  $region1: #{linnet_d_forward.16} parent=0
    #allocation2 [shape = 'u8[4096]{0}', space=vmem, size = 0x1000, scoped, tag = 'output window, operand 0']
    #allocation3 [shape = 's32[2]{0}', space=sflag, size = 0x8, scoped, tag = 'scoped memory for linnet_d_forward.16']
    %11 = vsyncpa [#allocation3], 0
    %s12 = scalar_lea.sflag [#allocation3], 1
    %13 = vsyncpa %s12, 0
    loop: start=0, step=1, limit=4
    $region2: #{linnet_d_forward.16} parent=1 // loop_pre_header
      _
    $region3: #{linnet_d_forward.16} parent=1 // loop_header
      %s15 = sphi 0, %s19
      %p16 = scmp.ge.s32.totalorder %s15, 4
      %s25 = sphi 0, %s27
      %s28 = sphi 0, %s25
      %s29 = sphi 0, %s28
      %s45 = sphi 0, %s29
      %s49 = sphi 0, %s49
      %s51 = sphi 0, %s49
      %s52 = sphi 0, %s51
      %s66 = sphi 0, %s52
      %s70 = sphi 0, %s70
      %s72 = sphi 0, %s70
      %s73 = sphi 0, %s72
      %s87 = sphi 0, %s73
      %s91 = sphi 0, %s91
      %s93 = sphi 0, %s91
      %s94 = sphi 0, %s93
      %s108 = sphi 0, %s94
      %s114 = sphi 0, %s116
      %s117 = sphi 0, %s114
      %s118 = sphi 0, %s117
      %s134 = sphi 0, %s118
      %s140 = sphi 0, %s142
      %s143 = sphi 0, %s140
      %s144 = sphi 0, %s143
      %s160 = sphi 0, %s144
    $region4: #{linnet_d_forward.16} parent=1 // loop_header_branch
      %18 = sbr.rel (%p16) target = $region8
    $region5: #{linnet_d_forward.16} parent=1 // loop_body
      %s20 = ssub.s32 %s15, 1
      %s21 = ssub.s32 %s15, 2
      %s22 = sadd.s32 %s15, 1
      %s23 = ssub.s32 %s15, %s22
      %p24 = scmp.eq.s32.totalorder %s23, 0
      %s26 = sadd.s32 %s25, 1
      %s27 = scalar_select %p24, %s25, %s26
      %p30 = pneg %p24
      %p31 = scmp.eq.s32.totalorder %s15, 1
      %p32 = por %p30, %p31
      %p33 = scmp.ne.s32.totalorder %s25, %s28
      %p34 = scmp.eq.s32.totalorder %s15, 0
      %p35 = por %p33, %p34
      %p36 = scmp.ne.s32.totalorder %s25, %s28
      %p37 = scmp.eq.s32.totalorder %s20, 1
      %p38 = por %p36, %p37
      %p39 = scmp.ne.s32.totalorder %s28, %s29
      %p40 = scmp.eq.s32.totalorder %s20, 0
      %p41 = por %p39, %p40
      %p42 = scmp.ne.s32.totalorder %s28, %s29
      %p43 = scmp.eq.s32.totalorder %s21, 1
      %p44 = por %p42, %p43
      %p46 = scmp.ne.s32.totalorder %s29, %s45
      %p47 = scmp.eq.s32.totalorder %s21, 0
      %p48 = por %p46, %p47
      %s50 = sadd.s32 %s49, 1
      %p53 = scmp.eq.s32.totalorder %s15, 1
      %p54 = scmp.ne.s32.totalorder %s49, %s51
      %p55 = scmp.eq.s32.totalorder %s15, 0
      %p56 = por %p54, %p55
      %p57 = scmp.ne.s32.totalorder %s49, %s51
      %p58 = scmp.eq.s32.totalorder %s20, 1
      %p59 = por %p57, %p58
      %p60 = scmp.ne.s32.totalorder %s51, %s52
      %p61 = scmp.eq.s32.totalorder %s20, 0
      %p62 = por %p60, %p61
      %p63 = scmp.ne.s32.totalorder %s51, %s52
      %p64 = scmp.eq.s32.totalorder %s21, 1
      %p65 = por %p63, %p64
      %p67 = scmp.ne.s32.totalorder %s52, %s66
      %p68 = scmp.eq.s32.totalorder %s21, 0
      %p69 = por %p67, %p68
      %s71 = sadd.s32 %s70, 1
      %p74 = scmp.eq.s32.totalorder %s15, 1
      %p75 = scmp.ne.s32.totalorder %s70, %s72
      %p76 = scmp.eq.s32.totalorder %s15, 0
      %p77 = por %p75, %p76
      %p78 = scmp.ne.s32.totalorder %s70, %s72
      %p79 = scmp.eq.s32.totalorder %s20, 1
      %p80 = por %p78, %p79
      %p81 = scmp.ne.s32.totalorder %s72, %s73
      %p82 = scmp.eq.s32.totalorder %s20, 0
      %p83 = por %p81, %p82
      %p84 = scmp.ne.s32.totalorder %s72, %s73
      %p85 = scmp.eq.s32.totalorder %s21, 1
      %p86 = por %p84, %p85
      %p88 = scmp.ne.s32.totalorder %s73, %s87
      %p89 = scmp.eq.s32.totalorder %s21, 0
      %p90 = por %p88, %p89
      %s92 = sadd.s32 %s91, 1
      %p95 = scmp.eq.s32.totalorder %s15, 1
      %p96 = scmp.ne.s32.totalorder %s91, %s93
      %p97 = scmp.eq.s32.totalorder %s15, 0
      %p98 = por %p96, %p97
      %p99 = scmp.ne.s32.totalorder %s91, %s93
      %p100 = scmp.eq.s32.totalorder %s20, 1
      %p101 = por %p99, %p100
      %p102 = scmp.ne.s32.totalorder %s93, %s94
      %p103 = scmp.eq.s32.totalorder %s20, 0
      %p104 = por %p102, %p103
      %p105 = scmp.ne.s32.totalorder %s93, %s94
      %p106 = scmp.eq.s32.totalorder %s21, 1
      %p107 = por %p105, %p106
      %p109 = scmp.ne.s32.totalorder %s94, %s108
      %p110 = scmp.eq.s32.totalorder %s21, 0
      %p111 = por %p109, %p110
      %s112 = ssub.s32 %s15, %s22
      %p113 = scmp.eq.s32.totalorder %s112, 0
      %s115 = sadd.s32 %s114, 1
      %s116 = scalar_select %p113, %s114, %s115
      %p119 = pneg %p113
      %p120 = scmp.eq.s32.totalorder %s15, 1
      %p121 = por %p119, %p120
      %p122 = scmp.ne.s32.totalorder %s114, %s117
      %p123 = scmp.eq.s32.totalorder %s15, 0
      %p124 = por %p122, %p123
      %p125 = scmp.ne.s32.totalorder %s114, %s117
      %p126 = scmp.eq.s32.totalorder %s20, 1
      %p127 = por %p125, %p126
      %p128 = scmp.ne.s32.totalorder %s117, %s118
      %p129 = scmp.eq.s32.totalorder %s20, 0
      %p130 = por %p128, %p129
      %p131 = scmp.ne.s32.totalorder %s117, %s118
      %p132 = scmp.eq.s32.totalorder %s21, 1
      %p133 = por %p131, %p132
      %p135 = scmp.ne.s32.totalorder %s118, %s134
      %p136 = scmp.eq.s32.totalorder %s21, 0
      %p137 = por %p135, %p136
      %s138 = ssub.s32 %s15, %s22
      %p139 = scmp.eq.s32.totalorder %s138, 0
      %s141 = sadd.s32 %s140, 1
      %s142 = scalar_select %p139, %s140, %s141
      %p145 = pneg %p139
      %p146 = scmp.eq.s32.totalorder %s15, 1
      %p147 = por %p145, %p146
      %p148 = scmp.ne.s32.totalorder %s140, %s143
      %p149 = scmp.eq.s32.totalorder %s15, 0
      %p150 = por %p148, %p149
      %p151 = scmp.ne.s32.totalorder %s140, %s143
      %p152 = scmp.eq.s32.totalorder %s20, 1
      %p153 = por %p151, %p152
      %p154 = scmp.ne.s32.totalorder %s143, %s144
      %p155 = scmp.eq.s32.totalorder %s20, 0
      %p156 = por %p154, %p155
      %p157 = scmp.ne.s32.totalorder %s143, %s144
      %p158 = scmp.eq.s32.totalorder %s21, 1
      %p159 = por %p157, %p158
      %p161 = scmp.ne.s32.totalorder %s144, %s160
      %p162 = scmp.eq.s32.totalorder %s21, 0
      %p163 = por %p161, %p162
      %p164 = scmp.le.s32.totalorder 1, %s15
      %p165 = scmp.lt.s32.totalorder %s15, 3
      %p166 = pnand %p164, %p165
      %p167 = pneg %p166
      // Predicated region
      $region9: #{linnet_d_forward.16} parent=5 // pred_check
        _
      $region10: #{linnet_d_forward.16} parent=5 // pred_check_branch
        %169 = sbr.rel (%p166) target = $region12
      $region11: #{linnet_d_forward.16} parent=5 // pred_region
        %s170 = ssub.s32 %s15, 1
        // Predicated region
        $region13: #{linnet_d_forward.16} parent=11 // pred_check
          %p171 = pneg %p62
        $region14: #{linnet_d_forward.16} parent=11 // pred_check_branch
          %173 = sbr.rel (%p171) target = $region16
        $region15: #{linnet_d_forward.16} parent=11 // pred_region
          _
        $region16: #{linnet_d_forward.16} parent=11 // pred_fallthru
          _
        // Predicated region
        $region17: #{linnet_d_forward.16} parent=11 // pred_check
          %p174 = pneg %p83
        $region18: #{linnet_d_forward.16} parent=11 // pred_check_branch
          %176 = sbr.rel (%p174) target = $region20
        $region19: #{linnet_d_forward.16} parent=11 // pred_region
          _
        $region20: #{linnet_d_forward.16} parent=11 // pred_fallthru
          _
        // Predicated region
        $region21: #{linnet_d_forward.16} parent=11 // pred_check
          %p177 = pneg %p104
        $region22: #{linnet_d_forward.16} parent=11 // pred_check_branch
          %179 = sbr.rel (%p177) target = $region24
        $region23: #{linnet_d_forward.16} parent=11 // pred_region
          _
        $region24: #{linnet_d_forward.16} parent=11 // pred_fallthru
          _
      $region12: #{linnet_d_forward.16} parent=5 // pred_fallthru
        _
      %p180 = scmp.lt.s32.totalorder %s15, 2
      // Predicated region
      $region25: #{linnet_d_forward.16} parent=5 // pred_check
        %p181 = pneg %p180
      $region26: #{linnet_d_forward.16} parent=5 // pred_check_branch
        %183 = sbr.rel (%p181) target = $region28
      $region27: #{linnet_d_forward.16} parent=5 // pred_region
        // Predicated region
        $region29: #{linnet_d_forward.16} parent=27 // pred_check
          %p184 = pneg %p35
        $region30: #{linnet_d_forward.16} parent=27 // pred_check_branch
          %186 = sbr.rel (%p184) target = $region32
        $region31: #{linnet_d_forward.16} parent=27 // pred_region
          %p187 = scmp.lt.s32.totalorder %s15, 1
          %s188 = scalar_select %p187, %s15, 1
          %s189 = smul.addr %s188, 8
          %s190 = scalar_lea.vmem %s0, %s189
        $region32: #{linnet_d_forward.16} parent=27 // pred_fallthru
          _
      $region28: #{linnet_d_forward.16} parent=5 // pred_fallthru
        _
      %p191 = scmp.le.s32.totalorder 1, %s15
      %p192 = scmp.lt.s32.totalorder %s15, 3
      %p193 = pnand %p191, %p192
      %p194 = pneg %p193
      // Predicated region
      $region33: #{linnet_d_forward.16} parent=5 // pred_check
        _
      $region34: #{linnet_d_forward.16} parent=5 // pred_check_branch
        %196 = sbr.rel (%p193) target = $region36
      $region35: #{linnet_d_forward.16} parent=5 // pred_region
        %s197 = ssub.s32 %s15, 1
        %p198 = scmp.lt.s32.totalorder %s20, 1
        %s199 = scalar_select %p198, %s20, 1
        %s200 = smul.addr %s199, 8
        %s201 = scalar_lea.vmem %s0, %s200
        %p202 = pneg %p41
        %p203 = pneg %p38
        %p204 = pneg %p62
        %p205 = pneg %p59
        %p206 = pneg %p83
        %p207 = pneg %p80
        %p208 = pneg %p104
        %p209 = pneg %p101
        %p210 = pneg %p130
        %p211 = pneg %p127
        %s212 = sand.u32 %s117, 1
        %s213 = scalar_lea.sflag [#allocation3], %s212
        %s214 = sand.u32 %s117, 1
        %s215 = smul.addr %s214, 4
        %s216 = scalar_lea.vmem [#allocation2], %s215
        %p217 = pneg %p156
        %p218 = pneg %p153
        %p219 = scmp.lt.s32.totalorder %s20, 1
        %s220 = scalar_select %p219, %s20, 1
        %s221 = scalar_lea.vmem %s5, %s220
        %p222 = scmp.lt.s32.totalorder %s20, 1
        %s223 = scalar_select %p222, %s20, 1
        %s224 = smul.addr %s223, 8
        %s225 = scalar_lea.vmem %s0, %s224
        %p226 = scmp.lt.s32.totalorder %s20, 1
        %s227 = scalar_select %p226, %s20, 1
        %s228 = scalar_lea.vmem %s5, %s227
        %v229 = vld [vmem:[%s225] sm:$0xff]
        %v230 = vld [vmem:[%s1] sm:$0x1]
        %v232 = vlaneseq
        %v233 = vshrl.u32 %v232, 7
        %v234 = vsub.s32 0, %v233
        %v235 = vrot.slane %v230, %v234
        %v237 = vmul.f32 %v229, %v235
        %v238 = vld [vmem:[%s2] sm:$0x1]
        %v240 = vlaneseq
        %v241 = vshrl.u32 %v240, 7
        %v242 = vsub.s32 0, %v241
        %v243 = vrot.slane %v238, %v242
        %v245 = vadd.f32 %v237, %v243
        %v246 = vmul.f32 %v245, 0.2
        %v247 = vmax.f32 %v245, %v246
        %v248 = vpack.c.bf16 %v247, %v247
        %249 = vst [vmem:[%s216] sm:$0xf] %v248
        %v250 = vld [vmem:[%s3] sm:$0xff]
        %252 = vset.pattern.permute.xlu0 0
        %253 = vperm.xlu0 %252, %v250
        %v254 = vpop.permute.xlu0 %253
        %v256 = vmul.f32 %v247, %v254
        %v257 = vrot.slane %v256, 4
        %v258 = vadd.f32 %v256, %v257
        %v259 = vrot.slane %v258, 2
        %v260 = vadd.f32 %v258, %v259
        %v261 = vrot.slane %v260, 1
        %v262 = vadd.f32 %v260, %v261
        %263 = vst [vmem:[%s228] sm:$0x1] %v262
        %s264 = sand.u32 %s117, 1
        %s265 = scalar_lea.sflag [#allocation3], %s264
        %s266 = sand.u32 %s117, 1
        %s267 = smul.addr %s266, 4
        %s268 = scalar_lea.vmem [#allocation2], %s267
        %p269 = scmp.lt.s32.totalorder %s20, 1
        %s270 = scalar_select %p269, %s20, 1
        %s271 = scalar_lea.vmem %s5, %s270
        // Predicated region
        $region37: #{linnet_d_forward.16} parent=35 // pred_check
          %p272 = pneg %p127
        $region38: #{linnet_d_forward.16} parent=35 // pred_check_branch
          %274 = sbr.rel (%p272) target = $region40
        $region39: #{linnet_d_forward.16} parent=35 // pred_region
          %s276 = ssub.s32 64, 64
          %277 = vsyncadd %s265, %s276
          %s278 = smul.addr %s20, 64
          %s279 = scalar_lea.hbm %s4, %s278
          %s281 = sshll.u32 %s268, 4
          %s282 = int_to_ptr.vmem [resolvable:$true] %s281
          %284 = dma.vmem_to_hbm [thread:$0]  %s282, 64, %s279, %s265
        $region40: #{linnet_d_forward.16} parent=35 // pred_fallthru
          _
        // Predicated region
        $region41: #{linnet_d_forward.16} parent=35 // pred_check
          %p285 = pneg %p153
        $region42: #{linnet_d_forward.16} parent=35 // pred_check_branch
          %287 = sbr.rel (%p285) target = $region44
        $region43: #{linnet_d_forward.16} parent=35 // pred_region
          _
        $region44: #{linnet_d_forward.16} parent=35 // pred_fallthru
          _
      $region36: #{linnet_d_forward.16} parent=5 // pred_fallthru
        _
      %p288 = scmp.le.s32.totalorder 2, %s15
      // Predicated region
      $region45: #{linnet_d_forward.16} parent=5 // pred_check
        %p289 = pneg %p288
      $region46: #{linnet_d_forward.16} parent=5 // pred_check_branch
        %291 = sbr.rel (%p289) target = $region48
      $region47: #{linnet_d_forward.16} parent=5 // pred_region
        %s292 = ssub.s32 %s15, 2
        // Predicated region
        $region49: #{linnet_d_forward.16} parent=47 // pred_check
          %p293 = pneg %p133
        $region50: #{linnet_d_forward.16} parent=47 // pred_check_branch
          %295 = sbr.rel (%p293) target = $region52
        $region51: #{linnet_d_forward.16} parent=47 // pred_region
          %s296 = sand.u32 %s118, 1
          %s297 = scalar_lea.sflag [#allocation3], %s296
          %s298 = sand.u32 %s118, 1
          %s299 = smul.addr %s298, 4
          %s300 = scalar_lea.vmem [#allocation2], %s299
          %301 = dma.done %s297, 64
        $region52: #{linnet_d_forward.16} parent=47 // pred_fallthru
          _
        // Predicated region
        $region53: #{linnet_d_forward.16} parent=47 // pred_check
          %p302 = pneg %p159
        $region54: #{linnet_d_forward.16} parent=47 // pred_check_branch
          %304 = sbr.rel (%p302) target = $region56
        $region55: #{linnet_d_forward.16} parent=47 // pred_region
          %p305 = scmp.lt.s32.totalorder %s21, 1
          %s306 = scalar_select %p305, %s21, 1
          %s307 = scalar_lea.vmem %s5, %s306
        $region56: #{linnet_d_forward.16} parent=47 // pred_fallthru
          _
      $region48: #{linnet_d_forward.16} parent=5 // pred_fallthru
        _
    $region6: #{linnet_d_forward.16} parent=1 // loop_footer
      %s19 = sadd.s32 1, %s15
    $region7: #{linnet_d_forward.16} parent=1 // loop_footer_branch
      %14 = sbr.rel target = $region3
    $region8: #{linnet_d_forward.16} parent=1 // loop_exit
      _
    %308 = vsyncpa [#allocation3], 1
    %s309 = scalar_lea.sflag [#allocation3], 1
    %310 = vsyncpa %s309, 1

// kernel: linnet_d_forward.17
$region0: #{linnet_d_forward.17}
  #allocation0 [shape = 'u32[]', space=smem, size = 0x4, offset = 0x4, fixed_abs, tag = 'smem constant byte address 0x4 - core index']
  #allocation1 [shape = 'u32[144,128]{1,0:T(1,128)}', space=vmem, size = 0x12000, scoped, tag = 'internal scratch']
  %s0 = inlined_call_operand.vmem [shape: f32[2,128], index: 0, kind: input, shape index: {}]
  %s1 = inlined_call_operand.vmem [shape: f32[2,6], index: 1, kind: input, shape index: {}]
  %s2 = inlined_call_operand.vmem [shape: f32[6,128], index: 2, kind: input, shape index: {}]
  %s3 = inlined_call_operand.vmem [shape: f32[2,1], index: 3, kind: output, shape index: {}]
  %s4 = sld [smem:[#allocation0]]
  $region22: #{linnet_d_forward.17} parent=0
    _
  %s6 = ssub.s32 1, %s4
  %s7 = scalar_select 0, %s6, %s4
  // Predicated region
  $region2: #{linnet_d_forward.17} parent=0 // pred_check
    _
  $region3: #{linnet_d_forward.17} parent=0 // pred_check_branch
    %9 = sbr.rel (0) target = $region5
  $region4: #{linnet_d_forward.17} parent=0 // pred_region
    _
  $region5: #{linnet_d_forward.17} parent=0 // pred_fallthru
    _
  // Predicated region
  $region6: #{linnet_d_forward.17} parent=0 // pred_check
    _
  $region7: #{linnet_d_forward.17} parent=0 // pred_check_branch
    %11 = sbr.rel (0) target = $region9
  $region8: #{linnet_d_forward.17} parent=0 // pred_region
    _
  $region9: #{linnet_d_forward.17} parent=0 // pred_fallthru
    _
  // Predicated region
  $region10: #{linnet_d_forward.17} parent=0 // pred_check
    _
  $region11: #{linnet_d_forward.17} parent=0 // pred_check_branch
    %13 = sbr.rel (0) target = $region13
  $region12: #{linnet_d_forward.17} parent=0 // pred_region
    _
  $region13: #{linnet_d_forward.17} parent=0 // pred_fallthru
    _
  %v14 = vld [vmem:[%s1] sm:$0x3]
  %v15 = vld [vmem:[%s2] sm:$0x3f]
  %vm16 = vcmask 48128
  %v18 = vsel %vm16, %v14, 0
  %vm20 = vcmask 1045504
  %v22 = vsel %vm20, %v15, 0
  %24 = vmatprep.subr.mxu0 0.0
  %25 = vmatpush1.msra.mxu0 %v22
  %26 = vmatprep.subr.mxu0 0.0
  %27 = vmatpush1.msra.mxu0 0.0
  %28 = vmatprep.subr.mxu0 0.0
  %29 = vmatpush1.msra.mxu0 0.0
  %30 = vmatprep.subr.mxu0 0.0
  %31 = vmatpush1.msra.mxu0 0.0
  %32 = vmatprep.subr.mxu0 0.0
  %33 = vmatpush1.msra.mxu0 0.0
  %34 = vmatprep.subr.mxu0 0.0
  %35 = vmatpush1.msra.mxu0 0.0
  %36 = vmatprep.subr.mxu0 0.0
  %37 = vmatpush1.msra.mxu0 0.0
  %38 = vmatprep.subr.mxu0 0.0
  %39 = vmatpush1.msra.mxu0 0.0
  %40 = vmatprep.subr.mxu0 0.0
  %41 = vmatpush1.msra.mxu0 0.0
  %42 = vmatprep.subr.mxu0 0.0
  %43 = vmatpush1.msra.mxu0 0.0
  %44 = vmatprep.subr.mxu0 0.0
  %45 = vmatpush1.msra.mxu0 0.0
  %46 = vmatprep.subr.mxu0 0.0
  %47 = vmatpush1.msra.mxu0 0.0
  %48 = vmatprep.subr.mxu0 0.0
  %49 = vmatpush1.msra.mxu0 0.0
  %50 = vmatprep.subr.mxu0 0.0
  %51 = vmatpush1.msra.mxu0 0.0
  %52 = vmatprep.subr.mxu0 0.0
  %53 = vmatpush1.msra.mxu0 0.0
  %54 = vmatprep.subr.mxu0 0.0
  %55 = vmatpush1.msra.mxu0 0.0
  %56 = vmatprep.subr.mxu0 0.0
  %57 = vmatpush1.msra.mxu0 0.0
  %58 = vmatprep.subr.mxu0 0.0
  %59 = vmatpush1.msra.mxu0 0.0
  %60 = vmatprep.subr.mxu0 0.0
  %61 = vmatpush1.msra.mxu0 0.0
  %62 = vmatprep.subr.mxu0 0.0
  %63 = vmatpush1.msra.mxu0 0.0
  %64 = vmatprep.subr.mxu0 0.0
  %65 = vmatpush1.msra.mxu0 0.0
  %66 = vmatprep.subr.mxu0 0.0
  %67 = vmatpush1.msra.mxu0 0.0
  %68 = vmatprep.subr.mxu0 0.0
  %69 = vmatpush1.msra.mxu0 0.0
  %70 = vmatprep.subr.mxu0 0.0
  %71 = vmatpush1.msra.mxu0 0.0
  %72 = vmatprep.subr.mxu0 0.0
  %73 = vmatpush1.msra.mxu0 0.0
  %74 = vmatprep.subr.mxu0 0.0
  %75 = vmatpush1.msra.mxu0 0.0
  %76 = vmatprep.subr.mxu0 0.0
  %77 = vmatpush1.msra.mxu0 0.0
  %78 = vmatprep.subr.mxu0 0.0
  %79 = vmatpush1.msra.mxu0 0.0
  %80 = vmatprep.subr.mxu0 0.0
  %81 = vmatpush1.msra.mxu0 0.0
  %82 = vmatprep.subr.mxu0 0.0
  %83 = vmatpush1.msra.mxu0 0.0
  %84 = vmatprep.subr.mxu0 0.0
  %85 = vmatpush1.msra.mxu0 0.0
  %86 = vmatprep.subr.mxu0 0.0
  %87 = vmatpush1.msra.mxu0 0.0
  %88 = vmatprep.mubr.f32.mxu0 0.0
  %89 = vmatmul.mubr.f32.gmra.mrb[0].mxu0 %v18
  %v90 = vpop.f32.mrb[0].mxu0
  %v91 = vadd.f32 0.0, %v90
  %v92 = vpop.f32.mrb[0].mxu0
  %93 = vdwg.mxu0
  %v94 = vld [vmem:[%s0] sm:$0x3]
  %v95 = vmul.f32 %v91, %v94
  %vm96 = vcmask 1041408
  %v97 = vsel %vm96, %v95, 0.0
  %98 = vadd.xlane.f32.xlu0 %v97
  %v99 = vpop.xlane.xlu0 %98
  %vm100 = vcmask 1024
  %101 = vst.msk [vmem:[%s3] sm:$0x3] %vm100, %v99
  // Predicated region
  $region14: #{linnet_d_forward.17} parent=0 // pred_check
    _
  $region15: #{linnet_d_forward.17} parent=0 // pred_check_branch
    %103 = sbr.rel (0) target = $region17
  $region16: #{linnet_d_forward.17} parent=0 // pred_region
    _
  $region17: #{linnet_d_forward.17} parent=0 // pred_fallthru
    _
  // Predicated region
  $region18: #{linnet_d_forward.17} parent=0 // pred_check
    _
  $region19: #{linnet_d_forward.17} parent=0 // pred_check_branch
    %105 = sbr.rel (0) target = $region21
  $region20: #{linnet_d_forward.17} parent=0 // pred_region
    _
  $region21: #{linnet_d_forward.17} parent=0 // pred_fallthru
    _

// kernel: linnet_d_forward.15
$region0: #{linnet_d_forward.15}
  #allocation0 [shape = 'u32[]', space=smem, size = 0x4, offset = 0x4, fixed_abs, tag = 'smem constant byte address 0x4 - core index']
  #allocation1 [shape = 'u32[144,128]{1,0:T(1,128)}', space=vmem, size = 0x12000, scoped, tag = 'internal scratch']
  %s0 = inlined_call_operand.vmem [shape: bf16[2,16,256], index: 0, kind: input, shape index: {}]
  %s1 = inlined_call_operand.vmem [shape: bf16[4,256,128], index: 1, kind: input, shape index: {}]
  %s2 = inlined_call_operand.vmem [shape: f32[8,1], index: 2, kind: input, shape index: {}]
  %s3 = inlined_call_operand.vmem [shape: f32[2,8,128], index: 3, kind: output, shape index: {0}]
  %s4 = inlined_call_operand.vmem [shape: f32[2,1,128], index: 4, kind: output, shape index: {1}]
  %s5 = inlined_call_operand.vmem [shape: f32[2,1,128], index: 5, kind: output, shape index: {2}]
  %6 = xla_tuple %s3, %s4, %s5
  %s7 = sld [smem:[#allocation0]]
  $region61: #{linnet_d_forward.15} parent=0
    _
  %s9 = ssub.s32 1, %s7
  %s10 = scalar_select 0, %s9, %s7
  loop: start=0, step=1, limit=4
  $region2: #{linnet_d_forward.15} parent=0 // loop_pre_header
    _
  $region3: #{linnet_d_forward.15} parent=0 // loop_header
    %s12 = sphi 0, %s16
    %p13 = scmp.ge.s32.totalorder %s12, 4
    %s22 = sphi 0, %s24
    %s25 = sphi 0, %s22
    %s26 = sphi 0, %s25
    %s42 = sphi 0, %s26
    %s46 = sphi 0, %s46
    %s48 = sphi 0, %s46
    %s49 = sphi 0, %s48
    %s63 = sphi 0, %s49
    %s67 = sphi 0, %s67
    %s69 = sphi 0, %s67
    %s70 = sphi 0, %s69
    %s84 = sphi 0, %s70
    %s90 = sphi 0, %s92
    %s93 = sphi 0, %s90
    %s94 = sphi 0, %s93
    %s110 = sphi 0, %s94
    %s116 = sphi 0, %s118
    %s119 = sphi 0, %s116
    %s120 = sphi 0, %s119
    %s136 = sphi 0, %s120
    %s142 = sphi 0, %s144
    %s145 = sphi 0, %s142
    %s146 = sphi 0, %s145
    %s162 = sphi 0, %s146
  $region4: #{linnet_d_forward.15} parent=0 // loop_header_branch
    %15 = sbr.rel (%p13) target = $region8
  $region5: #{linnet_d_forward.15} parent=0 // loop_body
    %s17 = ssub.s32 %s12, 1
    %s18 = ssub.s32 %s12, 2
    %s19 = sadd.s32 %s12, 1
    %s20 = ssub.s32 %s12, %s19
    %p21 = scmp.eq.s32.totalorder %s20, 0
    %s23 = sadd.s32 %s22, 1
    %s24 = scalar_select %p21, %s22, %s23
    %p27 = pneg %p21
    %p28 = scmp.eq.s32.totalorder %s12, 1
    %p29 = por %p27, %p28
    %p30 = scmp.ne.s32.totalorder %s22, %s25
    %p31 = scmp.eq.s32.totalorder %s12, 0
    %p32 = por %p30, %p31
    %p33 = scmp.ne.s32.totalorder %s22, %s25
    %p34 = scmp.eq.s32.totalorder %s17, 1
    %p35 = por %p33, %p34
    %p36 = scmp.ne.s32.totalorder %s25, %s26
    %p37 = scmp.eq.s32.totalorder %s17, 0
    %p38 = por %p36, %p37
    %p39 = scmp.ne.s32.totalorder %s25, %s26
    %p40 = scmp.eq.s32.totalorder %s18, 1
    %p41 = por %p39, %p40
    %p43 = scmp.ne.s32.totalorder %s26, %s42
    %p44 = scmp.eq.s32.totalorder %s18, 0
    %p45 = por %p43, %p44
    %s47 = sadd.s32 %s46, 1
    %p50 = scmp.eq.s32.totalorder %s12, 1
    %p51 = scmp.ne.s32.totalorder %s46, %s48
    %p52 = scmp.eq.s32.totalorder %s12, 0
    %p53 = por %p51, %p52
    %p54 = scmp.ne.s32.totalorder %s46, %s48
    %p55 = scmp.eq.s32.totalorder %s17, 1
    %p56 = por %p54, %p55
    %p57 = scmp.ne.s32.totalorder %s48, %s49
    %p58 = scmp.eq.s32.totalorder %s17, 0
    %p59 = por %p57, %p58
    %p60 = scmp.ne.s32.totalorder %s48, %s49
    %p61 = scmp.eq.s32.totalorder %s18, 1
    %p62 = por %p60, %p61
    %p64 = scmp.ne.s32.totalorder %s49, %s63
    %p65 = scmp.eq.s32.totalorder %s18, 0
    %p66 = por %p64, %p65
    %s68 = sadd.s32 %s67, 1
    %p71 = scmp.eq.s32.totalorder %s12, 1
    %p72 = scmp.ne.s32.totalorder %s67, %s69
    %p73 = scmp.eq.s32.totalorder %s12, 0
    %p74 = por %p72, %p73
    %p75 = scmp.ne.s32.totalorder %s67, %s69
    %p76 = scmp.eq.s32.totalorder %s17, 1
    %p77 = por %p75, %p76
    %p78 = scmp.ne.s32.totalorder %s69, %s70
    %p79 = scmp.eq.s32.totalorder %s17, 0
    %p80 = por %p78, %p79
    %p81 = scmp.ne.s32.totalorder %s69, %s70
    %p82 = scmp.eq.s32.totalorder %s18, 1
    %p83 = por %p81, %p82
    %p85 = scmp.ne.s32.totalorder %s70, %s84
    %p86 = scmp.eq.s32.totalorder %s18, 0
    %p87 = por %p85, %p86
    %s88 = ssub.s32 %s12, %s19
    %p89 = scmp.eq.s32.totalorder %s88, 0
    %s91 = sadd.s32 %s90, 1
    %s92 = scalar_select %p89, %s90, %s91
    %p95 = pneg %p89
    %p96 = scmp.eq.s32.totalorder %s12, 1
    %p97 = por %p95, %p96
    %p98 = scmp.ne.s32.totalorder %s90, %s93
    %p99 = scmp.eq.s32.totalorder %s12, 0
    %p100 = por %p98, %p99
    %p101 = scmp.ne.s32.totalorder %s90, %s93
    %p102 = scmp.eq.s32.totalorder %s17, 1
    %p103 = por %p101, %p102
    %p104 = scmp.ne.s32.totalorder %s93, %s94
    %p105 = scmp.eq.s32.totalorder %s17, 0
    %p106 = por %p104, %p105
    %p107 = scmp.ne.s32.totalorder %s93, %s94
    %p108 = scmp.eq.s32.totalorder %s18, 1
    %p109 = por %p107, %p108
    %p111 = scmp.ne.s32.totalorder %s94, %s110
    %p112 = scmp.eq.s32.totalorder %s18, 0
    %p113 = por %p111, %p112
    %s114 = ssub.s32 %s12, %s19
    %p115 = scmp.eq.s32.totalorder %s114, 0
    %s117 = sadd.s32 %s116, 1
    %s118 = scalar_select %p115, %s116, %s117
    %p121 = pneg %p115
    %p122 = scmp.eq.s32.totalorder %s12, 1
    %p123 = por %p121, %p122
    %p124 = scmp.ne.s32.totalorder %s116, %s119
    %p125 = scmp.eq.s32.totalorder %s12, 0
    %p126 = por %p124, %p125
    %p127 = scmp.ne.s32.totalorder %s116, %s119
    %p128 = scmp.eq.s32.totalorder %s17, 1
    %p129 = por %p127, %p128
    %p130 = scmp.ne.s32.totalorder %s119, %s120
    %p131 = scmp.eq.s32.totalorder %s17, 0
    %p132 = por %p130, %p131
    %p133 = scmp.ne.s32.totalorder %s119, %s120
    %p134 = scmp.eq.s32.totalorder %s18, 1
    %p135 = por %p133, %p134
    %p137 = scmp.ne.s32.totalorder %s120, %s136
    %p138 = scmp.eq.s32.totalorder %s18, 0
    %p139 = por %p137, %p138
    %s140 = ssub.s32 %s12, %s19
    %p141 = scmp.eq.s32.totalorder %s140, 0
    %s143 = sadd.s32 %s142, 1
    %s144 = scalar_select %p141, %s142, %s143
    %p147 = pneg %p141
    %p148 = scmp.eq.s32.totalorder %s12, 1
    %p149 = por %p147, %p148
    %p150 = scmp.ne.s32.totalorder %s142, %s145
    %p151 = scmp.eq.s32.totalorder %s12, 0
    %p152 = por %p150, %p151
    %p153 = scmp.ne.s32.totalorder %s142, %s145
    %p154 = scmp.eq.s32.totalorder %s17, 1
    %p155 = por %p153, %p154
    %p156 = scmp.ne.s32.totalorder %s145, %s146
    %p157 = scmp.eq.s32.totalorder %s17, 0
    %p158 = por %p156, %p157
    %p159 = scmp.ne.s32.totalorder %s145, %s146
    %p160 = scmp.eq.s32.totalorder %s18, 1
    %p161 = por %p159, %p160
    %p163 = scmp.ne.s32.totalorder %s146, %s162
    %p164 = scmp.eq.s32.totalorder %s18, 0
    %p165 = por %p163, %p164
    %p166 = scmp.le.s32.totalorder 1, %s12
    %p167 = scmp.lt.s32.totalorder %s12, 3
    %p168 = pnand %p166, %p167
    %p169 = pneg %p168
    // Predicated region
    $region9: #{linnet_d_forward.15} parent=5 // pred_check
      _
    $region10: #{linnet_d_forward.15} parent=5 // pred_check_branch
      %171 = sbr.rel (%p168) target = $region12
    $region11: #{linnet_d_forward.15} parent=5 // pred_region
      %s172 = ssub.s32 %s12, 1
      // Predicated region
      $region13: #{linnet_d_forward.15} parent=11 // pred_check
        %p173 = pneg %p59
      $region14: #{linnet_d_forward.15} parent=11 // pred_check_branch
        %175 = sbr.rel (%p173) target = $region16
      $region15: #{linnet_d_forward.15} parent=11 // pred_region
        _
      $region16: #{linnet_d_forward.15} parent=11 // pred_fallthru
        _
      // Predicated region
      $region17: #{linnet_d_forward.15} parent=11 // pred_check
        %p176 = pneg %p80
      $region18: #{linnet_d_forward.15} parent=11 // pred_check_branch
        %178 = sbr.rel (%p176) target = $region20
      $region19: #{linnet_d_forward.15} parent=11 // pred_region
        _
      $region20: #{linnet_d_forward.15} parent=11 // pred_fallthru
        _
    $region12: #{linnet_d_forward.15} parent=5 // pred_fallthru
      _
    %p179 = scmp.lt.s32.totalorder %s12, 2
    // Predicated region
    $region21: #{linnet_d_forward.15} parent=5 // pred_check
      %p180 = pneg %p179
    $region22: #{linnet_d_forward.15} parent=5 // pred_check_branch
      %182 = sbr.rel (%p180) target = $region24
    $region23: #{linnet_d_forward.15} parent=5 // pred_region
      // Predicated region
      $region25: #{linnet_d_forward.15} parent=23 // pred_check
        %p183 = pneg %p32
      $region26: #{linnet_d_forward.15} parent=23 // pred_check_branch
        %185 = sbr.rel (%p183) target = $region28
      $region27: #{linnet_d_forward.15} parent=23 // pred_region
        %p186 = scmp.lt.s32.totalorder %s12, 1
        %s187 = scalar_select %p186, %s12, 1
        %s188 = smul.addr %s187, 4
        %s189 = smul.addr %s188, 4
        %s190 = scalar_lea.vmem %s0, %s189
      $region28: #{linnet_d_forward.15} parent=23 // pred_fallthru
        _
    $region24: #{linnet_d_forward.15} parent=5 // pred_fallthru
      _
    %p191 = scmp.le.s32.totalorder 1, %s12
    %p192 = scmp.lt.s32.totalorder %s12, 3
    %p193 = pnand %p191, %p192
    %p194 = pneg %p193
    // Predicated region
    $region29: #{linnet_d_forward.15} parent=5 // pred_check
      _
    $region30: #{linnet_d_forward.15} parent=5 // pred_check_branch
      %196 = sbr.rel (%p193) target = $region32
    $region31: #{linnet_d_forward.15} parent=5 // pred_region
      %s197 = ssub.s32 %s12, 1
      %p198 = scmp.lt.s32.totalorder %s17, 1
      %s199 = scalar_select %p198, %s17, 1
      %s200 = smul.addr %s199, 4
      %s201 = smul.addr %s200, 4
      %s202 = scalar_lea.vmem %s0, %s201
      %p203 = pneg %p38
      %p204 = pneg %p35
      %p205 = pneg %p59
      %p206 = pneg %p56
      %p207 = pneg %p80
      %p208 = pneg %p77
      %p209 = pneg %p106
      %p210 = pneg %p103
      %p211 = scmp.lt.s32.totalorder %s17, 1
      %s212 = scalar_select %p211, %s17, 1
      %s213 = smul.addr %s212, 8
      %s214 = scalar_lea.vmem %s3, %s213
      %p215 = pneg %p132
      %p216 = pneg %p129
      %p217 = scmp.lt.s32.totalorder %s17, 1
      %s218 = scalar_select %p217, %s17, 1
      %s219 = scalar_lea.vmem %s4, %s218
      %p220 = pneg %p158
      %p221 = pneg %p155
      %p222 = scmp.lt.s32.totalorder %s17, 1
      %s223 = scalar_select %p222, %s17, 1
      %s224 = scalar_lea.vmem %s5, %s223
      %p225 = scmp.lt.s32.totalorder %s17, 1
      %s226 = scalar_select %p225, %s17, 1
      %s227 = smul.addr %s226, 4
      %s228 = smul.addr %s227, 4
      %s229 = scalar_lea.vmem %s0, %s228
      %p230 = scmp.lt.s32.totalorder %s17, 1
      %s231 = scalar_select %p230, %s17, 1
      %s232 = smul.addr %s231, 8
      %s233 = scalar_lea.vmem %s3, %s232
      %p234 = scmp.lt.s32.totalorder %s17, 1
      %s235 = scalar_select %p234, %s17, 1
      %s236 = scalar_lea.vmem %s4, %s235
      %p237 = scmp.lt.s32.totalorder %s17, 1
      %s238 = scalar_select %p237, %s17, 1
      %s239 = scalar_lea.vmem %s5, %s238
      %v241 = vld [vmem:[%s229] sm:$0xff]
      %v242 = vld [vmem:[%s229 + $0x8] sm:$0xff]
      %v243 = vld [vmem:[%s1] sm:$0xf]
      %v244 = vld [vmem:[%s1 + $0x4] sm:$0xf]
      %v245 = vld [vmem:[%s1 + $0x8] sm:$0xf]
      %v246 = vld [vmem:[%s1 + $0xc] sm:$0xf]
      %v247 = vld [vmem:[%s1 + $0x10] sm:$0xf]
      %v248 = vld [vmem:[%s1 + $0x14] sm:$0xf]
      %v249 = vld [vmem:[%s1 + $0x18] sm:$0xf]
      %v250 = vld [vmem:[%s1 + $0x1c] sm:$0xf]
      %v251 = vld [vmem:[%s1 + $0x20] sm:$0xf]
      %v252 = vld [vmem:[%s1 + $0x24] sm:$0xf]
      %v253 = vld [vmem:[%s1 + $0x28] sm:$0xf]
      %v254 = vld [vmem:[%s1 + $0x2c] sm:$0xf]
      %v255 = vld [vmem:[%s1 + $0x30] sm:$0xf]
      %v256 = vld [vmem:[%s1 + $0x34] sm:$0xf]
      %v257 = vld [vmem:[%s1 + $0x38] sm:$0xf]
      %v258 = vld [vmem:[%s1 + $0x3c] sm:$0xf]
      %v259 = vld [vmem:[%s1 + $0x40] sm:$0xf]
      %v260 = vld [vmem:[%s1 + $0x44] sm:$0xf]
      %v261 = vld [vmem:[%s1 + $0x48] sm:$0xf]
      %v262 = vld [vmem:[%s1 + $0x4c] sm:$0xf]
      %v263 = vld [vmem:[%s1 + $0x50] sm:$0xf]
      %v264 = vld [vmem:[%s1 + $0x54] sm:$0xf]
      %v265 = vld [vmem:[%s1 + $0x58] sm:$0xf]
      %v266 = vld [vmem:[%s1 + $0x5c] sm:$0xf]
      %v267 = vld [vmem:[%s1 + $0x60] sm:$0xf]
      %v268 = vld [vmem:[%s1 + $0x64] sm:$0xf]
      %v269 = vld [vmem:[%s1 + $0x68] sm:$0xf]
      %v270 = vld [vmem:[%s1 + $0x6c] sm:$0xf]
      %v271 = vld [vmem:[%s1 + $0x70] sm:$0xf]
      %v272 = vld [vmem:[%s1 + $0x74] sm:$0xf]
      %v273 = vld [vmem:[%s1 + $0x78] sm:$0xf]
      %v274 = vld [vmem:[%s1 + $0x7c] sm:$0xf]
      %s275 = scalar_lea.vmem %s1, 128
      %v276 = vld [vmem:[%s275] sm:$0xf]
      %v277 = vld [vmem:[%s275 + $0x4] sm:$0xf]
      %v278 = vld [vmem:[%s275 + $0x8] sm:$0xf]
      %v279 = vld [vmem:[%s275 + $0xc] sm:$0xf]
      %v280 = vld [vmem:[%s275 + $0x10] sm:$0xf]
      %v281 = vld [vmem:[%s275 + $0x14] sm:$0xf]
      %v282 = vld [vmem:[%s275 + $0x18] sm:$0xf]
      %v283 = vld [vmem:[%s275 + $0x1c] sm:$0xf]
      %v284 = vld [vmem:[%s275 + $0x20] sm:$0xf]
      %v285 = vld [vmem:[%s275 + $0x24] sm:$0xf]
      %v286 = vld [vmem:[%s275 + $0x28] sm:$0xf]
      %v287 = vld [vmem:[%s275 + $0x2c] sm:$0xf]
      %v288 = vld [vmem:[%s275 + $0x30] sm:$0xf]
      %v289 = vld [vmem:[%s275 + $0x34] sm:$0xf]
      %v290 = vld [vmem:[%s275 + $0x38] sm:$0xf]
      %v291 = vld [vmem:[%s275 + $0x3c] sm:$0xf]
      %v292 = vld [vmem:[%s275 + $0x40] sm:$0xf]
      %v293 = vld [vmem:[%s275 + $0x44] sm:$0xf]
      %v294 = vld [vmem:[%s275 + $0x48] sm:$0xf]
      %v295 = vld [vmem:[%s275 + $0x4c] sm:$0xf]
      %v296 = vld [vmem:[%s275 + $0x50] sm:$0xf]
      %v297 = vld [vmem:[%s275 + $0x54] sm:$0xf]
      %v298 = vld [vmem:[%s275 + $0x58] sm:$0xf]
      %v299 = vld [vmem:[%s275 + $0x5c] sm:$0xf]
      %v300 = vld [vmem:[%s275 + $0x60] sm:$0xf]
      %v301 = vld [vmem:[%s275 + $0x64] sm:$0xf]
      %v302 = vld [vmem:[%s275 + $0x68] sm:$0xf]
      %v303 = vld [vmem:[%s275 + $0x6c] sm:$0xf]
      %v304 = vld [vmem:[%s275 + $0x70] sm:$0xf]
      %v305 = vld [vmem:[%s275 + $0x74] sm:$0xf]
      %v306 = vld [vmem:[%s275 + $0x78] sm:$0xf]
      %v307 = vld [vmem:[%s275 + $0x7c] sm:$0xf]
      %v310 = vunpack.c.l.b16 %v241
      %v311 = vunpack.c.h.b16 %v241
      %v312 = vunpack.c.l.b16 %v242
      %v313 = vunpack.c.h.b16 %v242
      %v314 = vpack.c.b16 %v312, %v310
      %v315 = vpack.c.b16 %v313, %v311
      %v317 = vshrl.u32 %v314, 16
      %v319 = vshll.u32 %v314, 16
      %v321 = vrot.slane %v319, 1
      %v322 = vor.u32 %v317, %v321
      %v324 = vshrl.u32 %v315, 16
      %v326 = vshll.u32 %v315, 16
      %v328 = vrot.slane %v326, 1
      %v329 = vor.u32 %v324, %v328
      %v364 = vunpack.c.l.b16 %v276
      %v365 = vunpack.c.l.b16 %v277
      %v366 = vunpack.c.l.b16 %v278
      %v367 = vunpack.c.l.b16 %v279
      %v368 = vunpack.c.l.b16 %v280
      %v369 = vunpack.c.l.b16 %v281
      %v370 = vunpack.c.l.b16 %v282
      %v371 = vunpack.c.l.b16 %v283
      %v372 = vunpack.c.l.b16 %v284
      %v373 = vunpack.c.l.b16 %v285
      %v374 = vunpack.c.l.b16 %v286
      %v375 = vunpack.c.l.b16 %v287
      %v376 = vunpack.c.l.b16 %v288
      %v377 = vunpack.c.l.b16 %v289
      %v378 = vunpack.c.l.b16 %v290
      %v379 = vunpack.c.l.b16 %v291
      %v380 = vunpack.c.l.b16 %v292
      %v381 = vunpack.c.l.b16 %v293
      %v382 = vunpack.c.l.b16 %v294
      %v383 = vunpack.c.l.b16 %v295
      %v384 = vunpack.c.l.b16 %v296
      %v385 = vunpack.c.l.b16 %v297
      %v386 = vunpack.c.l.b16 %v298
      %v387 = vunpack.c.l.b16 %v299
      %v388 = vunpack.c.l.b16 %v300
      %v389 = vunpack.c.l.b16 %v301
      %v390 = vunpack.c.l.b16 %v302
      %v391 = vunpack.c.l.b16 %v303
      %v392 = vunpack.c.l.b16 %v304
      %v393 = vunpack.c.l.b16 %v305
      %v394 = vunpack.c.l.b16 %v306
      %v395 = vunpack.c.l.b16 %v307
      %v396 = vpack.c.b16 %v365, %v364
      %v397 = vpack.c.b16 %v367, %v366
      %v398 = vpack.c.b16 %v369, %v368
      %v399 = vpack.c.b16 %v371, %v370
      %v400 = vpack.c.b16 %v373, %v372
      %v401 = vpack.c.b16 %v375, %v374
      %v402 = vpack.c.b16 %v377, %v376
      %v403 = vpack.c.b16 %v379, %v378
      %v404 = vpack.c.b16 %v381, %v380
      %v405 = vpack.c.b16 %v383, %v382
      %v406 = vpack.c.b16 %v385, %v384
      %v407 = vpack.c.b16 %v387, %v386
      %v408 = vpack.c.b16 %v389, %v388
      %v409 = vpack.c.b16 %v391, %v390
      %v410 = vpack.c.b16 %v393, %v392
      %v411 = vpack.c.b16 %v395, %v394
      %428 = vmatprep.subr.bf16.mxu0 0
      %429 = vmatpush1.bf16.msra.mxu0 %v396
      %430 = vmatprep.subr.bf16.mxu0 0
      %431 = vmatpush1.bf16.msra.mxu0 %v397
      %432 = vmatprep.subr.bf16.mxu0 0
      %433 = vmatpush1.bf16.msra.mxu0 %v398
      %434 = vmatprep.subr.bf16.mxu0 0
      %435 = vmatpush1.bf16.msra.mxu0 %v399
      %436 = vmatprep.subr.bf16.mxu0 0
      %437 = vmatpush1.bf16.msra.mxu0 %v400
      %438 = vmatprep.subr.bf16.mxu0 0
      %439 = vmatpush1.bf16.msra.mxu0 %v401
      %440 = vmatprep.subr.bf16.mxu0 0
      %441 = vmatpush1.bf16.msra.mxu0 %v402
      %442 = vmatprep.subr.bf16.mxu0 0
      %443 = vmatpush1.bf16.msra.mxu0 %v403
      %444 = vmatprep.subr.bf16.mxu0 0
      %445 = vmatpush1.bf16.msra.mxu0 %v404
      %446 = vmatprep.subr.bf16.mxu0 0
      %447 = vmatpush1.bf16.msra.mxu0 %v405
      %448 = vmatprep.subr.bf16.mxu0 0
      %449 = vmatpush1.bf16.msra.mxu0 %v406
      %450 = vmatprep.subr.bf16.mxu0 0
      %451 = vmatpush1.bf16.msra.mxu0 %v407
      %452 = vmatprep.subr.bf16.mxu0 0
      %453 = vmatpush1.bf16.msra.mxu0 %v408
      %454 = vmatprep.subr.bf16.mxu0 0
      %455 = vmatpush1.bf16.msra.mxu0 %v409
      %456 = vmatprep.subr.bf16.mxu0 0
      %457 = vmatpush1.bf16.msra.mxu0 %v410
      %458 = vmatprep.subr.bf16.mxu0 0
      %459 = vmatpush1.bf16.msra.mxu0 %v411
      %460 = vmatprep.mubr.bf16.mxu0 %v329
      %461 = vmatmul.mubr.bf16.gmra.mrb[0].mxu0 %v322
      %v462 = vpop.f32.mrb[0].mxu0
      %v463 = vadd.f32 0.0, %v462
      %v464 = vpop.f32.mrb[0].mxu0
      %v465 = vpop.f32.mrb[0].mxu0
      %v466 = vpop.f32.mrb[0].mxu0
      %467 = vdwg.mxu0
      %v468 = vpack.c.b16 %v310, %v310
      %v469 = vpack.c.b16 %v311, %v311
      %v504 = vunpack.c.l.b16 %v243
      %v505 = vunpack.c.l.b16 %v244
      %v506 = vunpack.c.l.b16 %v245
      %v507 = vunpack.c.l.b16 %v246
      %v508 = vunpack.c.l.b16 %v247
      %v509 = vunpack.c.l.b16 %v248
      %v510 = vunpack.c.l.b16 %v249
      %v511 = vunpack.c.l.b16 %v250
      %v512 = vunpack.c.l.b16 %v251
      %v513 = vunpack.c.l.b16 %v252
      %v514 = vunpack.c.l.b16 %v253
      %v515 = vunpack.c.l.b16 %v254
      %v516 = vunpack.c.l.b16 %v255
      %v517 = vunpack.c.l.b16 %v256
      %v518 = vunpack.c.l.b16 %v257
      %v519 = vunpack.c.l.b16 %v258
      %v520 = vunpack.c.l.b16 %v259
      %v521 = vunpack.c.l.b16 %v260
      %v522 = vunpack.c.l.b16 %v261
      %v523 = vunpack.c.l.b16 %v262
      %v524 = vunpack.c.l.b16 %v263
      %v525 = vunpack.c.l.b16 %v264
      %v526 = vunpack.c.l.b16 %v265
      %v527 = vunpack.c.l.b16 %v266
      %v528 = vunpack.c.l.b16 %v267
      %v529 = vunpack.c.l.b16 %v268
      %v530 = vunpack.c.l.b16 %v269
      %v531 = vunpack.c.l.b16 %v270
      %v532 = vunpack.c.l.b16 %v271
      %v533 = vunpack.c.l.b16 %v272
      %v534 = vunpack.c.l.b16 %v273
      %v535 = vunpack.c.l.b16 %v274
      %v536 = vpack.c.b16 %v505, %v504
      %v537 = vpack.c.b16 %v507, %v506
      %v538 = vpack.c.b16 %v509, %v508
      %v539 = vpack.c.b16 %v511, %v510
      %v540 = vpack.c.b16 %v513, %v512
      %v541 = vpack.c.b16 %v515, %v514
      %v542 = vpack.c.b16 %v517, %v516
      %v543 = vpack.c.b16 %v519, %v518
      %v544 = vpack.c.b16 %v521, %v520
      %v545 = vpack.c.b16 %v523, %v522
      %v546 = vpack.c.b16 %v525, %v524
      %v547 = vpack.c.b16 %v527, %v526
      %v548 = vpack.c.b16 %v529, %v528
      %v549 = vpack.c.b16 %v531, %v530
      %v550 = vpack.c.b16 %v533, %v532
      %v551 = vpack.c.b16 %v535, %v534
      %568 = vmatprep.subr.bf16.mxu0 0
      %569 = vmatpush1.bf16.msra.mxu0 %v536
      %570 = vmatprep.subr.bf16.mxu0 0
      %571 = vmatpush1.bf16.msra.mxu0 %v537
      %572 = vmatprep.subr.bf16.mxu0 0
      %573 = vmatpush1.bf16.msra.mxu0 %v538
      %574 = vmatprep.subr.bf16.mxu0 0
      %575 = vmatpush1.bf16.msra.mxu0 %v539
      %576 = vmatprep.subr.bf16.mxu0 0
      %577 = vmatpush1.bf16.msra.mxu0 %v540
      %578 = vmatprep.subr.bf16.mxu0 0
      %579 = vmatpush1.bf16.msra.mxu0 %v541
      %580 = vmatprep.subr.bf16.mxu0 0
      %581 = vmatpush1.bf16.msra.mxu0 %v542
      %582 = vmatprep.subr.bf16.mxu0 0
      %583 = vmatpush1.bf16.msra.mxu0 %v543
      %584 = vmatprep.subr.bf16.mxu0 0
      %585 = vmatpush1.bf16.msra.mxu0 %v544
      %586 = vmatprep.subr.bf16.mxu0 0
      %587 = vmatpush1.bf16.msra.mxu0 %v545
      %588 = vmatprep.subr.bf16.mxu0 0
      %589 = vmatpush1.bf16.msra.mxu0 %v546
      %590 = vmatprep.subr.bf16.mxu0 0
      %591 = vmatpush1.bf16.msra.mxu0 %v547
      %592 = vmatprep.subr.bf16.mxu0 0
      %593 = vmatpush1.bf16.msra.mxu0 %v548
      %594 = vmatprep.subr.bf16.mxu0 0
      %595 = vmatpush1.bf16.msra.mxu0 %v549
      %596 = vmatprep.subr.bf16.mxu0 0
      %597 = vmatpush1.bf16.msra.mxu0 %v550
      %598 = vmatprep.subr.bf16.mxu0 0
      %599 = vmatpush1.bf16.msra.mxu0 %v551
      %600 = vmatprep.mubr.bf16.mxu0 %v469
      %601 = vmatmul.mubr.bf16.gmra.mrb[0].mxu0 %v468
      %v602 = vpop.f32.mrb[0].mxu0
      %v603 = vadd.f32 %v463, %v602
      %v604 = vpop.f32.mrb[0].mxu0
      %v605 = vpop.f32.mrb[0].mxu0
      %v606 = vpop.f32.mrb[0].mxu0
      %607 = vdwg.mxu0
      %s608 = scalar_lea.vmem %s1, 256
      %v609 = vld [vmem:[%s608] sm:$0xf]
      %v610 = vld [vmem:[%s608 + $0x4] sm:$0xf]
      %v611 = vld [vmem:[%s608 + $0x8] sm:$0xf]
      %v612 = vld [vmem:[%s608 + $0xc] sm:$0xf]
      %v613 = vld [vmem:[%s608 + $0x10] sm:$0xf]
      %v614 = vld [vmem:[%s608 + $0x14] sm:$0xf]
      %v615 = vld [vmem:[%s608 + $0x18] sm:$0xf]
      %v616 = vld [vmem:[%s608 + $0x1c] sm:$0xf]
      %v617 = vld [vmem:[%s608 + $0x20] sm:$0xf]
      %v618 = vld [vmem:[%s608 + $0x24] sm:$0xf]
      %v619 = vld [vmem:[%s608 + $0x28] sm:$0xf]
      %v620 = vld [vmem:[%s608 + $0x2c] sm:$0xf]
      %v621 = vld [vmem:[%s608 + $0x30] sm:$0xf]
      %v622 = vld [vmem:[%s608 + $0x34] sm:$0xf]
      %v623 = vld [vmem:[%s608 + $0x38] sm:$0xf]
      %v624 = vld [vmem:[%s608 + $0x3c] sm:$0xf]
      %v625 = vld [vmem:[%s608 + $0x40] sm:$0xf]
      %v626 = vld [vmem:[%s608 + $0x44] sm:$0xf]
      %v627 = vld [vmem:[%s608 + $0x48] sm:$0xf]
      %v628 = vld [vmem:[%s608 + $0x4c] sm:$0xf]
      %v629 = vld [vmem:[%s608 + $0x50] sm:$0xf]
      %v630 = vld [vmem:[%s608 + $0x54] sm:$0xf]
      %v631 = vld [vmem:[%s608 + $0x58] sm:$0xf]
      %v632 = vld [vmem:[%s608 + $0x5c] sm:$0xf]
      %v633 = vld [vmem:[%s608 + $0x60] sm:$0xf]
      %v634 = vld [vmem:[%s608 + $0x64] sm:$0xf]
      %v635 = vld [vmem:[%s608 + $0x68] sm:$0xf]
      %v636 = vld [vmem:[%s608 + $0x6c] sm:$0xf]
      %v637 = vld [vmem:[%s608 + $0x70] sm:$0xf]
      %v638 = vld [vmem:[%s608 + $0x74] sm:$0xf]
      %v639 = vld [vmem:[%s608 + $0x78] sm:$0xf]
      %v640 = vld [vmem:[%s608 + $0x7c] sm:$0xf]
      %v641 = vrot.slane %v317, 1
      %v642 = vrot.slane %v319, 2
      %v643 = vor.u32 %v641, %v642
      %v644 = vrot.slane %v324, 1
      %v645 = vrot.slane %v326, 2
      %v646 = vor.u32 %v644, %v645
      %v681 = vunpack.c.l.b16 %v609
      %v682 = vunpack.c.l.b16 %v610
      %v683 = vunpack.c.l.b16 %v611
      %v684 = vunpack.c.l.b16 %v612
      %v685 = vunpack.c.l.b16 %v613
      %v686 = vunpack.c.l.b16 %v614
      %v687 = vunpack.c.l.b16 %v615
      %v688 = vunpack.c.l.b16 %v616
      %v689 = vunpack.c.l.b16 %v617
      %v690 = vunpack.c.l.b16 %v618
      %v691 = vunpack.c.l.b16 %v619
      %v692 = vunpack.c.l.b16 %v620
      %v693 = vunpack.c.l.b16 %v621
      %v694 = vunpack.c.l.b16 %v622
      %v695 = vunpack.c.l.b16 %v623
      %v696 = vunpack.c.l.b16 %v624
      %v697 = vunpack.c.l.b16 %v625
      %v698 = vunpack.c.l.b16 %v626
      %v699 = vunpack.c.l.b16 %v627
      %v700 = vunpack.c.l.b16 %v628
      %v701 = vunpack.c.l.b16 %v629
      %v702 = vunpack.c.l.b16 %v630
      %v703 = vunpack.c.l.b16 %v631
      %v704 = vunpack.c.l.b16 %v632
      %v705 = vunpack.c.l.b16 %v633
      %v706 = vunpack.c.l.b16 %v634
      %v707 = vunpack.c.l.b16 %v635
      %v708 = vunpack.c.l.b16 %v636
      %v709 = vunpack.c.l.b16 %v637
      %v710 = vunpack.c.l.b16 %v638
      %v711 = vunpack.c.l.b16 %v639
      %v712 = vunpack.c.l.b16 %v640
      %v713 = vpack.c.b16 %v682, %v681
      %v714 = vpack.c.b16 %v684, %v683
      %v715 = vpack.c.b16 %v686, %v685
      %v716 = vpack.c.b16 %v688, %v687
      %v717 = vpack.c.b16 %v690, %v689
      %v718 = vpack.c.b16 %v692, %v691
      %v719 = vpack.c.b16 %v694, %v693
      %v720 = vpack.c.b16 %v696, %v695
      %v721 = vpack.c.b16 %v698, %v697
      %v722 = vpack.c.b16 %v700, %v699
      %v723 = vpack.c.b16 %v702, %v701
      %v724 = vpack.c.b16 %v704, %v703
      %v725 = vpack.c.b16 %v706, %v705
      %v726 = vpack.c.b16 %v708, %v707
      %v727 = vpack.c.b16 %v710, %v709
      %v728 = vpack.c.b16 %v712, %v711
      %745 = vmatprep.subr.bf16.mxu0 0
      %746 = vmatpush1.bf16.msra.mxu0 %v713
      %747 = vmatprep.subr.bf16.mxu0 0
      %748 = vmatpush1.bf16.msra.mxu0 %v714
      %749 = vmatprep.subr.bf16.mxu0 0
      %750 = vmatpush1.bf16.msra.mxu0 %v715
      %751 = vmatprep.subr.bf16.mxu0 0
      %752 = vmatpush1.bf16.msra.mxu0 %v716
      %753 = vmatprep.subr.bf16.mxu0 0
      %754 = vmatpush1.bf16.msra.mxu0 %v717
      %755 = vmatprep.subr.bf16.mxu0 0
      %756 = vmatpush1.bf16.msra.mxu0 %v718
      %757 = vmatprep.subr.bf16.mxu0 0
      %758 = vmatpush1.bf16.msra.mxu0 %v719
      %759 = vmatprep.subr.bf16.mxu0 0
      %760 = vmatpush1.bf16.msra.mxu0 %v720
      %761 = vmatprep.subr.bf16.mxu0 0
      %762 = vmatpush1.bf16.msra.mxu0 %v721
      %763 = vmatprep.subr.bf16.mxu0 0
      %764 = vmatpush1.bf16.msra.mxu0 %v722
      %765 = vmatprep.subr.bf16.mxu0 0
      %766 = vmatpush1.bf16.msra.mxu0 %v723
      %767 = vmatprep.subr.bf16.mxu0 0
      %768 = vmatpush1.bf16.msra.mxu0 %v724
      %769 = vmatprep.subr.bf16.mxu0 0
      %770 = vmatpush1.bf16.msra.mxu0 %v725
      %771 = vmatprep.subr.bf16.mxu0 0
      %772 = vmatpush1.bf16.msra.mxu0 %v726
      %773 = vmatprep.subr.bf16.mxu0 0
      %774 = vmatpush1.bf16.msra.mxu0 %v727
      %775 = vmatprep.subr.bf16.mxu0 0
      %776 = vmatpush1.bf16.msra.mxu0 %v728
      %777 = vmatprep.mubr.bf16.mxu0 %v646
      %778 = vmatmul.mubr.bf16.gmra.mrb[0].mxu0 %v643
      %v779 = vpop.f32.mrb[0].mxu0
      %v780 = vadd.f32 0.0, %v779
      %v781 = vpop.f32.mrb[0].mxu0
      %v782 = vpop.f32.mrb[0].mxu0
      %v783 = vpop.f32.mrb[0].mxu0
      %784 = vdwg.mxu0
      %v785 = vadd.f32 %v603, %v780
      %s786 = scalar_lea.vmem %s1, 384
      %v787 = vld [vmem:[%s786] sm:$0xf]
      %v788 = vld [vmem:[%s786 + $0x4] sm:$0xf]
      %v789 = vld [vmem:[%s786 + $0x8] sm:$0xf]
      %v790 = vld [vmem:[%s786 + $0xc] sm:$0xf]
      %v791 = vld [vmem:[%s786 + $0x10] sm:$0xf]
      %v792 = vld [vmem:[%s786 + $0x14] sm:$0xf]
      %v793 = vld [vmem:[%s786 + $0x18] sm:$0xf]
      %v794 = vld [vmem:[%s786 + $0x1c] sm:$0xf]
      %v795 = vld [vmem:[%s786 + $0x20] sm:$0xf]
      %v796 = vld [vmem:[%s786 + $0x24] sm:$0xf]
      %v797 = vld [vmem:[%s786 + $0x28] sm:$0xf]
      %v798 = vld [vmem:[%s786 + $0x2c] sm:$0xf]
      %v799 = vld [vmem:[%s786 + $0x30] sm:$0xf]
      %v800 = vld [vmem:[%s786 + $0x34] sm:$0xf]
      %v801 = vld [vmem:[%s786 + $0x38] sm:$0xf]
      %v802 = vld [vmem:[%s786 + $0x3c] sm:$0xf]
      %v803 = vld [vmem:[%s786 + $0x40] sm:$0xf]
      %v804 = vld [vmem:[%s786 + $0x44] sm:$0xf]
      %v805 = vld [vmem:[%s786 + $0x48] sm:$0xf]
      %v806 = vld [vmem:[%s786 + $0x4c] sm:$0xf]
      %v807 = vld [vmem:[%s786 + $0x50] sm:$0xf]
      %v808 = vld [vmem:[%s786 + $0x54] sm:$0xf]
      %v809 = vld [vmem:[%s786 + $0x58] sm:$0xf]
      %v810 = vld [vmem:[%s786 + $0x5c] sm:$0xf]
      %v811 = vld [vmem:[%s786 + $0x60] sm:$0xf]
      %v812 = vld [vmem:[%s786 + $0x64] sm:$0xf]
      %v813 = vld [vmem:[%s786 + $0x68] sm:$0xf]
      %v814 = vld [vmem:[%s786 + $0x6c] sm:$0xf]
      %v815 = vld [vmem:[%s786 + $0x70] sm:$0xf]
      %v816 = vld [vmem:[%s786 + $0x74] sm:$0xf]
      %v817 = vld [vmem:[%s786 + $0x78] sm:$0xf]
      %v818 = vld [vmem:[%s786 + $0x7c] sm:$0xf]
      %v819 = vrot.slane %v314, 2
      %v820 = vrot.slane %v315, 2
      %v855 = vunpack.c.l.b16 %v787
      %v856 = vunpack.c.l.b16 %v788
      %v857 = vunpack.c.l.b16 %v789
      %v858 = vunpack.c.l.b16 %v790
      %v859 = vunpack.c.l.b16 %v791
      %v860 = vunpack.c.l.b16 %v792
      %v861 = vunpack.c.l.b16 %v793
      %v862 = vunpack.c.l.b16 %v794
      %v863 = vunpack.c.l.b16 %v795
      %v864 = vunpack.c.l.b16 %v796
      %v865 = vunpack.c.l.b16 %v797
      %v866 = vunpack.c.l.b16 %v798
      %v867 = vunpack.c.l.b16 %v799
      %v868 = vunpack.c.l.b16 %v800
      %v869 = vunpack.c.l.b16 %v801
      %v870 = vunpack.c.l.b16 %v802
      %v871 = vunpack.c.l.b16 %v803
      %v872 = vunpack.c.l.b16 %v804
      %v873 = vunpack.c.l.b16 %v805
      %v874 = vunpack.c.l.b16 %v806
      %v875 = vunpack.c.l.b16 %v807
      %v876 = vunpack.c.l.b16 %v808
      %v877 = vunpack.c.l.b16 %v809
      %v878 = vunpack.c.l.b16 %v810
      %v879 = vunpack.c.l.b16 %v811
      %v880 = vunpack.c.l.b16 %v812
      %v881 = vunpack.c.l.b16 %v813
      %v882 = vunpack.c.l.b16 %v814
      %v883 = vunpack.c.l.b16 %v815
      %v884 = vunpack.c.l.b16 %v816
      %v885 = vunpack.c.l.b16 %v817
      %v886 = vunpack.c.l.b16 %v818
      %v887 = vpack.c.b16 %v856, %v855
      %v888 = vpack.c.b16 %v858, %v857
      %v889 = vpack.c.b16 %v860, %v859
      %v890 = vpack.c.b16 %v862, %v861
      %v891 = vpack.c.b16 %v864, %v863
      %v892 = vpack.c.b16 %v866, %v865
      %v893 = vpack.c.b16 %v868, %v867
      %v894 = vpack.c.b16 %v870, %v869
      %v895 = vpack.c.b16 %v872, %v871
      %v896 = vpack.c.b16 %v874, %v873
      %v897 = vpack.c.b16 %v876, %v875
      %v898 = vpack.c.b16 %v878, %v877
      %v899 = vpack.c.b16 %v880, %v879
      %v900 = vpack.c.b16 %v882, %v881
      %v901 = vpack.c.b16 %v884, %v883
      %v902 = vpack.c.b16 %v886, %v885
      %919 = vmatprep.subr.bf16.mxu0 0
      %920 = vmatpush1.bf16.msra.mxu0 %v887
      %921 = vmatprep.subr.bf16.mxu0 0
      %922 = vmatpush1.bf16.msra.mxu0 %v888
      %923 = vmatprep.subr.bf16.mxu0 0
      %924 = vmatpush1.bf16.msra.mxu0 %v889
      %925 = vmatprep.subr.bf16.mxu0 0
      %926 = vmatpush1.bf16.msra.mxu0 %v890
      %927 = vmatprep.subr.bf16.mxu0 0
      %928 = vmatpush1.bf16.msra.mxu0 %v891
      %929 = vmatprep.subr.bf16.mxu0 0
      %930 = vmatpush1.bf16.msra.mxu0 %v892
      %931 = vmatprep.subr.bf16.mxu0 0
      %932 = vmatpush1.bf16.msra.mxu0 %v893
      %933 = vmatprep.subr.bf16.mxu0 0
      %934 = vmatpush1.bf16.msra.mxu0 %v894
      %935 = vmatprep.subr.bf16.mxu0 0
      %936 = vmatpush1.bf16.msra.mxu0 %v895
      %937 = vmatprep.subr.bf16.mxu0 0
      %938 = vmatpush1.bf16.msra.mxu0 %v896
      %939 = vmatprep.subr.bf16.mxu0 0
      %940 = vmatpush1.bf16.msra.mxu0 %v897
      %941 = vmatprep.subr.bf16.mxu0 0
      %942 = vmatpush1.bf16.msra.mxu0 %v898
      %943 = vmatprep.subr.bf16.mxu0 0
      %944 = vmatpush1.bf16.msra.mxu0 %v899
      %945 = vmatprep.subr.bf16.mxu0 0
      %946 = vmatpush1.bf16.msra.mxu0 %v900
      %947 = vmatprep.subr.bf16.mxu0 0
      %948 = vmatpush1.bf16.msra.mxu0 %v901
      %949 = vmatprep.subr.bf16.mxu0 0
      %950 = vmatpush1.bf16.msra.mxu0 %v902
      %951 = vmatprep.mubr.bf16.mxu0 %v820
      %952 = vmatmul.mubr.bf16.gmra.mrb[0].mxu0 %v819
      %v953 = vpop.f32.mrb[0].mxu0
      %v954 = vadd.f32 0.0, %v953
      %v955 = vpop.f32.mrb[0].mxu0
      %v956 = vpop.f32.mrb[0].mxu0
      %v957 = vpop.f32.mrb[0].mxu0
      %958 = vdwg.mxu0
      %v959 = vadd.f32 %v785, %v954
      %960 = vst [vmem:[%s233] sm:$0xff] %v959
      %v961 = vld [vmem:[%s2] sm:$0xff]
      %963 = vset.pattern.permute.xlu0 0
      %964 = vperm.xlu0 %963, %v961
      %v965 = vpop.permute.xlu0 %964
      %v967 = vmul.f32 %v959, %v965
      %v968 = vrot.slane %v967, 4
      %v969 = vadd.f32 %v967, %v968
      %v970 = vrot.slane %v969, 2
      %v971 = vadd.f32 %v969, %v970
      %v972 = vrot.slane %v971, 1
      %v973 = vadd.f32 %v971, %v972
      %974 = vst [vmem:[%s236] sm:$0x1] %v973
      %v975 = vmul.f32 %v967, %v959
      %v976 = vrot.slane %v975, 4
      %v977 = vadd.f32 %v975, %v976
      %v978 = vrot.slane %v977, 2
      %v979 = vadd.f32 %v977, %v978
      %v980 = vrot.slane %v979, 1
      %v981 = vadd.f32 %v979, %v980
      %982 = vst [vmem:[%s239] sm:$0x1] %v981
      %p983 = scmp.lt.s32.totalorder %s17, 1
      %s984 = scalar_select %p983, %s17, 1
      %s985 = smul.addr %s984, 8
      %s986 = scalar_lea.vmem %s3, %s985
      %p987 = scmp.lt.s32.totalorder %s17, 1
      %s988 = scalar_select %p987, %s17, 1
      %s989 = scalar_lea.vmem %s4, %s988
      %p990 = scmp.lt.s32.totalorder %s17, 1
      %s991 = scalar_select %p990, %s17, 1
      %s992 = scalar_lea.vmem %s5, %s991
      // Predicated region
      $region33: #{linnet_d_forward.15} parent=31 // pred_check
        %p993 = pneg %p103
      $region34: #{linnet_d_forward.15} parent=31 // pred_check_branch
        %995 = sbr.rel (%p993) target = $region36
      $region35: #{linnet_d_forward.15} parent=31 // pred_region
        _
      $region36: #{linnet_d_forward.15} parent=31 // pred_fallthru
        _
      // Predicated region
      $region37: #{linnet_d_forward.15} parent=31 // pred_check
        %p996 = pneg %p129
      $region38: #{linnet_d_forward.15} parent=31 // pred_check_branch
        %998 = sbr.rel (%p996) target = $region40
      $region39: #{linnet_d_forward.15} parent=31 // pred_region
        _
      $region40: #{linnet_d_forward.15} parent=31 // pred_fallthru
        _
      // Predicated region
      $region41: #{linnet_d_forward.15} parent=31 // pred_check
        %p999 = pneg %p155
      $region42: #{linnet_d_forward.15} parent=31 // pred_check_branch
        %1001 = sbr.rel (%p999) target = $region44
      $region43: #{linnet_d_forward.15} parent=31 // pred_region
        _
      $region44: #{linnet_d_forward.15} parent=31 // pred_fallthru
        _
    $region32: #{linnet_d_forward.15} parent=5 // pred_fallthru
      _
    %p1002 = scmp.le.s32.totalorder 2, %s12
    // Predicated region
    $region45: #{linnet_d_forward.15} parent=5 // pred_check
      %p1003 = pneg %p1002
    $region46: #{linnet_d_forward.15} parent=5 // pred_check_branch
      %1005 = sbr.rel (%p1003) target = $region48
    $region47: #{linnet_d_forward.15} parent=5 // pred_region
      %s1006 = ssub.s32 %s12, 2
      // Predicated region
      $region49: #{linnet_d_forward.15} parent=47 // pred_check
        %p1007 = pneg %p109
      $region50: #{linnet_d_forward.15} parent=47 // pred_check_branch
        %1009 = sbr.rel (%p1007) target = $region52
      $region51: #{linnet_d_forward.15} parent=47 // pred_region
        %p1010 = scmp.lt.s32.totalorder %s18, 1
        %s1011 = scalar_select %p1010, %s18, 1
        %s1012 = smul.addr %s1011, 8
        %s1013 = scalar_lea.vmem %s3, %s1012
      $region52: #{linnet_d_forward.15} parent=47 // pred_fallthru
        _
      // Predicated region
      $region53: #{linnet_d_forward.15} parent=47 // pred_check
        %p1014 = pneg %p135
      $region54: #{linnet_d_forward.15} parent=47 // pred_check_branch
        %1016 = sbr.rel (%p1014) target = $region56
      $region55: #{linnet_d_forward.15} parent=47 // pred_region
        %p1017 = scmp.lt.s32.totalorder %s18, 1
        %s1018 = scalar_select %p1017, %s18, 1
        %s1019 = scalar_lea.vmem %s4, %s1018
      $region56: #{linnet_d_forward.15} parent=47 // pred_fallthru
        _
      // Predicated region
      $region57: #{linnet_d_forward.15} parent=47 // pred_check
        %p1020 = pneg %p161
      $region58: #{linnet_d_forward.15} parent=47 // pred_check_branch
        %1022 = sbr.rel (%p1020) target = $region60
      $region59: #{linnet_d_forward.15} parent=47 // pred_region
        %p1023 = scmp.lt.s32.totalorder %s18, 1
        %s1024 = scalar_select %p1023, %s18, 1
        %s1025 = scalar_lea.vmem %s5, %s1024
      $region60: #{linnet_d_forward.15} parent=47 // pred_fallthru
        _
    $region48: #{linnet_d_forward.15} parent=5 // pred_fallthru
      _
  $region6: #{linnet_d_forward.15} parent=0 // loop_footer
    %s16 = sadd.s32 1, %s12
  $region7: #{linnet_d_forward.15} parent=0 // loop_footer_branch
    %11 = sbr.rel target = $region3
  $region8: #{linnet_d_forward.15} parent=0 // loop_exit
    _

</llo_original>
